<compile_context>
chip_gen: v7x
topology: tpu7x:2x2x1
jax: 0.10.0
libtpu: 0.0.40
codegen_flags: <defaults>
</compile_context>

<pallas_src>
import functools

import jax
import jax.numpy as jnp
import numpy as np
from jax.experimental import pallas as pl
from jax.experimental.pallas import tpu as pltpu


def _round_up(x, m):
    return ((x + m - 1) // m) * m


def _complex_conv_kernel(slab_ref, w_ref, b_ref, o_ref, acc_ref, *, tap_offsets, M):
    """One (batch*row-tile, cin-chunk) grid step.

    slab_ref : (1, 1, 2*CC, L_in)   interleaved (re, im) input channels,
                                    spatial flattened with row pitch WL.
    w_ref    : (1, T, 2*Cout_p, 2*CC) per-tap combined complex weights.
    b_ref    : (2*Cout_p, 1)        combined complex bias (f32, resident).
    o_ref    : (1, 2*Cout_p, M)     lane-dense output tile.
    acc_ref  : (2*Cout_p, M) f32    accumulator across cin chunks.
    """
    c = pl.program_id(1)

    # In-kernel "im2col": each tap is a static lane-offset window of the slab.
    partial = None
    for t, off in enumerate(tap_offsets):
        xt = slab_ref[0, 0, :, off:off + M]                 # (2*CC, M)
        contrib = jnp.dot(w_ref[0, t], xt, preferred_element_type=jnp.float32)
        partial = contrib if partial is None else partial + contrib

    @pl.when(c == 0)
    def _init():
        acc_ref[...] = partial

    @pl.when(c > 0)
    def _accumulate():
        acc_ref[...] += partial

    @pl.when(c == pl.num_programs(1) - 1)
    def _finalize():
        o_ref[0] = (acc_ref[...] + b_ref[...]).astype(o_ref.dtype)


def _pick_tiles(Hout, Cin, Cout2p, T, WL, KH, d, tail, bpe_c, bpe_o, budget):
    """Pick (row tile TH, cin chunk CC) under a VMEM block budget."""
    def block_bytes(TH, CC):
        L_in = (TH + (KH - 1) * d) * WL + tail
        M = TH * WL
        return (2 * (2 * CC) * L_in * bpe_c            # slab, double buffered
                + 2 * T * Cout2p * (2 * CC) * bpe_c    # weight chunk, double buffered
                + 2 * Cout2p * M * bpe_o               # output, double buffered
                + Cout2p * M * 4)                      # f32 accumulator scratch

    divisors = [c for c in range(Cin, 0, -1) if Cin % c == 0]
    th_cap = min(Hout, 128)
    chosen, fallback = None, None
    for CC in divisors:                                # prefer fewer reduction steps
        th = next((TH for TH in range(th_cap, 0, -1)
                   if block_bytes(TH, CC) <= budget), None)
        if th is None:
            continue
        if fallback is None or th > fallback[0]:
            fallback = (th, CC)
        if th >= min(8, Hout):
            chosen = (th, CC)
            break
    if chosen is None:
        chosen = fallback if fallback is not None else (1, divisors[-1])
    return chosen


def complex_conv2d(x, w_re, b_re, w_im, b_im, *,
                   stride=1, padding=0, dilation=1, groups=1,
                   compute_dtype=jnp.bfloat16, out_dtype=None,
                   tile_h=None, cin_chunk=None,
                   vmem_block_budget=18 * 1024 * 1024):
    """x: (N, Cin, H, W, 2) float32. Weights in PyTorch OIHW layout."""
    # TODO(synk): groups != 1 and stride != 1 are not implemented (module defaults).
    assert groups == 1, "only groups == 1 is implemented"
    assert stride == 1, "only stride == 1 is implemented"

    N, Cin, H, W, two = x.shape
    assert two == 2
    Cout, Cin_w, KH, KW = w_re.shape
    assert Cin_w == Cin and w_im.shape == w_re.shape
    d = int(dilation)

    Hp, Wp = H + 2 * padding, W + 2 * padding
    Hout = Hp - d * (KH - 1)
    Wout = Wp - d * (KW - 1)
    assert Hout > 0 and Wout > 0

    if out_dtype is None:
        out_dtype = (jnp.float32
                     if jnp.dtype(compute_dtype) == jnp.dtype(jnp.float32)
                     else compute_dtype)
    bpe_c = jnp.dtype(compute_dtype).itemsize
    bpe_o = jnp.dtype(out_dtype).itemsize

    T = KH * KW
    Cout2 = 2 * Cout
    Cout2p = _round_up(Cout2, 8)
    WL = _round_up(Wp, 128)                      # lane pitch of one spatial row
    tail = _round_up((KW - 1) * d, 128) if (KW - 1) * d > 0 else 0

    th_auto, cc_auto = _pick_tiles(Hout, Cin, Cout2p, T, WL, KH, d, tail,
                                   bpe_c, bpe_o, vmem_block_budget)
    TH = th_auto if tile_h is None else max(1, min(int(tile_h), Hout))
    CC = cc_auto if cin_chunk is None else int(cin_chunk)
    assert Cin % CC == 0
    R = -(-Hout // TH)
    if tile_h is None and N * R < 2 and Hout >= 2:   # keep both v7x TCs busy
        TH = -(-Hout // 2)
        R = -(-Hout // TH)

    C = Cin // CC
    CC2 = 2 * CC
    TH_in = TH + (KH - 1) * d
    L_in = TH_in * WL + tail
    M = TH * WL
    NR = N * R

    # ---- glue: interleave re/im channels, zero-pad, halo-replicate row slabs ----
    xi = jnp.transpose(x, (0, 1, 4, 2, 3)).reshape(N, 2 * Cin, H, W)
    Hp_ext = R * TH + (KH - 1) * d               # bottom-padded so every slab is full
    xi = jnp.pad(xi, ((0, 0), (0, 0),
                      (padding, Hp_ext - H - padding),
                      (padding, WL - W - padding)))
    slabs = jnp.stack([xi[:, :, r * TH:r * TH + TH_in, :] for r in range(R)], axis=1)
    slabs = slabs.reshape(NR, 2 * Cin, TH_in * WL)
    if tail:
        slabs = jnp.pad(slabs, ((0, 0), (0, 0), (0, tail)))
    slabs = slabs.reshape(NR, C, CC2, L_in).astype(compute_dtype)

    # ---- glue: per-tap combined complex weights, chunk axis pre-split ----
    wr = jnp.transpose(w_re, (2, 3, 1, 0)).reshape(T, Cin, Cout)
    wi = jnp.transpose(w_im, (2, 3, 1, 0)).reshape(T, Cin, Cout)
    w_even = jnp.concatenate([wr, wi], axis=2)     # rows multiplied by x_re
    w_odd = jnp.concatenate([-wi, wr], axis=2)     # rows multiplied by x_im
    w_big = jnp.stack([w_even, w_odd], axis=2).reshape(T, 2 * Cin, Cout2)
    w_big = jnp.pad(w_big, ((0, 0), (0, 0), (0, Cout2p - Cout2)))
    w_big = jnp.transpose(w_big.reshape(T, C, CC2, Cout2p), (1, 0, 3, 2))
    w_big = w_big.astype(compute_dtype)            # (C, T, Cout2p, CC2)

    b_big = jnp.concatenate([b_re - b_im, b_re + b_im])
    b_big = jnp.pad(b_big, (0, Cout2p - Cout2)).reshape(Cout2p, 1).astype(jnp.float32)

    tap_offsets = tuple(kh * d * WL + kw * d for kh in range(KH) for kw in range(KW))

    est = (2 * CC2 * L_in * bpe_c + 2 * T * Cout2p * CC2 * bpe_c
           + 2 * Cout2p * M * bpe_o + Cout2p * M * 4)
    vmem_limit = int(min(56 * 2**20, max(32 * 2**20, 2 * est + (8 << 20))))

    kernel = functools.partial(_complex_conv_kernel, tap_offsets=tap_offsets, M=M)
    out = pl.pallas_call(
        kernel,
        out_shape=jax.ShapeDtypeStruct((NR, Cout2p, M), out_dtype),
        grid_spec=pltpu.PrefetchScalarGridSpec(
            num_scalar_prefetch=0,
            grid=(NR, C),
            in_specs=[
                pl.BlockSpec((1, 1, CC2, L_in), lambda n, c: (n, c, 0, 0)),
                pl.BlockSpec((1, T, Cout2p, CC2), lambda n, c: (c, 0, 0, 0)),
                pl.BlockSpec((Cout2p, 1), lambda n, c: (0, 0)),
            ],
            out_specs=pl.BlockSpec((1, Cout2p, M), lambda n, c: (n, 0, 0)),
            scratch_shapes=[pltpu.VMEM((Cout2p, M), jnp.float32)],
        ),
        compiler_params=pltpu.CompilerParams(
            dimension_semantics=("parallel", "arbitrary"),
            vmem_limit_bytes=vmem_limit),
    )(slabs, w_big, b_big)

    # ---- glue: un-tile rows, drop lane/channel padding, split real/imag ----
    out = out.reshape(N, R, Cout2p, TH, WL)
    out = jnp.transpose(out, (0, 2, 1, 3, 4)).reshape(N, Cout2p, R * TH, WL)
    out = out[:, :, :Hout, :Wout]
    return jnp.stack([out[:, :Cout], out[:, Cout:Cout2]], axis=-1)


def _conv_ref(xc, w, bias, padding, dilation):
    y = jax.lax.conv_general_dilated(
        xc, w, window_strides=(1, 1),
        padding=[(padding, padding), (padding, padding)],
        rhs_dilation=(dilation, dilation),
        dimension_numbers=('NCHW', 'OIHW', 'NCHW'))
    return y + bias[None, :, None, None]


if __name__ == "__main__":
    N, Cin, Cout, H, W, K = 2, 8, 8, 16, 16, 3
    padding, dilation = 1, 1

    key = jax.random.PRNGKey(0)
    kx, kwr, kbr, kwi, kbi = jax.random.split(key, 5)

    x = jax.random.normal(kx, (N, Cin, H, W, 2), jnp.float32)

    # Deterministic params mimicking nn.Conv2d's uniform(-1/sqrt(fan_in), ..)
    fan_in = Cin * K * K
    bound = 1.0 / np.sqrt(fan_in)
    w_re = jax.random.uniform(kwr, (Cout, Cin, K, K), jnp.float32, -bound, bound)
    b_re = jax.random.uniform(kbr, (Cout,), jnp.float32, -bound, bound)
    w_im = jax.random.uniform(kwi, (Cout, Cin, K, K), jnp.float32, -bound, bound)
    b_im = jax.random.uniform(kbi, (Cout,), jnp.float32, -bound, bound)

    # Pure-JAX reference of the PyTorch forward pass.
    x_r, x_i = x[..., 0], x[..., 1]
    ref = jnp.stack(
        [_conv_ref(x_r, w_re, b_re, padding, dilation)
         - _conv_ref(x_i, w_im, b_im, padding, dilation),
         _conv_ref(x_i, w_re, b_re, padding, dilation)
         + _conv_ref(x_r, w_im, b_im, padding, dilation)],
        axis=-1)
    ref = np.asarray(ref)

    # f32 MXU operands, auto tiling (single cin chunk, full-height row tile).
    out_f32 = complex_conv2d(x, w_re, b_re, w_im, b_im,
                             padding=padding, dilation=dilation,
                             compute_dtype=jnp.float32)
    out_f32 = jax.block_until_ready(out_f32)
    assert out_f32.shape == (N, Cout, H, W, 2), out_f32.shape
    np.testing.assert_allclose(np.asarray(out_f32), ref, rtol=2e-4, atol=2e-4)

    # bf16 MXU operands (default; f32 accumulate, bf16 output) with forced row
    # tiling and cin chunking to exercise the reduction-axis/accumulator path.
    out_bf16 = complex_conv2d(x, w_re, b_re, w_im, b_im,
                              padding=padding, dilation=dilation,
                              tile_h=8, cin_chunk=4)
    out_bf16 = jax.block_until_ready(out_bf16)
    assert out_bf16.shape == (N, Cout, H, W, 2), out_bf16.shape
    np.testing.assert_allclose(np.asarray(out_bf16.astype(jnp.float32)), ref,
                               rtol=5e-2, atol=5e-2)

    print("KERNEL_OK")
</pallas_src>

<mosaic_0001>
module attributes {stable_mosaic.version = 11 : i64} {
  func.func @_complex_conv_kernel(%arg0: i32, %arg1: i32, %arg2: memref<1x1x16x2432xf32, #tpu.memory_space<vmem>>, %arg3: memref<1x9x16x16xf32, #tpu.memory_space<vmem>>, %arg4: memref<16x1xf32, #tpu.memory_space<vmem>>, %arg5: memref<1x16x2048xf32, #tpu.memory_space<vmem>>, %arg6: memref<16x2048xf32, #tpu.memory_space<vmem>>) attributes {dimension_semantics = [#tpu.dimension_semantics<parallel>, #tpu.dimension_semantics<arbitrary>], iteration_bounds = array<i64: 2, 1>, scalar_prefetch = 0 : i64, scratch_operands = 1 : i64, tpu.core_type = #tpu.core_type<tc>, window_params = [{transform_indices = @transform_0, window_bounds = array<i64: 1, 1, 16, 2432>}, {transform_indices = @transform_1, window_bounds = array<i64: 1, 9, 16, 16>}, {pipeline_mode = #tpu.pipeline_mode<synchronous>, transform_indices = @transform_2, window_bounds = array<i64: 16, 1>}, {transform_indices = @transform_3, window_bounds = array<i64: 1, 16, 2048>}]} {
    %c0 = arith.constant 0 : index
    %c0_0 = arith.constant 0 : index
    %c0_1 = arith.constant 0 : index
    %c0_2 = arith.constant 0 : index
    %0 = vector.load %arg2[%c0, %c0_0, %c0_1, %c0_2] : memref<1x1x16x2432xf32, #tpu.memory_space<vmem>>, vector<1x1x16x2048xf32>
    %1 = vector.shape_cast %0 : vector<1x1x16x2048xf32> to vector<16x2048xf32>
    %c0_3 = arith.constant 0 : index
    %c0_4 = arith.constant 0 : index
    %c0_5 = arith.constant 0 : index
    %c0_6 = arith.constant 0 : index
    %2 = vector.load %arg3[%c0_3, %c0_4, %c0_5, %c0_6] : memref<1x9x16x16xf32, #tpu.memory_space<vmem>>, vector<1x1x16x16xf32>
    %3 = vector.shape_cast %2 : vector<1x1x16x16xf32> to vector<16x16xf32>
    %cst = arith.constant dense<0.000000e+00> : vector<16x2048xf32>
    %4 = tpu.matmul %3, %1, %cst {dimension_numbers = #tpu.dot_dimension_numbers<[1], [0], [0], [1], [0, 0, 1, 1], [], []>} : vector<16x16xf32>, vector<16x2048xf32>, vector<16x2048xf32> -> vector<16x2048xf32>
    %c0_7 = arith.constant 0 : index
    %c0_8 = arith.constant 0 : index
    %c0_9 = arith.constant 0 : index
    %c1 = arith.constant 1 : index
    %5 = vector.load %arg2[%c0_7, %c0_8, %c0_9, %c1] : memref<1x1x16x2432xf32, #tpu.memory_space<vmem>>, vector<1x1x16x2048xf32>
    %6 = vector.shape_cast %5 : vector<1x1x16x2048xf32> to vector<16x2048xf32>
    %c0_10 = arith.constant 0 : index
    %c1_11 = arith.constant 1 : index
    %c0_12 = arith.constant 0 : index
    %c0_13 = arith.constant 0 : index
    %7 = vector.load %arg3[%c0_10, %c1_11, %c0_12, %c0_13] : memref<1x9x16x16xf32, #tpu.memory_space<vmem>>, vector<1x1x16x16xf32>
    %8 = vector.shape_cast %7 : vector<1x1x16x16xf32> to vector<16x16xf32>
    %cst_14 = arith.constant dense<0.000000e+00> : vector<16x2048xf32>
    %9 = tpu.matmul %8, %6, %cst_14 {dimension_numbers = #tpu.dot_dimension_numbers<[1], [0], [0], [1], [0, 0, 1, 1], [], []>} : vector<16x16xf32>, vector<16x2048xf32>, vector<16x2048xf32> -> vector<16x2048xf32>
    %10 = arith.addf %4, %9 : vector<16x2048xf32>
    %c0_15 = arith.constant 0 : index
    %c0_16 = arith.constant 0 : index
    %c0_17 = arith.constant 0 : index
    %c2 = arith.constant 2 : index
    %11 = vector.load %arg2[%c0_15, %c0_16, %c0_17, %c2] : memref<1x1x16x2432xf32, #tpu.memory_space<vmem>>, vector<1x1x16x2048xf32>
    %12 = vector.shape_cast %11 : vector<1x1x16x2048xf32> to vector<16x2048xf32>
    %c0_18 = arith.constant 0 : index
    %c2_19 = arith.constant 2 : index
    %c0_20 = arith.constant 0 : index
    %c0_21 = arith.constant 0 : index
    %13 = vector.load %arg3[%c0_18, %c2_19, %c0_20, %c0_21] : memref<1x9x16x16xf32, #tpu.memory_space<vmem>>, vector<1x1x16x16xf32>
    %14 = vector.shape_cast %13 : vector<1x1x16x16xf32> to vector<16x16xf32>
    %cst_22 = arith.constant dense<0.000000e+00> : vector<16x2048xf32>
    %15 = tpu.matmul %14, %12, %cst_22 {dimension_numbers = #tpu.dot_dimension_numbers<[1], [0], [0], [1], [0, 0, 1, 1], [], []>} : vector<16x16xf32>, vector<16x2048xf32>, vector<16x2048xf32> -> vector<16x2048xf32>
    %16 = arith.addf %10, %15 : vector<16x2048xf32>
    %c0_23 = arith.constant 0 : index
    %c0_24 = arith.constant 0 : index
    %c0_25 = arith.constant 0 : index
    %c128 = arith.constant 128 : index
    %17 = vector.load %arg2[%c0_23, %c0_24, %c0_25, %c128] : memref<1x1x16x2432xf32, #tpu.memory_space<vmem>>, vector<1x1x16x2048xf32>
    %18 = vector.shape_cast %17 : vector<1x1x16x2048xf32> to vector<16x2048xf32>
    %c0_26 = arith.constant 0 : index
    %c3 = arith.constant 3 : index
    %c0_27 = arith.constant 0 : index
    %c0_28 = arith.constant 0 : index
    %19 = vector.load %arg3[%c0_26, %c3, %c0_27, %c0_28] : memref<1x9x16x16xf32, #tpu.memory_space<vmem>>, vector<1x1x16x16xf32>
    %20 = vector.shape_cast %19 : vector<1x1x16x16xf32> to vector<16x16xf32>
    %cst_29 = arith.constant dense<0.000000e+00> : vector<16x2048xf32>
    %21 = tpu.matmul %20, %18, %cst_29 {dimension_numbers = #tpu.dot_dimension_numbers<[1], [0], [0], [1], [0, 0, 1, 1], [], []>} : vector<16x16xf32>, vector<16x2048xf32>, vector<16x2048xf32> -> vector<16x2048xf32>
    %22 = arith.addf %16, %21 : vector<16x2048xf32>
    %c0_30 = arith.constant 0 : index
    %c0_31 = arith.constant 0 : index
    %c0_32 = arith.constant 0 : index
    %c129 = arith.constant 129 : index
    %23 = vector.load %arg2[%c0_30, %c0_31, %c0_32, %c129] : memref<1x1x16x2432xf32, #tpu.memory_space<vmem>>, vector<1x1x16x2048xf32>
    %24 = vector.shape_cast %23 : vector<1x1x16x2048xf32> to vector<16x2048xf32>
    %c0_33 = arith.constant 0 : index
    %c4 = arith.constant 4 : index
    %c0_34 = arith.constant 0 : index
    %c0_35 = arith.constant 0 : index
    %25 = vector.load %arg3[%c0_33, %c4, %c0_34, %c0_35] : memref<1x9x16x16xf32, #tpu.memory_space<vmem>>, vector<1x1x16x16xf32>
    %26 = vector.shape_cast %25 : vector<1x1x16x16xf32> to vector<16x16xf32>
    %cst_36 = arith.constant dense<0.000000e+00> : vector<16x2048xf32>
    %27 = tpu.matmul %26, %24, %cst_36 {dimension_numbers = #tpu.dot_dimension_numbers<[1], [0], [0], [1], [0, 0, 1, 1], [], []>} : vector<16x16xf32>, vector<16x2048xf32>, vector<16x2048xf32> -> vector<16x2048xf32>
    %28 = arith.addf %22, %27 : vector<16x2048xf32>
    %c0_37 = arith.constant 0 : index
    %c0_38 = arith.constant 0 : index
    %c0_39 = arith.constant 0 : index
    %c130 = arith.constant 130 : index
    %29 = vector.load %arg2[%c0_37, %c0_38, %c0_39, %c130] : memref<1x1x16x2432xf32, #tpu.memory_space<vmem>>, vector<1x1x16x2048xf32>
    %30 = vector.shape_cast %29 : vector<1x1x16x2048xf32> to vector<16x2048xf32>
    %c0_40 = arith.constant 0 : index
    %c5 = arith.constant 5 : index
    %c0_41 = arith.constant 0 : index
    %c0_42 = arith.constant 0 : index
    %31 = vector.load %arg3[%c0_40, %c5, %c0_41, %c0_42] : memref<1x9x16x16xf32, #tpu.memory_space<vmem>>, vector<1x1x16x16xf32>
    %32 = vector.shape_cast %31 : vector<1x1x16x16xf32> to vector<16x16xf32>
    %cst_43 = arith.constant dense<0.000000e+00> : vector<16x2048xf32>
    %33 = tpu.matmul %32, %30, %cst_43 {dimension_numbers = #tpu.dot_dimension_numbers<[1], [0], [0], [1], [0, 0, 1, 1], [], []>} : vector<16x16xf32>, vector<16x2048xf32>, vector<16x2048xf32> -> vector<16x2048xf32>
    %34 = arith.addf %28, %33 : vector<16x2048xf32>
    %c0_44 = arith.constant 0 : index
    %c0_45 = arith.constant 0 : index
    %c0_46 = arith.constant 0 : index
    %c256 = arith.constant 256 : index
    %35 = vector.load %arg2[%c0_44, %c0_45, %c0_46, %c256] : memref<1x1x16x2432xf32, #tpu.memory_space<vmem>>, vector<1x1x16x2048xf32>
    %36 = vector.shape_cast %35 : vector<1x1x16x2048xf32> to vector<16x2048xf32>
    %c0_47 = arith.constant 0 : index
    %c6 = arith.constant 6 : index
    %c0_48 = arith.constant 0 : index
    %c0_49 = arith.constant 0 : index
    %37 = vector.load %arg3[%c0_47, %c6, %c0_48, %c0_49] : memref<1x9x16x16xf32, #tpu.memory_space<vmem>>, vector<1x1x16x16xf32>
    %38 = vector.shape_cast %37 : vector<1x1x16x16xf32> to vector<16x16xf32>
    %cst_50 = arith.constant dense<0.000000e+00> : vector<16x2048xf32>
    %39 = tpu.matmul %38, %36, %cst_50 {dimension_numbers = #tpu.dot_dimension_numbers<[1], [0], [0], [1], [0, 0, 1, 1], [], []>} : vector<16x16xf32>, vector<16x2048xf32>, vector<16x2048xf32> -> vector<16x2048xf32>
    %40 = arith.addf %34, %39 : vector<16x2048xf32>
    %c0_51 = arith.constant 0 : index
    %c0_52 = arith.constant 0 : index
    %c0_53 = arith.constant 0 : index
    %c257 = arith.constant 257 : index
    %41 = vector.load %arg2[%c0_51, %c0_52, %c0_53, %c257] : memref<1x1x16x2432xf32, #tpu.memory_space<vmem>>, vector<1x1x16x2048xf32>
    %42 = vector.shape_cast %41 : vector<1x1x16x2048xf32> to vector<16x2048xf32>
    %c0_54 = arith.constant 0 : index
    %c7 = arith.constant 7 : index
    %c0_55 = arith.constant 0 : index
    %c0_56 = arith.constant 0 : index
    %43 = vector.load %arg3[%c0_54, %c7, %c0_55, %c0_56] : memref<1x9x16x16xf32, #tpu.memory_space<vmem>>, vector<1x1x16x16xf32>
    %44 = vector.shape_cast %43 : vector<1x1x16x16xf32> to vector<16x16xf32>
    %cst_57 = arith.constant dense<0.000000e+00> : vector<16x2048xf32>
    %45 = tpu.matmul %44, %42, %cst_57 {dimension_numbers = #tpu.dot_dimension_numbers<[1], [0], [0], [1], [0, 0, 1, 1], [], []>} : vector<16x16xf32>, vector<16x2048xf32>, vector<16x2048xf32> -> vector<16x2048xf32>
    %46 = arith.addf %40, %45 : vector<16x2048xf32>
    %c0_58 = arith.constant 0 : index
    %c0_59 = arith.constant 0 : index
    %c0_60 = arith.constant 0 : index
    %c258 = arith.constant 258 : index
    %47 = vector.load %arg2[%c0_58, %c0_59, %c0_60, %c258] : memref<1x1x16x2432xf32, #tpu.memory_space<vmem>>, vector<1x1x16x2048xf32>
    %48 = vector.shape_cast %47 : vector<1x1x16x2048xf32> to vector<16x2048xf32>
    %c0_61 = arith.constant 0 : index
    %c8 = arith.constant 8 : index
    %c0_62 = arith.constant 0 : index
    %c0_63 = arith.constant 0 : index
    %49 = vector.load %arg3[%c0_61, %c8, %c0_62, %c0_63] : memref<1x9x16x16xf32, #tpu.memory_space<vmem>>, vector<1x1x16x16xf32>
    %50 = vector.shape_cast %49 : vector<1x1x16x16xf32> to vector<16x16xf32>
    %cst_64 = arith.constant dense<0.000000e+00> : vector<16x2048xf32>
    %51 = tpu.matmul %50, %48, %cst_64 {dimension_numbers = #tpu.dot_dimension_numbers<[1], [0], [0], [1], [0, 0, 1, 1], [], []>} : vector<16x16xf32>, vector<16x2048xf32>, vector<16x2048xf32> -> vector<16x2048xf32>
    %52 = arith.addf %46, %51 : vector<16x2048xf32>
    %c0_i32 = arith.constant 0 : i32
    %53 = arith.cmpi eq, %arg1, %c0_i32 : i32
    %54 = arith.extui %53 : i1 to i32
    %c0_i32_65 = arith.constant 0 : i32
    %55 = arith.cmpi ne, %54, %c0_i32_65 : i32
    scf.if %55 {
      %c0_70 = arith.constant 0 : index
      %c0_71 = arith.constant 0 : index
      %62 = vector.load %arg6[%c0_70, %c0_71] : memref<16x2048xf32, #tpu.memory_space<vmem>>, vector<16x2048xf32>
      tpu.vector_store %arg6[%c0_70, %c0_71], %52 {strides = array<i32>} : memref<16x2048xf32, #tpu.memory_space<vmem>>, vector<16x2048xf32>,
    } else {
    }
    %c0_i32_66 = arith.constant 0 : i32
    %56 = arith.cmpi sgt, %arg1, %c0_i32_66 : i32
    %57 = arith.extui %56 : i1 to i32
    %c0_i32_67 = arith.constant 0 : i32
    %58 = arith.cmpi ne, %57, %c0_i32_67 : i32
    scf.if %58 {
      %c0_70 = arith.constant 0 : index
      %c0_71 = arith.constant 0 : index
      %62 = vector.load %arg6[%c0_70, %c0_71] : memref<16x2048xf32, #tpu.memory_space<vmem>>, vector<16x2048xf32>
      %63 = arith.addf %62, %52 : vector<16x2048xf32>
      %c0_72 = arith.constant 0 : index
      %c0_73 = arith.constant 0 : index
      %64 = vector.load %arg6[%c0_72, %c0_73] : memref<16x2048xf32, #tpu.memory_space<vmem>>, vector<16x2048xf32>
      tpu.vector_store %arg6[%c0_72, %c0_73], %63 {strides = array<i32>} : memref<16x2048xf32, #tpu.memory_space<vmem>>, vector<16x2048xf32>,
    } else {
    }
    %c0_i32_68 = arith.constant 0 : i32
    %59 = arith.cmpi eq, %arg1, %c0_i32_68 : i32
    %60 = arith.extui %59 : i1 to i32
    %c0_i32_69 = arith.constant 0 : i32
    %61 = arith.cmpi ne, %60, %c0_i32_69 : i32
    scf.if %61 {
      %c0_70 = arith.constant 0 : index
      %c0_71 = arith.constant 0 : index
      %62 = vector.load %arg6[%c0_70, %c0_71] : memref<16x2048xf32, #tpu.memory_space<vmem>>, vector<16x2048xf32>
      %c0_72 = arith.constant 0 : index
      %c0_73 = arith.constant 0 : index
      %63 = vector.load %arg4[%c0_72, %c0_73] : memref<16x1xf32, #tpu.memory_space<vmem>>, vector<16x1xf32>
      %64 = vector.broadcast %63 : vector<16x1xf32> to vector<16x2048xf32>
      %65 = arith.addf %62, %64 : vector<16x2048xf32>
      %c0_74 = arith.constant 0 : index
      %c0_75 = arith.constant 0 : index
      %c0_76 = arith.constant 0 : index
      %66 = vector.load %arg5[%c0_74, %c0_75, %c0_76] : memref<1x16x2048xf32, #tpu.memory_space<vmem>>, vector<1x16x2048xf32>
      %67 = vector.shape_cast %66 : vector<1x16x2048xf32> to vector<16x2048xf32>
      %68 = vector.shape_cast %65 : vector<16x2048xf32> to vector<1x16x2048xf32>
      tpu.vector_store %arg5[%c0_74, %c0_75, %c0_76], %68 {strides = array<i32>} : memref<1x16x2048xf32, #tpu.memory_space<vmem>>, vector<1x16x2048xf32>,
    } else {
    }
    return
  }
  func.func @transform_0(%arg0: i32, %arg1: i32) -> (i32, i32, i32, i32) {
    %c0_i32 = arith.constant 0 : i32
    %c0_i32_0 = arith.constant 0 : i32
    %c0_i32_1 = arith.constant 0 : i32
    return %arg0, %arg1, %c0_i32, %c0_i32_0 : i32, i32, i32, i32
  }
  func.func @transform_1(%arg0: i32, %arg1: i32) -> (i32, i32, i32, i32) {
    %c0_i32 = arith.constant 0 : i32
    %c0_i32_0 = arith.constant 0 : i32
    %c0_i32_1 = arith.constant 0 : i32
    %c0_i32_2 = arith.constant 0 : i32
    return %arg1, %c0_i32, %c0_i32_0, %c0_i32_1 : i32, i32, i32, i32
  }
  func.func @transform_2(%arg0: i32, %arg1: i32) -> (i32, i32) {
    %c0_i32 = arith.constant 0 : i32
    %c0_i32_0 = arith.constant 0 : i32
    %c0_i32_1 = arith.constant 0 : i32
    return %c0_i32, %c0_i32_0 : i32, i32
  }
  func.func @transform_3(%arg0: i32, %arg1: i32) -> (i32, i32, i32) {
    %c0_i32 = arith.constant 0 : i32
    %c0_i32_0 = arith.constant 0 : i32
    %c0_i32_1 = arith.constant 0 : i32
    return %arg0, %c0_i32, %c0_i32_0 : i32, i32, i32
  }
}

</mosaic_0001>

<llo_original>
// kernel: tpu_custom_call.1
$region0: #{tpu_custom_call.1}
  #allocation0 [shape = 'u32[]', space=smem, size = 0x4, offset = 0x4, fixed_abs, tag = 'smem constant byte address 0x4 - core index']
  #allocation1 [shape = 'u32[144,128]{1,0:T(1,128)}', space=vmem, size = 0x12000, scoped, tag = 'internal scratch']
  #allocation2 [shape = 'f32[16,2048]{1,0:T(8,128)}', space=vmem, size = 0x20000, scoped, tag = 'scratch operand']
  %s0 = inlined_call_operand.hbm [shape: f32[2,1,16,2432], index: 0, kind: input, shape index: {}]
  %s1 = inlined_call_operand.hbm [shape: f32[1,9,16,16], index: 1, kind: input, shape index: {}]
  %s2 = inlined_call_operand.vmem [shape: f32[16,1], index: 2, kind: input, shape index: {}]
  %s3 = inlined_call_operand.hbm [shape: f32[2,16,2048], index: 3, kind: output, shape index: {}]
  %s4 = sld [smem:[#allocation0]]
  $region65: #{tpu_custom_call.1} parent=0
    _
  %s6 = ssub.s32 1, %s4
  %s7 = scalar_select 0, %s6, %s4
  $region1: #{tpu_custom_call.1} parent=0
    #allocation3 [shape = 'u8[311296]{0}', space=vmem, size = 0x4c000, scoped, tag = 'input window, operand 0']
    #allocation4 [shape = 's32[2]{0}', space=sflag, size = 0x8, scoped, tag = 'scoped memory for tpu_custom_call.1']
    #allocation5 [shape = 's32[2]{0}', space=sflag, size = 0x8, scoped, tag = 'scoped memory for tpu_custom_call.1']
    #allocation6 [shape = 'u8[73728]{0}', space=vmem, size = 0x12000, scoped, tag = 'input window, operand 1, single buffered']
    #allocation7 [shape = 's32[1]{0}', space=sflag, size = 0x4, scoped, tag = 'scoped memory for tpu_custom_call.1']
    #allocation8 [shape = 'u8[262144]{0}', space=vmem, size = 0x40000, scoped, tag = 'output window, operand 0']
    %8 = vsyncpa [#allocation4], 0
    %s9 = scalar_lea.sflag [#allocation4], 1
    %10 = vsyncpa %s9, 0
    %11 = vsyncpa [#allocation7], 0
    %12 = vsyncpa [#allocation5], 0
    %s13 = scalar_lea.sflag [#allocation5], 1
    %14 = vsyncpa %s13, 0
    loop: start=0, step=1, limit=4
    $region2: #{tpu_custom_call.1} parent=1 // loop_pre_header
      _
    $region3: #{tpu_custom_call.1} parent=1 // loop_header
      %s16 = sphi 0, %s20
      %p17 = scmp.ge.s32.totalorder %s16, 4
      %s23 = sphi 0, %s35
      %s24 = sphi 0, %s31
      %s25 = sphi 0, %s23
      %s26 = sphi 0, %s24
      %s27 = sphi 0, %s25
      %s28 = sphi 0, %s26
      %s40 = sphi 0, %s42
      %s43 = sphi 0, %s40
      %s44 = sphi 0, %s43
      %s60 = sphi 0, %s44
      %s66 = sphi 0, %s68
      %s69 = sphi 0, %s66
      %s70 = sphi 0, %s69
      %s86 = sphi 0, %s70
      %s90 = sphi 0, %s90
      %s92 = sphi 0, %s90
      %s93 = sphi 0, %s92
      %s107 = sphi 0, %s93
      %s113 = sphi 0, %s115
      %s116 = sphi 0, %s113
      %s117 = sphi 0, %s116
      %s133 = sphi 0, %s117
    $region4: #{tpu_custom_call.1} parent=1 // loop_header_branch
      %19 = sbr.rel (%p17) target = $region8
    $region5: #{tpu_custom_call.1} parent=1 // loop_body
      %s21 = ssub.s32 %s16, 1
      %s22 = ssub.s32 %s16, 2
      %s29 = sadd.s32 1, %s24
      %p30 = scmp.ge.s32.totalorder %s29, 1
      %s31 = scalar_select %p30, 0, %s29
      %s32 = sadd.s32 1, %s23
      %s33 = scalar_select %p30, %s32, %s23
      %p34 = scmp.ge.s32.totalorder %s33, 2
      %s35 = scalar_select %p34, 0, %s33
      %s36 = ssub.s32 %s23, %s35
      %s37 = ssub.s32 %s24, %s31
      %s38 = sor.u32 %s36, %s37
      %p39 = scmp.eq.s32.totalorder %s38, 0
      %s41 = sadd.s32 %s40, 1
      %s42 = scalar_select %p39, %s40, %s41
      %p45 = pneg %p39
      %p46 = scmp.eq.s32.totalorder %s16, 1
      %p47 = por %p45, %p46
      %p48 = scmp.ne.s32.totalorder %s40, %s43
      %p49 = scmp.eq.s32.totalorder %s16, 0
      %p50 = por %p48, %p49
      %p51 = scmp.ne.s32.totalorder %s40, %s43
      %p52 = scmp.eq.s32.totalorder %s21, 1
      %p53 = por %p51, %p52
      %p54 = scmp.ne.s32.totalorder %s43, %s44
      %p55 = scmp.eq.s32.totalorder %s21, 0
      %p56 = por %p54, %p55
      %p57 = scmp.ne.s32.totalorder %s43, %s44
      %p58 = scmp.eq.s32.totalorder %s22, 1
      %p59 = por %p57, %p58
      %p61 = scmp.ne.s32.totalorder %s44, %s60
      %p62 = scmp.eq.s32.totalorder %s22, 0
      %p63 = por %p61, %p62
      %s64 = ssub.s32 %s24, %s31
      %p65 = scmp.eq.s32.totalorder %s64, 0
      %s67 = sadd.s32 %s66, 1
      %s68 = scalar_select %p65, %s66, %s67
      %p71 = pneg %p65
      %p72 = scmp.eq.s32.totalorder %s16, 1
      %p73 = por %p71, %p72
      %p74 = scmp.ne.s32.totalorder %s66, %s69
      %p75 = scmp.eq.s32.totalorder %s16, 0
      %p76 = por %p74, %p75
      %p77 = scmp.ne.s32.totalorder %s66, %s69
      %p78 = scmp.eq.s32.totalorder %s21, 1
      %p79 = por %p77, %p78
      %p80 = scmp.ne.s32.totalorder %s69, %s70
      %p81 = scmp.eq.s32.totalorder %s21, 0
      %p82 = por %p80, %p81
      %p83 = scmp.ne.s32.totalorder %s69, %s70
      %p84 = scmp.eq.s32.totalorder %s22, 1
      %p85 = por %p83, %p84
      %p87 = scmp.ne.s32.totalorder %s70, %s86
      %p88 = scmp.eq.s32.totalorder %s22, 0
      %p89 = por %p87, %p88
      %s91 = sadd.s32 %s90, 1
      %p94 = scmp.eq.s32.totalorder %s16, 1
      %p95 = scmp.ne.s32.totalorder %s90, %s92
      %p96 = scmp.eq.s32.totalorder %s16, 0
      %p97 = por %p95, %p96
      %p98 = scmp.ne.s32.totalorder %s90, %s92
      %p99 = scmp.eq.s32.totalorder %s21, 1
      %p100 = por %p98, %p99
      %p101 = scmp.ne.s32.totalorder %s92, %s93
      %p102 = scmp.eq.s32.totalorder %s21, 0
      %p103 = por %p101, %p102
      %p104 = scmp.ne.s32.totalorder %s92, %s93
      %p105 = scmp.eq.s32.totalorder %s22, 1
      %p106 = por %p104, %p105
      %p108 = scmp.ne.s32.totalorder %s93, %s107
      %p109 = scmp.eq.s32.totalorder %s22, 0
      %p110 = por %p108, %p109
      %s111 = ssub.s32 %s23, %s35
      %p112 = scmp.eq.s32.totalorder %s111, 0
      %s114 = sadd.s32 %s113, 1
      %s115 = scalar_select %p112, %s113, %s114
      %p118 = pneg %p112
      %p119 = scmp.eq.s32.totalorder %s16, 1
      %p120 = por %p118, %p119
      %p121 = scmp.ne.s32.totalorder %s113, %s116
      %p122 = scmp.eq.s32.totalorder %s16, 0
      %p123 = por %p121, %p122
      %p124 = scmp.ne.s32.totalorder %s113, %s116
      %p125 = scmp.eq.s32.totalorder %s21, 1
      %p126 = por %p124, %p125
      %p127 = scmp.ne.s32.totalorder %s116, %s117
      %p128 = scmp.eq.s32.totalorder %s21, 0
      %p129 = por %p127, %p128
      %p130 = scmp.ne.s32.totalorder %s116, %s117
      %p131 = scmp.eq.s32.totalorder %s22, 1
      %p132 = por %p130, %p131
      %p134 = scmp.ne.s32.totalorder %s117, %s133
      %p135 = scmp.eq.s32.totalorder %s22, 0
      %p136 = por %p134, %p135
      %p137 = scmp.le.s32.totalorder 1, %s16
      %p138 = scmp.lt.s32.totalorder %s16, 3
      %p139 = pnand %p137, %p138
      %p140 = pneg %p139
      // Predicated region
      $region9: #{tpu_custom_call.1} parent=5 // pred_check
        _
      $region10: #{tpu_custom_call.1} parent=5 // pred_check_branch
        %142 = sbr.rel (%p139) target = $region12
      $region11: #{tpu_custom_call.1} parent=5 // pred_region
        %s143 = ssub.s32 %s16, 1
        // Predicated region
        $region13: #{tpu_custom_call.1} parent=11 // pred_check
          %p144 = pneg %p82
        $region14: #{tpu_custom_call.1} parent=11 // pred_check_branch
          %146 = sbr.rel (%p144) target = $region16
        $region15: #{tpu_custom_call.1} parent=11 // pred_region
          %s148 = ssub.s32 2304, 2304
          %149 = vsyncadd [#allocation7], %s148
          %s150 = smul.addr %s26, 18
          %s151 = smul.addr %s150, 128
          %s152 = scalar_lea.hbm %s1, %s151
          %s153 = sshll.u32 [#allocation6], 4
          %s154 = int_to_ptr.vmem [resolvable:$true] %s153
          %159 = dma.hbm_to_vmem [thread:$0]  %s152, 2304, %s154, [#allocation7], 128, 128, 8
        $region16: #{tpu_custom_call.1} parent=11 // pred_fallthru
          _
        // Predicated region
        $region17: #{tpu_custom_call.1} parent=11 // pred_check
          %p160 = pneg %p103
        $region18: #{tpu_custom_call.1} parent=11 // pred_check_branch
          %162 = sbr.rel (%p160) target = $region20
        $region19: #{tpu_custom_call.1} parent=11 // pred_region
          _
        $region20: #{tpu_custom_call.1} parent=11 // pred_fallthru
          _
      $region12: #{tpu_custom_call.1} parent=5 // pred_fallthru
        _
      %p163 = scmp.lt.s32.totalorder %s16, 2
      // Predicated region
      $region21: #{tpu_custom_call.1} parent=5 // pred_check
        %p164 = pneg %p163
      $region22: #{tpu_custom_call.1} parent=5 // pred_check_branch
        %166 = sbr.rel (%p164) target = $region24
      $region23: #{tpu_custom_call.1} parent=5 // pred_region
        // Predicated region
        $region25: #{tpu_custom_call.1} parent=23 // pred_check
          %p167 = pneg %p50
        $region26: #{tpu_custom_call.1} parent=23 // pred_check_branch
          %169 = sbr.rel (%p167) target = $region28
        $region27: #{tpu_custom_call.1} parent=23 // pred_region
          %s170 = sand.u32 %s40, 1
          %s171 = scalar_lea.sflag [#allocation4], %s170
          %s172 = sand.u32 %s40, 1
          %s173 = smul.addr %s172, 304
          %s174 = scalar_lea.vmem [#allocation3], %s173
          %s176 = ssub.s32 4864, 4864
          %177 = vsyncadd %s171, %s176
          %s178 = smul.addr %s24, 38
          %s179 = smul.addr %s23, 38
          %s180 = sadd.s32 %s178, %s179
          %s181 = smul.addr %s180, 128
          %s182 = scalar_lea.hbm %s0, %s181
          %s183 = sshll.u32 %s174, 4
          %s184 = int_to_ptr.vmem [resolvable:$true] %s183
          %189 = dma.hbm_to_vmem [thread:$0]  %s182, 4864, %s184, %s171, 2432, 2432, 152
        $region28: #{tpu_custom_call.1} parent=23 // pred_fallthru
          _
      $region24: #{tpu_custom_call.1} parent=5 // pred_fallthru
        _
      %p190 = scmp.le.s32.totalorder 1, %s16
      %p191 = scmp.lt.s32.totalorder %s16, 3
      %p192 = pnand %p190, %p191
      %p193 = pneg %p192
      // Predicated region
      $region29: #{tpu_custom_call.1} parent=5 // pred_check
        _
      $region30: #{tpu_custom_call.1} parent=5 // pred_check_branch
        %195 = sbr.rel (%p192) target = $region32
      $region31: #{tpu_custom_call.1} parent=5 // pred_region
        %s196 = ssub.s32 %s16, 1
        %s197 = sand.u32 %s43, 1
        %s198 = scalar_lea.sflag [#allocation4], %s197
        %s199 = sand.u32 %s43, 1
        %s200 = smul.addr %s199, 304
        %s201 = scalar_lea.vmem [#allocation3], %s200
        // Predicated region
        $region33: #{tpu_custom_call.1} parent=31 // pred_check
          %p202 = pneg %p56
        $region34: #{tpu_custom_call.1} parent=31 // pred_check_branch
          %204 = sbr.rel (%p202) target = $region36
        $region35: #{tpu_custom_call.1} parent=31 // pred_region
          %205 = dma.done %s198, 4864
        $region36: #{tpu_custom_call.1} parent=31 // pred_fallthru
          _
        // Predicated region
        $region37: #{tpu_custom_call.1} parent=31 // pred_check
          %p206 = pneg %p82
        $region38: #{tpu_custom_call.1} parent=31 // pred_check_branch
          %208 = sbr.rel (%p206) target = $region40
        $region39: #{tpu_custom_call.1} parent=31 // pred_region
          %209 = dma.done [#allocation7], 2304
        $region40: #{tpu_custom_call.1} parent=31 // pred_fallthru
          _
        %s210 = sand.u32 %s43, 1
        %s211 = scalar_lea.sflag [#allocation4], %s210
        %s212 = sand.u32 %s43, 1
        %s213 = smul.addr %s212, 304
        %s214 = scalar_lea.vmem [#allocation3], %s213
        %p215 = pneg %p56
        %p216 = pneg %p53
        %p217 = pneg %p82
        %p218 = pneg %p79
        %p219 = pneg %p103
        %p220 = pneg %p100
        %p221 = pneg %p129
        %p222 = pneg %p126
        %s223 = sand.u32 %s116, 1
        %s224 = scalar_lea.sflag [#allocation5], %s223
        %s225 = sand.u32 %s116, 1
        %s226 = smul.addr %s225, 256
        %s227 = scalar_lea.vmem [#allocation8], %s226
        %v228 = vld [vmem:[%s201] sm:$0xff]
        %v229 = vld [vmem:[%s201 + $0x8] sm:$0xff]
        %v230 = vld [vmem:[%s201 + $0x10] sm:$0xff]
        %v231 = vld [vmem:[%s201 + $0x18] sm:$0xff]
        %v232 = vld [vmem:[%s201 + $0x20] sm:$0xff]
        %v233 = vld [vmem:[%s201 + $0x28] sm:$0xff]
        %v234 = vld [vmem:[%s201 + $0x30] sm:$0xff]
        %v235 = vld [vmem:[%s201 + $0x38] sm:$0xff]
        %v236 = vld [vmem:[%s201 + $0x40] sm:$0xff]
        %v237 = vld [vmem:[%s201 + $0x48] sm:$0xff]
        %v238 = vld [vmem:[%s201 + $0x50] sm:$0xff]
        %v239 = vld [vmem:[%s201 + $0x58] sm:$0xff]
        %v240 = vld [vmem:[%s201 + $0x60] sm:$0xff]
        %v241 = vld [vmem:[%s201 + $0x68] sm:$0xff]
        %v242 = vld [vmem:[%s201 + $0x70] sm:$0xff]
        %v243 = vld [vmem:[%s201 + $0x78] sm:$0xff]
        %v244 = vld [vmem:[%s201 + $0x98] sm:$0xff]
        %v245 = vld [vmem:[%s201 + $0xa0] sm:$0xff]
        %v246 = vld [vmem:[%s201 + $0xa8] sm:$0xff]
        %v247 = vld [vmem:[%s201 + $0xb0] sm:$0xff]
        %v248 = vld [vmem:[%s201 + $0xb8] sm:$0xff]
        %v249 = vld [vmem:[%s201 + $0xc0] sm:$0xff]
        %v250 = vld [vmem:[%s201 + $0xc8] sm:$0xff]
        %v251 = vld [vmem:[%s201 + $0xd0] sm:$0xff]
        %v252 = vld [vmem:[%s201 + $0xd8] sm:$0xff]
        %v253 = vld [vmem:[%s201 + $0xe0] sm:$0xff]
        %v254 = vld [vmem:[%s201 + $0xe8] sm:$0xff]
        %v255 = vld [vmem:[%s201 + $0xf0] sm:$0xff]
        %v256 = vld [vmem:[%s201 + $0xf8] sm:$0xff]
        %v257 = vld [vmem:[%s201 + $0x100] sm:$0xff]
        %v258 = vld [vmem:[%s201 + $0x108] sm:$0xff]
        %v259 = vld [vmem:[%s201 + $0x110] sm:$0xff]
        %v260 = vld [vmem:[#allocation6] sm:$0xff]
        %v261 = vld [vmem:[#allocation6 + $0x8] sm:$0xff]
        %v262 = vld [vmem:[%s201 + $0x80] sm:$0xff]
        %v263 = vld [vmem:[%s201 + $0x118] sm:$0xff]
        %s264 = scalar_lea.vmem [#allocation6], 16
        %v265 = vld [vmem:[%s264] sm:$0xff]
        %v266 = vld [vmem:[%s264 + $0x8] sm:$0xff]
        %301 = vrot.lane.b32.xlu0 %v228, 127
        %v302 = vpop.permute.xlu0 %301
        %303 = vrot.lane.b32.xlu0 %v229, 127
        %v304 = vpop.permute.xlu0 %303
        %305 = vrot.lane.b32.xlu0 %v230, 127
        %v306 = vpop.permute.xlu0 %305
        %307 = vrot.lane.b32.xlu0 %v231, 127
        %v308 = vpop.permute.xlu0 %307
        %309 = vrot.lane.b32.xlu0 %v232, 127
        %v310 = vpop.permute.xlu0 %309
        %311 = vrot.lane.b32.xlu0 %v233, 127
        %v312 = vpop.permute.xlu0 %311
        %313 = vrot.lane.b32.xlu0 %v234, 127
        %v314 = vpop.permute.xlu0 %313
        %315 = vrot.lane.b32.xlu0 %v235, 127
        %v316 = vpop.permute.xlu0 %315
        %317 = vrot.lane.b32.xlu0 %v236, 127
        %v318 = vpop.permute.xlu0 %317
        %319 = vrot.lane.b32.xlu0 %v237, 127
        %v320 = vpop.permute.xlu0 %319
        %321 = vrot.lane.b32.xlu0 %v238, 127
        %v322 = vpop.permute.xlu0 %321
        %323 = vrot.lane.b32.xlu0 %v239, 127
        %v324 = vpop.permute.xlu0 %323
        %325 = vrot.lane.b32.xlu0 %v240, 127
        %v326 = vpop.permute.xlu0 %325
        %327 = vrot.lane.b32.xlu0 %v241, 127
        %v328 = vpop.permute.xlu0 %327
        %329 = vrot.lane.b32.xlu0 %v242, 127
        %v330 = vpop.permute.xlu0 %329
        %331 = vrot.lane.b32.xlu0 %v243, 127
        %v332 = vpop.permute.xlu0 %331
        %333 = vrot.lane.b32.xlu0 %v262, 127
        %v334 = vpop.permute.xlu0 %333
        %335 = vrot.lane.b32.xlu0 %v244, 127
        %v336 = vpop.permute.xlu0 %335
        %337 = vrot.lane.b32.xlu0 %v245, 127
        %v338 = vpop.permute.xlu0 %337
        %339 = vrot.lane.b32.xlu0 %v246, 127
        %v340 = vpop.permute.xlu0 %339
        %341 = vrot.lane.b32.xlu0 %v247, 127
        %v342 = vpop.permute.xlu0 %341
        %343 = vrot.lane.b32.xlu0 %v248, 127
        %v344 = vpop.permute.xlu0 %343
        %345 = vrot.lane.b32.xlu0 %v249, 127
        %v346 = vpop.permute.xlu0 %345
        %347 = vrot.lane.b32.xlu0 %v250, 127
        %v348 = vpop.permute.xlu0 %347
        %349 = vrot.lane.b32.xlu0 %v251, 127
        %v350 = vpop.permute.xlu0 %349
        %351 = vrot.lane.b32.xlu0 %v252, 127
        %v352 = vpop.permute.xlu0 %351
        %353 = vrot.lane.b32.xlu0 %v253, 127
        %v354 = vpop.permute.xlu0 %353
        %355 = vrot.lane.b32.xlu0 %v254, 127
        %v356 = vpop.permute.xlu0 %355
        %357 = vrot.lane.b32.xlu0 %v255, 127
        %v358 = vpop.permute.xlu0 %357
        %359 = vrot.lane.b32.xlu0 %v256, 127
        %v360 = vpop.permute.xlu0 %359
        %361 = vrot.lane.b32.xlu0 %v257, 127
        %v362 = vpop.permute.xlu0 %361
        %363 = vrot.lane.b32.xlu0 %v258, 127
        %v364 = vpop.permute.xlu0 %363
        %365 = vrot.lane.b32.xlu0 %v259, 127
        %v366 = vpop.permute.xlu0 %365
        %367 = vrot.lane.b32.xlu0 %v263, 127
        %v368 = vpop.permute.xlu0 %367
        %vm369 = vcmask 1039360
        %v370 = vsel %vm369, %v302, %v304
        %v371 = vsel %vm369, %v304, %v306
        %v372 = vsel %vm369, %v306, %v308
        %v373 = vsel %vm369, %v308, %v310
        %v374 = vsel %vm369, %v310, %v312
        %v375 = vsel %vm369, %v312, %v314
        %v376 = vsel %vm369, %v314, %v316
        %v377 = vsel %vm369, %v316, %v318
        %v378 = vsel %vm369, %v318, %v320
        %v379 = vsel %vm369, %v320, %v322
        %v380 = vsel %vm369, %v322, %v324
        %v381 = vsel %vm369, %v324, %v326
        %v382 = vsel %vm369, %v326, %v328
        %v383 = vsel %vm369, %v328, %v330
        %v384 = vsel %vm369, %v330, %v332
        %v385 = vsel %vm369, %v332, %v334
        %v386 = vsel %vm369, %v336, %v338
        %v387 = vsel %vm369, %v338, %v340
        %v388 = vsel %vm369, %v340, %v342
        %v389 = vsel %vm369, %v342, %v344
        %v390 = vsel %vm369, %v344, %v346
        %v391 = vsel %vm369, %v346, %v348
        %v392 = vsel %vm369, %v348, %v350
        %v393 = vsel %vm369, %v350, %v352
        %v394 = vsel %vm369, %v352, %v354
        %v395 = vsel %vm369, %v354, %v356
        %v396 = vsel %vm369, %v356, %v358
        %v397 = vsel %vm369, %v358, %v360
        %v398 = vsel %vm369, %v360, %v362
        %v399 = vsel %vm369, %v362, %v364
        %v400 = vsel %vm369, %v364, %v366
        %v401 = vsel %vm369, %v366, %v368
        %vm434 = vcmask 130048
        %v436 = vsel %vm434, %v265, 0
        %v439 = vsel %vm434, %v266, 0
        %441 = vmatprep.subr.mxu0 %v371
        %442 = vmatpush1.msra.mxu0 %v370
        %443 = vmatprep.subr.mxu0 %v387
        %444 = vmatpush1.msra.mxu0 %v386
        %445 = vmatprep.subr.mxu0 0.0
        %446 = vmatpush1.msra.mxu0 0.0
        %447 = vmatprep.subr.mxu0 0.0
        %448 = vmatpush1.msra.mxu0 0.0
        %449 = vmatprep.subr.mxu0 0.0
        %450 = vmatpush1.msra.mxu0 0.0
        %451 = vmatprep.subr.mxu0 0.0
        %452 = vmatpush1.msra.mxu0 0.0
        %453 = vmatprep.subr.mxu0 0.0
        %454 = vmatpush1.msra.mxu0 0.0
        %455 = vmatprep.subr.mxu0 0.0
        %456 = vmatpush1.msra.mxu0 0.0
        %457 = vmatprep.subr.mxu0 0.0
        %458 = vmatpush1.msra.mxu0 0.0
        %459 = vmatprep.subr.mxu0 0.0
        %460 = vmatpush1.msra.mxu0 0.0
        %461 = vmatprep.subr.mxu0 0.0
        %462 = vmatpush1.msra.mxu0 0.0
        %463 = vmatprep.subr.mxu0 0.0
        %464 = vmatpush1.msra.mxu0 0.0
        %465 = vmatprep.subr.mxu0 0.0
        %466 = vmatpush1.msra.mxu0 0.0
        %467 = vmatprep.subr.mxu0 0.0
        %468 = vmatpush1.msra.mxu0 0.0
        %469 = vmatprep.subr.mxu0 0.0
        %470 = vmatpush1.msra.mxu0 0.0
        %471 = vmatprep.subr.mxu0 0.0
        %472 = vmatpush1.msra.mxu0 0.0
        %473 = vmatprep.subr.mxu0 0.0
        %474 = vmatpush1.msra.mxu0 0.0
        %475 = vmatprep.subr.mxu0 0.0
        %476 = vmatpush1.msra.mxu0 0.0
        %477 = vmatprep.subr.mxu0 0.0
        %478 = vmatpush1.msra.mxu0 0.0
        %479 = vmatprep.subr.mxu0 0.0
        %480 = vmatpush1.msra.mxu0 0.0
        %481 = vmatprep.subr.mxu0 0.0
        %482 = vmatpush1.msra.mxu0 0.0
        %483 = vmatprep.subr.mxu0 0.0
        %484 = vmatpush1.msra.mxu0 0.0
        %485 = vmatprep.subr.mxu0 0.0
        %486 = vmatpush1.msra.mxu0 0.0
        %487 = vmatprep.subr.mxu0 0.0
        %488 = vmatpush1.msra.mxu0 0.0
        %489 = vmatprep.subr.mxu0 0.0
        %490 = vmatpush1.msra.mxu0 0.0
        %491 = vmatprep.subr.mxu0 0.0
        %492 = vmatpush1.msra.mxu0 0.0
        %493 = vmatprep.subr.mxu0 0.0
        %494 = vmatpush1.msra.mxu0 0.0
        %495 = vmatprep.subr.mxu0 0.0
        %496 = vmatpush1.msra.mxu0 0.0
        %497 = vmatprep.subr.mxu0 0.0
        %498 = vmatpush1.msra.mxu0 0.0
        %499 = vmatprep.subr.mxu0 0.0
        %500 = vmatpush1.msra.mxu0 0.0
        %501 = vmatprep.subr.mxu0 0.0
        %502 = vmatpush1.msra.mxu0 0.0
        %503 = vmatprep.subr.mxu0 0.0
        %504 = vmatpush1.msra.mxu0 0.0
        %505 = vmatprep.mubr.f32.mxu0 0.0
        %506 = vmatmul.mubr.f32.gmra.mrb[0].mxu0 %v436
        %v507 = vpop.f32.mrb[0].mxu0
        %v508 = vadd.f32 0.0, %v507
        %v509 = vpop.f32.mrb[0].mxu0
        %v510 = vadd.f32 0.0, %v509
        %511 = vmatprep.mubr.f32.mxu0 0.0
        %512 = vmatmul.mubr.f32.gmra.mrb[0].mxu0 %v439
        %v513 = vpop.f32.mrb[0].mxu0
        %v514 = vadd.f32 0.0, %v513
        %v515 = vpop.f32.mrb[0].mxu0
        %v516 = vadd.f32 0.0, %v515
        %517 = vdwg.mxu0
        %518 = vmatprep.subr.mxu0 %v373
        %519 = vmatpush1.msra.mxu0 %v372
        %520 = vmatprep.subr.mxu0 %v389
        %521 = vmatpush1.msra.mxu0 %v388
        %522 = vmatprep.subr.mxu0 0.0
        %523 = vmatpush1.msra.mxu0 0.0
        %524 = vmatprep.subr.mxu0 0.0
        %525 = vmatpush1.msra.mxu0 0.0
        %526 = vmatprep.subr.mxu0 0.0
        %527 = vmatpush1.msra.mxu0 0.0
        %528 = vmatprep.subr.mxu0 0.0
        %529 = vmatpush1.msra.mxu0 0.0
        %530 = vmatprep.subr.mxu0 0.0
        %531 = vmatpush1.msra.mxu0 0.0
        %532 = vmatprep.subr.mxu0 0.0
        %533 = vmatpush1.msra.mxu0 0.0
        %534 = vmatprep.subr.mxu0 0.0
        %535 = vmatpush1.msra.mxu0 0.0
        %536 = vmatprep.subr.mxu0 0.0
        %537 = vmatpush1.msra.mxu0 0.0
        %538 = vmatprep.subr.mxu0 0.0
        %539 = vmatpush1.msra.mxu0 0.0
        %540 = vmatprep.subr.mxu0 0.0
        %541 = vmatpush1.msra.mxu0 0.0
        %542 = vmatprep.subr.mxu0 0.0
        %543 = vmatpush1.msra.mxu0 0.0
        %544 = vmatprep.subr.mxu0 0.0
        %545 = vmatpush1.msra.mxu0 0.0
        %546 = vmatprep.subr.mxu0 0.0
        %547 = vmatpush1.msra.mxu0 0.0
        %548 = vmatprep.subr.mxu0 0.0
        %549 = vmatpush1.msra.mxu0 0.0
        %550 = vmatprep.subr.mxu0 0.0
        %551 = vmatpush1.msra.mxu0 0.0
        %552 = vmatprep.subr.mxu0 0.0
        %553 = vmatpush1.msra.mxu0 0.0
        %554 = vmatprep.subr.mxu0 0.0
        %555 = vmatpush1.msra.mxu0 0.0
        %556 = vmatprep.subr.mxu0 0.0
        %557 = vmatpush1.msra.mxu0 0.0
        %558 = vmatprep.subr.mxu0 0.0
        %559 = vmatpush1.msra.mxu0 0.0
        %560 = vmatprep.subr.mxu0 0.0
        %561 = vmatpush1.msra.mxu0 0.0
        %562 = vmatprep.subr.mxu0 0.0
        %563 = vmatpush1.msra.mxu0 0.0
        %564 = vmatprep.subr.mxu0 0.0
        %565 = vmatpush1.msra.mxu0 0.0
        %566 = vmatprep.subr.mxu0 0.0
        %567 = vmatpush1.msra.mxu0 0.0
        %568 = vmatprep.subr.mxu0 0.0
        %569 = vmatpush1.msra.mxu0 0.0
        %570 = vmatprep.subr.mxu0 0.0
        %571 = vmatpush1.msra.mxu0 0.0
        %572 = vmatprep.subr.mxu0 0.0
        %573 = vmatpush1.msra.mxu0 0.0
        %574 = vmatprep.subr.mxu0 0.0
        %575 = vmatpush1.msra.mxu0 0.0
        %576 = vmatprep.subr.mxu0 0.0
        %577 = vmatpush1.msra.mxu0 0.0
        %578 = vmatprep.subr.mxu0 0.0
        %579 = vmatpush1.msra.mxu0 0.0
        %580 = vmatprep.subr.mxu0 0.0
        %581 = vmatpush1.msra.mxu0 0.0
        %582 = vmatprep.mubr.f32.mxu0 0.0
        %583 = vmatmul.mubr.f32.gmra.mrb[0].mxu0 %v436
        %v584 = vpop.f32.mrb[0].mxu0
        %v585 = vadd.f32 0.0, %v584
        %v586 = vpop.f32.mrb[0].mxu0
        %v587 = vadd.f32 0.0, %v586
        %588 = vmatprep.mubr.f32.mxu0 0.0
        %589 = vmatmul.mubr.f32.gmra.mrb[0].mxu0 %v439
        %v590 = vpop.f32.mrb[0].mxu0
        %v591 = vadd.f32 0.0, %v590
        %v592 = vpop.f32.mrb[0].mxu0
        %v593 = vadd.f32 0.0, %v592
        %594 = vdwg.mxu0
        %595 = vmatprep.subr.mxu0 %v375
        %596 = vmatpush1.msra.mxu0 %v374
        %597 = vmatprep.subr.mxu0 %v391
        %598 = vmatpush1.msra.mxu0 %v390
        %599 = vmatprep.subr.mxu0 0.0
        %600 = vmatpush1.msra.mxu0 0.0
        %601 = vmatprep.subr.mxu0 0.0
        %602 = vmatpush1.msra.mxu0 0.0
        %603 = vmatprep.subr.mxu0 0.0
        %604 = vmatpush1.msra.mxu0 0.0
        %605 = vmatprep.subr.mxu0 0.0
        %606 = vmatpush1.msra.mxu0 0.0
        %607 = vmatprep.subr.mxu0 0.0
        %608 = vmatpush1.msra.mxu0 0.0
        %609 = vmatprep.subr.mxu0 0.0
        %610 = vmatpush1.msra.mxu0 0.0
        %611 = vmatprep.subr.mxu0 0.0
        %612 = vmatpush1.msra.mxu0 0.0
        %613 = vmatprep.subr.mxu0 0.0
        %614 = vmatpush1.msra.mxu0 0.0
        %615 = vmatprep.subr.mxu0 0.0
        %616 = vmatpush1.msra.mxu0 0.0
        %617 = vmatprep.subr.mxu0 0.0
        %618 = vmatpush1.msra.mxu0 0.0
        %619 = vmatprep.subr.mxu0 0.0
        %620 = vmatpush1.msra.mxu0 0.0
        %621 = vmatprep.subr.mxu0 0.0
        %622 = vmatpush1.msra.mxu0 0.0
        %623 = vmatprep.subr.mxu0 0.0
        %624 = vmatpush1.msra.mxu0 0.0
        %625 = vmatprep.subr.mxu0 0.0
        %626 = vmatpush1.msra.mxu0 0.0
        %627 = vmatprep.subr.mxu0 0.0
        %628 = vmatpush1.msra.mxu0 0.0
        %629 = vmatprep.subr.mxu0 0.0
        %630 = vmatpush1.msra.mxu0 0.0
        %631 = vmatprep.subr.mxu0 0.0
        %632 = vmatpush1.msra.mxu0 0.0
        %633 = vmatprep.subr.mxu0 0.0
        %634 = vmatpush1.msra.mxu0 0.0
        %635 = vmatprep.subr.mxu0 0.0
        %636 = vmatpush1.msra.mxu0 0.0
        %637 = vmatprep.subr.mxu0 0.0
        %638 = vmatpush1.msra.mxu0 0.0
        %639 = vmatprep.subr.mxu0 0.0
        %640 = vmatpush1.msra.mxu0 0.0
        %641 = vmatprep.subr.mxu0 0.0
        %642 = vmatpush1.msra.mxu0 0.0
        %643 = vmatprep.subr.mxu0 0.0
        %644 = vmatpush1.msra.mxu0 0.0
        %645 = vmatprep.subr.mxu0 0.0
        %646 = vmatpush1.msra.mxu0 0.0
        %647 = vmatprep.subr.mxu0 0.0
        %648 = vmatpush1.msra.mxu0 0.0
        %649 = vmatprep.subr.mxu0 0.0
        %650 = vmatpush1.msra.mxu0 0.0
        %651 = vmatprep.subr.mxu0 0.0
        %652 = vmatpush1.msra.mxu0 0.0
        %653 = vmatprep.subr.mxu0 0.0
        %654 = vmatpush1.msra.mxu0 0.0
        %655 = vmatprep.subr.mxu0 0.0
        %656 = vmatpush1.msra.mxu0 0.0
        %657 = vmatprep.subr.mxu0 0.0
        %658 = vmatpush1.msra.mxu0 0.0
        %659 = vmatprep.mubr.f32.mxu0 0.0
        %660 = vmatmul.mubr.f32.gmra.mrb[0].mxu0 %v436
        %v661 = vpop.f32.mrb[0].mxu0
        %v662 = vadd.f32 0.0, %v661
        %v663 = vpop.f32.mrb[0].mxu0
        %v664 = vadd.f32 0.0, %v663
        %665 = vmatprep.mubr.f32.mxu0 0.0
        %666 = vmatmul.mubr.f32.gmra.mrb[0].mxu0 %v439
        %v667 = vpop.f32.mrb[0].mxu0
        %v668 = vadd.f32 0.0, %v667
        %v669 = vpop.f32.mrb[0].mxu0
        %v670 = vadd.f32 0.0, %v669
        %671 = vdwg.mxu0
        %672 = vmatprep.subr.mxu0 %v377
        %673 = vmatpush1.msra.mxu0 %v376
        %674 = vmatprep.subr.mxu0 %v393
        %675 = vmatpush1.msra.mxu0 %v392
        %676 = vmatprep.subr.mxu0 0.0
        %677 = vmatpush1.msra.mxu0 0.0
        %678 = vmatprep.subr.mxu0 0.0
        %679 = vmatpush1.msra.mxu0 0.0
        %680 = vmatprep.subr.mxu0 0.0
        %681 = vmatpush1.msra.mxu0 0.0
        %682 = vmatprep.subr.mxu0 0.0
        %683 = vmatpush1.msra.mxu0 0.0
        %684 = vmatprep.subr.mxu0 0.0
        %685 = vmatpush1.msra.mxu0 0.0
        %686 = vmatprep.subr.mxu0 0.0
        %687 = vmatpush1.msra.mxu0 0.0
        %688 = vmatprep.subr.mxu0 0.0
        %689 = vmatpush1.msra.mxu0 0.0
        %690 = vmatprep.subr.mxu0 0.0
        %691 = vmatpush1.msra.mxu0 0.0
        %692 = vmatprep.subr.mxu0 0.0
        %693 = vmatpush1.msra.mxu0 0.0
        %694 = vmatprep.subr.mxu0 0.0
        %695 = vmatpush1.msra.mxu0 0.0
        %696 = vmatprep.subr.mxu0 0.0
        %697 = vmatpush1.msra.mxu0 0.0
        %698 = vmatprep.subr.mxu0 0.0
        %699 = vmatpush1.msra.mxu0 0.0
        %700 = vmatprep.subr.mxu0 0.0
        %701 = vmatpush1.msra.mxu0 0.0
        %702 = vmatprep.subr.mxu0 0.0
        %703 = vmatpush1.msra.mxu0 0.0
        %704 = vmatprep.subr.mxu0 0.0
        %705 = vmatpush1.msra.mxu0 0.0
        %706 = vmatprep.subr.mxu0 0.0
        %707 = vmatpush1.msra.mxu0 0.0
        %708 = vmatprep.subr.mxu0 0.0
        %709 = vmatpush1.msra.mxu0 0.0
        %710 = vmatprep.subr.mxu0 0.0
        %711 = vmatpush1.msra.mxu0 0.0
        %712 = vmatprep.subr.mxu0 0.0
        %713 = vmatpush1.msra.mxu0 0.0
        %714 = vmatprep.subr.mxu0 0.0
        %715 = vmatpush1.msra.mxu0 0.0
        %716 = vmatprep.subr.mxu0 0.0
        %717 = vmatpush1.msra.mxu0 0.0
        %718 = vmatprep.subr.mxu0 0.0
        %719 = vmatpush1.msra.mxu0 0.0
        %720 = vmatprep.subr.mxu0 0.0
        %721 = vmatpush1.msra.mxu0 0.0
        %722 = vmatprep.subr.mxu0 0.0
        %723 = vmatpush1.msra.mxu0 0.0
        %724 = vmatprep.subr.mxu0 0.0
        %725 = vmatpush1.msra.mxu0 0.0
        %726 = vmatprep.subr.mxu0 0.0
        %727 = vmatpush1.msra.mxu0 0.0
        %728 = vmatprep.subr.mxu0 0.0
        %729 = vmatpush1.msra.mxu0 0.0
        %730 = vmatprep.subr.mxu0 0.0
        %731 = vmatpush1.msra.mxu0 0.0
        %732 = vmatprep.subr.mxu0 0.0
        %733 = vmatpush1.msra.mxu0 0.0
        %734 = vmatprep.subr.mxu0 0.0
        %735 = vmatpush1.msra.mxu0 0.0
        %736 = vmatprep.mubr.f32.mxu0 0.0
        %737 = vmatmul.mubr.f32.gmra.mrb[0].mxu0 %v436
        %v738 = vpop.f32.mrb[0].mxu0
        %v739 = vadd.f32 0.0, %v738
        %v740 = vpop.f32.mrb[0].mxu0
        %v741 = vadd.f32 0.0, %v740
        %742 = vmatprep.mubr.f32.mxu0 0.0
        %743 = vmatmul.mubr.f32.gmra.mrb[0].mxu0 %v439
        %v744 = vpop.f32.mrb[0].mxu0
        %v745 = vadd.f32 0.0, %v744
        %v746 = vpop.f32.mrb[0].mxu0
        %v747 = vadd.f32 0.0, %v746
        %748 = vdwg.mxu0
        %749 = vmatprep.subr.mxu0 %v379
        %750 = vmatpush1.msra.mxu0 %v378
        %751 = vmatprep.subr.mxu0 %v395
        %752 = vmatpush1.msra.mxu0 %v394
        %753 = vmatprep.subr.mxu0 0.0
        %754 = vmatpush1.msra.mxu0 0.0
        %755 = vmatprep.subr.mxu0 0.0
        %756 = vmatpush1.msra.mxu0 0.0
        %757 = vmatprep.subr.mxu0 0.0
        %758 = vmatpush1.msra.mxu0 0.0
        %759 = vmatprep.subr.mxu0 0.0
        %760 = vmatpush1.msra.mxu0 0.0
        %761 = vmatprep.subr.mxu0 0.0
        %762 = vmatpush1.msra.mxu0 0.0
        %763 = vmatprep.subr.mxu0 0.0
        %764 = vmatpush1.msra.mxu0 0.0
        %765 = vmatprep.subr.mxu0 0.0
        %766 = vmatpush1.msra.mxu0 0.0
        %767 = vmatprep.subr.mxu0 0.0
        %768 = vmatpush1.msra.mxu0 0.0
        %769 = vmatprep.subr.mxu0 0.0
        %770 = vmatpush1.msra.mxu0 0.0
        %771 = vmatprep.subr.mxu0 0.0
        %772 = vmatpush1.msra.mxu0 0.0
        %773 = vmatprep.subr.mxu0 0.0
        %774 = vmatpush1.msra.mxu0 0.0
        %775 = vmatprep.subr.mxu0 0.0
        %776 = vmatpush1.msra.mxu0 0.0
        %777 = vmatprep.subr.mxu0 0.0
        %778 = vmatpush1.msra.mxu0 0.0
        %779 = vmatprep.subr.mxu0 0.0
        %780 = vmatpush1.msra.mxu0 0.0
        %781 = vmatprep.subr.mxu0 0.0
        %782 = vmatpush1.msra.mxu0 0.0
        %783 = vmatprep.subr.mxu0 0.0
        %784 = vmatpush1.msra.mxu0 0.0
        %785 = vmatprep.subr.mxu0 0.0
        %786 = vmatpush1.msra.mxu0 0.0
        %787 = vmatprep.subr.mxu0 0.0
        %788 = vmatpush1.msra.mxu0 0.0
        %789 = vmatprep.subr.mxu0 0.0
        %790 = vmatpush1.msra.mxu0 0.0
        %791 = vmatprep.subr.mxu0 0.0
        %792 = vmatpush1.msra.mxu0 0.0
        %793 = vmatprep.subr.mxu0 0.0
        %794 = vmatpush1.msra.mxu0 0.0
        %795 = vmatprep.subr.mxu0 0.0
        %796 = vmatpush1.msra.mxu0 0.0
        %797 = vmatprep.subr.mxu0 0.0
        %798 = vmatpush1.msra.mxu0 0.0
        %799 = vmatprep.subr.mxu0 0.0
        %800 = vmatpush1.msra.mxu0 0.0
        %801 = vmatprep.subr.mxu0 0.0
        %802 = vmatpush1.msra.mxu0 0.0
        %803 = vmatprep.subr.mxu0 0.0
        %804 = vmatpush1.msra.mxu0 0.0
        %805 = vmatprep.subr.mxu0 0.0
        %806 = vmatpush1.msra.mxu0 0.0
        %807 = vmatprep.subr.mxu0 0.0
        %808 = vmatpush1.msra.mxu0 0.0
        %809 = vmatprep.subr.mxu0 0.0
        %810 = vmatpush1.msra.mxu0 0.0
        %811 = vmatprep.subr.mxu0 0.0
        %812 = vmatpush1.msra.mxu0 0.0
        %813 = vmatprep.mubr.f32.mxu0 0.0
        %814 = vmatmul.mubr.f32.gmra.mrb[0].mxu0 %v436
        %v815 = vpop.f32.mrb[0].mxu0
        %v816 = vadd.f32 0.0, %v815
        %v817 = vpop.f32.mrb[0].mxu0
        %v818 = vadd.f32 0.0, %v817
        %819 = vmatprep.mubr.f32.mxu0 0.0
        %820 = vmatmul.mubr.f32.gmra.mrb[0].mxu0 %v439
        %v821 = vpop.f32.mrb[0].mxu0
        %v822 = vadd.f32 0.0, %v821
        %v823 = vpop.f32.mrb[0].mxu0
        %v824 = vadd.f32 0.0, %v823
        %825 = vdwg.mxu0
        %826 = vmatprep.subr.mxu0 %v381
        %827 = vmatpush1.msra.mxu0 %v380
        %828 = vmatprep.subr.mxu0 %v397
        %829 = vmatpush1.msra.mxu0 %v396
        %830 = vmatprep.subr.mxu0 0.0
        %831 = vmatpush1.msra.mxu0 0.0
        %832 = vmatprep.subr.mxu0 0.0
        %833 = vmatpush1.msra.mxu0 0.0
        %834 = vmatprep.subr.mxu0 0.0
        %835 = vmatpush1.msra.mxu0 0.0
        %836 = vmatprep.subr.mxu0 0.0
        %837 = vmatpush1.msra.mxu0 0.0
        %838 = vmatprep.subr.mxu0 0.0
        %839 = vmatpush1.msra.mxu0 0.0
        %840 = vmatprep.subr.mxu0 0.0
        %841 = vmatpush1.msra.mxu0 0.0
        %842 = vmatprep.subr.mxu0 0.0
        %843 = vmatpush1.msra.mxu0 0.0
        %844 = vmatprep.subr.mxu0 0.0
        %845 = vmatpush1.msra.mxu0 0.0
        %846 = vmatprep.subr.mxu0 0.0
        %847 = vmatpush1.msra.mxu0 0.0
        %848 = vmatprep.subr.mxu0 0.0
        %849 = vmatpush1.msra.mxu0 0.0
        %850 = vmatprep.subr.mxu0 0.0
        %851 = vmatpush1.msra.mxu0 0.0
        %852 = vmatprep.subr.mxu0 0.0
        %853 = vmatpush1.msra.mxu0 0.0
        %854 = vmatprep.subr.mxu0 0.0
        %855 = vmatpush1.msra.mxu0 0.0
        %856 = vmatprep.subr.mxu0 0.0
        %857 = vmatpush1.msra.mxu0 0.0
        %858 = vmatprep.subr.mxu0 0.0
        %859 = vmatpush1.msra.mxu0 0.0
        %860 = vmatprep.subr.mxu0 0.0
        %861 = vmatpush1.msra.mxu0 0.0
        %862 = vmatprep.subr.mxu0 0.0
        %863 = vmatpush1.msra.mxu0 0.0
        %864 = vmatprep.subr.mxu0 0.0
        %865 = vmatpush1.msra.mxu0 0.0
        %866 = vmatprep.subr.mxu0 0.0
        %867 = vmatpush1.msra.mxu0 0.0
        %868 = vmatprep.subr.mxu0 0.0
        %869 = vmatpush1.msra.mxu0 0.0
        %870 = vmatprep.subr.mxu0 0.0
        %871 = vmatpush1.msra.mxu0 0.0
        %872 = vmatprep.subr.mxu0 0.0
        %873 = vmatpush1.msra.mxu0 0.0
        %874 = vmatprep.subr.mxu0 0.0
        %875 = vmatpush1.msra.mxu0 0.0
        %876 = vmatprep.subr.mxu0 0.0
        %877 = vmatpush1.msra.mxu0 0.0
        %878 = vmatprep.subr.mxu0 0.0
        %879 = vmatpush1.msra.mxu0 0.0
        %880 = vmatprep.subr.mxu0 0.0
        %881 = vmatpush1.msra.mxu0 0.0
        %882 = vmatprep.subr.mxu0 0.0
        %883 = vmatpush1.msra.mxu0 0.0
        %884 = vmatprep.subr.mxu0 0.0
        %885 = vmatpush1.msra.mxu0 0.0
        %886 = vmatprep.subr.mxu0 0.0
        %887 = vmatpush1.msra.mxu0 0.0
        %888 = vmatprep.subr.mxu0 0.0
        %889 = vmatpush1.msra.mxu0 0.0
        %890 = vmatprep.mubr.f32.mxu0 0.0
        %891 = vmatmul.mubr.f32.gmra.mrb[0].mxu0 %v436
        %v892 = vpop.f32.mrb[0].mxu0
        %v893 = vadd.f32 0.0, %v892
        %v894 = vpop.f32.mrb[0].mxu0
        %v895 = vadd.f32 0.0, %v894
        %896 = vmatprep.mubr.f32.mxu0 0.0
        %897 = vmatmul.mubr.f32.gmra.mrb[0].mxu0 %v439
        %v898 = vpop.f32.mrb[0].mxu0
        %v899 = vadd.f32 0.0, %v898
        %v900 = vpop.f32.mrb[0].mxu0
        %v901 = vadd.f32 0.0, %v900
        %902 = vdwg.mxu0
        %903 = vmatprep.subr.mxu0 %v383
        %904 = vmatpush1.msra.mxu0 %v382
        %905 = vmatprep.subr.mxu0 %v399
        %906 = vmatpush1.msra.mxu0 %v398
        %907 = vmatprep.subr.mxu0 0.0
        %908 = vmatpush1.msra.mxu0 0.0
        %909 = vmatprep.subr.mxu0 0.0
        %910 = vmatpush1.msra.mxu0 0.0
        %911 = vmatprep.subr.mxu0 0.0
        %912 = vmatpush1.msra.mxu0 0.0
        %913 = vmatprep.subr.mxu0 0.0
        %914 = vmatpush1.msra.mxu0 0.0
        %915 = vmatprep.subr.mxu0 0.0
        %916 = vmatpush1.msra.mxu0 0.0
        %917 = vmatprep.subr.mxu0 0.0
        %918 = vmatpush1.msra.mxu0 0.0
        %919 = vmatprep.subr.mxu0 0.0
        %920 = vmatpush1.msra.mxu0 0.0
        %921 = vmatprep.subr.mxu0 0.0
        %922 = vmatpush1.msra.mxu0 0.0
        %923 = vmatprep.subr.mxu0 0.0
        %924 = vmatpush1.msra.mxu0 0.0
        %925 = vmatprep.subr.mxu0 0.0
        %926 = vmatpush1.msra.mxu0 0.0
        %927 = vmatprep.subr.mxu0 0.0
        %928 = vmatpush1.msra.mxu0 0.0
        %929 = vmatprep.subr.mxu0 0.0
        %930 = vmatpush1.msra.mxu0 0.0
        %931 = vmatprep.subr.mxu0 0.0
        %932 = vmatpush1.msra.mxu0 0.0
        %933 = vmatprep.subr.mxu0 0.0
        %934 = vmatpush1.msra.mxu0 0.0
        %935 = vmatprep.subr.mxu0 0.0
        %936 = vmatpush1.msra.mxu0 0.0
        %937 = vmatprep.subr.mxu0 0.0
        %938 = vmatpush1.msra.mxu0 0.0
        %939 = vmatprep.subr.mxu0 0.0
        %940 = vmatpush1.msra.mxu0 0.0
        %941 = vmatprep.subr.mxu0 0.0
        %942 = vmatpush1.msra.mxu0 0.0
        %943 = vmatprep.subr.mxu0 0.0
        %944 = vmatpush1.msra.mxu0 0.0
        %945 = vmatprep.subr.mxu0 0.0
        %946 = vmatpush1.msra.mxu0 0.0
        %947 = vmatprep.subr.mxu0 0.0
        %948 = vmatpush1.msra.mxu0 0.0
        %949 = vmatprep.subr.mxu0 0.0
        %950 = vmatpush1.msra.mxu0 0.0
        %951 = vmatprep.subr.mxu0 0.0
        %952 = vmatpush1.msra.mxu0 0.0
        %953 = vmatprep.subr.mxu0 0.0
        %954 = vmatpush1.msra.mxu0 0.0
        %955 = vmatprep.subr.mxu0 0.0
        %956 = vmatpush1.msra.mxu0 0.0
        %957 = vmatprep.subr.mxu0 0.0
        %958 = vmatpush1.msra.mxu0 0.0
        %959 = vmatprep.subr.mxu0 0.0
        %960 = vmatpush1.msra.mxu0 0.0
        %961 = vmatprep.subr.mxu0 0.0
        %962 = vmatpush1.msra.mxu0 0.0
        %963 = vmatprep.subr.mxu0 0.0
        %964 = vmatpush1.msra.mxu0 0.0
        %965 = vmatprep.subr.mxu0 0.0
        %966 = vmatpush1.msra.mxu0 0.0
        %967 = vmatprep.mubr.f32.mxu0 0.0
        %968 = vmatmul.mubr.f32.gmra.mrb[0].mxu0 %v436
        %v969 = vpop.f32.mrb[0].mxu0
        %v970 = vadd.f32 0.0, %v969
        %v971 = vpop.f32.mrb[0].mxu0
        %v972 = vadd.f32 0.0, %v971
        %973 = vmatprep.mubr.f32.mxu0 0.0
        %974 = vmatmul.mubr.f32.gmra.mrb[0].mxu0 %v439
        %v975 = vpop.f32.mrb[0].mxu0
        %v976 = vadd.f32 0.0, %v975
        %v977 = vpop.f32.mrb[0].mxu0
        %v978 = vadd.f32 0.0, %v977
        %979 = vdwg.mxu0
        %980 = vmatprep.subr.mxu0 %v385
        %981 = vmatpush1.msra.mxu0 %v384
        %982 = vmatprep.subr.mxu0 %v401
        %983 = vmatpush1.msra.mxu0 %v400
        %984 = vmatprep.subr.mxu0 0.0
        %985 = vmatpush1.msra.mxu0 0.0
        %986 = vmatprep.subr.mxu0 0.0
        %987 = vmatpush1.msra.mxu0 0.0
        %988 = vmatprep.subr.mxu0 0.0
        %989 = vmatpush1.msra.mxu0 0.0
        %990 = vmatprep.subr.mxu0 0.0
        %991 = vmatpush1.msra.mxu0 0.0
        %992 = vmatprep.subr.mxu0 0.0
        %993 = vmatpush1.msra.mxu0 0.0
        %994 = vmatprep.subr.mxu0 0.0
        %995 = vmatpush1.msra.mxu0 0.0
        %996 = vmatprep.subr.mxu0 0.0
        %997 = vmatpush1.msra.mxu0 0.0
        %998 = vmatprep.subr.mxu0 0.0
        %999 = vmatpush1.msra.mxu0 0.0
        %1000 = vmatprep.subr.mxu0 0.0
        %1001 = vmatpush1.msra.mxu0 0.0
        %1002 = vmatprep.subr.mxu0 0.0
        %1003 = vmatpush1.msra.mxu0 0.0
        %1004 = vmatprep.subr.mxu0 0.0
        %1005 = vmatpush1.msra.mxu0 0.0
        %1006 = vmatprep.subr.mxu0 0.0
        %1007 = vmatpush1.msra.mxu0 0.0
        %1008 = vmatprep.subr.mxu0 0.0
        %1009 = vmatpush1.msra.mxu0 0.0
        %1010 = vmatprep.subr.mxu0 0.0
        %1011 = vmatpush1.msra.mxu0 0.0
        %1012 = vmatprep.subr.mxu0 0.0
        %1013 = vmatpush1.msra.mxu0 0.0
        %1014 = vmatprep.subr.mxu0 0.0
        %1015 = vmatpush1.msra.mxu0 0.0
        %1016 = vmatprep.subr.mxu0 0.0
        %1017 = vmatpush1.msra.mxu0 0.0
        %1018 = vmatprep.subr.mxu0 0.0
        %1019 = vmatpush1.msra.mxu0 0.0
        %1020 = vmatprep.subr.mxu0 0.0
        %1021 = vmatpush1.msra.mxu0 0.0
        %1022 = vmatprep.subr.mxu0 0.0
        %1023 = vmatpush1.msra.mxu0 0.0
        %1024 = vmatprep.subr.mxu0 0.0
        %1025 = vmatpush1.msra.mxu0 0.0
        %1026 = vmatprep.subr.mxu0 0.0
        %1027 = vmatpush1.msra.mxu0 0.0
        %1028 = vmatprep.subr.mxu0 0.0
        %1029 = vmatpush1.msra.mxu0 0.0
        %1030 = vmatprep.subr.mxu0 0.0
        %1031 = vmatpush1.msra.mxu0 0.0
        %1032 = vmatprep.subr.mxu0 0.0
        %1033 = vmatpush1.msra.mxu0 0.0
        %1034 = vmatprep.subr.mxu0 0.0
        %1035 = vmatpush1.msra.mxu0 0.0
        %1036 = vmatprep.subr.mxu0 0.0
        %1037 = vmatpush1.msra.mxu0 0.0
        %1038 = vmatprep.subr.mxu0 0.0
        %1039 = vmatpush1.msra.mxu0 0.0
        %1040 = vmatprep.subr.mxu0 0.0
        %1041 = vmatpush1.msra.mxu0 0.0
        %1042 = vmatprep.subr.mxu0 0.0
        %1043 = vmatpush1.msra.mxu0 0.0
        %1044 = vmatprep.mubr.f32.mxu0 0.0
        %1045 = vmatmul.mubr.f32.gmra.mrb[0].mxu0 %v436
        %v1046 = vpop.f32.mrb[0].mxu0
        %v1047 = vadd.f32 0.0, %v1046
        %v1048 = vpop.f32.mrb[0].mxu0
        %v1049 = vadd.f32 0.0, %v1048
        %1050 = vmatprep.mubr.f32.mxu0 0.0
        %1051 = vmatmul.mubr.f32.gmra.mrb[0].mxu0 %v439
        %v1052 = vpop.f32.mrb[0].mxu0
        %v1053 = vadd.f32 0.0, %v1052
        %v1054 = vpop.f32.mrb[0].mxu0
        %v1055 = vadd.f32 0.0, %v1054
        %1056 = vdwg.mxu0
        %v1058 = vsel %vm434, %v260, 0
        %v1061 = vsel %vm434, %v261, 0
        %1063 = vmatprep.subr.mxu0 %v229
        %1064 = vmatpush1.msra.mxu0 %v228
        %1065 = vmatprep.subr.mxu0 %v245
        %1066 = vmatpush1.msra.mxu0 %v244
        %1067 = vmatprep.subr.mxu0 0.0
        %1068 = vmatpush1.msra.mxu0 0.0
        %1069 = vmatprep.subr.mxu0 0.0
        %1070 = vmatpush1.msra.mxu0 0.0
        %1071 = vmatprep.subr.mxu0 0.0
        %1072 = vmatpush1.msra.mxu0 0.0
        %1073 = vmatprep.subr.mxu0 0.0
        %1074 = vmatpush1.msra.mxu0 0.0
        %1075 = vmatprep.subr.mxu0 0.0
        %1076 = vmatpush1.msra.mxu0 0.0
        %1077 = vmatprep.subr.mxu0 0.0
        %1078 = vmatpush1.msra.mxu0 0.0
        %1079 = vmatprep.subr.mxu0 0.0
        %1080 = vmatpush1.msra.mxu0 0.0
        %1081 = vmatprep.subr.mxu0 0.0
        %1082 = vmatpush1.msra.mxu0 0.0
        %1083 = vmatprep.subr.mxu0 0.0
        %1084 = vmatpush1.msra.mxu0 0.0
        %1085 = vmatprep.subr.mxu0 0.0
        %1086 = vmatpush1.msra.mxu0 0.0
        %1087 = vmatprep.subr.mxu0 0.0
        %1088 = vmatpush1.msra.mxu0 0.0
        %1089 = vmatprep.subr.mxu0 0.0
        %1090 = vmatpush1.msra.mxu0 0.0
        %1091 = vmatprep.subr.mxu0 0.0
        %1092 = vmatpush1.msra.mxu0 0.0
        %1093 = vmatprep.subr.mxu0 0.0
        %1094 = vmatpush1.msra.mxu0 0.0
        %1095 = vmatprep.subr.mxu0 0.0
        %1096 = vmatpush1.msra.mxu0 0.0
        %1097 = vmatprep.subr.mxu0 0.0
        %1098 = vmatpush1.msra.mxu0 0.0
        %1099 = vmatprep.subr.mxu0 0.0
        %1100 = vmatpush1.msra.mxu0 0.0
        %1101 = vmatprep.subr.mxu0 0.0
        %1102 = vmatpush1.msra.mxu0 0.0
        %1103 = vmatprep.subr.mxu0 0.0
        %1104 = vmatpush1.msra.mxu0 0.0
        %1105 = vmatprep.subr.mxu0 0.0
        %1106 = vmatpush1.msra.mxu0 0.0
        %1107 = vmatprep.subr.mxu0 0.0
        %1108 = vmatpush1.msra.mxu0 0.0
        %1109 = vmatprep.subr.mxu0 0.0
        %1110 = vmatpush1.msra.mxu0 0.0
        %1111 = vmatprep.subr.mxu0 0.0
        %1112 = vmatpush1.msra.mxu0 0.0
        %1113 = vmatprep.subr.mxu0 0.0
        %1114 = vmatpush1.msra.mxu0 0.0
        %1115 = vmatprep.subr.mxu0 0.0
        %1116 = vmatpush1.msra.mxu0 0.0
        %1117 = vmatprep.subr.mxu0 0.0
        %1118 = vmatpush1.msra.mxu0 0.0
        %1119 = vmatprep.subr.mxu0 0.0
        %1120 = vmatpush1.msra.mxu0 0.0
        %1121 = vmatprep.subr.mxu0 0.0
        %1122 = vmatpush1.msra.mxu0 0.0
        %1123 = vmatprep.subr.mxu0 0.0
        %1124 = vmatpush1.msra.mxu0 0.0
        %1125 = vmatprep.subr.mxu0 0.0
        %1126 = vmatpush1.msra.mxu0 0.0
        %1127 = vmatprep.mubr.f32.mxu0 0.0
        %1128 = vmatmul.mubr.f32.gmra.mrb[0].mxu0 %v1058
        %v1129 = vpop.f32.mrb[0].mxu0
        %v1130 = vadd.f32 %v508, %v1129
        %v1131 = vpop.f32.mrb[0].mxu0
        %v1132 = vadd.f32 %v510, %v1131
        %1133 = vmatprep.mubr.f32.mxu0 0.0
        %1134 = vmatmul.mubr.f32.gmra.mrb[0].mxu0 %v1061
        %v1135 = vpop.f32.mrb[0].mxu0
        %v1136 = vadd.f32 %v514, %v1135
        %v1137 = vpop.f32.mrb[0].mxu0
        %v1138 = vadd.f32 %v516, %v1137
        %1139 = vdwg.mxu0
        %1140 = vmatprep.subr.mxu0 %v231
        %1141 = vmatpush1.msra.mxu0 %v230
        %1142 = vmatprep.subr.mxu0 %v247
        %1143 = vmatpush1.msra.mxu0 %v246
        %1144 = vmatprep.subr.mxu0 0.0
        %1145 = vmatpush1.msra.mxu0 0.0
        %1146 = vmatprep.subr.mxu0 0.0
        %1147 = vmatpush1.msra.mxu0 0.0
        %1148 = vmatprep.subr.mxu0 0.0
        %1149 = vmatpush1.msra.mxu0 0.0
        %1150 = vmatprep.subr.mxu0 0.0
        %1151 = vmatpush1.msra.mxu0 0.0
        %1152 = vmatprep.subr.mxu0 0.0
        %1153 = vmatpush1.msra.mxu0 0.0
        %1154 = vmatprep.subr.mxu0 0.0
        %1155 = vmatpush1.msra.mxu0 0.0
        %1156 = vmatprep.subr.mxu0 0.0
        %1157 = vmatpush1.msra.mxu0 0.0
        %1158 = vmatprep.subr.mxu0 0.0
        %1159 = vmatpush1.msra.mxu0 0.0
        %1160 = vmatprep.subr.mxu0 0.0
        %1161 = vmatpush1.msra.mxu0 0.0
        %1162 = vmatprep.subr.mxu0 0.0
        %1163 = vmatpush1.msra.mxu0 0.0
        %1164 = vmatprep.subr.mxu0 0.0
        %1165 = vmatpush1.msra.mxu0 0.0
        %1166 = vmatprep.subr.mxu0 0.0
        %1167 = vmatpush1.msra.mxu0 0.0
        %1168 = vmatprep.subr.mxu0 0.0
        %1169 = vmatpush1.msra.mxu0 0.0
        %1170 = vmatprep.subr.mxu0 0.0
        %1171 = vmatpush1.msra.mxu0 0.0
        %1172 = vmatprep.subr.mxu0 0.0
        %1173 = vmatpush1.msra.mxu0 0.0
        %1174 = vmatprep.subr.mxu0 0.0
        %1175 = vmatpush1.msra.mxu0 0.0
        %1176 = vmatprep.subr.mxu0 0.0
        %1177 = vmatpush1.msra.mxu0 0.0
        %1178 = vmatprep.subr.mxu0 0.0
        %1179 = vmatpush1.msra.mxu0 0.0
        %1180 = vmatprep.subr.mxu0 0.0
        %1181 = vmatpush1.msra.mxu0 0.0
        %1182 = vmatprep.subr.mxu0 0.0
        %1183 = vmatpush1.msra.mxu0 0.0
        %1184 = vmatprep.subr.mxu0 0.0
        %1185 = vmatpush1.msra.mxu0 0.0
        %1186 = vmatprep.subr.mxu0 0.0
        %1187 = vmatpush1.msra.mxu0 0.0
        %1188 = vmatprep.subr.mxu0 0.0
        %1189 = vmatpush1.msra.mxu0 0.0
        %1190 = vmatprep.subr.mxu0 0.0
        %1191 = vmatpush1.msra.mxu0 0.0
        %1192 = vmatprep.subr.mxu0 0.0
        %1193 = vmatpush1.msra.mxu0 0.0
        %1194 = vmatprep.subr.mxu0 0.0
        %1195 = vmatpush1.msra.mxu0 0.0
        %1196 = vmatprep.subr.mxu0 0.0
        %1197 = vmatpush1.msra.mxu0 0.0
        %1198 = vmatprep.subr.mxu0 0.0
        %1199 = vmatpush1.msra.mxu0 0.0
        %1200 = vmatprep.subr.mxu0 0.0
        %1201 = vmatpush1.msra.mxu0 0.0
        %1202 = vmatprep.subr.mxu0 0.0
        %1203 = vmatpush1.msra.mxu0 0.0
        %1204 = vmatprep.mubr.f32.mxu0 0.0
        %1205 = vmatmul.mubr.f32.gmra.mrb[0].mxu0 %v1058
        %v1206 = vpop.f32.mrb[0].mxu0
        %v1207 = vadd.f32 %v585, %v1206
        %v1208 = vpop.f32.mrb[0].mxu0
        %v1209 = vadd.f32 %v587, %v1208
        %1210 = vmatprep.mubr.f32.mxu0 0.0
        %1211 = vmatmul.mubr.f32.gmra.mrb[0].mxu0 %v1061
        %v1212 = vpop.f32.mrb[0].mxu0
        %v1213 = vadd.f32 %v591, %v1212
        %v1214 = vpop.f32.mrb[0].mxu0
        %v1215 = vadd.f32 %v593, %v1214
        %1216 = vdwg.mxu0
        %1217 = vmatprep.subr.mxu0 %v233
        %1218 = vmatpush1.msra.mxu0 %v232
        %1219 = vmatprep.subr.mxu0 %v249
        %1220 = vmatpush1.msra.mxu0 %v248
        %1221 = vmatprep.subr.mxu0 0.0
        %1222 = vmatpush1.msra.mxu0 0.0
        %1223 = vmatprep.subr.mxu0 0.0
        %1224 = vmatpush1.msra.mxu0 0.0
        %1225 = vmatprep.subr.mxu0 0.0
        %1226 = vmatpush1.msra.mxu0 0.0
        %1227 = vmatprep.subr.mxu0 0.0
        %1228 = vmatpush1.msra.mxu0 0.0
        %1229 = vmatprep.subr.mxu0 0.0
        %1230 = vmatpush1.msra.mxu0 0.0
        %1231 = vmatprep.subr.mxu0 0.0
        %1232 = vmatpush1.msra.mxu0 0.0
        %1233 = vmatprep.subr.mxu0 0.0
        %1234 = vmatpush1.msra.mxu0 0.0
        %1235 = vmatprep.subr.mxu0 0.0
        %1236 = vmatpush1.msra.mxu0 0.0
        %1237 = vmatprep.subr.mxu0 0.0
        %1238 = vmatpush1.msra.mxu0 0.0
        %1239 = vmatprep.subr.mxu0 0.0
        %1240 = vmatpush1.msra.mxu0 0.0
        %1241 = vmatprep.subr.mxu0 0.0
        %1242 = vmatpush1.msra.mxu0 0.0
        %1243 = vmatprep.subr.mxu0 0.0
        %1244 = vmatpush1.msra.mxu0 0.0
        %1245 = vmatprep.subr.mxu0 0.0
        %1246 = vmatpush1.msra.mxu0 0.0
        %1247 = vmatprep.subr.mxu0 0.0
        %1248 = vmatpush1.msra.mxu0 0.0
        %1249 = vmatprep.subr.mxu0 0.0
        %1250 = vmatpush1.msra.mxu0 0.0
        %1251 = vmatprep.subr.mxu0 0.0
        %1252 = vmatpush1.msra.mxu0 0.0
        %1253 = vmatprep.subr.mxu0 0.0
        %1254 = vmatpush1.msra.mxu0 0.0
        %1255 = vmatprep.subr.mxu0 0.0
        %1256 = vmatpush1.msra.mxu0 0.0
        %1257 = vmatprep.subr.mxu0 0.0
        %1258 = vmatpush1.msra.mxu0 0.0
        %1259 = vmatprep.subr.mxu0 0.0
        %1260 = vmatpush1.msra.mxu0 0.0
        %1261 = vmatprep.subr.mxu0 0.0
        %1262 = vmatpush1.msra.mxu0 0.0
        %1263 = vmatprep.subr.mxu0 0.0
        %1264 = vmatpush1.msra.mxu0 0.0
        %1265 = vmatprep.subr.mxu0 0.0
        %1266 = vmatpush1.msra.mxu0 0.0
        %1267 = vmatprep.subr.mxu0 0.0
        %1268 = vmatpush1.msra.mxu0 0.0
        %1269 = vmatprep.subr.mxu0 0.0
        %1270 = vmatpush1.msra.mxu0 0.0
        %1271 = vmatprep.subr.mxu0 0.0
        %1272 = vmatpush1.msra.mxu0 0.0
        %1273 = vmatprep.subr.mxu0 0.0
        %1274 = vmatpush1.msra.mxu0 0.0
        %1275 = vmatprep.subr.mxu0 0.0
        %1276 = vmatpush1.msra.mxu0 0.0
        %1277 = vmatprep.subr.mxu0 0.0
        %1278 = vmatpush1.msra.mxu0 0.0
        %1279 = vmatprep.subr.mxu0 0.0
        %1280 = vmatpush1.msra.mxu0 0.0
        %1281 = vmatprep.mubr.f32.mxu0 0.0
        %1282 = vmatmul.mubr.f32.gmra.mrb[0].mxu0 %v1058
        %v1283 = vpop.f32.mrb[0].mxu0
        %v1284 = vadd.f32 %v662, %v1283
        %v1285 = vpop.f32.mrb[0].mxu0
        %v1286 = vadd.f32 %v664, %v1285
        %1287 = vmatprep.mubr.f32.mxu0 0.0
        %1288 = vmatmul.mubr.f32.gmra.mrb[0].mxu0 %v1061
        %v1289 = vpop.f32.mrb[0].mxu0
        %v1290 = vadd.f32 %v668, %v1289
        %v1291 = vpop.f32.mrb[0].mxu0
        %v1292 = vadd.f32 %v670, %v1291
        %1293 = vdwg.mxu0
        %1294 = vmatprep.subr.mxu0 %v235
        %1295 = vmatpush1.msra.mxu0 %v234
        %1296 = vmatprep.subr.mxu0 %v251
        %1297 = vmatpush1.msra.mxu0 %v250
        %1298 = vmatprep.subr.mxu0 0.0
        %1299 = vmatpush1.msra.mxu0 0.0
        %1300 = vmatprep.subr.mxu0 0.0
        %1301 = vmatpush1.msra.mxu0 0.0
        %1302 = vmatprep.subr.mxu0 0.0
        %1303 = vmatpush1.msra.mxu0 0.0
        %1304 = vmatprep.subr.mxu0 0.0
        %1305 = vmatpush1.msra.mxu0 0.0
        %1306 = vmatprep.subr.mxu0 0.0
        %1307 = vmatpush1.msra.mxu0 0.0
        %1308 = vmatprep.subr.mxu0 0.0
        %1309 = vmatpush1.msra.mxu0 0.0
        %1310 = vmatprep.subr.mxu0 0.0
        %1311 = vmatpush1.msra.mxu0 0.0
        %1312 = vmatprep.subr.mxu0 0.0
        %1313 = vmatpush1.msra.mxu0 0.0
        %1314 = vmatprep.subr.mxu0 0.0
        %1315 = vmatpush1.msra.mxu0 0.0
        %1316 = vmatprep.subr.mxu0 0.0
        %1317 = vmatpush1.msra.mxu0 0.0
        %1318 = vmatprep.subr.mxu0 0.0
        %1319 = vmatpush1.msra.mxu0 0.0
        %1320 = vmatprep.subr.mxu0 0.0
        %1321 = vmatpush1.msra.mxu0 0.0
        %1322 = vmatprep.subr.mxu0 0.0
        %1323 = vmatpush1.msra.mxu0 0.0
        %1324 = vmatprep.subr.mxu0 0.0
        %1325 = vmatpush1.msra.mxu0 0.0
        %1326 = vmatprep.subr.mxu0 0.0
        %1327 = vmatpush1.msra.mxu0 0.0
        %1328 = vmatprep.subr.mxu0 0.0
        %1329 = vmatpush1.msra.mxu0 0.0
        %1330 = vmatprep.subr.mxu0 0.0
        %1331 = vmatpush1.msra.mxu0 0.0
        %1332 = vmatprep.subr.mxu0 0.0
        %1333 = vmatpush1.msra.mxu0 0.0
        %1334 = vmatprep.subr.mxu0 0.0
        %1335 = vmatpush1.msra.mxu0 0.0
        %1336 = vmatprep.subr.mxu0 0.0
        %1337 = vmatpush1.msra.mxu0 0.0
        %1338 = vmatprep.subr.mxu0 0.0
        %1339 = vmatpush1.msra.mxu0 0.0
        %1340 = vmatprep.subr.mxu0 0.0
        %1341 = vmatpush1.msra.mxu0 0.0
        %1342 = vmatprep.subr.mxu0 0.0
        %1343 = vmatpush1.msra.mxu0 0.0
        %1344 = vmatprep.subr.mxu0 0.0
        %1345 = vmatpush1.msra.mxu0 0.0
        %1346 = vmatprep.subr.mxu0 0.0
        %1347 = vmatpush1.msra.mxu0 0.0
        %1348 = vmatprep.subr.mxu0 0.0
        %1349 = vmatpush1.msra.mxu0 0.0
        %1350 = vmatprep.subr.mxu0 0.0
        %1351 = vmatpush1.msra.mxu0 0.0
        %1352 = vmatprep.subr.mxu0 0.0
        %1353 = vmatpush1.msra.mxu0 0.0
        %1354 = vmatprep.subr.mxu0 0.0
        %1355 = vmatpush1.msra.mxu0 0.0
        %1356 = vmatprep.subr.mxu0 0.0
        %1357 = vmatpush1.msra.mxu0 0.0
        %1358 = vmatprep.mubr.f32.mxu0 0.0
        %1359 = vmatmul.mubr.f32.gmra.mrb[0].mxu0 %v1058
        %v1360 = vpop.f32.mrb[0].mxu0
        %v1361 = vadd.f32 %v739, %v1360
        %v1362 = vpop.f32.mrb[0].mxu0
        %v1363 = vadd.f32 %v741, %v1362
        %1364 = vmatprep.mubr.f32.mxu0 0.0
        %1365 = vmatmul.mubr.f32.gmra.mrb[0].mxu0 %v1061
        %v1366 = vpop.f32.mrb[0].mxu0
        %v1367 = vadd.f32 %v745, %v1366
        %v1368 = vpop.f32.mrb[0].mxu0
        %v1369 = vadd.f32 %v747, %v1368
        %1370 = vdwg.mxu0
        %1371 = vmatprep.subr.mxu0 %v237
        %1372 = vmatpush1.msra.mxu0 %v236
        %1373 = vmatprep.subr.mxu0 %v253
        %1374 = vmatpush1.msra.mxu0 %v252
        %1375 = vmatprep.subr.mxu0 0.0
        %1376 = vmatpush1.msra.mxu0 0.0
        %1377 = vmatprep.subr.mxu0 0.0
        %1378 = vmatpush1.msra.mxu0 0.0
        %1379 = vmatprep.subr.mxu0 0.0
        %1380 = vmatpush1.msra.mxu0 0.0
        %1381 = vmatprep.subr.mxu0 0.0
        %1382 = vmatpush1.msra.mxu0 0.0
        %1383 = vmatprep.subr.mxu0 0.0
        %1384 = vmatpush1.msra.mxu0 0.0
        %1385 = vmatprep.subr.mxu0 0.0
        %1386 = vmatpush1.msra.mxu0 0.0
        %1387 = vmatprep.subr.mxu0 0.0
        %1388 = vmatpush1.msra.mxu0 0.0
        %1389 = vmatprep.subr.mxu0 0.0
        %1390 = vmatpush1.msra.mxu0 0.0
        %1391 = vmatprep.subr.mxu0 0.0
        %1392 = vmatpush1.msra.mxu0 0.0
        %1393 = vmatprep.subr.mxu0 0.0
        %1394 = vmatpush1.msra.mxu0 0.0
        %1395 = vmatprep.subr.mxu0 0.0
        %1396 = vmatpush1.msra.mxu0 0.0
        %1397 = vmatprep.subr.mxu0 0.0
        %1398 = vmatpush1.msra.mxu0 0.0
        %1399 = vmatprep.subr.mxu0 0.0
        %1400 = vmatpush1.msra.mxu0 0.0
        %1401 = vmatprep.subr.mxu0 0.0
        %1402 = vmatpush1.msra.mxu0 0.0
        %1403 = vmatprep.subr.mxu0 0.0
        %1404 = vmatpush1.msra.mxu0 0.0
        %1405 = vmatprep.subr.mxu0 0.0
        %1406 = vmatpush1.msra.mxu0 0.0
        %1407 = vmatprep.subr.mxu0 0.0
        %1408 = vmatpush1.msra.mxu0 0.0
        %1409 = vmatprep.subr.mxu0 0.0
        %1410 = vmatpush1.msra.mxu0 0.0
        %1411 = vmatprep.subr.mxu0 0.0
        %1412 = vmatpush1.msra.mxu0 0.0
        %1413 = vmatprep.subr.mxu0 0.0
        %1414 = vmatpush1.msra.mxu0 0.0
        %1415 = vmatprep.subr.mxu0 0.0
        %1416 = vmatpush1.msra.mxu0 0.0
        %1417 = vmatprep.subr.mxu0 0.0
        %1418 = vmatpush1.msra.mxu0 0.0
        %1419 = vmatprep.subr.mxu0 0.0
        %1420 = vmatpush1.msra.mxu0 0.0
        %1421 = vmatprep.subr.mxu0 0.0
        %1422 = vmatpush1.msra.mxu0 0.0
        %1423 = vmatprep.subr.mxu0 0.0
        %1424 = vmatpush1.msra.mxu0 0.0
        %1425 = vmatprep.subr.mxu0 0.0
        %1426 = vmatpush1.msra.mxu0 0.0
        %1427 = vmatprep.subr.mxu0 0.0
        %1428 = vmatpush1.msra.mxu0 0.0
        %1429 = vmatprep.subr.mxu0 0.0
        %1430 = vmatpush1.msra.mxu0 0.0
        %1431 = vmatprep.subr.mxu0 0.0
        %1432 = vmatpush1.msra.mxu0 0.0
        %1433 = vmatprep.subr.mxu0 0.0
        %1434 = vmatpush1.msra.mxu0 0.0
        %1435 = vmatprep.mubr.f32.mxu0 0.0
        %1436 = vmatmul.mubr.f32.gmra.mrb[0].mxu0 %v1058
        %v1437 = vpop.f32.mrb[0].mxu0
        %v1438 = vadd.f32 %v816, %v1437
        %v1439 = vpop.f32.mrb[0].mxu0
        %v1440 = vadd.f32 %v818, %v1439
        %1441 = vmatprep.mubr.f32.mxu0 0.0
        %1442 = vmatmul.mubr.f32.gmra.mrb[0].mxu0 %v1061
        %v1443 = vpop.f32.mrb[0].mxu0
        %v1444 = vadd.f32 %v822, %v1443
        %v1445 = vpop.f32.mrb[0].mxu0
        %v1446 = vadd.f32 %v824, %v1445
        %1447 = vdwg.mxu0
        %1448 = vmatprep.subr.mxu0 %v239
        %1449 = vmatpush1.msra.mxu0 %v238
        %1450 = vmatprep.subr.mxu0 %v255
        %1451 = vmatpush1.msra.mxu0 %v254
        %1452 = vmatprep.subr.mxu0 0.0
        %1453 = vmatpush1.msra.mxu0 0.0
        %1454 = vmatprep.subr.mxu0 0.0
        %1455 = vmatpush1.msra.mxu0 0.0
        %1456 = vmatprep.subr.mxu0 0.0
        %1457 = vmatpush1.msra.mxu0 0.0
        %1458 = vmatprep.subr.mxu0 0.0
        %1459 = vmatpush1.msra.mxu0 0.0
        %1460 = vmatprep.subr.mxu0 0.0
        %1461 = vmatpush1.msra.mxu0 0.0
        %1462 = vmatprep.subr.mxu0 0.0
        %1463 = vmatpush1.msra.mxu0 0.0
        %1464 = vmatprep.subr.mxu0 0.0
        %1465 = vmatpush1.msra.mxu0 0.0
        %1466 = vmatprep.subr.mxu0 0.0
        %1467 = vmatpush1.msra.mxu0 0.0
        %1468 = vmatprep.subr.mxu0 0.0
        %1469 = vmatpush1.msra.mxu0 0.0
        %1470 = vmatprep.subr.mxu0 0.0
        %1471 = vmatpush1.msra.mxu0 0.0
        %1472 = vmatprep.subr.mxu0 0.0
        %1473 = vmatpush1.msra.mxu0 0.0
        %1474 = vmatprep.subr.mxu0 0.0
        %1475 = vmatpush1.msra.mxu0 0.0
        %1476 = vmatprep.subr.mxu0 0.0
        %1477 = vmatpush1.msra.mxu0 0.0
        %1478 = vmatprep.subr.mxu0 0.0
        %1479 = vmatpush1.msra.mxu0 0.0
        %1480 = vmatprep.subr.mxu0 0.0
        %1481 = vmatpush1.msra.mxu0 0.0
        %1482 = vmatprep.subr.mxu0 0.0
        %1483 = vmatpush1.msra.mxu0 0.0
        %1484 = vmatprep.subr.mxu0 0.0
        %1485 = vmatpush1.msra.mxu0 0.0
        %1486 = vmatprep.subr.mxu0 0.0
        %1487 = vmatpush1.msra.mxu0 0.0
        %1488 = vmatprep.subr.mxu0 0.0
        %1489 = vmatpush1.msra.mxu0 0.0
        %1490 = vmatprep.subr.mxu0 0.0
        %1491 = vmatpush1.msra.mxu0 0.0
        %1492 = vmatprep.subr.mxu0 0.0
        %1493 = vmatpush1.msra.mxu0 0.0
        %1494 = vmatprep.subr.mxu0 0.0
        %1495 = vmatpush1.msra.mxu0 0.0
        %1496 = vmatprep.subr.mxu0 0.0
        %1497 = vmatpush1.msra.mxu0 0.0
        %1498 = vmatprep.subr.mxu0 0.0
        %1499 = vmatpush1.msra.mxu0 0.0
        %1500 = vmatprep.subr.mxu0 0.0
        %1501 = vmatpush1.msra.mxu0 0.0
        %1502 = vmatprep.subr.mxu0 0.0
        %1503 = vmatpush1.msra.mxu0 0.0
        %1504 = vmatprep.subr.mxu0 0.0
        %1505 = vmatpush1.msra.mxu0 0.0
        %1506 = vmatprep.subr.mxu0 0.0
        %1507 = vmatpush1.msra.mxu0 0.0
        %1508 = vmatprep.subr.mxu0 0.0
        %1509 = vmatpush1.msra.mxu0 0.0
        %1510 = vmatprep.subr.mxu0 0.0
        %1511 = vmatpush1.msra.mxu0 0.0
        %1512 = vmatprep.mubr.f32.mxu0 0.0
        %1513 = vmatmul.mubr.f32.gmra.mrb[0].mxu0 %v1058
        %v1514 = vpop.f32.mrb[0].mxu0
        %v1515 = vadd.f32 %v893, %v1514
        %v1516 = vpop.f32.mrb[0].mxu0
        %v1517 = vadd.f32 %v895, %v1516
        %1518 = vmatprep.mubr.f32.mxu0 0.0
        %1519 = vmatmul.mubr.f32.gmra.mrb[0].mxu0 %v1061
        %v1520 = vpop.f32.mrb[0].mxu0
        %v1521 = vadd.f32 %v899, %v1520
        %v1522 = vpop.f32.mrb[0].mxu0
        %v1523 = vadd.f32 %v901, %v1522
        %1524 = vdwg.mxu0
        %1525 = vmatprep.subr.mxu0 %v241
        %1526 = vmatpush1.msra.mxu0 %v240
        %1527 = vmatprep.subr.mxu0 %v257
        %1528 = vmatpush1.msra.mxu0 %v256
        %1529 = vmatprep.subr.mxu0 0.0
        %1530 = vmatpush1.msra.mxu0 0.0
        %1531 = vmatprep.subr.mxu0 0.0
        %1532 = vmatpush1.msra.mxu0 0.0
        %1533 = vmatprep.subr.mxu0 0.0
        %1534 = vmatpush1.msra.mxu0 0.0
        %1535 = vmatprep.subr.mxu0 0.0
        %1536 = vmatpush1.msra.mxu0 0.0
        %1537 = vmatprep.subr.mxu0 0.0
        %1538 = vmatpush1.msra.mxu0 0.0
        %1539 = vmatprep.subr.mxu0 0.0
        %1540 = vmatpush1.msra.mxu0 0.0
        %1541 = vmatprep.subr.mxu0 0.0
        %1542 = vmatpush1.msra.mxu0 0.0
        %1543 = vmatprep.subr.mxu0 0.0
        %1544 = vmatpush1.msra.mxu0 0.0
        %1545 = vmatprep.subr.mxu0 0.0
        %1546 = vmatpush1.msra.mxu0 0.0
        %1547 = vmatprep.subr.mxu0 0.0
        %1548 = vmatpush1.msra.mxu0 0.0
        %1549 = vmatprep.subr.mxu0 0.0
        %1550 = vmatpush1.msra.mxu0 0.0
        %1551 = vmatprep.subr.mxu0 0.0
        %1552 = vmatpush1.msra.mxu0 0.0
        %1553 = vmatprep.subr.mxu0 0.0
        %1554 = vmatpush1.msra.mxu0 0.0
        %1555 = vmatprep.subr.mxu0 0.0
        %1556 = vmatpush1.msra.mxu0 0.0
        %1557 = vmatprep.subr.mxu0 0.0
        %1558 = vmatpush1.msra.mxu0 0.0
        %1559 = vmatprep.subr.mxu0 0.0
        %1560 = vmatpush1.msra.mxu0 0.0
        %1561 = vmatprep.subr.mxu0 0.0
        %1562 = vmatpush1.msra.mxu0 0.0
        %1563 = vmatprep.subr.mxu0 0.0
        %1564 = vmatpush1.msra.mxu0 0.0
        %1565 = vmatprep.subr.mxu0 0.0
        %1566 = vmatpush1.msra.mxu0 0.0
        %1567 = vmatprep.subr.mxu0 0.0
        %1568 = vmatpush1.msra.mxu0 0.0
        %1569 = vmatprep.subr.mxu0 0.0
        %1570 = vmatpush1.msra.mxu0 0.0
        %1571 = vmatprep.subr.mxu0 0.0
        %1572 = vmatpush1.msra.mxu0 0.0
        %1573 = vmatprep.subr.mxu0 0.0
        %1574 = vmatpush1.msra.mxu0 0.0
        %1575 = vmatprep.subr.mxu0 0.0
        %1576 = vmatpush1.msra.mxu0 0.0
        %1577 = vmatprep.subr.mxu0 0.0
        %1578 = vmatpush1.msra.mxu0 0.0
        %1579 = vmatprep.subr.mxu0 0.0
        %1580 = vmatpush1.msra.mxu0 0.0
        %1581 = vmatprep.subr.mxu0 0.0
        %1582 = vmatpush1.msra.mxu0 0.0
        %1583 = vmatprep.subr.mxu0 0.0
        %1584 = vmatpush1.msra.mxu0 0.0
        %1585 = vmatprep.subr.mxu0 0.0
        %1586 = vmatpush1.msra.mxu0 0.0
        %1587 = vmatprep.subr.mxu0 0.0
        %1588 = vmatpush1.msra.mxu0 0.0
        %1589 = vmatprep.mubr.f32.mxu0 0.0
        %1590 = vmatmul.mubr.f32.gmra.mrb[0].mxu0 %v1058
        %v1591 = vpop.f32.mrb[0].mxu0
        %v1592 = vadd.f32 %v970, %v1591
        %v1593 = vpop.f32.mrb[0].mxu0
        %v1594 = vadd.f32 %v972, %v1593
        %1595 = vmatprep.mubr.f32.mxu0 0.0
        %1596 = vmatmul.mubr.f32.gmra.mrb[0].mxu0 %v1061
        %v1597 = vpop.f32.mrb[0].mxu0
        %v1598 = vadd.f32 %v976, %v1597
        %v1599 = vpop.f32.mrb[0].mxu0
        %v1600 = vadd.f32 %v978, %v1599
        %1601 = vdwg.mxu0
        %1602 = vmatprep.subr.mxu0 %v243
        %1603 = vmatpush1.msra.mxu0 %v242
        %1604 = vmatprep.subr.mxu0 %v259
        %1605 = vmatpush1.msra.mxu0 %v258
        %1606 = vmatprep.subr.mxu0 0.0
        %1607 = vmatpush1.msra.mxu0 0.0
        %1608 = vmatprep.subr.mxu0 0.0
        %1609 = vmatpush1.msra.mxu0 0.0
        %1610 = vmatprep.subr.mxu0 0.0
        %1611 = vmatpush1.msra.mxu0 0.0
        %1612 = vmatprep.subr.mxu0 0.0
        %1613 = vmatpush1.msra.mxu0 0.0
        %1614 = vmatprep.subr.mxu0 0.0
        %1615 = vmatpush1.msra.mxu0 0.0
        %1616 = vmatprep.subr.mxu0 0.0
        %1617 = vmatpush1.msra.mxu0 0.0
        %1618 = vmatprep.subr.mxu0 0.0
        %1619 = vmatpush1.msra.mxu0 0.0
        %1620 = vmatprep.subr.mxu0 0.0
        %1621 = vmatpush1.msra.mxu0 0.0
        %1622 = vmatprep.subr.mxu0 0.0
        %1623 = vmatpush1.msra.mxu0 0.0
        %1624 = vmatprep.subr.mxu0 0.0
        %1625 = vmatpush1.msra.mxu0 0.0
        %1626 = vmatprep.subr.mxu0 0.0
        %1627 = vmatpush1.msra.mxu0 0.0
        %1628 = vmatprep.subr.mxu0 0.0
        %1629 = vmatpush1.msra.mxu0 0.0
        %1630 = vmatprep.subr.mxu0 0.0
        %1631 = vmatpush1.msra.mxu0 0.0
        %1632 = vmatprep.subr.mxu0 0.0
        %1633 = vmatpush1.msra.mxu0 0.0
        %1634 = vmatprep.subr.mxu0 0.0
        %1635 = vmatpush1.msra.mxu0 0.0
        %1636 = vmatprep.subr.mxu0 0.0
        %1637 = vmatpush1.msra.mxu0 0.0
        %1638 = vmatprep.subr.mxu0 0.0
        %1639 = vmatpush1.msra.mxu0 0.0
        %1640 = vmatprep.subr.mxu0 0.0
        %1641 = vmatpush1.msra.mxu0 0.0
        %1642 = vmatprep.subr.mxu0 0.0
        %1643 = vmatpush1.msra.mxu0 0.0
        %1644 = vmatprep.subr.mxu0 0.0
        %1645 = vmatpush1.msra.mxu0 0.0
        %1646 = vmatprep.subr.mxu0 0.0
        %1647 = vmatpush1.msra.mxu0 0.0
        %1648 = vmatprep.subr.mxu0 0.0
        %1649 = vmatpush1.msra.mxu0 0.0
        %1650 = vmatprep.subr.mxu0 0.0
        %1651 = vmatpush1.msra.mxu0 0.0
        %1652 = vmatprep.subr.mxu0 0.0
        %1653 = vmatpush1.msra.mxu0 0.0
        %1654 = vmatprep.subr.mxu0 0.0
        %1655 = vmatpush1.msra.mxu0 0.0
        %1656 = vmatprep.subr.mxu0 0.0
        %1657 = vmatpush1.msra.mxu0 0.0
        %1658 = vmatprep.subr.mxu0 0.0
        %1659 = vmatpush1.msra.mxu0 0.0
        %1660 = vmatprep.subr.mxu0 0.0
        %1661 = vmatpush1.msra.mxu0 0.0
        %1662 = vmatprep.subr.mxu0 0.0
        %1663 = vmatpush1.msra.mxu0 0.0
        %1664 = vmatprep.subr.mxu0 0.0
        %1665 = vmatpush1.msra.mxu0 0.0
        %1666 = vmatprep.mubr.f32.mxu0 0.0
        %1667 = vmatmul.mubr.f32.gmra.mrb[0].mxu0 %v1058
        %v1668 = vpop.f32.mrb[0].mxu0
        %v1669 = vadd.f32 %v1047, %v1668
        %v1670 = vpop.f32.mrb[0].mxu0
        %v1671 = vadd.f32 %v1049, %v1670
        %1672 = vmatprep.mubr.f32.mxu0 0.0
        %1673 = vmatmul.mubr.f32.gmra.mrb[0].mxu0 %v1061
        %v1674 = vpop.f32.mrb[0].mxu0
        %v1675 = vadd.f32 %v1053, %v1674
        %v1676 = vpop.f32.mrb[0].mxu0
        %v1677 = vadd.f32 %v1055, %v1676
        %1678 = vdwg.mxu0
        %s1679 = scalar_lea.vmem [#allocation6], 32
        %v1680 = vld [vmem:[%s1679] sm:$0xff]
        %v1681 = vld [vmem:[%s1679 + $0x8] sm:$0xff]
        %1682 = vrot.lane.b32.xlu0 %v228, 126
        %v1683 = vpop.permute.xlu0 %1682
        %1684 = vrot.lane.b32.xlu0 %v229, 126
        %v1685 = vpop.permute.xlu0 %1684
        %1686 = vrot.lane.b32.xlu0 %v230, 126
        %v1687 = vpop.permute.xlu0 %1686
        %1688 = vrot.lane.b32.xlu0 %v231, 126
        %v1689 = vpop.permute.xlu0 %1688
        %1690 = vrot.lane.b32.xlu0 %v232, 126
        %v1691 = vpop.permute.xlu0 %1690
        %1692 = vrot.lane.b32.xlu0 %v233, 126
        %v1693 = vpop.permute.xlu0 %1692
        %1694 = vrot.lane.b32.xlu0 %v234, 126
        %v1695 = vpop.permute.xlu0 %1694
        %1696 = vrot.lane.b32.xlu0 %v235, 126
        %v1697 = vpop.permute.xlu0 %1696
        %1698 = vrot.lane.b32.xlu0 %v236, 126
        %v1699 = vpop.permute.xlu0 %1698
        %1700 = vrot.lane.b32.xlu0 %v237, 126
        %v1701 = vpop.permute.xlu0 %1700
        %1702 = vrot.lane.b32.xlu0 %v238, 126
        %v1703 = vpop.permute.xlu0 %1702
        %1704 = vrot.lane.b32.xlu0 %v239, 126
        %v1705 = vpop.permute.xlu0 %1704
        %1706 = vrot.lane.b32.xlu0 %v240, 126
        %v1707 = vpop.permute.xlu0 %1706
        %1708 = vrot.lane.b32.xlu0 %v241, 126
        %v1709 = vpop.permute.xlu0 %1708
        %1710 = vrot.lane.b32.xlu0 %v242, 126
        %v1711 = vpop.permute.xlu0 %1710
        %1712 = vrot.lane.b32.xlu0 %v243, 126
        %v1713 = vpop.permute.xlu0 %1712
        %1714 = vrot.lane.b32.xlu0 %v262, 126
        %v1715 = vpop.permute.xlu0 %1714
        %1716 = vrot.lane.b32.xlu0 %v244, 126
        %v1717 = vpop.permute.xlu0 %1716
        %1718 = vrot.lane.b32.xlu0 %v245, 126
        %v1719 = vpop.permute.xlu0 %1718
        %1720 = vrot.lane.b32.xlu0 %v246, 126
        %v1721 = vpop.permute.xlu0 %1720
        %1722 = vrot.lane.b32.xlu0 %v247, 126
        %v1723 = vpop.permute.xlu0 %1722
        %1724 = vrot.lane.b32.xlu0 %v248, 126
        %v1725 = vpop.permute.xlu0 %1724
        %1726 = vrot.lane.b32.xlu0 %v249, 126
        %v1727 = vpop.permute.xlu0 %1726
        %1728 = vrot.lane.b32.xlu0 %v250, 126
        %v1729 = vpop.permute.xlu0 %1728
        %1730 = vrot.lane.b32.xlu0 %v251, 126
        %v1731 = vpop.permute.xlu0 %1730
        %1732 = vrot.lane.b32.xlu0 %v252, 126
        %v1733 = vpop.permute.xlu0 %1732
        %1734 = vrot.lane.b32.xlu0 %v253, 126
        %v1735 = vpop.permute.xlu0 %1734
        %1736 = vrot.lane.b32.xlu0 %v254, 126
        %v1737 = vpop.permute.xlu0 %1736
        %1738 = vrot.lane.b32.xlu0 %v255, 126
        %v1739 = vpop.permute.xlu0 %1738
        %1740 = vrot.lane.b32.xlu0 %v256, 126
        %v1741 = vpop.permute.xlu0 %1740
        %1742 = vrot.lane.b32.xlu0 %v257, 126
        %v1743 = vpop.permute.xlu0 %1742
        %1744 = vrot.lane.b32.xlu0 %v258, 126
        %v1745 = vpop.permute.xlu0 %1744
        %1746 = vrot.lane.b32.xlu0 %v259, 126
        %v1747 = vpop.permute.xlu0 %1746
        %1748 = vrot.lane.b32.xlu0 %v263, 126
        %v1749 = vpop.permute.xlu0 %1748
        %vm1750 = vcmask 1031168
        %v1751 = vsel %vm1750, %v1683, %v1685
        %v1752 = vsel %vm1750, %v1685, %v1687
        %v1753 = vsel %vm1750, %v1687, %v1689
        %v1754 = vsel %vm1750, %v1689, %v1691
        %v1755 = vsel %vm1750, %v1691, %v1693
        %v1756 = vsel %vm1750, %v1693, %v1695
        %v1757 = vsel %vm1750, %v1695, %v1697
        %v1758 = vsel %vm1750, %v1697, %v1699
        %v1759 = vsel %vm1750, %v1699, %v1701
        %v1760 = vsel %vm1750, %v1701, %v1703
        %v1761 = vsel %vm1750, %v1703, %v1705
        %v1762 = vsel %vm1750, %v1705, %v1707
        %v1763 = vsel %vm1750, %v1707, %v1709
        %v1764 = vsel %vm1750, %v1709, %v1711
        %v1765 = vsel %vm1750, %v1711, %v1713
        %v1766 = vsel %vm1750, %v1713, %v1715
        %v1767 = vsel %vm1750, %v1717, %v1719
        %v1768 = vsel %vm1750, %v1719, %v1721
        %v1769 = vsel %vm1750, %v1721, %v1723
        %v1770 = vsel %vm1750, %v1723, %v1725
        %v1771 = vsel %vm1750, %v1725, %v1727
        %v1772 = vsel %vm1750, %v1727, %v1729
        %v1773 = vsel %vm1750, %v1729, %v1731
        %v1774 = vsel %vm1750, %v1731, %v1733
        %v1775 = vsel %vm1750, %v1733, %v1735
        %v1776 = vsel %vm1750, %v1735, %v1737
        %v1777 = vsel %vm1750, %v1737, %v1739
        %v1778 = vsel %vm1750, %v1739, %v1741
        %v1779 = vsel %vm1750, %v1741, %v1743
        %v1780 = vsel %vm1750, %v1743, %v1745
        %v1781 = vsel %vm1750, %v1745, %v1747
        %v1782 = vsel %vm1750, %v1747, %v1749
        %v1816 = vsel %vm434, %v1680, 0
        %v1819 = vsel %vm434, %v1681, 0
        %1821 = vmatprep.subr.mxu0 %v1752
        %1822 = vmatpush1.msra.mxu0 %v1751
        %1823 = vmatprep.subr.mxu0 %v1768
        %1824 = vmatpush1.msra.mxu0 %v1767
        %1825 = vmatprep.subr.mxu0 0.0
        %1826 = vmatpush1.msra.mxu0 0.0
        %1827 = vmatprep.subr.mxu0 0.0
        %1828 = vmatpush1.msra.mxu0 0.0
        %1829 = vmatprep.subr.mxu0 0.0
        %1830 = vmatpush1.msra.mxu0 0.0
        %1831 = vmatprep.subr.mxu0 0.0
        %1832 = vmatpush1.msra.mxu0 0.0
        %1833 = vmatprep.subr.mxu0 0.0
        %1834 = vmatpush1.msra.mxu0 0.0
        %1835 = vmatprep.subr.mxu0 0.0
        %1836 = vmatpush1.msra.mxu0 0.0
        %1837 = vmatprep.subr.mxu0 0.0
        %1838 = vmatpush1.msra.mxu0 0.0
        %1839 = vmatprep.subr.mxu0 0.0
        %1840 = vmatpush1.msra.mxu0 0.0
        %1841 = vmatprep.subr.mxu0 0.0
        %1842 = vmatpush1.msra.mxu0 0.0
        %1843 = vmatprep.subr.mxu0 0.0
        %1844 = vmatpush1.msra.mxu0 0.0
        %1845 = vmatprep.subr.mxu0 0.0
        %1846 = vmatpush1.msra.mxu0 0.0
        %1847 = vmatprep.subr.mxu0 0.0
        %1848 = vmatpush1.msra.mxu0 0.0
        %1849 = vmatprep.subr.mxu0 0.0
        %1850 = vmatpush1.msra.mxu0 0.0
        %1851 = vmatprep.subr.mxu0 0.0
        %1852 = vmatpush1.msra.mxu0 0.0
        %1853 = vmatprep.subr.mxu0 0.0
        %1854 = vmatpush1.msra.mxu0 0.0
        %1855 = vmatprep.subr.mxu0 0.0
        %1856 = vmatpush1.msra.mxu0 0.0
        %1857 = vmatprep.subr.mxu0 0.0
        %1858 = vmatpush1.msra.mxu0 0.0
        %1859 = vmatprep.subr.mxu0 0.0
        %1860 = vmatpush1.msra.mxu0 0.0
        %1861 = vmatprep.subr.mxu0 0.0
        %1862 = vmatpush1.msra.mxu0 0.0
        %1863 = vmatprep.subr.mxu0 0.0
        %1864 = vmatpush1.msra.mxu0 0.0
        %1865 = vmatprep.subr.mxu0 0.0
        %1866 = vmatpush1.msra.mxu0 0.0
        %1867 = vmatprep.subr.mxu0 0.0
        %1868 = vmatpush1.msra.mxu0 0.0
        %1869 = vmatprep.subr.mxu0 0.0
        %1870 = vmatpush1.msra.mxu0 0.0
        %1871 = vmatprep.subr.mxu0 0.0
        %1872 = vmatpush1.msra.mxu0 0.0
        %1873 = vmatprep.subr.mxu0 0.0
        %1874 = vmatpush1.msra.mxu0 0.0
        %1875 = vmatprep.subr.mxu0 0.0
        %1876 = vmatpush1.msra.mxu0 0.0
        %1877 = vmatprep.subr.mxu0 0.0
        %1878 = vmatpush1.msra.mxu0 0.0
        %1879 = vmatprep.subr.mxu0 0.0
        %1880 = vmatpush1.msra.mxu0 0.0
        %1881 = vmatprep.subr.mxu0 0.0
        %1882 = vmatpush1.msra.mxu0 0.0
        %1883 = vmatprep.subr.mxu0 0.0
        %1884 = vmatpush1.msra.mxu0 0.0
        %1885 = vmatprep.mubr.f32.mxu0 0.0
        %1886 = vmatmul.mubr.f32.gmra.mrb[0].mxu0 %v1816
        %v1887 = vpop.f32.mrb[0].mxu0
        %v1888 = vadd.f32 0.0, %v1887
        %v1889 = vpop.f32.mrb[0].mxu0
        %v1890 = vadd.f32 0.0, %v1889
        %1891 = vmatprep.mubr.f32.mxu0 0.0
        %1892 = vmatmul.mubr.f32.gmra.mrb[0].mxu0 %v1819
        %v1893 = vpop.f32.mrb[0].mxu0
        %v1894 = vadd.f32 0.0, %v1893
        %v1895 = vpop.f32.mrb[0].mxu0
        %v1896 = vadd.f32 0.0, %v1895
        %1897 = vdwg.mxu0
        %1898 = vmatprep.subr.mxu0 %v1754
        %1899 = vmatpush1.msra.mxu0 %v1753
        %1900 = vmatprep.subr.mxu0 %v1770
        %1901 = vmatpush1.msra.mxu0 %v1769
        %1902 = vmatprep.subr.mxu0 0.0
        %1903 = vmatpush1.msra.mxu0 0.0
        %1904 = vmatprep.subr.mxu0 0.0
        %1905 = vmatpush1.msra.mxu0 0.0
        %1906 = vmatprep.subr.mxu0 0.0
        %1907 = vmatpush1.msra.mxu0 0.0
        %1908 = vmatprep.subr.mxu0 0.0
        %1909 = vmatpush1.msra.mxu0 0.0
        %1910 = vmatprep.subr.mxu0 0.0
        %1911 = vmatpush1.msra.mxu0 0.0
        %1912 = vmatprep.subr.mxu0 0.0
        %1913 = vmatpush1.msra.mxu0 0.0
        %1914 = vmatprep.subr.mxu0 0.0
        %1915 = vmatpush1.msra.mxu0 0.0
        %1916 = vmatprep.subr.mxu0 0.0
        %1917 = vmatpush1.msra.mxu0 0.0
        %1918 = vmatprep.subr.mxu0 0.0
        %1919 = vmatpush1.msra.mxu0 0.0
        %1920 = vmatprep.subr.mxu0 0.0
        %1921 = vmatpush1.msra.mxu0 0.0
        %1922 = vmatprep.subr.mxu0 0.0
        %1923 = vmatpush1.msra.mxu0 0.0
        %1924 = vmatprep.subr.mxu0 0.0
        %1925 = vmatpush1.msra.mxu0 0.0
        %1926 = vmatprep.subr.mxu0 0.0
        %1927 = vmatpush1.msra.mxu0 0.0
        %1928 = vmatprep.subr.mxu0 0.0
        %1929 = vmatpush1.msra.mxu0 0.0
        %1930 = vmatprep.subr.mxu0 0.0
        %1931 = vmatpush1.msra.mxu0 0.0
        %1932 = vmatprep.subr.mxu0 0.0
        %1933 = vmatpush1.msra.mxu0 0.0
        %1934 = vmatprep.subr.mxu0 0.0
        %1935 = vmatpush1.msra.mxu0 0.0
        %1936 = vmatprep.subr.mxu0 0.0
        %1937 = vmatpush1.msra.mxu0 0.0
        %1938 = vmatprep.subr.mxu0 0.0
        %1939 = vmatpush1.msra.mxu0 0.0
        %1940 = vmatprep.subr.mxu0 0.0
        %1941 = vmatpush1.msra.mxu0 0.0
        %1942 = vmatprep.subr.mxu0 0.0
        %1943 = vmatpush1.msra.mxu0 0.0
        %1944 = vmatprep.subr.mxu0 0.0
        %1945 = vmatpush1.msra.mxu0 0.0
        %1946 = vmatprep.subr.mxu0 0.0
        %1947 = vmatpush1.msra.mxu0 0.0
        %1948 = vmatprep.subr.mxu0 0.0
        %1949 = vmatpush1.msra.mxu0 0.0
        %1950 = vmatprep.subr.mxu0 0.0
        %1951 = vmatpush1.msra.mxu0 0.0
        %1952 = vmatprep.subr.mxu0 0.0
        %1953 = vmatpush1.msra.mxu0 0.0
        %1954 = vmatprep.subr.mxu0 0.0
        %1955 = vmatpush1.msra.mxu0 0.0
        %1956 = vmatprep.subr.mxu0 0.0
        %1957 = vmatpush1.msra.mxu0 0.0
        %1958 = vmatprep.subr.mxu0 0.0
        %1959 = vmatpush1.msra.mxu0 0.0
        %1960 = vmatprep.subr.mxu0 0.0
        %1961 = vmatpush1.msra.mxu0 0.0
        %1962 = vmatprep.mubr.f32.mxu0 0.0
        %1963 = vmatmul.mubr.f32.gmra.mrb[0].mxu0 %v1816
        %v1964 = vpop.f32.mrb[0].mxu0
        %v1965 = vadd.f32 0.0, %v1964
        %v1966 = vpop.f32.mrb[0].mxu0
        %v1967 = vadd.f32 0.0, %v1966
        %1968 = vmatprep.mubr.f32.mxu0 0.0
        %1969 = vmatmul.mubr.f32.gmra.mrb[0].mxu0 %v1819
        %v1970 = vpop.f32.mrb[0].mxu0
        %v1971 = vadd.f32 0.0, %v1970
        %v1972 = vpop.f32.mrb[0].mxu0
        %v1973 = vadd.f32 0.0, %v1972
        %1974 = vdwg.mxu0
        %1975 = vmatprep.subr.mxu0 %v1756
        %1976 = vmatpush1.msra.mxu0 %v1755
        %1977 = vmatprep.subr.mxu0 %v1772
        %1978 = vmatpush1.msra.mxu0 %v1771
        %1979 = vmatprep.subr.mxu0 0.0
        %1980 = vmatpush1.msra.mxu0 0.0
        %1981 = vmatprep.subr.mxu0 0.0
        %1982 = vmatpush1.msra.mxu0 0.0
        %1983 = vmatprep.subr.mxu0 0.0
        %1984 = vmatpush1.msra.mxu0 0.0
        %1985 = vmatprep.subr.mxu0 0.0
        %1986 = vmatpush1.msra.mxu0 0.0
        %1987 = vmatprep.subr.mxu0 0.0
        %1988 = vmatpush1.msra.mxu0 0.0
        %1989 = vmatprep.subr.mxu0 0.0
        %1990 = vmatpush1.msra.mxu0 0.0
        %1991 = vmatprep.subr.mxu0 0.0
        %1992 = vmatpush1.msra.mxu0 0.0
        %1993 = vmatprep.subr.mxu0 0.0
        %1994 = vmatpush1.msra.mxu0 0.0
        %1995 = vmatprep.subr.mxu0 0.0
        %1996 = vmatpush1.msra.mxu0 0.0
        %1997 = vmatprep.subr.mxu0 0.0
        %1998 = vmatpush1.msra.mxu0 0.0
        %1999 = vmatprep.subr.mxu0 0.0
        %2000 = vmatpush1.msra.mxu0 0.0
        %2001 = vmatprep.subr.mxu0 0.0
        %2002 = vmatpush1.msra.mxu0 0.0
        %2003 = vmatprep.subr.mxu0 0.0
        %2004 = vmatpush1.msra.mxu0 0.0
        %2005 = vmatprep.subr.mxu0 0.0
        %2006 = vmatpush1.msra.mxu0 0.0
        %2007 = vmatprep.subr.mxu0 0.0
        %2008 = vmatpush1.msra.mxu0 0.0
        %2009 = vmatprep.subr.mxu0 0.0
        %2010 = vmatpush1.msra.mxu0 0.0
        %2011 = vmatprep.subr.mxu0 0.0
        %2012 = vmatpush1.msra.mxu0 0.0
        %2013 = vmatprep.subr.mxu0 0.0
        %2014 = vmatpush1.msra.mxu0 0.0
        %2015 = vmatprep.subr.mxu0 0.0
        %2016 = vmatpush1.msra.mxu0 0.0
        %2017 = vmatprep.subr.mxu0 0.0
        %2018 = vmatpush1.msra.mxu0 0.0
        %2019 = vmatprep.subr.mxu0 0.0
        %2020 = vmatpush1.msra.mxu0 0.0
        %2021 = vmatprep.subr.mxu0 0.0
        %2022 = vmatpush1.msra.mxu0 0.0
        %2023 = vmatprep.subr.mxu0 0.0
        %2024 = vmatpush1.msra.mxu0 0.0
        %2025 = vmatprep.subr.mxu0 0.0
        %2026 = vmatpush1.msra.mxu0 0.0
        %2027 = vmatprep.subr.mxu0 0.0
        %2028 = vmatpush1.msra.mxu0 0.0
        %2029 = vmatprep.subr.mxu0 0.0
        %2030 = vmatpush1.msra.mxu0 0.0
        %2031 = vmatprep.subr.mxu0 0.0
        %2032 = vmatpush1.msra.mxu0 0.0
        %2033 = vmatprep.subr.mxu0 0.0
        %2034 = vmatpush1.msra.mxu0 0.0
        %2035 = vmatprep.subr.mxu0 0.0
        %2036 = vmatpush1.msra.mxu0 0.0
        %2037 = vmatprep.subr.mxu0 0.0
        %2038 = vmatpush1.msra.mxu0 0.0
        %2039 = vmatprep.mubr.f32.mxu0 0.0
        %2040 = vmatmul.mubr.f32.gmra.mrb[0].mxu0 %v1816
        %v2041 = vpop.f32.mrb[0].mxu0
        %v2042 = vadd.f32 0.0, %v2041
        %v2043 = vpop.f32.mrb[0].mxu0
        %v2044 = vadd.f32 0.0, %v2043
        %2045 = vmatprep.mubr.f32.mxu0 0.0
        %2046 = vmatmul.mubr.f32.gmra.mrb[0].mxu0 %v1819
        %v2047 = vpop.f32.mrb[0].mxu0
        %v2048 = vadd.f32 0.0, %v2047
        %v2049 = vpop.f32.mrb[0].mxu0
        %v2050 = vadd.f32 0.0, %v2049
        %2051 = vdwg.mxu0
        %2052 = vmatprep.subr.mxu0 %v1758
        %2053 = vmatpush1.msra.mxu0 %v1757
        %2054 = vmatprep.subr.mxu0 %v1774
        %2055 = vmatpush1.msra.mxu0 %v1773
        %2056 = vmatprep.subr.mxu0 0.0
        %2057 = vmatpush1.msra.mxu0 0.0
        %2058 = vmatprep.subr.mxu0 0.0
        %2059 = vmatpush1.msra.mxu0 0.0
        %2060 = vmatprep.subr.mxu0 0.0
        %2061 = vmatpush1.msra.mxu0 0.0
        %2062 = vmatprep.subr.mxu0 0.0
        %2063 = vmatpush1.msra.mxu0 0.0
        %2064 = vmatprep.subr.mxu0 0.0
        %2065 = vmatpush1.msra.mxu0 0.0
        %2066 = vmatprep.subr.mxu0 0.0
        %2067 = vmatpush1.msra.mxu0 0.0
        %2068 = vmatprep.subr.mxu0 0.0
        %2069 = vmatpush1.msra.mxu0 0.0
        %2070 = vmatprep.subr.mxu0 0.0
        %2071 = vmatpush1.msra.mxu0 0.0
        %2072 = vmatprep.subr.mxu0 0.0
        %2073 = vmatpush1.msra.mxu0 0.0
        %2074 = vmatprep.subr.mxu0 0.0
        %2075 = vmatpush1.msra.mxu0 0.0
        %2076 = vmatprep.subr.mxu0 0.0
        %2077 = vmatpush1.msra.mxu0 0.0
        %2078 = vmatprep.subr.mxu0 0.0
        %2079 = vmatpush1.msra.mxu0 0.0
        %2080 = vmatprep.subr.mxu0 0.0
        %2081 = vmatpush1.msra.mxu0 0.0
        %2082 = vmatprep.subr.mxu0 0.0
        %2083 = vmatpush1.msra.mxu0 0.0
        %2084 = vmatprep.subr.mxu0 0.0
        %2085 = vmatpush1.msra.mxu0 0.0
        %2086 = vmatprep.subr.mxu0 0.0
        %2087 = vmatpush1.msra.mxu0 0.0
        %2088 = vmatprep.subr.mxu0 0.0
        %2089 = vmatpush1.msra.mxu0 0.0
        %2090 = vmatprep.subr.mxu0 0.0
        %2091 = vmatpush1.msra.mxu0 0.0
        %2092 = vmatprep.subr.mxu0 0.0
        %2093 = vmatpush1.msra.mxu0 0.0
        %2094 = vmatprep.subr.mxu0 0.0
        %2095 = vmatpush1.msra.mxu0 0.0
        %2096 = vmatprep.subr.mxu0 0.0
        %2097 = vmatpush1.msra.mxu0 0.0
        %2098 = vmatprep.subr.mxu0 0.0
        %2099 = vmatpush1.msra.mxu0 0.0
        %2100 = vmatprep.subr.mxu0 0.0
        %2101 = vmatpush1.msra.mxu0 0.0
        %2102 = vmatprep.subr.mxu0 0.0
        %2103 = vmatpush1.msra.mxu0 0.0
        %2104 = vmatprep.subr.mxu0 0.0
        %2105 = vmatpush1.msra.mxu0 0.0
        %2106 = vmatprep.subr.mxu0 0.0
        %2107 = vmatpush1.msra.mxu0 0.0
        %2108 = vmatprep.subr.mxu0 0.0
        %2109 = vmatpush1.msra.mxu0 0.0
        %2110 = vmatprep.subr.mxu0 0.0
        %2111 = vmatpush1.msra.mxu0 0.0
        %2112 = vmatprep.subr.mxu0 0.0
        %2113 = vmatpush1.msra.mxu0 0.0
        %2114 = vmatprep.subr.mxu0 0.0
        %2115 = vmatpush1.msra.mxu0 0.0
        %2116 = vmatprep.mubr.f32.mxu0 0.0
        %2117 = vmatmul.mubr.f32.gmra.mrb[0].mxu0 %v1816
        %v2118 = vpop.f32.mrb[0].mxu0
        %v2119 = vadd.f32 0.0, %v2118
        %v2120 = vpop.f32.mrb[0].mxu0
        %v2121 = vadd.f32 0.0, %v2120
        %2122 = vmatprep.mubr.f32.mxu0 0.0
        %2123 = vmatmul.mubr.f32.gmra.mrb[0].mxu0 %v1819
        %v2124 = vpop.f32.mrb[0].mxu0
        %v2125 = vadd.f32 0.0, %v2124
        %v2126 = vpop.f32.mrb[0].mxu0
        %v2127 = vadd.f32 0.0, %v2126
        %2128 = vdwg.mxu0
        %2129 = vmatprep.subr.mxu0 %v1760
        %2130 = vmatpush1.msra.mxu0 %v1759
        %2131 = vmatprep.subr.mxu0 %v1776
        %2132 = vmatpush1.msra.mxu0 %v1775
        %2133 = vmatprep.subr.mxu0 0.0
        %2134 = vmatpush1.msra.mxu0 0.0
        %2135 = vmatprep.subr.mxu0 0.0
        %2136 = vmatpush1.msra.mxu0 0.0
        %2137 = vmatprep.subr.mxu0 0.0
        %2138 = vmatpush1.msra.mxu0 0.0
        %2139 = vmatprep.subr.mxu0 0.0
        %2140 = vmatpush1.msra.mxu0 0.0
        %2141 = vmatprep.subr.mxu0 0.0
        %2142 = vmatpush1.msra.mxu0 0.0
        %2143 = vmatprep.subr.mxu0 0.0
        %2144 = vmatpush1.msra.mxu0 0.0
        %2145 = vmatprep.subr.mxu0 0.0
        %2146 = vmatpush1.msra.mxu0 0.0
        %2147 = vmatprep.subr.mxu0 0.0
        %2148 = vmatpush1.msra.mxu0 0.0
        %2149 = vmatprep.subr.mxu0 0.0
        %2150 = vmatpush1.msra.mxu0 0.0
        %2151 = vmatprep.subr.mxu0 0.0
        %2152 = vmatpush1.msra.mxu0 0.0
        %2153 = vmatprep.subr.mxu0 0.0
        %2154 = vmatpush1.msra.mxu0 0.0
        %2155 = vmatprep.subr.mxu0 0.0
        %2156 = vmatpush1.msra.mxu0 0.0
        %2157 = vmatprep.subr.mxu0 0.0
        %2158 = vmatpush1.msra.mxu0 0.0
        %2159 = vmatprep.subr.mxu0 0.0
        %2160 = vmatpush1.msra.mxu0 0.0
        %2161 = vmatprep.subr.mxu0 0.0
        %2162 = vmatpush1.msra.mxu0 0.0
        %2163 = vmatprep.subr.mxu0 0.0
        %2164 = vmatpush1.msra.mxu0 0.0
        %2165 = vmatprep.subr.mxu0 0.0
        %2166 = vmatpush1.msra.mxu0 0.0
        %2167 = vmatprep.subr.mxu0 0.0
        %2168 = vmatpush1.msra.mxu0 0.0
        %2169 = vmatprep.subr.mxu0 0.0
        %2170 = vmatpush1.msra.mxu0 0.0
        %2171 = vmatprep.subr.mxu0 0.0
        %2172 = vmatpush1.msra.mxu0 0.0
        %2173 = vmatprep.subr.mxu0 0.0
        %2174 = vmatpush1.msra.mxu0 0.0
        %2175 = vmatprep.subr.mxu0 0.0
        %2176 = vmatpush1.msra.mxu0 0.0
        %2177 = vmatprep.subr.mxu0 0.0
        %2178 = vmatpush1.msra.mxu0 0.0
        %2179 = vmatprep.subr.mxu0 0.0
        %2180 = vmatpush1.msra.mxu0 0.0
        %2181 = vmatprep.subr.mxu0 0.0
        %2182 = vmatpush1.msra.mxu0 0.0
        %2183 = vmatprep.subr.mxu0 0.0
        %2184 = vmatpush1.msra.mxu0 0.0
        %2185 = vmatprep.subr.mxu0 0.0
        %2186 = vmatpush1.msra.mxu0 0.0
        %2187 = vmatprep.subr.mxu0 0.0
        %2188 = vmatpush1.msra.mxu0 0.0
        %2189 = vmatprep.subr.mxu0 0.0
        %2190 = vmatpush1.msra.mxu0 0.0
        %2191 = vmatprep.subr.mxu0 0.0
        %2192 = vmatpush1.msra.mxu0 0.0
        %2193 = vmatprep.mubr.f32.mxu0 0.0
        %2194 = vmatmul.mubr.f32.gmra.mrb[0].mxu0 %v1816
        %v2195 = vpop.f32.mrb[0].mxu0
        %v2196 = vadd.f32 0.0, %v2195
        %v2197 = vpop.f32.mrb[0].mxu0
        %v2198 = vadd.f32 0.0, %v2197
        %2199 = vmatprep.mubr.f32.mxu0 0.0
        %2200 = vmatmul.mubr.f32.gmra.mrb[0].mxu0 %v1819
        %v2201 = vpop.f32.mrb[0].mxu0
        %v2202 = vadd.f32 0.0, %v2201
        %v2203 = vpop.f32.mrb[0].mxu0
        %v2204 = vadd.f32 0.0, %v2203
        %2205 = vdwg.mxu0
        %2206 = vmatprep.subr.mxu0 %v1762
        %2207 = vmatpush1.msra.mxu0 %v1761
        %2208 = vmatprep.subr.mxu0 %v1778
        %2209 = vmatpush1.msra.mxu0 %v1777
        %2210 = vmatprep.subr.mxu0 0.0
        %2211 = vmatpush1.msra.mxu0 0.0
        %2212 = vmatprep.subr.mxu0 0.0
        %2213 = vmatpush1.msra.mxu0 0.0
        %2214 = vmatprep.subr.mxu0 0.0
        %2215 = vmatpush1.msra.mxu0 0.0
        %2216 = vmatprep.subr.mxu0 0.0
        %2217 = vmatpush1.msra.mxu0 0.0
        %2218 = vmatprep.subr.mxu0 0.0
        %2219 = vmatpush1.msra.mxu0 0.0
        %2220 = vmatprep.subr.mxu0 0.0
        %2221 = vmatpush1.msra.mxu0 0.0
        %2222 = vmatprep.subr.mxu0 0.0
        %2223 = vmatpush1.msra.mxu0 0.0
        %2224 = vmatprep.subr.mxu0 0.0
        %2225 = vmatpush1.msra.mxu0 0.0
        %2226 = vmatprep.subr.mxu0 0.0
        %2227 = vmatpush1.msra.mxu0 0.0
        %2228 = vmatprep.subr.mxu0 0.0
        %2229 = vmatpush1.msra.mxu0 0.0
        %2230 = vmatprep.subr.mxu0 0.0
        %2231 = vmatpush1.msra.mxu0 0.0
        %2232 = vmatprep.subr.mxu0 0.0
        %2233 = vmatpush1.msra.mxu0 0.0
        %2234 = vmatprep.subr.mxu0 0.0
        %2235 = vmatpush1.msra.mxu0 0.0
        %2236 = vmatprep.subr.mxu0 0.0
        %2237 = vmatpush1.msra.mxu0 0.0
        %2238 = vmatprep.subr.mxu0 0.0
        %2239 = vmatpush1.msra.mxu0 0.0
        %2240 = vmatprep.subr.mxu0 0.0
        %2241 = vmatpush1.msra.mxu0 0.0
        %2242 = vmatprep.subr.mxu0 0.0
        %2243 = vmatpush1.msra.mxu0 0.0
        %2244 = vmatprep.subr.mxu0 0.0
        %2245 = vmatpush1.msra.mxu0 0.0
        %2246 = vmatprep.subr.mxu0 0.0
        %2247 = vmatpush1.msra.mxu0 0.0
        %2248 = vmatprep.subr.mxu0 0.0
        %2249 = vmatpush1.msra.mxu0 0.0
        %2250 = vmatprep.subr.mxu0 0.0
        %2251 = vmatpush1.msra.mxu0 0.0
        %2252 = vmatprep.subr.mxu0 0.0
        %2253 = vmatpush1.msra.mxu0 0.0
        %2254 = vmatprep.subr.mxu0 0.0
        %2255 = vmatpush1.msra.mxu0 0.0
        %2256 = vmatprep.subr.mxu0 0.0
        %2257 = vmatpush1.msra.mxu0 0.0
        %2258 = vmatprep.subr.mxu0 0.0
        %2259 = vmatpush1.msra.mxu0 0.0
        %2260 = vmatprep.subr.mxu0 0.0
        %2261 = vmatpush1.msra.mxu0 0.0
        %2262 = vmatprep.subr.mxu0 0.0
        %2263 = vmatpush1.msra.mxu0 0.0
        %2264 = vmatprep.subr.mxu0 0.0
        %2265 = vmatpush1.msra.mxu0 0.0
        %2266 = vmatprep.subr.mxu0 0.0
        %2267 = vmatpush1.msra.mxu0 0.0
        %2268 = vmatprep.subr.mxu0 0.0
        %2269 = vmatpush1.msra.mxu0 0.0
        %2270 = vmatprep.mubr.f32.mxu0 0.0
        %2271 = vmatmul.mubr.f32.gmra.mrb[0].mxu0 %v1816
        %v2272 = vpop.f32.mrb[0].mxu0
        %v2273 = vadd.f32 0.0, %v2272
        %v2274 = vpop.f32.mrb[0].mxu0
        %v2275 = vadd.f32 0.0, %v2274
        %2276 = vmatprep.mubr.f32.mxu0 0.0
        %2277 = vmatmul.mubr.f32.gmra.mrb[0].mxu0 %v1819
        %v2278 = vpop.f32.mrb[0].mxu0
        %v2279 = vadd.f32 0.0, %v2278
        %v2280 = vpop.f32.mrb[0].mxu0
        %v2281 = vadd.f32 0.0, %v2280
        %2282 = vdwg.mxu0
        %2283 = vmatprep.subr.mxu0 %v1764
        %2284 = vmatpush1.msra.mxu0 %v1763
        %2285 = vmatprep.subr.mxu0 %v1780
        %2286 = vmatpush1.msra.mxu0 %v1779
        %2287 = vmatprep.subr.mxu0 0.0
        %2288 = vmatpush1.msra.mxu0 0.0
        %2289 = vmatprep.subr.mxu0 0.0
        %2290 = vmatpush1.msra.mxu0 0.0
        %2291 = vmatprep.subr.mxu0 0.0
        %2292 = vmatpush1.msra.mxu0 0.0
        %2293 = vmatprep.subr.mxu0 0.0
        %2294 = vmatpush1.msra.mxu0 0.0
        %2295 = vmatprep.subr.mxu0 0.0
        %2296 = vmatpush1.msra.mxu0 0.0
        %2297 = vmatprep.subr.mxu0 0.0
        %2298 = vmatpush1.msra.mxu0 0.0
        %2299 = vmatprep.subr.mxu0 0.0
        %2300 = vmatpush1.msra.mxu0 0.0
        %2301 = vmatprep.subr.mxu0 0.0
        %2302 = vmatpush1.msra.mxu0 0.0
        %2303 = vmatprep.subr.mxu0 0.0
        %2304 = vmatpush1.msra.mxu0 0.0
        %2305 = vmatprep.subr.mxu0 0.0
        %2306 = vmatpush1.msra.mxu0 0.0
        %2307 = vmatprep.subr.mxu0 0.0
        %2308 = vmatpush1.msra.mxu0 0.0
        %2309 = vmatprep.subr.mxu0 0.0
        %2310 = vmatpush1.msra.mxu0 0.0
        %2311 = vmatprep.subr.mxu0 0.0
        %2312 = vmatpush1.msra.mxu0 0.0
        %2313 = vmatprep.subr.mxu0 0.0
        %2314 = vmatpush1.msra.mxu0 0.0
        %2315 = vmatprep.subr.mxu0 0.0
        %2316 = vmatpush1.msra.mxu0 0.0
        %2317 = vmatprep.subr.mxu0 0.0
        %2318 = vmatpush1.msra.mxu0 0.0
        %2319 = vmatprep.subr.mxu0 0.0
        %2320 = vmatpush1.msra.mxu0 0.0
        %2321 = vmatprep.subr.mxu0 0.0
        %2322 = vmatpush1.msra.mxu0 0.0
        %2323 = vmatprep.subr.mxu0 0.0
        %2324 = vmatpush1.msra.mxu0 0.0
        %2325 = vmatprep.subr.mxu0 0.0
        %2326 = vmatpush1.msra.mxu0 0.0
        %2327 = vmatprep.subr.mxu0 0.0
        %2328 = vmatpush1.msra.mxu0 0.0
        %2329 = vmatprep.subr.mxu0 0.0
        %2330 = vmatpush1.msra.mxu0 0.0
        %2331 = vmatprep.subr.mxu0 0.0
        %2332 = vmatpush1.msra.mxu0 0.0
        %2333 = vmatprep.subr.mxu0 0.0
        %2334 = vmatpush1.msra.mxu0 0.0
        %2335 = vmatprep.subr.mxu0 0.0
        %2336 = vmatpush1.msra.mxu0 0.0
        %2337 = vmatprep.subr.mxu0 0.0
        %2338 = vmatpush1.msra.mxu0 0.0
        %2339 = vmatprep.subr.mxu0 0.0
        %2340 = vmatpush1.msra.mxu0 0.0
        %2341 = vmatprep.subr.mxu0 0.0
        %2342 = vmatpush1.msra.mxu0 0.0
        %2343 = vmatprep.subr.mxu0 0.0
        %2344 = vmatpush1.msra.mxu0 0.0
        %2345 = vmatprep.subr.mxu0 0.0
        %2346 = vmatpush1.msra.mxu0 0.0
        %2347 = vmatprep.mubr.f32.mxu0 0.0
        %2348 = vmatmul.mubr.f32.gmra.mrb[0].mxu0 %v1816
        %v2349 = vpop.f32.mrb[0].mxu0
        %v2350 = vadd.f32 0.0, %v2349
        %v2351 = vpop.f32.mrb[0].mxu0
        %v2352 = vadd.f32 0.0, %v2351
        %2353 = vmatprep.mubr.f32.mxu0 0.0
        %2354 = vmatmul.mubr.f32.gmra.mrb[0].mxu0 %v1819
        %v2355 = vpop.f32.mrb[0].mxu0
        %v2356 = vadd.f32 0.0, %v2355
        %v2357 = vpop.f32.mrb[0].mxu0
        %v2358 = vadd.f32 0.0, %v2357
        %2359 = vdwg.mxu0
        %2360 = vmatprep.subr.mxu0 %v1766
        %2361 = vmatpush1.msra.mxu0 %v1765
        %2362 = vmatprep.subr.mxu0 %v1782
        %2363 = vmatpush1.msra.mxu0 %v1781
        %2364 = vmatprep.subr.mxu0 0.0
        %2365 = vmatpush1.msra.mxu0 0.0
        %2366 = vmatprep.subr.mxu0 0.0
        %2367 = vmatpush1.msra.mxu0 0.0
        %2368 = vmatprep.subr.mxu0 0.0
        %2369 = vmatpush1.msra.mxu0 0.0
        %2370 = vmatprep.subr.mxu0 0.0
        %2371 = vmatpush1.msra.mxu0 0.0
        %2372 = vmatprep.subr.mxu0 0.0
        %2373 = vmatpush1.msra.mxu0 0.0
        %2374 = vmatprep.subr.mxu0 0.0
        %2375 = vmatpush1.msra.mxu0 0.0
        %2376 = vmatprep.subr.mxu0 0.0
        %2377 = vmatpush1.msra.mxu0 0.0
        %2378 = vmatprep.subr.mxu0 0.0
        %2379 = vmatpush1.msra.mxu0 0.0
        %2380 = vmatprep.subr.mxu0 0.0
        %2381 = vmatpush1.msra.mxu0 0.0
        %2382 = vmatprep.subr.mxu0 0.0
        %2383 = vmatpush1.msra.mxu0 0.0
        %2384 = vmatprep.subr.mxu0 0.0
        %2385 = vmatpush1.msra.mxu0 0.0
        %2386 = vmatprep.subr.mxu0 0.0
        %2387 = vmatpush1.msra.mxu0 0.0
        %2388 = vmatprep.subr.mxu0 0.0
        %2389 = vmatpush1.msra.mxu0 0.0
        %2390 = vmatprep.subr.mxu0 0.0
        %2391 = vmatpush1.msra.mxu0 0.0
        %2392 = vmatprep.subr.mxu0 0.0
        %2393 = vmatpush1.msra.mxu0 0.0
        %2394 = vmatprep.subr.mxu0 0.0
        %2395 = vmatpush1.msra.mxu0 0.0
        %2396 = vmatprep.subr.mxu0 0.0
        %2397 = vmatpush1.msra.mxu0 0.0
        %2398 = vmatprep.subr.mxu0 0.0
        %2399 = vmatpush1.msra.mxu0 0.0
        %2400 = vmatprep.subr.mxu0 0.0
        %2401 = vmatpush1.msra.mxu0 0.0
        %2402 = vmatprep.subr.mxu0 0.0
        %2403 = vmatpush1.msra.mxu0 0.0
        %2404 = vmatprep.subr.mxu0 0.0
        %2405 = vmatpush1.msra.mxu0 0.0
        %2406 = vmatprep.subr.mxu0 0.0
        %2407 = vmatpush1.msra.mxu0 0.0
        %2408 = vmatprep.subr.mxu0 0.0
        %2409 = vmatpush1.msra.mxu0 0.0
        %2410 = vmatprep.subr.mxu0 0.0
        %2411 = vmatpush1.msra.mxu0 0.0
        %2412 = vmatprep.subr.mxu0 0.0
        %2413 = vmatpush1.msra.mxu0 0.0
        %2414 = vmatprep.subr.mxu0 0.0
        %2415 = vmatpush1.msra.mxu0 0.0
        %2416 = vmatprep.subr.mxu0 0.0
        %2417 = vmatpush1.msra.mxu0 0.0
        %2418 = vmatprep.subr.mxu0 0.0
        %2419 = vmatpush1.msra.mxu0 0.0
        %2420 = vmatprep.subr.mxu0 0.0
        %2421 = vmatpush1.msra.mxu0 0.0
        %2422 = vmatprep.subr.mxu0 0.0
        %2423 = vmatpush1.msra.mxu0 0.0
        %2424 = vmatprep.mubr.f32.mxu0 0.0
        %2425 = vmatmul.mubr.f32.gmra.mrb[0].mxu0 %v1816
        %v2426 = vpop.f32.mrb[0].mxu0
        %v2427 = vadd.f32 0.0, %v2426
        %v2428 = vpop.f32.mrb[0].mxu0
        %v2429 = vadd.f32 0.0, %v2428
        %2430 = vmatprep.mubr.f32.mxu0 0.0
        %2431 = vmatmul.mubr.f32.gmra.mrb[0].mxu0 %v1819
        %v2432 = vpop.f32.mrb[0].mxu0
        %v2433 = vadd.f32 0.0, %v2432
        %v2434 = vpop.f32.mrb[0].mxu0
        %v2435 = vadd.f32 0.0, %v2434
        %2436 = vdwg.mxu0
        %v2437 = vadd.f32 %v1130, %v1888
        %v2438 = vadd.f32 %v1132, %v1890
        %v2439 = vadd.f32 %v1207, %v1965
        %v2440 = vadd.f32 %v1209, %v1967
        %v2441 = vadd.f32 %v1284, %v2042
        %v2442 = vadd.f32 %v1286, %v2044
        %v2443 = vadd.f32 %v1361, %v2119
        %v2444 = vadd.f32 %v1363, %v2121
        %v2445 = vadd.f32 %v1438, %v2196
        %v2446 = vadd.f32 %v1440, %v2198
        %v2447 = vadd.f32 %v1515, %v2273
        %v2448 = vadd.f32 %v1517, %v2275
        %v2449 = vadd.f32 %v1592, %v2350
        %v2450 = vadd.f32 %v1594, %v2352
        %v2451 = vadd.f32 %v1669, %v2427
        %v2452 = vadd.f32 %v1671, %v2429
        %v2453 = vadd.f32 %v1136, %v1894
        %v2454 = vadd.f32 %v1138, %v1896
        %v2455 = vadd.f32 %v1213, %v1971
        %v2456 = vadd.f32 %v1215, %v1973
        %v2457 = vadd.f32 %v1290, %v2048
        %v2458 = vadd.f32 %v1292, %v2050
        %v2459 = vadd.f32 %v1367, %v2125
        %v2460 = vadd.f32 %v1369, %v2127
        %v2461 = vadd.f32 %v1444, %v2202
        %v2462 = vadd.f32 %v1446, %v2204
        %v2463 = vadd.f32 %v1521, %v2279
        %v2464 = vadd.f32 %v1523, %v2281
        %v2465 = vadd.f32 %v1598, %v2356
        %v2466 = vadd.f32 %v1600, %v2358
        %v2467 = vadd.f32 %v1675, %v2433
        %v2468 = vadd.f32 %v1677, %v2435
        %s2469 = scalar_lea.vmem [#allocation6], 48
        %v2470 = vld [vmem:[%s2469] sm:$0xff]
        %v2471 = vld [vmem:[%s2469 + $0x8] sm:$0xff]
        %v2473 = vsel %vm434, %v2470, 0
        %v2476 = vsel %vm434, %v2471, 0
        %2478 = vmatprep.subr.mxu0 %v230
        %2479 = vmatpush1.msra.mxu0 %v229
        %2480 = vmatprep.subr.mxu0 %v246
        %2481 = vmatpush1.msra.mxu0 %v245
        %2482 = vmatprep.subr.mxu0 0.0
        %2483 = vmatpush1.msra.mxu0 0.0
        %2484 = vmatprep.subr.mxu0 0.0
        %2485 = vmatpush1.msra.mxu0 0.0
        %2486 = vmatprep.subr.mxu0 0.0
        %2487 = vmatpush1.msra.mxu0 0.0
        %2488 = vmatprep.subr.mxu0 0.0
        %2489 = vmatpush1.msra.mxu0 0.0
        %2490 = vmatprep.subr.mxu0 0.0
        %2491 = vmatpush1.msra.mxu0 0.0
        %2492 = vmatprep.subr.mxu0 0.0
        %2493 = vmatpush1.msra.mxu0 0.0
        %2494 = vmatprep.subr.mxu0 0.0
        %2495 = vmatpush1.msra.mxu0 0.0
        %2496 = vmatprep.subr.mxu0 0.0
        %2497 = vmatpush1.msra.mxu0 0.0
        %2498 = vmatprep.subr.mxu0 0.0
        %2499 = vmatpush1.msra.mxu0 0.0
        %2500 = vmatprep.subr.mxu0 0.0
        %2501 = vmatpush1.msra.mxu0 0.0
        %2502 = vmatprep.subr.mxu0 0.0
        %2503 = vmatpush1.msra.mxu0 0.0
        %2504 = vmatprep.subr.mxu0 0.0
        %2505 = vmatpush1.msra.mxu0 0.0
        %2506 = vmatprep.subr.mxu0 0.0
        %2507 = vmatpush1.msra.mxu0 0.0
        %2508 = vmatprep.subr.mxu0 0.0
        %2509 = vmatpush1.msra.mxu0 0.0
        %2510 = vmatprep.subr.mxu0 0.0
        %2511 = vmatpush1.msra.mxu0 0.0
        %2512 = vmatprep.subr.mxu0 0.0
        %2513 = vmatpush1.msra.mxu0 0.0
        %2514 = vmatprep.subr.mxu0 0.0
        %2515 = vmatpush1.msra.mxu0 0.0
        %2516 = vmatprep.subr.mxu0 0.0
        %2517 = vmatpush1.msra.mxu0 0.0
        %2518 = vmatprep.subr.mxu0 0.0
        %2519 = vmatpush1.msra.mxu0 0.0
        %2520 = vmatprep.subr.mxu0 0.0
        %2521 = vmatpush1.msra.mxu0 0.0
        %2522 = vmatprep.subr.mxu0 0.0
        %2523 = vmatpush1.msra.mxu0 0.0
        %2524 = vmatprep.subr.mxu0 0.0
        %2525 = vmatpush1.msra.mxu0 0.0
        %2526 = vmatprep.subr.mxu0 0.0
        %2527 = vmatpush1.msra.mxu0 0.0
        %2528 = vmatprep.subr.mxu0 0.0
        %2529 = vmatpush1.msra.mxu0 0.0
        %2530 = vmatprep.subr.mxu0 0.0
        %2531 = vmatpush1.msra.mxu0 0.0
        %2532 = vmatprep.subr.mxu0 0.0
        %2533 = vmatpush1.msra.mxu0 0.0
        %2534 = vmatprep.subr.mxu0 0.0
        %2535 = vmatpush1.msra.mxu0 0.0
        %2536 = vmatprep.subr.mxu0 0.0
        %2537 = vmatpush1.msra.mxu0 0.0
        %2538 = vmatprep.subr.mxu0 0.0
        %2539 = vmatpush1.msra.mxu0 0.0
        %2540 = vmatprep.subr.mxu0 0.0
        %2541 = vmatpush1.msra.mxu0 0.0
        %2542 = vmatprep.mubr.f32.mxu0 0.0
        %2543 = vmatmul.mubr.f32.gmra.mrb[0].mxu0 %v2473
        %v2544 = vpop.f32.mrb[0].mxu0
        %v2545 = vadd.f32 0.0, %v2544
        %v2546 = vpop.f32.mrb[0].mxu0
        %v2547 = vadd.f32 0.0, %v2546
        %2548 = vmatprep.mubr.f32.mxu0 0.0
        %2549 = vmatmul.mubr.f32.gmra.mrb[0].mxu0 %v2476
        %v2550 = vpop.f32.mrb[0].mxu0
        %v2551 = vadd.f32 0.0, %v2550
        %v2552 = vpop.f32.mrb[0].mxu0
        %v2553 = vadd.f32 0.0, %v2552
        %2554 = vdwg.mxu0
        %2555 = vmatprep.subr.mxu0 %v232
        %2556 = vmatpush1.msra.mxu0 %v231
        %2557 = vmatprep.subr.mxu0 %v248
        %2558 = vmatpush1.msra.mxu0 %v247
        %2559 = vmatprep.subr.mxu0 0.0
        %2560 = vmatpush1.msra.mxu0 0.0
        %2561 = vmatprep.subr.mxu0 0.0
        %2562 = vmatpush1.msra.mxu0 0.0
        %2563 = vmatprep.subr.mxu0 0.0
        %2564 = vmatpush1.msra.mxu0 0.0
        %2565 = vmatprep.subr.mxu0 0.0
        %2566 = vmatpush1.msra.mxu0 0.0
        %2567 = vmatprep.subr.mxu0 0.0
        %2568 = vmatpush1.msra.mxu0 0.0
        %2569 = vmatprep.subr.mxu0 0.0
        %2570 = vmatpush1.msra.mxu0 0.0
        %2571 = vmatprep.subr.mxu0 0.0
        %2572 = vmatpush1.msra.mxu0 0.0
        %2573 = vmatprep.subr.mxu0 0.0
        %2574 = vmatpush1.msra.mxu0 0.0
        %2575 = vmatprep.subr.mxu0 0.0
        %2576 = vmatpush1.msra.mxu0 0.0
        %2577 = vmatprep.subr.mxu0 0.0
        %2578 = vmatpush1.msra.mxu0 0.0
        %2579 = vmatprep.subr.mxu0 0.0
        %2580 = vmatpush1.msra.mxu0 0.0
        %2581 = vmatprep.subr.mxu0 0.0
        %2582 = vmatpush1.msra.mxu0 0.0
        %2583 = vmatprep.subr.mxu0 0.0
        %2584 = vmatpush1.msra.mxu0 0.0
        %2585 = vmatprep.subr.mxu0 0.0
        %2586 = vmatpush1.msra.mxu0 0.0
        %2587 = vmatprep.subr.mxu0 0.0
        %2588 = vmatpush1.msra.mxu0 0.0
        %2589 = vmatprep.subr.mxu0 0.0
        %2590 = vmatpush1.msra.mxu0 0.0
        %2591 = vmatprep.subr.mxu0 0.0
        %2592 = vmatpush1.msra.mxu0 0.0
        %2593 = vmatprep.subr.mxu0 0.0
        %2594 = vmatpush1.msra.mxu0 0.0
        %2595 = vmatprep.subr.mxu0 0.0
        %2596 = vmatpush1.msra.mxu0 0.0
        %2597 = vmatprep.subr.mxu0 0.0
        %2598 = vmatpush1.msra.mxu0 0.0
        %2599 = vmatprep.subr.mxu0 0.0
        %2600 = vmatpush1.msra.mxu0 0.0
        %2601 = vmatprep.subr.mxu0 0.0
        %2602 = vmatpush1.msra.mxu0 0.0
        %2603 = vmatprep.subr.mxu0 0.0
        %2604 = vmatpush1.msra.mxu0 0.0
        %2605 = vmatprep.subr.mxu0 0.0
        %2606 = vmatpush1.msra.mxu0 0.0
        %2607 = vmatprep.subr.mxu0 0.0
        %2608 = vmatpush1.msra.mxu0 0.0
        %2609 = vmatprep.subr.mxu0 0.0
        %2610 = vmatpush1.msra.mxu0 0.0
        %2611 = vmatprep.subr.mxu0 0.0
        %2612 = vmatpush1.msra.mxu0 0.0
        %2613 = vmatprep.subr.mxu0 0.0
        %2614 = vmatpush1.msra.mxu0 0.0
        %2615 = vmatprep.subr.mxu0 0.0
        %2616 = vmatpush1.msra.mxu0 0.0
        %2617 = vmatprep.subr.mxu0 0.0
        %2618 = vmatpush1.msra.mxu0 0.0
        %2619 = vmatprep.mubr.f32.mxu0 0.0
        %2620 = vmatmul.mubr.f32.gmra.mrb[0].mxu0 %v2473
        %v2621 = vpop.f32.mrb[0].mxu0
        %v2622 = vadd.f32 0.0, %v2621
        %v2623 = vpop.f32.mrb[0].mxu0
        %v2624 = vadd.f32 0.0, %v2623
        %2625 = vmatprep.mubr.f32.mxu0 0.0
        %2626 = vmatmul.mubr.f32.gmra.mrb[0].mxu0 %v2476
        %v2627 = vpop.f32.mrb[0].mxu0
        %v2628 = vadd.f32 0.0, %v2627
        %v2629 = vpop.f32.mrb[0].mxu0
        %v2630 = vadd.f32 0.0, %v2629
        %2631 = vdwg.mxu0
        %2632 = vmatprep.subr.mxu0 %v234
        %2633 = vmatpush1.msra.mxu0 %v233
        %2634 = vmatprep.subr.mxu0 %v250
        %2635 = vmatpush1.msra.mxu0 %v249
        %2636 = vmatprep.subr.mxu0 0.0
        %2637 = vmatpush1.msra.mxu0 0.0
        %2638 = vmatprep.subr.mxu0 0.0
        %2639 = vmatpush1.msra.mxu0 0.0
        %2640 = vmatprep.subr.mxu0 0.0
        %2641 = vmatpush1.msra.mxu0 0.0
        %2642 = vmatprep.subr.mxu0 0.0
        %2643 = vmatpush1.msra.mxu0 0.0
        %2644 = vmatprep.subr.mxu0 0.0
        %2645 = vmatpush1.msra.mxu0 0.0
        %2646 = vmatprep.subr.mxu0 0.0
        %2647 = vmatpush1.msra.mxu0 0.0
        %2648 = vmatprep.subr.mxu0 0.0
        %2649 = vmatpush1.msra.mxu0 0.0
        %2650 = vmatprep.subr.mxu0 0.0
        %2651 = vmatpush1.msra.mxu0 0.0
        %2652 = vmatprep.subr.mxu0 0.0
        %2653 = vmatpush1.msra.mxu0 0.0
        %2654 = vmatprep.subr.mxu0 0.0
        %2655 = vmatpush1.msra.mxu0 0.0
        %2656 = vmatprep.subr.mxu0 0.0
        %2657 = vmatpush1.msra.mxu0 0.0
        %2658 = vmatprep.subr.mxu0 0.0
        %2659 = vmatpush1.msra.mxu0 0.0
        %2660 = vmatprep.subr.mxu0 0.0
        %2661 = vmatpush1.msra.mxu0 0.0
        %2662 = vmatprep.subr.mxu0 0.0
        %2663 = vmatpush1.msra.mxu0 0.0
        %2664 = vmatprep.subr.mxu0 0.0
        %2665 = vmatpush1.msra.mxu0 0.0
        %2666 = vmatprep.subr.mxu0 0.0
        %2667 = vmatpush1.msra.mxu0 0.0
        %2668 = vmatprep.subr.mxu0 0.0
        %2669 = vmatpush1.msra.mxu0 0.0
        %2670 = vmatprep.subr.mxu0 0.0
        %2671 = vmatpush1.msra.mxu0 0.0
        %2672 = vmatprep.subr.mxu0 0.0
        %2673 = vmatpush1.msra.mxu0 0.0
        %2674 = vmatprep.subr.mxu0 0.0
        %2675 = vmatpush1.msra.mxu0 0.0
        %2676 = vmatprep.subr.mxu0 0.0
        %2677 = vmatpush1.msra.mxu0 0.0
        %2678 = vmatprep.subr.mxu0 0.0
        %2679 = vmatpush1.msra.mxu0 0.0
        %2680 = vmatprep.subr.mxu0 0.0
        %2681 = vmatpush1.msra.mxu0 0.0
        %2682 = vmatprep.subr.mxu0 0.0
        %2683 = vmatpush1.msra.mxu0 0.0
        %2684 = vmatprep.subr.mxu0 0.0
        %2685 = vmatpush1.msra.mxu0 0.0
        %2686 = vmatprep.subr.mxu0 0.0
        %2687 = vmatpush1.msra.mxu0 0.0
        %2688 = vmatprep.subr.mxu0 0.0
        %2689 = vmatpush1.msra.mxu0 0.0
        %2690 = vmatprep.subr.mxu0 0.0
        %2691 = vmatpush1.msra.mxu0 0.0
        %2692 = vmatprep.subr.mxu0 0.0
        %2693 = vmatpush1.msra.mxu0 0.0
        %2694 = vmatprep.subr.mxu0 0.0
        %2695 = vmatpush1.msra.mxu0 0.0
        %2696 = vmatprep.mubr.f32.mxu0 0.0
        %2697 = vmatmul.mubr.f32.gmra.mrb[0].mxu0 %v2473
        %v2698 = vpop.f32.mrb[0].mxu0
        %v2699 = vadd.f32 0.0, %v2698
        %v2700 = vpop.f32.mrb[0].mxu0
        %v2701 = vadd.f32 0.0, %v2700
        %2702 = vmatprep.mubr.f32.mxu0 0.0
        %2703 = vmatmul.mubr.f32.gmra.mrb[0].mxu0 %v2476
        %v2704 = vpop.f32.mrb[0].mxu0
        %v2705 = vadd.f32 0.0, %v2704
        %v2706 = vpop.f32.mrb[0].mxu0
        %v2707 = vadd.f32 0.0, %v2706
        %2708 = vdwg.mxu0
        %2709 = vmatprep.subr.mxu0 %v236
        %2710 = vmatpush1.msra.mxu0 %v235
        %2711 = vmatprep.subr.mxu0 %v252
        %2712 = vmatpush1.msra.mxu0 %v251
        %2713 = vmatprep.subr.mxu0 0.0
        %2714 = vmatpush1.msra.mxu0 0.0
        %2715 = vmatprep.subr.mxu0 0.0
        %2716 = vmatpush1.msra.mxu0 0.0
        %2717 = vmatprep.subr.mxu0 0.0
        %2718 = vmatpush1.msra.mxu0 0.0
        %2719 = vmatprep.subr.mxu0 0.0
        %2720 = vmatpush1.msra.mxu0 0.0
        %2721 = vmatprep.subr.mxu0 0.0
        %2722 = vmatpush1.msra.mxu0 0.0
        %2723 = vmatprep.subr.mxu0 0.0
        %2724 = vmatpush1.msra.mxu0 0.0
        %2725 = vmatprep.subr.mxu0 0.0
        %2726 = vmatpush1.msra.mxu0 0.0
        %2727 = vmatprep.subr.mxu0 0.0
        %2728 = vmatpush1.msra.mxu0 0.0
        %2729 = vmatprep.subr.mxu0 0.0
        %2730 = vmatpush1.msra.mxu0 0.0
        %2731 = vmatprep.subr.mxu0 0.0
        %2732 = vmatpush1.msra.mxu0 0.0
        %2733 = vmatprep.subr.mxu0 0.0
        %2734 = vmatpush1.msra.mxu0 0.0
        %2735 = vmatprep.subr.mxu0 0.0
        %2736 = vmatpush1.msra.mxu0 0.0
        %2737 = vmatprep.subr.mxu0 0.0
        %2738 = vmatpush1.msra.mxu0 0.0
        %2739 = vmatprep.subr.mxu0 0.0
        %2740 = vmatpush1.msra.mxu0 0.0
        %2741 = vmatprep.subr.mxu0 0.0
        %2742 = vmatpush1.msra.mxu0 0.0
        %2743 = vmatprep.subr.mxu0 0.0
        %2744 = vmatpush1.msra.mxu0 0.0
        %2745 = vmatprep.subr.mxu0 0.0
        %2746 = vmatpush1.msra.mxu0 0.0
        %2747 = vmatprep.subr.mxu0 0.0
        %2748 = vmatpush1.msra.mxu0 0.0
        %2749 = vmatprep.subr.mxu0 0.0
        %2750 = vmatpush1.msra.mxu0 0.0
        %2751 = vmatprep.subr.mxu0 0.0
        %2752 = vmatpush1.msra.mxu0 0.0
        %2753 = vmatprep.subr.mxu0 0.0
        %2754 = vmatpush1.msra.mxu0 0.0
        %2755 = vmatprep.subr.mxu0 0.0
        %2756 = vmatpush1.msra.mxu0 0.0
        %2757 = vmatprep.subr.mxu0 0.0
        %2758 = vmatpush1.msra.mxu0 0.0
        %2759 = vmatprep.subr.mxu0 0.0
        %2760 = vmatpush1.msra.mxu0 0.0
        %2761 = vmatprep.subr.mxu0 0.0
        %2762 = vmatpush1.msra.mxu0 0.0
        %2763 = vmatprep.subr.mxu0 0.0
        %2764 = vmatpush1.msra.mxu0 0.0
        %2765 = vmatprep.subr.mxu0 0.0
        %2766 = vmatpush1.msra.mxu0 0.0
        %2767 = vmatprep.subr.mxu0 0.0
        %2768 = vmatpush1.msra.mxu0 0.0
        %2769 = vmatprep.subr.mxu0 0.0
        %2770 = vmatpush1.msra.mxu0 0.0
        %2771 = vmatprep.subr.mxu0 0.0
        %2772 = vmatpush1.msra.mxu0 0.0
        %2773 = vmatprep.mubr.f32.mxu0 0.0
        %2774 = vmatmul.mubr.f32.gmra.mrb[0].mxu0 %v2473
        %v2775 = vpop.f32.mrb[0].mxu0
        %v2776 = vadd.f32 0.0, %v2775
        %v2777 = vpop.f32.mrb[0].mxu0
        %v2778 = vadd.f32 0.0, %v2777
        %2779 = vmatprep.mubr.f32.mxu0 0.0
        %2780 = vmatmul.mubr.f32.gmra.mrb[0].mxu0 %v2476
        %v2781 = vpop.f32.mrb[0].mxu0
        %v2782 = vadd.f32 0.0, %v2781
        %v2783 = vpop.f32.mrb[0].mxu0
        %v2784 = vadd.f32 0.0, %v2783
        %2785 = vdwg.mxu0
        %2786 = vmatprep.subr.mxu0 %v238
        %2787 = vmatpush1.msra.mxu0 %v237
        %2788 = vmatprep.subr.mxu0 %v254
        %2789 = vmatpush1.msra.mxu0 %v253
        %2790 = vmatprep.subr.mxu0 0.0
        %2791 = vmatpush1.msra.mxu0 0.0
        %2792 = vmatprep.subr.mxu0 0.0
        %2793 = vmatpush1.msra.mxu0 0.0
        %2794 = vmatprep.subr.mxu0 0.0
        %2795 = vmatpush1.msra.mxu0 0.0
        %2796 = vmatprep.subr.mxu0 0.0
        %2797 = vmatpush1.msra.mxu0 0.0
        %2798 = vmatprep.subr.mxu0 0.0
        %2799 = vmatpush1.msra.mxu0 0.0
        %2800 = vmatprep.subr.mxu0 0.0
        %2801 = vmatpush1.msra.mxu0 0.0
        %2802 = vmatprep.subr.mxu0 0.0
        %2803 = vmatpush1.msra.mxu0 0.0
        %2804 = vmatprep.subr.mxu0 0.0
        %2805 = vmatpush1.msra.mxu0 0.0
        %2806 = vmatprep.subr.mxu0 0.0
        %2807 = vmatpush1.msra.mxu0 0.0
        %2808 = vmatprep.subr.mxu0 0.0
        %2809 = vmatpush1.msra.mxu0 0.0
        %2810 = vmatprep.subr.mxu0 0.0
        %2811 = vmatpush1.msra.mxu0 0.0
        %2812 = vmatprep.subr.mxu0 0.0
        %2813 = vmatpush1.msra.mxu0 0.0
        %2814 = vmatprep.subr.mxu0 0.0
        %2815 = vmatpush1.msra.mxu0 0.0
        %2816 = vmatprep.subr.mxu0 0.0
        %2817 = vmatpush1.msra.mxu0 0.0
        %2818 = vmatprep.subr.mxu0 0.0
        %2819 = vmatpush1.msra.mxu0 0.0
        %2820 = vmatprep.subr.mxu0 0.0
        %2821 = vmatpush1.msra.mxu0 0.0
        %2822 = vmatprep.subr.mxu0 0.0
        %2823 = vmatpush1.msra.mxu0 0.0
        %2824 = vmatprep.subr.mxu0 0.0
        %2825 = vmatpush1.msra.mxu0 0.0
        %2826 = vmatprep.subr.mxu0 0.0
        %2827 = vmatpush1.msra.mxu0 0.0
        %2828 = vmatprep.subr.mxu0 0.0
        %2829 = vmatpush1.msra.mxu0 0.0
        %2830 = vmatprep.subr.mxu0 0.0
        %2831 = vmatpush1.msra.mxu0 0.0
        %2832 = vmatprep.subr.mxu0 0.0
        %2833 = vmatpush1.msra.mxu0 0.0
        %2834 = vmatprep.subr.mxu0 0.0
        %2835 = vmatpush1.msra.mxu0 0.0
        %2836 = vmatprep.subr.mxu0 0.0
        %2837 = vmatpush1.msra.mxu0 0.0
        %2838 = vmatprep.subr.mxu0 0.0
        %2839 = vmatpush1.msra.mxu0 0.0
        %2840 = vmatprep.subr.mxu0 0.0
        %2841 = vmatpush1.msra.mxu0 0.0
        %2842 = vmatprep.subr.mxu0 0.0
        %2843 = vmatpush1.msra.mxu0 0.0
        %2844 = vmatprep.subr.mxu0 0.0
        %2845 = vmatpush1.msra.mxu0 0.0
        %2846 = vmatprep.subr.mxu0 0.0
        %2847 = vmatpush1.msra.mxu0 0.0
        %2848 = vmatprep.subr.mxu0 0.0
        %2849 = vmatpush1.msra.mxu0 0.0
        %2850 = vmatprep.mubr.f32.mxu0 0.0
        %2851 = vmatmul.mubr.f32.gmra.mrb[0].mxu0 %v2473
        %v2852 = vpop.f32.mrb[0].mxu0
        %v2853 = vadd.f32 0.0, %v2852
        %v2854 = vpop.f32.mrb[0].mxu0
        %v2855 = vadd.f32 0.0, %v2854
        %2856 = vmatprep.mubr.f32.mxu0 0.0
        %2857 = vmatmul.mubr.f32.gmra.mrb[0].mxu0 %v2476
        %v2858 = vpop.f32.mrb[0].mxu0
        %v2859 = vadd.f32 0.0, %v2858
        %v2860 = vpop.f32.mrb[0].mxu0
        %v2861 = vadd.f32 0.0, %v2860
        %2862 = vdwg.mxu0
        %2863 = vmatprep.subr.mxu0 %v240
        %2864 = vmatpush1.msra.mxu0 %v239
        %2865 = vmatprep.subr.mxu0 %v256
        %2866 = vmatpush1.msra.mxu0 %v255
        %2867 = vmatprep.subr.mxu0 0.0
        %2868 = vmatpush1.msra.mxu0 0.0
        %2869 = vmatprep.subr.mxu0 0.0
        %2870 = vmatpush1.msra.mxu0 0.0
        %2871 = vmatprep.subr.mxu0 0.0
        %2872 = vmatpush1.msra.mxu0 0.0
        %2873 = vmatprep.subr.mxu0 0.0
        %2874 = vmatpush1.msra.mxu0 0.0
        %2875 = vmatprep.subr.mxu0 0.0
        %2876 = vmatpush1.msra.mxu0 0.0
        %2877 = vmatprep.subr.mxu0 0.0
        %2878 = vmatpush1.msra.mxu0 0.0
        %2879 = vmatprep.subr.mxu0 0.0
        %2880 = vmatpush1.msra.mxu0 0.0
        %2881 = vmatprep.subr.mxu0 0.0
        %2882 = vmatpush1.msra.mxu0 0.0
        %2883 = vmatprep.subr.mxu0 0.0
        %2884 = vmatpush1.msra.mxu0 0.0
        %2885 = vmatprep.subr.mxu0 0.0
        %2886 = vmatpush1.msra.mxu0 0.0
        %2887 = vmatprep.subr.mxu0 0.0
        %2888 = vmatpush1.msra.mxu0 0.0
        %2889 = vmatprep.subr.mxu0 0.0
        %2890 = vmatpush1.msra.mxu0 0.0
        %2891 = vmatprep.subr.mxu0 0.0
        %2892 = vmatpush1.msra.mxu0 0.0
        %2893 = vmatprep.subr.mxu0 0.0
        %2894 = vmatpush1.msra.mxu0 0.0
        %2895 = vmatprep.subr.mxu0 0.0
        %2896 = vmatpush1.msra.mxu0 0.0
        %2897 = vmatprep.subr.mxu0 0.0
        %2898 = vmatpush1.msra.mxu0 0.0
        %2899 = vmatprep.subr.mxu0 0.0
        %2900 = vmatpush1.msra.mxu0 0.0
        %2901 = vmatprep.subr.mxu0 0.0
        %2902 = vmatpush1.msra.mxu0 0.0
        %2903 = vmatprep.subr.mxu0 0.0
        %2904 = vmatpush1.msra.mxu0 0.0
        %2905 = vmatprep.subr.mxu0 0.0
        %2906 = vmatpush1.msra.mxu0 0.0
        %2907 = vmatprep.subr.mxu0 0.0
        %2908 = vmatpush1.msra.mxu0 0.0
        %2909 = vmatprep.subr.mxu0 0.0
        %2910 = vmatpush1.msra.mxu0 0.0
        %2911 = vmatprep.subr.mxu0 0.0
        %2912 = vmatpush1.msra.mxu0 0.0
        %2913 = vmatprep.subr.mxu0 0.0
        %2914 = vmatpush1.msra.mxu0 0.0
        %2915 = vmatprep.subr.mxu0 0.0
        %2916 = vmatpush1.msra.mxu0 0.0
        %2917 = vmatprep.subr.mxu0 0.0
        %2918 = vmatpush1.msra.mxu0 0.0
        %2919 = vmatprep.subr.mxu0 0.0
        %2920 = vmatpush1.msra.mxu0 0.0
        %2921 = vmatprep.subr.mxu0 0.0
        %2922 = vmatpush1.msra.mxu0 0.0
        %2923 = vmatprep.subr.mxu0 0.0
        %2924 = vmatpush1.msra.mxu0 0.0
        %2925 = vmatprep.subr.mxu0 0.0
        %2926 = vmatpush1.msra.mxu0 0.0
        %2927 = vmatprep.mubr.f32.mxu0 0.0
        %2928 = vmatmul.mubr.f32.gmra.mrb[0].mxu0 %v2473
        %v2929 = vpop.f32.mrb[0].mxu0
        %v2930 = vadd.f32 0.0, %v2929
        %v2931 = vpop.f32.mrb[0].mxu0
        %v2932 = vadd.f32 0.0, %v2931
        %2933 = vmatprep.mubr.f32.mxu0 0.0
        %2934 = vmatmul.mubr.f32.gmra.mrb[0].mxu0 %v2476
        %v2935 = vpop.f32.mrb[0].mxu0
        %v2936 = vadd.f32 0.0, %v2935
        %v2937 = vpop.f32.mrb[0].mxu0
        %v2938 = vadd.f32 0.0, %v2937
        %2939 = vdwg.mxu0
        %2940 = vmatprep.subr.mxu0 %v242
        %2941 = vmatpush1.msra.mxu0 %v241
        %2942 = vmatprep.subr.mxu0 %v258
        %2943 = vmatpush1.msra.mxu0 %v257
        %2944 = vmatprep.subr.mxu0 0.0
        %2945 = vmatpush1.msra.mxu0 0.0
        %2946 = vmatprep.subr.mxu0 0.0
        %2947 = vmatpush1.msra.mxu0 0.0
        %2948 = vmatprep.subr.mxu0 0.0
        %2949 = vmatpush1.msra.mxu0 0.0
        %2950 = vmatprep.subr.mxu0 0.0
        %2951 = vmatpush1.msra.mxu0 0.0
        %2952 = vmatprep.subr.mxu0 0.0
        %2953 = vmatpush1.msra.mxu0 0.0
        %2954 = vmatprep.subr.mxu0 0.0
        %2955 = vmatpush1.msra.mxu0 0.0
        %2956 = vmatprep.subr.mxu0 0.0
        %2957 = vmatpush1.msra.mxu0 0.0
        %2958 = vmatprep.subr.mxu0 0.0
        %2959 = vmatpush1.msra.mxu0 0.0
        %2960 = vmatprep.subr.mxu0 0.0
        %2961 = vmatpush1.msra.mxu0 0.0
        %2962 = vmatprep.subr.mxu0 0.0
        %2963 = vmatpush1.msra.mxu0 0.0
        %2964 = vmatprep.subr.mxu0 0.0
        %2965 = vmatpush1.msra.mxu0 0.0
        %2966 = vmatprep.subr.mxu0 0.0
        %2967 = vmatpush1.msra.mxu0 0.0
        %2968 = vmatprep.subr.mxu0 0.0
        %2969 = vmatpush1.msra.mxu0 0.0
        %2970 = vmatprep.subr.mxu0 0.0
        %2971 = vmatpush1.msra.mxu0 0.0
        %2972 = vmatprep.subr.mxu0 0.0
        %2973 = vmatpush1.msra.mxu0 0.0
        %2974 = vmatprep.subr.mxu0 0.0
        %2975 = vmatpush1.msra.mxu0 0.0
        %2976 = vmatprep.subr.mxu0 0.0
        %2977 = vmatpush1.msra.mxu0 0.0
        %2978 = vmatprep.subr.mxu0 0.0
        %2979 = vmatpush1.msra.mxu0 0.0
        %2980 = vmatprep.subr.mxu0 0.0
        %2981 = vmatpush1.msra.mxu0 0.0
        %2982 = vmatprep.subr.mxu0 0.0
        %2983 = vmatpush1.msra.mxu0 0.0
        %2984 = vmatprep.subr.mxu0 0.0
        %2985 = vmatpush1.msra.mxu0 0.0
        %2986 = vmatprep.subr.mxu0 0.0
        %2987 = vmatpush1.msra.mxu0 0.0
        %2988 = vmatprep.subr.mxu0 0.0
        %2989 = vmatpush1.msra.mxu0 0.0
        %2990 = vmatprep.subr.mxu0 0.0
        %2991 = vmatpush1.msra.mxu0 0.0
        %2992 = vmatprep.subr.mxu0 0.0
        %2993 = vmatpush1.msra.mxu0 0.0
        %2994 = vmatprep.subr.mxu0 0.0
        %2995 = vmatpush1.msra.mxu0 0.0
        %2996 = vmatprep.subr.mxu0 0.0
        %2997 = vmatpush1.msra.mxu0 0.0
        %2998 = vmatprep.subr.mxu0 0.0
        %2999 = vmatpush1.msra.mxu0 0.0
        %3000 = vmatprep.subr.mxu0 0.0
        %3001 = vmatpush1.msra.mxu0 0.0
        %3002 = vmatprep.subr.mxu0 0.0
        %3003 = vmatpush1.msra.mxu0 0.0
        %3004 = vmatprep.mubr.f32.mxu0 0.0
        %3005 = vmatmul.mubr.f32.gmra.mrb[0].mxu0 %v2473
        %v3006 = vpop.f32.mrb[0].mxu0
        %v3007 = vadd.f32 0.0, %v3006
        %v3008 = vpop.f32.mrb[0].mxu0
        %v3009 = vadd.f32 0.0, %v3008
        %3010 = vmatprep.mubr.f32.mxu0 0.0
        %3011 = vmatmul.mubr.f32.gmra.mrb[0].mxu0 %v2476
        %v3012 = vpop.f32.mrb[0].mxu0
        %v3013 = vadd.f32 0.0, %v3012
        %v3014 = vpop.f32.mrb[0].mxu0
        %v3015 = vadd.f32 0.0, %v3014
        %3016 = vdwg.mxu0
        %3017 = vmatprep.subr.mxu0 %v262
        %3018 = vmatpush1.msra.mxu0 %v243
        %3019 = vmatprep.subr.mxu0 %v263
        %3020 = vmatpush1.msra.mxu0 %v259
        %3021 = vmatprep.subr.mxu0 0.0
        %3022 = vmatpush1.msra.mxu0 0.0
        %3023 = vmatprep.subr.mxu0 0.0
        %3024 = vmatpush1.msra.mxu0 0.0
        %3025 = vmatprep.subr.mxu0 0.0
        %3026 = vmatpush1.msra.mxu0 0.0
        %3027 = vmatprep.subr.mxu0 0.0
        %3028 = vmatpush1.msra.mxu0 0.0
        %3029 = vmatprep.subr.mxu0 0.0
        %3030 = vmatpush1.msra.mxu0 0.0
        %3031 = vmatprep.subr.mxu0 0.0
        %3032 = vmatpush1.msra.mxu0 0.0
        %3033 = vmatprep.subr.mxu0 0.0
        %3034 = vmatpush1.msra.mxu0 0.0
        %3035 = vmatprep.subr.mxu0 0.0
        %3036 = vmatpush1.msra.mxu0 0.0
        %3037 = vmatprep.subr.mxu0 0.0
        %3038 = vmatpush1.msra.mxu0 0.0
        %3039 = vmatprep.subr.mxu0 0.0
        %3040 = vmatpush1.msra.mxu0 0.0
        %3041 = vmatprep.subr.mxu0 0.0
        %3042 = vmatpush1.msra.mxu0 0.0
        %3043 = vmatprep.subr.mxu0 0.0
        %3044 = vmatpush1.msra.mxu0 0.0
        %3045 = vmatprep.subr.mxu0 0.0
        %3046 = vmatpush1.msra.mxu0 0.0
        %3047 = vmatprep.subr.mxu0 0.0
        %3048 = vmatpush1.msra.mxu0 0.0
        %3049 = vmatprep.subr.mxu0 0.0
        %3050 = vmatpush1.msra.mxu0 0.0
        %3051 = vmatprep.subr.mxu0 0.0
        %3052 = vmatpush1.msra.mxu0 0.0
        %3053 = vmatprep.subr.mxu0 0.0
        %3054 = vmatpush1.msra.mxu0 0.0
        %3055 = vmatprep.subr.mxu0 0.0
        %3056 = vmatpush1.msra.mxu0 0.0
        %3057 = vmatprep.subr.mxu0 0.0
        %3058 = vmatpush1.msra.mxu0 0.0
        %3059 = vmatprep.subr.mxu0 0.0
        %3060 = vmatpush1.msra.mxu0 0.0
        %3061 = vmatprep.subr.mxu0 0.0
        %3062 = vmatpush1.msra.mxu0 0.0
        %3063 = vmatprep.subr.mxu0 0.0
        %3064 = vmatpush1.msra.mxu0 0.0
        %3065 = vmatprep.subr.mxu0 0.0
        %3066 = vmatpush1.msra.mxu0 0.0
        %3067 = vmatprep.subr.mxu0 0.0
        %3068 = vmatpush1.msra.mxu0 0.0
        %3069 = vmatprep.subr.mxu0 0.0
        %3070 = vmatpush1.msra.mxu0 0.0
        %3071 = vmatprep.subr.mxu0 0.0
        %3072 = vmatpush1.msra.mxu0 0.0
        %3073 = vmatprep.subr.mxu0 0.0
        %3074 = vmatpush1.msra.mxu0 0.0
        %3075 = vmatprep.subr.mxu0 0.0
        %3076 = vmatpush1.msra.mxu0 0.0
        %3077 = vmatprep.subr.mxu0 0.0
        %3078 = vmatpush1.msra.mxu0 0.0
        %3079 = vmatprep.subr.mxu0 0.0
        %3080 = vmatpush1.msra.mxu0 0.0
        %3081 = vmatprep.mubr.f32.mxu0 0.0
        %3082 = vmatmul.mubr.f32.gmra.mrb[0].mxu0 %v2473
        %v3083 = vpop.f32.mrb[0].mxu0
        %v3084 = vadd.f32 0.0, %v3083
        %v3085 = vpop.f32.mrb[0].mxu0
        %v3086 = vadd.f32 0.0, %v3085
        %3087 = vmatprep.mubr.f32.mxu0 0.0
        %3088 = vmatmul.mubr.f32.gmra.mrb[0].mxu0 %v2476
        %v3089 = vpop.f32.mrb[0].mxu0
        %v3090 = vadd.f32 0.0, %v3089
        %v3091 = vpop.f32.mrb[0].mxu0
        %v3092 = vadd.f32 0.0, %v3091
        %3093 = vdwg.mxu0
        %v3094 = vadd.f32 %v2437, %v2545
        %v3095 = vadd.f32 %v2438, %v2547
        %v3096 = vadd.f32 %v2439, %v2622
        %v3097 = vadd.f32 %v2440, %v2624
        %v3098 = vadd.f32 %v2441, %v2699
        %v3099 = vadd.f32 %v2442, %v2701
        %v3100 = vadd.f32 %v2443, %v2776
        %v3101 = vadd.f32 %v2444, %v2778
        %v3102 = vadd.f32 %v2445, %v2853
        %v3103 = vadd.f32 %v2446, %v2855
        %v3104 = vadd.f32 %v2447, %v2930
        %v3105 = vadd.f32 %v2448, %v2932
        %v3106 = vadd.f32 %v2449, %v3007
        %v3107 = vadd.f32 %v2450, %v3009
        %v3108 = vadd.f32 %v2451, %v3084
        %v3109 = vadd.f32 %v2452, %v3086
        %v3110 = vadd.f32 %v2453, %v2551
        %v3111 = vadd.f32 %v2454, %v2553
        %v3112 = vadd.f32 %v2455, %v2628
        %v3113 = vadd.f32 %v2456, %v2630
        %v3114 = vadd.f32 %v2457, %v2705
        %v3115 = vadd.f32 %v2458, %v2707
        %v3116 = vadd.f32 %v2459, %v2782
        %v3117 = vadd.f32 %v2460, %v2784
        %v3118 = vadd.f32 %v2461, %v2859
        %v3119 = vadd.f32 %v2462, %v2861
        %v3120 = vadd.f32 %v2463, %v2936
        %v3121 = vadd.f32 %v2464, %v2938
        %v3122 = vadd.f32 %v2465, %v3013
        %v3123 = vadd.f32 %v2466, %v3015
        %v3124 = vadd.f32 %v2467, %v3090
        %v3125 = vadd.f32 %v2468, %v3092
        %v3126 = vld [vmem:[%s201 + $0x8] sm:$0xff]
        %v3127 = vld [vmem:[%s201 + $0x10] sm:$0xff]
        %v3128 = vld [vmem:[%s201 + $0x18] sm:$0xff]
        %v3129 = vld [vmem:[%s201 + $0x20] sm:$0xff]
        %v3130 = vld [vmem:[%s201 + $0x28] sm:$0xff]
        %v3131 = vld [vmem:[%s201 + $0x30] sm:$0xff]
        %v3132 = vld [vmem:[%s201 + $0x38] sm:$0xff]
        %v3133 = vld [vmem:[%s201 + $0x40] sm:$0xff]
        %v3134 = vld [vmem:[%s201 + $0x48] sm:$0xff]
        %v3135 = vld [vmem:[%s201 + $0x50] sm:$0xff]
        %v3136 = vld [vmem:[%s201 + $0x58] sm:$0xff]
        %v3137 = vld [vmem:[%s201 + $0x60] sm:$0xff]
        %v3138 = vld [vmem:[%s201 + $0x68] sm:$0xff]
        %v3139 = vld [vmem:[%s201 + $0x70] sm:$0xff]
        %v3140 = vld [vmem:[%s201 + $0x78] sm:$0xff]
        %v3141 = vld [vmem:[%s201 + $0x80] sm:$0xff]
        %v3142 = vld [vmem:[%s201 + $0x88] sm:$0xff]
        %v3143 = vld [vmem:[%s201 + $0xa0] sm:$0xff]
        %v3144 = vld [vmem:[%s201 + $0xa8] sm:$0xff]
        %v3145 = vld [vmem:[%s201 + $0xb0] sm:$0xff]
        %v3146 = vld [vmem:[%s201 + $0xb8] sm:$0xff]
        %v3147 = vld [vmem:[%s201 + $0xc0] sm:$0xff]
        %v3148 = vld [vmem:[%s201 + $0xc8] sm:$0xff]
        %v3149 = vld [vmem:[%s201 + $0xd0] sm:$0xff]
        %v3150 = vld [vmem:[%s201 + $0xd8] sm:$0xff]
        %v3151 = vld [vmem:[%s201 + $0xe0] sm:$0xff]
        %v3152 = vld [vmem:[%s201 + $0xe8] sm:$0xff]
        %v3153 = vld [vmem:[%s201 + $0xf0] sm:$0xff]
        %v3154 = vld [vmem:[%s201 + $0xf8] sm:$0xff]
        %v3155 = vld [vmem:[%s201 + $0x100] sm:$0xff]
        %v3156 = vld [vmem:[%s201 + $0x108] sm:$0xff]
        %v3157 = vld [vmem:[%s201 + $0x110] sm:$0xff]
        %v3158 = vld [vmem:[%s201 + $0x118] sm:$0xff]
        %v3159 = vld [vmem:[%s201 + $0x120] sm:$0xff]
        %s3160 = scalar_lea.vmem [#allocation6], 64
        %v3161 = vld [vmem:[%s3160] sm:$0xff]
        %v3162 = vld [vmem:[%s3160 + $0x8] sm:$0xff]
        %3197 = vrot.lane.b32.xlu0 %v3126, 127
        %v3198 = vpop.permute.xlu0 %3197
        %3199 = vrot.lane.b32.xlu0 %v3127, 127
        %v3200 = vpop.permute.xlu0 %3199
        %3201 = vrot.lane.b32.xlu0 %v3128, 127
        %v3202 = vpop.permute.xlu0 %3201
        %3203 = vrot.lane.b32.xlu0 %v3129, 127
        %v3204 = vpop.permute.xlu0 %3203
        %3205 = vrot.lane.b32.xlu0 %v3130, 127
        %v3206 = vpop.permute.xlu0 %3205
        %3207 = vrot.lane.b32.xlu0 %v3131, 127
        %v3208 = vpop.permute.xlu0 %3207
        %3209 = vrot.lane.b32.xlu0 %v3132, 127
        %v3210 = vpop.permute.xlu0 %3209
        %3211 = vrot.lane.b32.xlu0 %v3133, 127
        %v3212 = vpop.permute.xlu0 %3211
        %3213 = vrot.lane.b32.xlu0 %v3134, 127
        %v3214 = vpop.permute.xlu0 %3213
        %3215 = vrot.lane.b32.xlu0 %v3135, 127
        %v3216 = vpop.permute.xlu0 %3215
        %3217 = vrot.lane.b32.xlu0 %v3136, 127
        %v3218 = vpop.permute.xlu0 %3217
        %3219 = vrot.lane.b32.xlu0 %v3137, 127
        %v3220 = vpop.permute.xlu0 %3219
        %3221 = vrot.lane.b32.xlu0 %v3138, 127
        %v3222 = vpop.permute.xlu0 %3221
        %3223 = vrot.lane.b32.xlu0 %v3139, 127
        %v3224 = vpop.permute.xlu0 %3223
        %3225 = vrot.lane.b32.xlu0 %v3140, 127
        %v3226 = vpop.permute.xlu0 %3225
        %3227 = vrot.lane.b32.xlu0 %v3141, 127
        %v3228 = vpop.permute.xlu0 %3227
        %3229 = vrot.lane.b32.xlu0 %v3142, 127
        %v3230 = vpop.permute.xlu0 %3229
        %3231 = vrot.lane.b32.xlu0 %v3143, 127
        %v3232 = vpop.permute.xlu0 %3231
        %3233 = vrot.lane.b32.xlu0 %v3144, 127
        %v3234 = vpop.permute.xlu0 %3233
        %3235 = vrot.lane.b32.xlu0 %v3145, 127
        %v3236 = vpop.permute.xlu0 %3235
        %3237 = vrot.lane.b32.xlu0 %v3146, 127
        %v3238 = vpop.permute.xlu0 %3237
        %3239 = vrot.lane.b32.xlu0 %v3147, 127
        %v3240 = vpop.permute.xlu0 %3239
        %3241 = vrot.lane.b32.xlu0 %v3148, 127
        %v3242 = vpop.permute.xlu0 %3241
        %3243 = vrot.lane.b32.xlu0 %v3149, 127
        %v3244 = vpop.permute.xlu0 %3243
        %3245 = vrot.lane.b32.xlu0 %v3150, 127
        %v3246 = vpop.permute.xlu0 %3245
        %3247 = vrot.lane.b32.xlu0 %v3151, 127
        %v3248 = vpop.permute.xlu0 %3247
        %3249 = vrot.lane.b32.xlu0 %v3152, 127
        %v3250 = vpop.permute.xlu0 %3249
        %3251 = vrot.lane.b32.xlu0 %v3153, 127
        %v3252 = vpop.permute.xlu0 %3251
        %3253 = vrot.lane.b32.xlu0 %v3154, 127
        %v3254 = vpop.permute.xlu0 %3253
        %3255 = vrot.lane.b32.xlu0 %v3155, 127
        %v3256 = vpop.permute.xlu0 %3255
        %3257 = vrot.lane.b32.xlu0 %v3156, 127
        %v3258 = vpop.permute.xlu0 %3257
        %3259 = vrot.lane.b32.xlu0 %v3157, 127
        %v3260 = vpop.permute.xlu0 %3259
        %3261 = vrot.lane.b32.xlu0 %v3158, 127
        %v3262 = vpop.permute.xlu0 %3261
        %3263 = vrot.lane.b32.xlu0 %v3159, 127
        %v3264 = vpop.permute.xlu0 %3263
        %v3265 = vsel %vm369, %v3198, %v3200
        %v3266 = vsel %vm369, %v3200, %v3202
        %v3267 = vsel %vm369, %v3202, %v3204
        %v3268 = vsel %vm369, %v3204, %v3206
        %v3269 = vsel %vm369, %v3206, %v3208
        %v3270 = vsel %vm369, %v3208, %v3210
        %v3271 = vsel %vm369, %v3210, %v3212
        %v3272 = vsel %vm369, %v3212, %v3214
        %v3273 = vsel %vm369, %v3214, %v3216
        %v3274 = vsel %vm369, %v3216, %v3218
        %v3275 = vsel %vm369, %v3218, %v3220
        %v3276 = vsel %vm369, %v3220, %v3222
        %v3277 = vsel %vm369, %v3222, %v3224
        %v3278 = vsel %vm369, %v3224, %v3226
        %v3279 = vsel %vm369, %v3226, %v3228
        %v3280 = vsel %vm369, %v3228, %v3230
        %v3281 = vsel %vm369, %v3232, %v3234
        %v3282 = vsel %vm369, %v3234, %v3236
        %v3283 = vsel %vm369, %v3236, %v3238
        %v3284 = vsel %vm369, %v3238, %v3240
        %v3285 = vsel %vm369, %v3240, %v3242
        %v3286 = vsel %vm369, %v3242, %v3244
        %v3287 = vsel %vm369, %v3244, %v3246
        %v3288 = vsel %vm369, %v3246, %v3248
        %v3289 = vsel %vm369, %v3248, %v3250
        %v3290 = vsel %vm369, %v3250, %v3252
        %v3291 = vsel %vm369, %v3252, %v3254
        %v3292 = vsel %vm369, %v3254, %v3256
        %v3293 = vsel %vm369, %v3256, %v3258
        %v3294 = vsel %vm369, %v3258, %v3260
        %v3295 = vsel %vm369, %v3260, %v3262
        %v3296 = vsel %vm369, %v3262, %v3264
        %v3330 = vsel %vm434, %v3161, 0
        %v3333 = vsel %vm434, %v3162, 0
        %3335 = vmatprep.subr.mxu0 %v3266
        %3336 = vmatpush1.msra.mxu0 %v3265
        %3337 = vmatprep.subr.mxu0 %v3282
        %3338 = vmatpush1.msra.mxu0 %v3281
        %3339 = vmatprep.subr.mxu0 0.0
        %3340 = vmatpush1.msra.mxu0 0.0
        %3341 = vmatprep.subr.mxu0 0.0
        %3342 = vmatpush1.msra.mxu0 0.0
        %3343 = vmatprep.subr.mxu0 0.0
        %3344 = vmatpush1.msra.mxu0 0.0
        %3345 = vmatprep.subr.mxu0 0.0
        %3346 = vmatpush1.msra.mxu0 0.0
        %3347 = vmatprep.subr.mxu0 0.0
        %3348 = vmatpush1.msra.mxu0 0.0
        %3349 = vmatprep.subr.mxu0 0.0
        %3350 = vmatpush1.msra.mxu0 0.0
        %3351 = vmatprep.subr.mxu0 0.0
        %3352 = vmatpush1.msra.mxu0 0.0
        %3353 = vmatprep.subr.mxu0 0.0
        %3354 = vmatpush1.msra.mxu0 0.0
        %3355 = vmatprep.subr.mxu0 0.0
        %3356 = vmatpush1.msra.mxu0 0.0
        %3357 = vmatprep.subr.mxu0 0.0
        %3358 = vmatpush1.msra.mxu0 0.0
        %3359 = vmatprep.subr.mxu0 0.0
        %3360 = vmatpush1.msra.mxu0 0.0
        %3361 = vmatprep.subr.mxu0 0.0
        %3362 = vmatpush1.msra.mxu0 0.0
        %3363 = vmatprep.subr.mxu0 0.0
        %3364 = vmatpush1.msra.mxu0 0.0
        %3365 = vmatprep.subr.mxu0 0.0
        %3366 = vmatpush1.msra.mxu0 0.0
        %3367 = vmatprep.subr.mxu0 0.0
        %3368 = vmatpush1.msra.mxu0 0.0
        %3369 = vmatprep.subr.mxu0 0.0
        %3370 = vmatpush1.msra.mxu0 0.0
        %3371 = vmatprep.subr.mxu0 0.0
        %3372 = vmatpush1.msra.mxu0 0.0
        %3373 = vmatprep.subr.mxu0 0.0
        %3374 = vmatpush1.msra.mxu0 0.0
        %3375 = vmatprep.subr.mxu0 0.0
        %3376 = vmatpush1.msra.mxu0 0.0
        %3377 = vmatprep.subr.mxu0 0.0
        %3378 = vmatpush1.msra.mxu0 0.0
        %3379 = vmatprep.subr.mxu0 0.0
        %3380 = vmatpush1.msra.mxu0 0.0
        %3381 = vmatprep.subr.mxu0 0.0
        %3382 = vmatpush1.msra.mxu0 0.0
        %3383 = vmatprep.subr.mxu0 0.0
        %3384 = vmatpush1.msra.mxu0 0.0
        %3385 = vmatprep.subr.mxu0 0.0
        %3386 = vmatpush1.msra.mxu0 0.0
        %3387 = vmatprep.subr.mxu0 0.0
        %3388 = vmatpush1.msra.mxu0 0.0
        %3389 = vmatprep.subr.mxu0 0.0
        %3390 = vmatpush1.msra.mxu0 0.0
        %3391 = vmatprep.subr.mxu0 0.0
        %3392 = vmatpush1.msra.mxu0 0.0
        %3393 = vmatprep.subr.mxu0 0.0
        %3394 = vmatpush1.msra.mxu0 0.0
        %3395 = vmatprep.subr.mxu0 0.0
        %3396 = vmatpush1.msra.mxu0 0.0
        %3397 = vmatprep.subr.mxu0 0.0
        %3398 = vmatpush1.msra.mxu0 0.0
        %3399 = vmatprep.mubr.f32.mxu0 0.0
        %3400 = vmatmul.mubr.f32.gmra.mrb[0].mxu0 %v3330
        %v3401 = vpop.f32.mrb[0].mxu0
        %v3402 = vadd.f32 0.0, %v3401
        %v3403 = vpop.f32.mrb[0].mxu0
        %v3404 = vadd.f32 0.0, %v3403
        %3405 = vmatprep.mubr.f32.mxu0 0.0
        %3406 = vmatmul.mubr.f32.gmra.mrb[0].mxu0 %v3333
        %v3407 = vpop.f32.mrb[0].mxu0
        %v3408 = vadd.f32 0.0, %v3407
        %v3409 = vpop.f32.mrb[0].mxu0
        %v3410 = vadd.f32 0.0, %v3409
        %3411 = vdwg.mxu0
        %3412 = vmatprep.subr.mxu0 %v3268
        %3413 = vmatpush1.msra.mxu0 %v3267
        %3414 = vmatprep.subr.mxu0 %v3284
        %3415 = vmatpush1.msra.mxu0 %v3283
        %3416 = vmatprep.subr.mxu0 0.0
        %3417 = vmatpush1.msra.mxu0 0.0
        %3418 = vmatprep.subr.mxu0 0.0
        %3419 = vmatpush1.msra.mxu0 0.0
        %3420 = vmatprep.subr.mxu0 0.0
        %3421 = vmatpush1.msra.mxu0 0.0
        %3422 = vmatprep.subr.mxu0 0.0
        %3423 = vmatpush1.msra.mxu0 0.0
        %3424 = vmatprep.subr.mxu0 0.0
        %3425 = vmatpush1.msra.mxu0 0.0
        %3426 = vmatprep.subr.mxu0 0.0
        %3427 = vmatpush1.msra.mxu0 0.0
        %3428 = vmatprep.subr.mxu0 0.0
        %3429 = vmatpush1.msra.mxu0 0.0
        %3430 = vmatprep.subr.mxu0 0.0
        %3431 = vmatpush1.msra.mxu0 0.0
        %3432 = vmatprep.subr.mxu0 0.0
        %3433 = vmatpush1.msra.mxu0 0.0
        %3434 = vmatprep.subr.mxu0 0.0
        %3435 = vmatpush1.msra.mxu0 0.0
        %3436 = vmatprep.subr.mxu0 0.0
        %3437 = vmatpush1.msra.mxu0 0.0
        %3438 = vmatprep.subr.mxu0 0.0
        %3439 = vmatpush1.msra.mxu0 0.0
        %3440 = vmatprep.subr.mxu0 0.0
        %3441 = vmatpush1.msra.mxu0 0.0
        %3442 = vmatprep.subr.mxu0 0.0
        %3443 = vmatpush1.msra.mxu0 0.0
        %3444 = vmatprep.subr.mxu0 0.0
        %3445 = vmatpush1.msra.mxu0 0.0
        %3446 = vmatprep.subr.mxu0 0.0
        %3447 = vmatpush1.msra.mxu0 0.0
        %3448 = vmatprep.subr.mxu0 0.0
        %3449 = vmatpush1.msra.mxu0 0.0
        %3450 = vmatprep.subr.mxu0 0.0
        %3451 = vmatpush1.msra.mxu0 0.0
        %3452 = vmatprep.subr.mxu0 0.0
        %3453 = vmatpush1.msra.mxu0 0.0
        %3454 = vmatprep.subr.mxu0 0.0
        %3455 = vmatpush1.msra.mxu0 0.0
        %3456 = vmatprep.subr.mxu0 0.0
        %3457 = vmatpush1.msra.mxu0 0.0
        %3458 = vmatprep.subr.mxu0 0.0
        %3459 = vmatpush1.msra.mxu0 0.0
        %3460 = vmatprep.subr.mxu0 0.0
        %3461 = vmatpush1.msra.mxu0 0.0
        %3462 = vmatprep.subr.mxu0 0.0
        %3463 = vmatpush1.msra.mxu0 0.0
        %3464 = vmatprep.subr.mxu0 0.0
        %3465 = vmatpush1.msra.mxu0 0.0
        %3466 = vmatprep.subr.mxu0 0.0
        %3467 = vmatpush1.msra.mxu0 0.0
        %3468 = vmatprep.subr.mxu0 0.0
        %3469 = vmatpush1.msra.mxu0 0.0
        %3470 = vmatprep.subr.mxu0 0.0
        %3471 = vmatpush1.msra.mxu0 0.0
        %3472 = vmatprep.subr.mxu0 0.0
        %3473 = vmatpush1.msra.mxu0 0.0
        %3474 = vmatprep.subr.mxu0 0.0
        %3475 = vmatpush1.msra.mxu0 0.0
        %3476 = vmatprep.mubr.f32.mxu0 0.0
        %3477 = vmatmul.mubr.f32.gmra.mrb[0].mxu0 %v3330
        %v3478 = vpop.f32.mrb[0].mxu0
        %v3479 = vadd.f32 0.0, %v3478
        %v3480 = vpop.f32.mrb[0].mxu0
        %v3481 = vadd.f32 0.0, %v3480
        %3482 = vmatprep.mubr.f32.mxu0 0.0
        %3483 = vmatmul.mubr.f32.gmra.mrb[0].mxu0 %v3333
        %v3484 = vpop.f32.mrb[0].mxu0
        %v3485 = vadd.f32 0.0, %v3484
        %v3486 = vpop.f32.mrb[0].mxu0
        %v3487 = vadd.f32 0.0, %v3486
        %3488 = vdwg.mxu0
        %3489 = vmatprep.subr.mxu0 %v3270
        %3490 = vmatpush1.msra.mxu0 %v3269
        %3491 = vmatprep.subr.mxu0 %v3286
        %3492 = vmatpush1.msra.mxu0 %v3285
        %3493 = vmatprep.subr.mxu0 0.0
        %3494 = vmatpush1.msra.mxu0 0.0
        %3495 = vmatprep.subr.mxu0 0.0
        %3496 = vmatpush1.msra.mxu0 0.0
        %3497 = vmatprep.subr.mxu0 0.0
        %3498 = vmatpush1.msra.mxu0 0.0
        %3499 = vmatprep.subr.mxu0 0.0
        %3500 = vmatpush1.msra.mxu0 0.0
        %3501 = vmatprep.subr.mxu0 0.0
        %3502 = vmatpush1.msra.mxu0 0.0
        %3503 = vmatprep.subr.mxu0 0.0
        %3504 = vmatpush1.msra.mxu0 0.0
        %3505 = vmatprep.subr.mxu0 0.0
        %3506 = vmatpush1.msra.mxu0 0.0
        %3507 = vmatprep.subr.mxu0 0.0
        %3508 = vmatpush1.msra.mxu0 0.0
        %3509 = vmatprep.subr.mxu0 0.0
        %3510 = vmatpush1.msra.mxu0 0.0
        %3511 = vmatprep.subr.mxu0 0.0
        %3512 = vmatpush1.msra.mxu0 0.0
        %3513 = vmatprep.subr.mxu0 0.0
        %3514 = vmatpush1.msra.mxu0 0.0
        %3515 = vmatprep.subr.mxu0 0.0
        %3516 = vmatpush1.msra.mxu0 0.0
        %3517 = vmatprep.subr.mxu0 0.0
        %3518 = vmatpush1.msra.mxu0 0.0
        %3519 = vmatprep.subr.mxu0 0.0
        %3520 = vmatpush1.msra.mxu0 0.0
        %3521 = vmatprep.subr.mxu0 0.0
        %3522 = vmatpush1.msra.mxu0 0.0
        %3523 = vmatprep.subr.mxu0 0.0
        %3524 = vmatpush1.msra.mxu0 0.0
        %3525 = vmatprep.subr.mxu0 0.0
        %3526 = vmatpush1.msra.mxu0 0.0
        %3527 = vmatprep.subr.mxu0 0.0
        %3528 = vmatpush1.msra.mxu0 0.0
        %3529 = vmatprep.subr.mxu0 0.0
        %3530 = vmatpush1.msra.mxu0 0.0
        %3531 = vmatprep.subr.mxu0 0.0
        %3532 = vmatpush1.msra.mxu0 0.0
        %3533 = vmatprep.subr.mxu0 0.0
        %3534 = vmatpush1.msra.mxu0 0.0
        %3535 = vmatprep.subr.mxu0 0.0
        %3536 = vmatpush1.msra.mxu0 0.0
        %3537 = vmatprep.subr.mxu0 0.0
        %3538 = vmatpush1.msra.mxu0 0.0
        %3539 = vmatprep.subr.mxu0 0.0
        %3540 = vmatpush1.msra.mxu0 0.0
        %3541 = vmatprep.subr.mxu0 0.0
        %3542 = vmatpush1.msra.mxu0 0.0
        %3543 = vmatprep.subr.mxu0 0.0
        %3544 = vmatpush1.msra.mxu0 0.0
        %3545 = vmatprep.subr.mxu0 0.0
        %3546 = vmatpush1.msra.mxu0 0.0
        %3547 = vmatprep.subr.mxu0 0.0
        %3548 = vmatpush1.msra.mxu0 0.0
        %3549 = vmatprep.subr.mxu0 0.0
        %3550 = vmatpush1.msra.mxu0 0.0
        %3551 = vmatprep.subr.mxu0 0.0
        %3552 = vmatpush1.msra.mxu0 0.0
        %3553 = vmatprep.mubr.f32.mxu0 0.0
        %3554 = vmatmul.mubr.f32.gmra.mrb[0].mxu0 %v3330
        %v3555 = vpop.f32.mrb[0].mxu0
        %v3556 = vadd.f32 0.0, %v3555
        %v3557 = vpop.f32.mrb[0].mxu0
        %v3558 = vadd.f32 0.0, %v3557
        %3559 = vmatprep.mubr.f32.mxu0 0.0
        %3560 = vmatmul.mubr.f32.gmra.mrb[0].mxu0 %v3333
        %v3561 = vpop.f32.mrb[0].mxu0
        %v3562 = vadd.f32 0.0, %v3561
        %v3563 = vpop.f32.mrb[0].mxu0
        %v3564 = vadd.f32 0.0, %v3563
        %3565 = vdwg.mxu0
        %3566 = vmatprep.subr.mxu0 %v3272
        %3567 = vmatpush1.msra.mxu0 %v3271
        %3568 = vmatprep.subr.mxu0 %v3288
        %3569 = vmatpush1.msra.mxu0 %v3287
        %3570 = vmatprep.subr.mxu0 0.0
        %3571 = vmatpush1.msra.mxu0 0.0
        %3572 = vmatprep.subr.mxu0 0.0
        %3573 = vmatpush1.msra.mxu0 0.0
        %3574 = vmatprep.subr.mxu0 0.0
        %3575 = vmatpush1.msra.mxu0 0.0
        %3576 = vmatprep.subr.mxu0 0.0
        %3577 = vmatpush1.msra.mxu0 0.0
        %3578 = vmatprep.subr.mxu0 0.0
        %3579 = vmatpush1.msra.mxu0 0.0
        %3580 = vmatprep.subr.mxu0 0.0
        %3581 = vmatpush1.msra.mxu0 0.0
        %3582 = vmatprep.subr.mxu0 0.0
        %3583 = vmatpush1.msra.mxu0 0.0
        %3584 = vmatprep.subr.mxu0 0.0
        %3585 = vmatpush1.msra.mxu0 0.0
        %3586 = vmatprep.subr.mxu0 0.0
        %3587 = vmatpush1.msra.mxu0 0.0
        %3588 = vmatprep.subr.mxu0 0.0
        %3589 = vmatpush1.msra.mxu0 0.0
        %3590 = vmatprep.subr.mxu0 0.0
        %3591 = vmatpush1.msra.mxu0 0.0
        %3592 = vmatprep.subr.mxu0 0.0
        %3593 = vmatpush1.msra.mxu0 0.0
        %3594 = vmatprep.subr.mxu0 0.0
        %3595 = vmatpush1.msra.mxu0 0.0
        %3596 = vmatprep.subr.mxu0 0.0
        %3597 = vmatpush1.msra.mxu0 0.0
        %3598 = vmatprep.subr.mxu0 0.0
        %3599 = vmatpush1.msra.mxu0 0.0
        %3600 = vmatprep.subr.mxu0 0.0
        %3601 = vmatpush1.msra.mxu0 0.0
        %3602 = vmatprep.subr.mxu0 0.0
        %3603 = vmatpush1.msra.mxu0 0.0
        %3604 = vmatprep.subr.mxu0 0.0
        %3605 = vmatpush1.msra.mxu0 0.0
        %3606 = vmatprep.subr.mxu0 0.0
        %3607 = vmatpush1.msra.mxu0 0.0
        %3608 = vmatprep.subr.mxu0 0.0
        %3609 = vmatpush1.msra.mxu0 0.0
        %3610 = vmatprep.subr.mxu0 0.0
        %3611 = vmatpush1.msra.mxu0 0.0
        %3612 = vmatprep.subr.mxu0 0.0
        %3613 = vmatpush1.msra.mxu0 0.0
        %3614 = vmatprep.subr.mxu0 0.0
        %3615 = vmatpush1.msra.mxu0 0.0
        %3616 = vmatprep.subr.mxu0 0.0
        %3617 = vmatpush1.msra.mxu0 0.0
        %3618 = vmatprep.subr.mxu0 0.0
        %3619 = vmatpush1.msra.mxu0 0.0
        %3620 = vmatprep.subr.mxu0 0.0
        %3621 = vmatpush1.msra.mxu0 0.0
        %3622 = vmatprep.subr.mxu0 0.0
        %3623 = vmatpush1.msra.mxu0 0.0
        %3624 = vmatprep.subr.mxu0 0.0
        %3625 = vmatpush1.msra.mxu0 0.0
        %3626 = vmatprep.subr.mxu0 0.0
        %3627 = vmatpush1.msra.mxu0 0.0
        %3628 = vmatprep.subr.mxu0 0.0
        %3629 = vmatpush1.msra.mxu0 0.0
        %3630 = vmatprep.mubr.f32.mxu0 0.0
        %3631 = vmatmul.mubr.f32.gmra.mrb[0].mxu0 %v3330
        %v3632 = vpop.f32.mrb[0].mxu0
        %v3633 = vadd.f32 0.0, %v3632
        %v3634 = vpop.f32.mrb[0].mxu0
        %v3635 = vadd.f32 0.0, %v3634
        %3636 = vmatprep.mubr.f32.mxu0 0.0
        %3637 = vmatmul.mubr.f32.gmra.mrb[0].mxu0 %v3333
        %v3638 = vpop.f32.mrb[0].mxu0
        %v3639 = vadd.f32 0.0, %v3638
        %v3640 = vpop.f32.mrb[0].mxu0
        %v3641 = vadd.f32 0.0, %v3640
        %3642 = vdwg.mxu0
        %3643 = vmatprep.subr.mxu0 %v3274
        %3644 = vmatpush1.msra.mxu0 %v3273
        %3645 = vmatprep.subr.mxu0 %v3290
        %3646 = vmatpush1.msra.mxu0 %v3289
        %3647 = vmatprep.subr.mxu0 0.0
        %3648 = vmatpush1.msra.mxu0 0.0
        %3649 = vmatprep.subr.mxu0 0.0
        %3650 = vmatpush1.msra.mxu0 0.0
        %3651 = vmatprep.subr.mxu0 0.0
        %3652 = vmatpush1.msra.mxu0 0.0
        %3653 = vmatprep.subr.mxu0 0.0
        %3654 = vmatpush1.msra.mxu0 0.0
        %3655 = vmatprep.subr.mxu0 0.0
        %3656 = vmatpush1.msra.mxu0 0.0
        %3657 = vmatprep.subr.mxu0 0.0
        %3658 = vmatpush1.msra.mxu0 0.0
        %3659 = vmatprep.subr.mxu0 0.0
        %3660 = vmatpush1.msra.mxu0 0.0
        %3661 = vmatprep.subr.mxu0 0.0
        %3662 = vmatpush1.msra.mxu0 0.0
        %3663 = vmatprep.subr.mxu0 0.0
        %3664 = vmatpush1.msra.mxu0 0.0
        %3665 = vmatprep.subr.mxu0 0.0
        %3666 = vmatpush1.msra.mxu0 0.0
        %3667 = vmatprep.subr.mxu0 0.0
        %3668 = vmatpush1.msra.mxu0 0.0
        %3669 = vmatprep.subr.mxu0 0.0
        %3670 = vmatpush1.msra.mxu0 0.0
        %3671 = vmatprep.subr.mxu0 0.0
        %3672 = vmatpush1.msra.mxu0 0.0
        %3673 = vmatprep.subr.mxu0 0.0
        %3674 = vmatpush1.msra.mxu0 0.0
        %3675 = vmatprep.subr.mxu0 0.0
        %3676 = vmatpush1.msra.mxu0 0.0
        %3677 = vmatprep.subr.mxu0 0.0
        %3678 = vmatpush1.msra.mxu0 0.0
        %3679 = vmatprep.subr.mxu0 0.0
        %3680 = vmatpush1.msra.mxu0 0.0
        %3681 = vmatprep.subr.mxu0 0.0
        %3682 = vmatpush1.msra.mxu0 0.0
        %3683 = vmatprep.subr.mxu0 0.0
        %3684 = vmatpush1.msra.mxu0 0.0
        %3685 = vmatprep.subr.mxu0 0.0
        %3686 = vmatpush1.msra.mxu0 0.0
        %3687 = vmatprep.subr.mxu0 0.0
        %3688 = vmatpush1.msra.mxu0 0.0
        %3689 = vmatprep.subr.mxu0 0.0
        %3690 = vmatpush1.msra.mxu0 0.0
        %3691 = vmatprep.subr.mxu0 0.0
        %3692 = vmatpush1.msra.mxu0 0.0
        %3693 = vmatprep.subr.mxu0 0.0
        %3694 = vmatpush1.msra.mxu0 0.0
        %3695 = vmatprep.subr.mxu0 0.0
        %3696 = vmatpush1.msra.mxu0 0.0
        %3697 = vmatprep.subr.mxu0 0.0
        %3698 = vmatpush1.msra.mxu0 0.0
        %3699 = vmatprep.subr.mxu0 0.0
        %3700 = vmatpush1.msra.mxu0 0.0
        %3701 = vmatprep.subr.mxu0 0.0
        %3702 = vmatpush1.msra.mxu0 0.0
        %3703 = vmatprep.subr.mxu0 0.0
        %3704 = vmatpush1.msra.mxu0 0.0
        %3705 = vmatprep.subr.mxu0 0.0
        %3706 = vmatpush1.msra.mxu0 0.0
        %3707 = vmatprep.mubr.f32.mxu0 0.0
        %3708 = vmatmul.mubr.f32.gmra.mrb[0].mxu0 %v3330
        %v3709 = vpop.f32.mrb[0].mxu0
        %v3710 = vadd.f32 0.0, %v3709
        %v3711 = vpop.f32.mrb[0].mxu0
        %v3712 = vadd.f32 0.0, %v3711
        %3713 = vmatprep.mubr.f32.mxu0 0.0
        %3714 = vmatmul.mubr.f32.gmra.mrb[0].mxu0 %v3333
        %v3715 = vpop.f32.mrb[0].mxu0
        %v3716 = vadd.f32 0.0, %v3715
        %v3717 = vpop.f32.mrb[0].mxu0
        %v3718 = vadd.f32 0.0, %v3717
        %3719 = vdwg.mxu0
        %3720 = vmatprep.subr.mxu0 %v3276
        %3721 = vmatpush1.msra.mxu0 %v3275
        %3722 = vmatprep.subr.mxu0 %v3292
        %3723 = vmatpush1.msra.mxu0 %v3291
        %3724 = vmatprep.subr.mxu0 0.0
        %3725 = vmatpush1.msra.mxu0 0.0
        %3726 = vmatprep.subr.mxu0 0.0
        %3727 = vmatpush1.msra.mxu0 0.0
        %3728 = vmatprep.subr.mxu0 0.0
        %3729 = vmatpush1.msra.mxu0 0.0
        %3730 = vmatprep.subr.mxu0 0.0
        %3731 = vmatpush1.msra.mxu0 0.0
        %3732 = vmatprep.subr.mxu0 0.0
        %3733 = vmatpush1.msra.mxu0 0.0
        %3734 = vmatprep.subr.mxu0 0.0
        %3735 = vmatpush1.msra.mxu0 0.0
        %3736 = vmatprep.subr.mxu0 0.0
        %3737 = vmatpush1.msra.mxu0 0.0
        %3738 = vmatprep.subr.mxu0 0.0
        %3739 = vmatpush1.msra.mxu0 0.0
        %3740 = vmatprep.subr.mxu0 0.0
        %3741 = vmatpush1.msra.mxu0 0.0
        %3742 = vmatprep.subr.mxu0 0.0
        %3743 = vmatpush1.msra.mxu0 0.0
        %3744 = vmatprep.subr.mxu0 0.0
        %3745 = vmatpush1.msra.mxu0 0.0
        %3746 = vmatprep.subr.mxu0 0.0
        %3747 = vmatpush1.msra.mxu0 0.0
        %3748 = vmatprep.subr.mxu0 0.0
        %3749 = vmatpush1.msra.mxu0 0.0
        %3750 = vmatprep.subr.mxu0 0.0
        %3751 = vmatpush1.msra.mxu0 0.0
        %3752 = vmatprep.subr.mxu0 0.0
        %3753 = vmatpush1.msra.mxu0 0.0
        %3754 = vmatprep.subr.mxu0 0.0
        %3755 = vmatpush1.msra.mxu0 0.0
        %3756 = vmatprep.subr.mxu0 0.0
        %3757 = vmatpush1.msra.mxu0 0.0
        %3758 = vmatprep.subr.mxu0 0.0
        %3759 = vmatpush1.msra.mxu0 0.0
        %3760 = vmatprep.subr.mxu0 0.0
        %3761 = vmatpush1.msra.mxu0 0.0
        %3762 = vmatprep.subr.mxu0 0.0
        %3763 = vmatpush1.msra.mxu0 0.0
        %3764 = vmatprep.subr.mxu0 0.0
        %3765 = vmatpush1.msra.mxu0 0.0
        %3766 = vmatprep.subr.mxu0 0.0
        %3767 = vmatpush1.msra.mxu0 0.0
        %3768 = vmatprep.subr.mxu0 0.0
        %3769 = vmatpush1.msra.mxu0 0.0
        %3770 = vmatprep.subr.mxu0 0.0
        %3771 = vmatpush1.msra.mxu0 0.0
        %3772 = vmatprep.subr.mxu0 0.0
        %3773 = vmatpush1.msra.mxu0 0.0
        %3774 = vmatprep.subr.mxu0 0.0
        %3775 = vmatpush1.msra.mxu0 0.0
        %3776 = vmatprep.subr.mxu0 0.0
        %3777 = vmatpush1.msra.mxu0 0.0
        %3778 = vmatprep.subr.mxu0 0.0
        %3779 = vmatpush1.msra.mxu0 0.0
        %3780 = vmatprep.subr.mxu0 0.0
        %3781 = vmatpush1.msra.mxu0 0.0
        %3782 = vmatprep.subr.mxu0 0.0
        %3783 = vmatpush1.msra.mxu0 0.0
        %3784 = vmatprep.mubr.f32.mxu0 0.0
        %3785 = vmatmul.mubr.f32.gmra.mrb[0].mxu0 %v3330
        %v3786 = vpop.f32.mrb[0].mxu0
        %v3787 = vadd.f32 0.0, %v3786
        %v3788 = vpop.f32.mrb[0].mxu0
        %v3789 = vadd.f32 0.0, %v3788
        %3790 = vmatprep.mubr.f32.mxu0 0.0
        %3791 = vmatmul.mubr.f32.gmra.mrb[0].mxu0 %v3333
        %v3792 = vpop.f32.mrb[0].mxu0
        %v3793 = vadd.f32 0.0, %v3792
        %v3794 = vpop.f32.mrb[0].mxu0
        %v3795 = vadd.f32 0.0, %v3794
        %3796 = vdwg.mxu0
        %3797 = vmatprep.subr.mxu0 %v3278
        %3798 = vmatpush1.msra.mxu0 %v3277
        %3799 = vmatprep.subr.mxu0 %v3294
        %3800 = vmatpush1.msra.mxu0 %v3293
        %3801 = vmatprep.subr.mxu0 0.0
        %3802 = vmatpush1.msra.mxu0 0.0
        %3803 = vmatprep.subr.mxu0 0.0
        %3804 = vmatpush1.msra.mxu0 0.0
        %3805 = vmatprep.subr.mxu0 0.0
        %3806 = vmatpush1.msra.mxu0 0.0
        %3807 = vmatprep.subr.mxu0 0.0
        %3808 = vmatpush1.msra.mxu0 0.0
        %3809 = vmatprep.subr.mxu0 0.0
        %3810 = vmatpush1.msra.mxu0 0.0
        %3811 = vmatprep.subr.mxu0 0.0
        %3812 = vmatpush1.msra.mxu0 0.0
        %3813 = vmatprep.subr.mxu0 0.0
        %3814 = vmatpush1.msra.mxu0 0.0
        %3815 = vmatprep.subr.mxu0 0.0
        %3816 = vmatpush1.msra.mxu0 0.0
        %3817 = vmatprep.subr.mxu0 0.0
        %3818 = vmatpush1.msra.mxu0 0.0
        %3819 = vmatprep.subr.mxu0 0.0
        %3820 = vmatpush1.msra.mxu0 0.0
        %3821 = vmatprep.subr.mxu0 0.0
        %3822 = vmatpush1.msra.mxu0 0.0
        %3823 = vmatprep.subr.mxu0 0.0
        %3824 = vmatpush1.msra.mxu0 0.0
        %3825 = vmatprep.subr.mxu0 0.0
        %3826 = vmatpush1.msra.mxu0 0.0
        %3827 = vmatprep.subr.mxu0 0.0
        %3828 = vmatpush1.msra.mxu0 0.0
        %3829 = vmatprep.subr.mxu0 0.0
        %3830 = vmatpush1.msra.mxu0 0.0
        %3831 = vmatprep.subr.mxu0 0.0
        %3832 = vmatpush1.msra.mxu0 0.0
        %3833 = vmatprep.subr.mxu0 0.0
        %3834 = vmatpush1.msra.mxu0 0.0
        %3835 = vmatprep.subr.mxu0 0.0
        %3836 = vmatpush1.msra.mxu0 0.0
        %3837 = vmatprep.subr.mxu0 0.0
        %3838 = vmatpush1.msra.mxu0 0.0
        %3839 = vmatprep.subr.mxu0 0.0
        %3840 = vmatpush1.msra.mxu0 0.0
        %3841 = vmatprep.subr.mxu0 0.0
        %3842 = vmatpush1.msra.mxu0 0.0
        %3843 = vmatprep.subr.mxu0 0.0
        %3844 = vmatpush1.msra.mxu0 0.0
        %3845 = vmatprep.subr.mxu0 0.0
        %3846 = vmatpush1.msra.mxu0 0.0
        %3847 = vmatprep.subr.mxu0 0.0
        %3848 = vmatpush1.msra.mxu0 0.0
        %3849 = vmatprep.subr.mxu0 0.0
        %3850 = vmatpush1.msra.mxu0 0.0
        %3851 = vmatprep.subr.mxu0 0.0
        %3852 = vmatpush1.msra.mxu0 0.0
        %3853 = vmatprep.subr.mxu0 0.0
        %3854 = vmatpush1.msra.mxu0 0.0
        %3855 = vmatprep.subr.mxu0 0.0
        %3856 = vmatpush1.msra.mxu0 0.0
        %3857 = vmatprep.subr.mxu0 0.0
        %3858 = vmatpush1.msra.mxu0 0.0
        %3859 = vmatprep.subr.mxu0 0.0
        %3860 = vmatpush1.msra.mxu0 0.0
        %3861 = vmatprep.mubr.f32.mxu0 0.0
        %3862 = vmatmul.mubr.f32.gmra.mrb[0].mxu0 %v3330
        %v3863 = vpop.f32.mrb[0].mxu0
        %v3864 = vadd.f32 0.0, %v3863
        %v3865 = vpop.f32.mrb[0].mxu0
        %v3866 = vadd.f32 0.0, %v3865
        %3867 = vmatprep.mubr.f32.mxu0 0.0
        %3868 = vmatmul.mubr.f32.gmra.mrb[0].mxu0 %v3333
        %v3869 = vpop.f32.mrb[0].mxu0
        %v3870 = vadd.f32 0.0, %v3869
        %v3871 = vpop.f32.mrb[0].mxu0
        %v3872 = vadd.f32 0.0, %v3871
        %3873 = vdwg.mxu0
        %3874 = vmatprep.subr.mxu0 %v3280
        %3875 = vmatpush1.msra.mxu0 %v3279
        %3876 = vmatprep.subr.mxu0 %v3296
        %3877 = vmatpush1.msra.mxu0 %v3295
        %3878 = vmatprep.subr.mxu0 0.0
        %3879 = vmatpush1.msra.mxu0 0.0
        %3880 = vmatprep.subr.mxu0 0.0
        %3881 = vmatpush1.msra.mxu0 0.0
        %3882 = vmatprep.subr.mxu0 0.0
        %3883 = vmatpush1.msra.mxu0 0.0
        %3884 = vmatprep.subr.mxu0 0.0
        %3885 = vmatpush1.msra.mxu0 0.0
        %3886 = vmatprep.subr.mxu0 0.0
        %3887 = vmatpush1.msra.mxu0 0.0
        %3888 = vmatprep.subr.mxu0 0.0
        %3889 = vmatpush1.msra.mxu0 0.0
        %3890 = vmatprep.subr.mxu0 0.0
        %3891 = vmatpush1.msra.mxu0 0.0
        %3892 = vmatprep.subr.mxu0 0.0
        %3893 = vmatpush1.msra.mxu0 0.0
        %3894 = vmatprep.subr.mxu0 0.0
        %3895 = vmatpush1.msra.mxu0 0.0
        %3896 = vmatprep.subr.mxu0 0.0
        %3897 = vmatpush1.msra.mxu0 0.0
        %3898 = vmatprep.subr.mxu0 0.0
        %3899 = vmatpush1.msra.mxu0 0.0
        %3900 = vmatprep.subr.mxu0 0.0
        %3901 = vmatpush1.msra.mxu0 0.0
        %3902 = vmatprep.subr.mxu0 0.0
        %3903 = vmatpush1.msra.mxu0 0.0
        %3904 = vmatprep.subr.mxu0 0.0
        %3905 = vmatpush1.msra.mxu0 0.0
        %3906 = vmatprep.subr.mxu0 0.0
        %3907 = vmatpush1.msra.mxu0 0.0
        %3908 = vmatprep.subr.mxu0 0.0
        %3909 = vmatpush1.msra.mxu0 0.0
        %3910 = vmatprep.subr.mxu0 0.0
        %3911 = vmatpush1.msra.mxu0 0.0
        %3912 = vmatprep.subr.mxu0 0.0
        %3913 = vmatpush1.msra.mxu0 0.0
        %3914 = vmatprep.subr.mxu0 0.0
        %3915 = vmatpush1.msra.mxu0 0.0
        %3916 = vmatprep.subr.mxu0 0.0
        %3917 = vmatpush1.msra.mxu0 0.0
        %3918 = vmatprep.subr.mxu0 0.0
        %3919 = vmatpush1.msra.mxu0 0.0
        %3920 = vmatprep.subr.mxu0 0.0
        %3921 = vmatpush1.msra.mxu0 0.0
        %3922 = vmatprep.subr.mxu0 0.0
        %3923 = vmatpush1.msra.mxu0 0.0
        %3924 = vmatprep.subr.mxu0 0.0
        %3925 = vmatpush1.msra.mxu0 0.0
        %3926 = vmatprep.subr.mxu0 0.0
        %3927 = vmatpush1.msra.mxu0 0.0
        %3928 = vmatprep.subr.mxu0 0.0
        %3929 = vmatpush1.msra.mxu0 0.0
        %3930 = vmatprep.subr.mxu0 0.0
        %3931 = vmatpush1.msra.mxu0 0.0
        %3932 = vmatprep.subr.mxu0 0.0
        %3933 = vmatpush1.msra.mxu0 0.0
        %3934 = vmatprep.subr.mxu0 0.0
        %3935 = vmatpush1.msra.mxu0 0.0
        %3936 = vmatprep.subr.mxu0 0.0
        %3937 = vmatpush1.msra.mxu0 0.0
        %3938 = vmatprep.mubr.f32.mxu0 0.0
        %3939 = vmatmul.mubr.f32.gmra.mrb[0].mxu0 %v3330
        %v3940 = vpop.f32.mrb[0].mxu0
        %v3941 = vadd.f32 0.0, %v3940
        %v3942 = vpop.f32.mrb[0].mxu0
        %v3943 = vadd.f32 0.0, %v3942
        %3944 = vmatprep.mubr.f32.mxu0 0.0
        %3945 = vmatmul.mubr.f32.gmra.mrb[0].mxu0 %v3333
        %v3946 = vpop.f32.mrb[0].mxu0
        %v3947 = vadd.f32 0.0, %v3946
        %v3948 = vpop.f32.mrb[0].mxu0
        %v3949 = vadd.f32 0.0, %v3948
        %3950 = vdwg.mxu0
        %v3951 = vadd.f32 %v3094, %v3402
        %v3952 = vadd.f32 %v3095, %v3404
        %v3953 = vadd.f32 %v3096, %v3479
        %v3954 = vadd.f32 %v3097, %v3481
        %v3955 = vadd.f32 %v3098, %v3556
        %v3956 = vadd.f32 %v3099, %v3558
        %v3957 = vadd.f32 %v3100, %v3633
        %v3958 = vadd.f32 %v3101, %v3635
        %v3959 = vadd.f32 %v3102, %v3710
        %v3960 = vadd.f32 %v3103, %v3712
        %v3961 = vadd.f32 %v3104, %v3787
        %v3962 = vadd.f32 %v3105, %v3789
        %v3963 = vadd.f32 %v3106, %v3864
        %v3964 = vadd.f32 %v3107, %v3866
        %v3965 = vadd.f32 %v3108, %v3941
        %v3966 = vadd.f32 %v3109, %v3943
        %v3967 = vadd.f32 %v3110, %v3408
        %v3968 = vadd.f32 %v3111, %v3410
        %v3969 = vadd.f32 %v3112, %v3485
        %v3970 = vadd.f32 %v3113, %v3487
        %v3971 = vadd.f32 %v3114, %v3562
        %v3972 = vadd.f32 %v3115, %v3564
        %v3973 = vadd.f32 %v3116, %v3639
        %v3974 = vadd.f32 %v3117, %v3641
        %v3975 = vadd.f32 %v3118, %v3716
        %v3976 = vadd.f32 %v3119, %v3718
        %v3977 = vadd.f32 %v3120, %v3793
        %v3978 = vadd.f32 %v3121, %v3795
        %v3979 = vadd.f32 %v3122, %v3870
        %v3980 = vadd.f32 %v3123, %v3872
        %v3981 = vadd.f32 %v3124, %v3947
        %v3982 = vadd.f32 %v3125, %v3949
        %s3983 = scalar_lea.vmem [#allocation6], 80
        %v3984 = vld [vmem:[%s3983] sm:$0xff]
        %v3985 = vld [vmem:[%s3983 + $0x8] sm:$0xff]
        %3986 = vrot.lane.b32.xlu0 %v3126, 126
        %v3987 = vpop.permute.xlu0 %3986
        %3988 = vrot.lane.b32.xlu0 %v3127, 126
        %v3989 = vpop.permute.xlu0 %3988
        %3990 = vrot.lane.b32.xlu0 %v3128, 126
        %v3991 = vpop.permute.xlu0 %3990
        %3992 = vrot.lane.b32.xlu0 %v3129, 126
        %v3993 = vpop.permute.xlu0 %3992
        %3994 = vrot.lane.b32.xlu0 %v3130, 126
        %v3995 = vpop.permute.xlu0 %3994
        %3996 = vrot.lane.b32.xlu0 %v3131, 126
        %v3997 = vpop.permute.xlu0 %3996
        %3998 = vrot.lane.b32.xlu0 %v3132, 126
        %v3999 = vpop.permute.xlu0 %3998
        %4000 = vrot.lane.b32.xlu0 %v3133, 126
        %v4001 = vpop.permute.xlu0 %4000
        %4002 = vrot.lane.b32.xlu0 %v3134, 126
        %v4003 = vpop.permute.xlu0 %4002
        %4004 = vrot.lane.b32.xlu0 %v3135, 126
        %v4005 = vpop.permute.xlu0 %4004
        %4006 = vrot.lane.b32.xlu0 %v3136, 126
        %v4007 = vpop.permute.xlu0 %4006
        %4008 = vrot.lane.b32.xlu0 %v3137, 126
        %v4009 = vpop.permute.xlu0 %4008
        %4010 = vrot.lane.b32.xlu0 %v3138, 126
        %v4011 = vpop.permute.xlu0 %4010
        %4012 = vrot.lane.b32.xlu0 %v3139, 126
        %v4013 = vpop.permute.xlu0 %4012
        %4014 = vrot.lane.b32.xlu0 %v3140, 126
        %v4015 = vpop.permute.xlu0 %4014
        %4016 = vrot.lane.b32.xlu0 %v3141, 126
        %v4017 = vpop.permute.xlu0 %4016
        %4018 = vrot.lane.b32.xlu0 %v3142, 126
        %v4019 = vpop.permute.xlu0 %4018
        %4020 = vrot.lane.b32.xlu0 %v3143, 126
        %v4021 = vpop.permute.xlu0 %4020
        %4022 = vrot.lane.b32.xlu0 %v3144, 126
        %v4023 = vpop.permute.xlu0 %4022
        %4024 = vrot.lane.b32.xlu0 %v3145, 126
        %v4025 = vpop.permute.xlu0 %4024
        %4026 = vrot.lane.b32.xlu0 %v3146, 126
        %v4027 = vpop.permute.xlu0 %4026
        %4028 = vrot.lane.b32.xlu0 %v3147, 126
        %v4029 = vpop.permute.xlu0 %4028
        %4030 = vrot.lane.b32.xlu0 %v3148, 126
        %v4031 = vpop.permute.xlu0 %4030
        %4032 = vrot.lane.b32.xlu0 %v3149, 126
        %v4033 = vpop.permute.xlu0 %4032
        %4034 = vrot.lane.b32.xlu0 %v3150, 126
        %v4035 = vpop.permute.xlu0 %4034
        %4036 = vrot.lane.b32.xlu0 %v3151, 126
        %v4037 = vpop.permute.xlu0 %4036
        %4038 = vrot.lane.b32.xlu0 %v3152, 126
        %v4039 = vpop.permute.xlu0 %4038
        %4040 = vrot.lane.b32.xlu0 %v3153, 126
        %v4041 = vpop.permute.xlu0 %4040
        %4042 = vrot.lane.b32.xlu0 %v3154, 126
        %v4043 = vpop.permute.xlu0 %4042
        %4044 = vrot.lane.b32.xlu0 %v3155, 126
        %v4045 = vpop.permute.xlu0 %4044
        %4046 = vrot.lane.b32.xlu0 %v3156, 126
        %v4047 = vpop.permute.xlu0 %4046
        %4048 = vrot.lane.b32.xlu0 %v3157, 126
        %v4049 = vpop.permute.xlu0 %4048
        %4050 = vrot.lane.b32.xlu0 %v3158, 126
        %v4051 = vpop.permute.xlu0 %4050
        %4052 = vrot.lane.b32.xlu0 %v3159, 126
        %v4053 = vpop.permute.xlu0 %4052
        %v4054 = vsel %vm1750, %v3987, %v3989
        %v4055 = vsel %vm1750, %v3989, %v3991
        %v4056 = vsel %vm1750, %v3991, %v3993
        %v4057 = vsel %vm1750, %v3993, %v3995
        %v4058 = vsel %vm1750, %v3995, %v3997
        %v4059 = vsel %vm1750, %v3997, %v3999
        %v4060 = vsel %vm1750, %v3999, %v4001
        %v4061 = vsel %vm1750, %v4001, %v4003
        %v4062 = vsel %vm1750, %v4003, %v4005
        %v4063 = vsel %vm1750, %v4005, %v4007
        %v4064 = vsel %vm1750, %v4007, %v4009
        %v4065 = vsel %vm1750, %v4009, %v4011
        %v4066 = vsel %vm1750, %v4011, %v4013
        %v4067 = vsel %vm1750, %v4013, %v4015
        %v4068 = vsel %vm1750, %v4015, %v4017
        %v4069 = vsel %vm1750, %v4017, %v4019
        %v4070 = vsel %vm1750, %v4021, %v4023
        %v4071 = vsel %vm1750, %v4023, %v4025
        %v4072 = vsel %vm1750, %v4025, %v4027
        %v4073 = vsel %vm1750, %v4027, %v4029
        %v4074 = vsel %vm1750, %v4029, %v4031
        %v4075 = vsel %vm1750, %v4031, %v4033
        %v4076 = vsel %vm1750, %v4033, %v4035
        %v4077 = vsel %vm1750, %v4035, %v4037
        %v4078 = vsel %vm1750, %v4037, %v4039
        %v4079 = vsel %vm1750, %v4039, %v4041
        %v4080 = vsel %vm1750, %v4041, %v4043
        %v4081 = vsel %vm1750, %v4043, %v4045
        %v4082 = vsel %vm1750, %v4045, %v4047
        %v4083 = vsel %vm1750, %v4047, %v4049
        %v4084 = vsel %vm1750, %v4049, %v4051
        %v4085 = vsel %vm1750, %v4051, %v4053
        %v4119 = vsel %vm434, %v3984, 0
        %v4122 = vsel %vm434, %v3985, 0
        %4124 = vmatprep.subr.mxu0 %v4055
        %4125 = vmatpush1.msra.mxu0 %v4054
        %4126 = vmatprep.subr.mxu0 %v4071
        %4127 = vmatpush1.msra.mxu0 %v4070
        %4128 = vmatprep.subr.mxu0 0.0
        %4129 = vmatpush1.msra.mxu0 0.0
        %4130 = vmatprep.subr.mxu0 0.0
        %4131 = vmatpush1.msra.mxu0 0.0
        %4132 = vmatprep.subr.mxu0 0.0
        %4133 = vmatpush1.msra.mxu0 0.0
        %4134 = vmatprep.subr.mxu0 0.0
        %4135 = vmatpush1.msra.mxu0 0.0
        %4136 = vmatprep.subr.mxu0 0.0
        %4137 = vmatpush1.msra.mxu0 0.0
        %4138 = vmatprep.subr.mxu0 0.0
        %4139 = vmatpush1.msra.mxu0 0.0
        %4140 = vmatprep.subr.mxu0 0.0
        %4141 = vmatpush1.msra.mxu0 0.0
        %4142 = vmatprep.subr.mxu0 0.0
        %4143 = vmatpush1.msra.mxu0 0.0
        %4144 = vmatprep.subr.mxu0 0.0
        %4145 = vmatpush1.msra.mxu0 0.0
        %4146 = vmatprep.subr.mxu0 0.0
        %4147 = vmatpush1.msra.mxu0 0.0
        %4148 = vmatprep.subr.mxu0 0.0
        %4149 = vmatpush1.msra.mxu0 0.0
        %4150 = vmatprep.subr.mxu0 0.0
        %4151 = vmatpush1.msra.mxu0 0.0
        %4152 = vmatprep.subr.mxu0 0.0
        %4153 = vmatpush1.msra.mxu0 0.0
        %4154 = vmatprep.subr.mxu0 0.0
        %4155 = vmatpush1.msra.mxu0 0.0
        %4156 = vmatprep.subr.mxu0 0.0
        %4157 = vmatpush1.msra.mxu0 0.0
        %4158 = vmatprep.subr.mxu0 0.0
        %4159 = vmatpush1.msra.mxu0 0.0
        %4160 = vmatprep.subr.mxu0 0.0
        %4161 = vmatpush1.msra.mxu0 0.0
        %4162 = vmatprep.subr.mxu0 0.0
        %4163 = vmatpush1.msra.mxu0 0.0
        %4164 = vmatprep.subr.mxu0 0.0
        %4165 = vmatpush1.msra.mxu0 0.0
        %4166 = vmatprep.subr.mxu0 0.0
        %4167 = vmatpush1.msra.mxu0 0.0
        %4168 = vmatprep.subr.mxu0 0.0
        %4169 = vmatpush1.msra.mxu0 0.0
        %4170 = vmatprep.subr.mxu0 0.0
        %4171 = vmatpush1.msra.mxu0 0.0
        %4172 = vmatprep.subr.mxu0 0.0
        %4173 = vmatpush1.msra.mxu0 0.0
        %4174 = vmatprep.subr.mxu0 0.0
        %4175 = vmatpush1.msra.mxu0 0.0
        %4176 = vmatprep.subr.mxu0 0.0
        %4177 = vmatpush1.msra.mxu0 0.0
        %4178 = vmatprep.subr.mxu0 0.0
        %4179 = vmatpush1.msra.mxu0 0.0
        %4180 = vmatprep.subr.mxu0 0.0
        %4181 = vmatpush1.msra.mxu0 0.0
        %4182 = vmatprep.subr.mxu0 0.0
        %4183 = vmatpush1.msra.mxu0 0.0
        %4184 = vmatprep.subr.mxu0 0.0
        %4185 = vmatpush1.msra.mxu0 0.0
        %4186 = vmatprep.subr.mxu0 0.0
        %4187 = vmatpush1.msra.mxu0 0.0
        %4188 = vmatprep.mubr.f32.mxu0 0.0
        %4189 = vmatmul.mubr.f32.gmra.mrb[0].mxu0 %v4119
        %v4190 = vpop.f32.mrb[0].mxu0
        %v4191 = vadd.f32 0.0, %v4190
        %v4192 = vpop.f32.mrb[0].mxu0
        %v4193 = vadd.f32 0.0, %v4192
        %4194 = vmatprep.mubr.f32.mxu0 0.0
        %4195 = vmatmul.mubr.f32.gmra.mrb[0].mxu0 %v4122
        %v4196 = vpop.f32.mrb[0].mxu0
        %v4197 = vadd.f32 0.0, %v4196
        %v4198 = vpop.f32.mrb[0].mxu0
        %v4199 = vadd.f32 0.0, %v4198
        %4200 = vdwg.mxu0
        %4201 = vmatprep.subr.mxu0 %v4057
        %4202 = vmatpush1.msra.mxu0 %v4056
        %4203 = vmatprep.subr.mxu0 %v4073
        %4204 = vmatpush1.msra.mxu0 %v4072
        %4205 = vmatprep.subr.mxu0 0.0
        %4206 = vmatpush1.msra.mxu0 0.0
        %4207 = vmatprep.subr.mxu0 0.0
        %4208 = vmatpush1.msra.mxu0 0.0
        %4209 = vmatprep.subr.mxu0 0.0
        %4210 = vmatpush1.msra.mxu0 0.0
        %4211 = vmatprep.subr.mxu0 0.0
        %4212 = vmatpush1.msra.mxu0 0.0
        %4213 = vmatprep.subr.mxu0 0.0
        %4214 = vmatpush1.msra.mxu0 0.0
        %4215 = vmatprep.subr.mxu0 0.0
        %4216 = vmatpush1.msra.mxu0 0.0
        %4217 = vmatprep.subr.mxu0 0.0
        %4218 = vmatpush1.msra.mxu0 0.0
        %4219 = vmatprep.subr.mxu0 0.0
        %4220 = vmatpush1.msra.mxu0 0.0
        %4221 = vmatprep.subr.mxu0 0.0
        %4222 = vmatpush1.msra.mxu0 0.0
        %4223 = vmatprep.subr.mxu0 0.0
        %4224 = vmatpush1.msra.mxu0 0.0
        %4225 = vmatprep.subr.mxu0 0.0
        %4226 = vmatpush1.msra.mxu0 0.0
        %4227 = vmatprep.subr.mxu0 0.0
        %4228 = vmatpush1.msra.mxu0 0.0
        %4229 = vmatprep.subr.mxu0 0.0
        %4230 = vmatpush1.msra.mxu0 0.0
        %4231 = vmatprep.subr.mxu0 0.0
        %4232 = vmatpush1.msra.mxu0 0.0
        %4233 = vmatprep.subr.mxu0 0.0
        %4234 = vmatpush1.msra.mxu0 0.0
        %4235 = vmatprep.subr.mxu0 0.0
        %4236 = vmatpush1.msra.mxu0 0.0
        %4237 = vmatprep.subr.mxu0 0.0
        %4238 = vmatpush1.msra.mxu0 0.0
        %4239 = vmatprep.subr.mxu0 0.0
        %4240 = vmatpush1.msra.mxu0 0.0
        %4241 = vmatprep.subr.mxu0 0.0
        %4242 = vmatpush1.msra.mxu0 0.0
        %4243 = vmatprep.subr.mxu0 0.0
        %4244 = vmatpush1.msra.mxu0 0.0
        %4245 = vmatprep.subr.mxu0 0.0
        %4246 = vmatpush1.msra.mxu0 0.0
        %4247 = vmatprep.subr.mxu0 0.0
        %4248 = vmatpush1.msra.mxu0 0.0
        %4249 = vmatprep.subr.mxu0 0.0
        %4250 = vmatpush1.msra.mxu0 0.0
        %4251 = vmatprep.subr.mxu0 0.0
        %4252 = vmatpush1.msra.mxu0 0.0
        %4253 = vmatprep.subr.mxu0 0.0
        %4254 = vmatpush1.msra.mxu0 0.0
        %4255 = vmatprep.subr.mxu0 0.0
        %4256 = vmatpush1.msra.mxu0 0.0
        %4257 = vmatprep.subr.mxu0 0.0
        %4258 = vmatpush1.msra.mxu0 0.0
        %4259 = vmatprep.subr.mxu0 0.0
        %4260 = vmatpush1.msra.mxu0 0.0
        %4261 = vmatprep.subr.mxu0 0.0
        %4262 = vmatpush1.msra.mxu0 0.0
        %4263 = vmatprep.subr.mxu0 0.0
        %4264 = vmatpush1.msra.mxu0 0.0
        %4265 = vmatprep.mubr.f32.mxu0 0.0
        %4266 = vmatmul.mubr.f32.gmra.mrb[0].mxu0 %v4119
        %v4267 = vpop.f32.mrb[0].mxu0
        %v4268 = vadd.f32 0.0, %v4267
        %v4269 = vpop.f32.mrb[0].mxu0
        %v4270 = vadd.f32 0.0, %v4269
        %4271 = vmatprep.mubr.f32.mxu0 0.0
        %4272 = vmatmul.mubr.f32.gmra.mrb[0].mxu0 %v4122
        %v4273 = vpop.f32.mrb[0].mxu0
        %v4274 = vadd.f32 0.0, %v4273
        %v4275 = vpop.f32.mrb[0].mxu0
        %v4276 = vadd.f32 0.0, %v4275
        %4277 = vdwg.mxu0
        %4278 = vmatprep.subr.mxu0 %v4059
        %4279 = vmatpush1.msra.mxu0 %v4058
        %4280 = vmatprep.subr.mxu0 %v4075
        %4281 = vmatpush1.msra.mxu0 %v4074
        %4282 = vmatprep.subr.mxu0 0.0
        %4283 = vmatpush1.msra.mxu0 0.0
        %4284 = vmatprep.subr.mxu0 0.0
        %4285 = vmatpush1.msra.mxu0 0.0
        %4286 = vmatprep.subr.mxu0 0.0
        %4287 = vmatpush1.msra.mxu0 0.0
        %4288 = vmatprep.subr.mxu0 0.0
        %4289 = vmatpush1.msra.mxu0 0.0
        %4290 = vmatprep.subr.mxu0 0.0
        %4291 = vmatpush1.msra.mxu0 0.0
        %4292 = vmatprep.subr.mxu0 0.0
        %4293 = vmatpush1.msra.mxu0 0.0
        %4294 = vmatprep.subr.mxu0 0.0
        %4295 = vmatpush1.msra.mxu0 0.0
        %4296 = vmatprep.subr.mxu0 0.0
        %4297 = vmatpush1.msra.mxu0 0.0
        %4298 = vmatprep.subr.mxu0 0.0
        %4299 = vmatpush1.msra.mxu0 0.0
        %4300 = vmatprep.subr.mxu0 0.0
        %4301 = vmatpush1.msra.mxu0 0.0
        %4302 = vmatprep.subr.mxu0 0.0
        %4303 = vmatpush1.msra.mxu0 0.0
        %4304 = vmatprep.subr.mxu0 0.0
        %4305 = vmatpush1.msra.mxu0 0.0
        %4306 = vmatprep.subr.mxu0 0.0
        %4307 = vmatpush1.msra.mxu0 0.0
        %4308 = vmatprep.subr.mxu0 0.0
        %4309 = vmatpush1.msra.mxu0 0.0
        %4310 = vmatprep.subr.mxu0 0.0
        %4311 = vmatpush1.msra.mxu0 0.0
        %4312 = vmatprep.subr.mxu0 0.0
        %4313 = vmatpush1.msra.mxu0 0.0
        %4314 = vmatprep.subr.mxu0 0.0
        %4315 = vmatpush1.msra.mxu0 0.0
        %4316 = vmatprep.subr.mxu0 0.0
        %4317 = vmatpush1.msra.mxu0 0.0
        %4318 = vmatprep.subr.mxu0 0.0
        %4319 = vmatpush1.msra.mxu0 0.0
        %4320 = vmatprep.subr.mxu0 0.0
        %4321 = vmatpush1.msra.mxu0 0.0
        %4322 = vmatprep.subr.mxu0 0.0
        %4323 = vmatpush1.msra.mxu0 0.0
        %4324 = vmatprep.subr.mxu0 0.0
        %4325 = vmatpush1.msra.mxu0 0.0
        %4326 = vmatprep.subr.mxu0 0.0
        %4327 = vmatpush1.msra.mxu0 0.0
        %4328 = vmatprep.subr.mxu0 0.0
        %4329 = vmatpush1.msra.mxu0 0.0
        %4330 = vmatprep.subr.mxu0 0.0
        %4331 = vmatpush1.msra.mxu0 0.0
        %4332 = vmatprep.subr.mxu0 0.0
        %4333 = vmatpush1.msra.mxu0 0.0
        %4334 = vmatprep.subr.mxu0 0.0
        %4335 = vmatpush1.msra.mxu0 0.0
        %4336 = vmatprep.subr.mxu0 0.0
        %4337 = vmatpush1.msra.mxu0 0.0
        %4338 = vmatprep.subr.mxu0 0.0
        %4339 = vmatpush1.msra.mxu0 0.0
        %4340 = vmatprep.subr.mxu0 0.0
        %4341 = vmatpush1.msra.mxu0 0.0
        %4342 = vmatprep.mubr.f32.mxu0 0.0
        %4343 = vmatmul.mubr.f32.gmra.mrb[0].mxu0 %v4119
        %v4344 = vpop.f32.mrb[0].mxu0
        %v4345 = vadd.f32 0.0, %v4344
        %v4346 = vpop.f32.mrb[0].mxu0
        %v4347 = vadd.f32 0.0, %v4346
        %4348 = vmatprep.mubr.f32.mxu0 0.0
        %4349 = vmatmul.mubr.f32.gmra.mrb[0].mxu0 %v4122
        %v4350 = vpop.f32.mrb[0].mxu0
        %v4351 = vadd.f32 0.0, %v4350
        %v4352 = vpop.f32.mrb[0].mxu0
        %v4353 = vadd.f32 0.0, %v4352
        %4354 = vdwg.mxu0
        %4355 = vmatprep.subr.mxu0 %v4061
        %4356 = vmatpush1.msra.mxu0 %v4060
        %4357 = vmatprep.subr.mxu0 %v4077
        %4358 = vmatpush1.msra.mxu0 %v4076
        %4359 = vmatprep.subr.mxu0 0.0
        %4360 = vmatpush1.msra.mxu0 0.0
        %4361 = vmatprep.subr.mxu0 0.0
        %4362 = vmatpush1.msra.mxu0 0.0
        %4363 = vmatprep.subr.mxu0 0.0
        %4364 = vmatpush1.msra.mxu0 0.0
        %4365 = vmatprep.subr.mxu0 0.0
        %4366 = vmatpush1.msra.mxu0 0.0
        %4367 = vmatprep.subr.mxu0 0.0
        %4368 = vmatpush1.msra.mxu0 0.0
        %4369 = vmatprep.subr.mxu0 0.0
        %4370 = vmatpush1.msra.mxu0 0.0
        %4371 = vmatprep.subr.mxu0 0.0
        %4372 = vmatpush1.msra.mxu0 0.0
        %4373 = vmatprep.subr.mxu0 0.0
        %4374 = vmatpush1.msra.mxu0 0.0
        %4375 = vmatprep.subr.mxu0 0.0
        %4376 = vmatpush1.msra.mxu0 0.0
        %4377 = vmatprep.subr.mxu0 0.0
        %4378 = vmatpush1.msra.mxu0 0.0
        %4379 = vmatprep.subr.mxu0 0.0
        %4380 = vmatpush1.msra.mxu0 0.0
        %4381 = vmatprep.subr.mxu0 0.0
        %4382 = vmatpush1.msra.mxu0 0.0
        %4383 = vmatprep.subr.mxu0 0.0
        %4384 = vmatpush1.msra.mxu0 0.0
        %4385 = vmatprep.subr.mxu0 0.0
        %4386 = vmatpush1.msra.mxu0 0.0
        %4387 = vmatprep.subr.mxu0 0.0
        %4388 = vmatpush1.msra.mxu0 0.0
        %4389 = vmatprep.subr.mxu0 0.0
        %4390 = vmatpush1.msra.mxu0 0.0
        %4391 = vmatprep.subr.mxu0 0.0
        %4392 = vmatpush1.msra.mxu0 0.0
        %4393 = vmatprep.subr.mxu0 0.0
        %4394 = vmatpush1.msra.mxu0 0.0
        %4395 = vmatprep.subr.mxu0 0.0
        %4396 = vmatpush1.msra.mxu0 0.0
        %4397 = vmatprep.subr.mxu0 0.0
        %4398 = vmatpush1.msra.mxu0 0.0
        %4399 = vmatprep.subr.mxu0 0.0
        %4400 = vmatpush1.msra.mxu0 0.0
        %4401 = vmatprep.subr.mxu0 0.0
        %4402 = vmatpush1.msra.mxu0 0.0
        %4403 = vmatprep.subr.mxu0 0.0
        %4404 = vmatpush1.msra.mxu0 0.0
        %4405 = vmatprep.subr.mxu0 0.0
        %4406 = vmatpush1.msra.mxu0 0.0
        %4407 = vmatprep.subr.mxu0 0.0
        %4408 = vmatpush1.msra.mxu0 0.0
        %4409 = vmatprep.subr.mxu0 0.0
        %4410 = vmatpush1.msra.mxu0 0.0
        %4411 = vmatprep.subr.mxu0 0.0
        %4412 = vmatpush1.msra.mxu0 0.0
        %4413 = vmatprep.subr.mxu0 0.0
        %4414 = vmatpush1.msra.mxu0 0.0
        %4415 = vmatprep.subr.mxu0 0.0
        %4416 = vmatpush1.msra.mxu0 0.0
        %4417 = vmatprep.subr.mxu0 0.0
        %4418 = vmatpush1.msra.mxu0 0.0
        %4419 = vmatprep.mubr.f32.mxu0 0.0
        %4420 = vmatmul.mubr.f32.gmra.mrb[0].mxu0 %v4119
        %v4421 = vpop.f32.mrb[0].mxu0
        %v4422 = vadd.f32 0.0, %v4421
        %v4423 = vpop.f32.mrb[0].mxu0
        %v4424 = vadd.f32 0.0, %v4423
        %4425 = vmatprep.mubr.f32.mxu0 0.0
        %4426 = vmatmul.mubr.f32.gmra.mrb[0].mxu0 %v4122
        %v4427 = vpop.f32.mrb[0].mxu0
        %v4428 = vadd.f32 0.0, %v4427
        %v4429 = vpop.f32.mrb[0].mxu0
        %v4430 = vadd.f32 0.0, %v4429
        %4431 = vdwg.mxu0
        %4432 = vmatprep.subr.mxu0 %v4063
        %4433 = vmatpush1.msra.mxu0 %v4062
        %4434 = vmatprep.subr.mxu0 %v4079
        %4435 = vmatpush1.msra.mxu0 %v4078
        %4436 = vmatprep.subr.mxu0 0.0
        %4437 = vmatpush1.msra.mxu0 0.0
        %4438 = vmatprep.subr.mxu0 0.0
        %4439 = vmatpush1.msra.mxu0 0.0
        %4440 = vmatprep.subr.mxu0 0.0
        %4441 = vmatpush1.msra.mxu0 0.0
        %4442 = vmatprep.subr.mxu0 0.0
        %4443 = vmatpush1.msra.mxu0 0.0
        %4444 = vmatprep.subr.mxu0 0.0
        %4445 = vmatpush1.msra.mxu0 0.0
        %4446 = vmatprep.subr.mxu0 0.0
        %4447 = vmatpush1.msra.mxu0 0.0
        %4448 = vmatprep.subr.mxu0 0.0
        %4449 = vmatpush1.msra.mxu0 0.0
        %4450 = vmatprep.subr.mxu0 0.0
        %4451 = vmatpush1.msra.mxu0 0.0
        %4452 = vmatprep.subr.mxu0 0.0
        %4453 = vmatpush1.msra.mxu0 0.0
        %4454 = vmatprep.subr.mxu0 0.0
        %4455 = vmatpush1.msra.mxu0 0.0
        %4456 = vmatprep.subr.mxu0 0.0
        %4457 = vmatpush1.msra.mxu0 0.0
        %4458 = vmatprep.subr.mxu0 0.0
        %4459 = vmatpush1.msra.mxu0 0.0
        %4460 = vmatprep.subr.mxu0 0.0
        %4461 = vmatpush1.msra.mxu0 0.0
        %4462 = vmatprep.subr.mxu0 0.0
        %4463 = vmatpush1.msra.mxu0 0.0
        %4464 = vmatprep.subr.mxu0 0.0
        %4465 = vmatpush1.msra.mxu0 0.0
        %4466 = vmatprep.subr.mxu0 0.0
        %4467 = vmatpush1.msra.mxu0 0.0
        %4468 = vmatprep.subr.mxu0 0.0
        %4469 = vmatpush1.msra.mxu0 0.0
        %4470 = vmatprep.subr.mxu0 0.0
        %4471 = vmatpush1.msra.mxu0 0.0
        %4472 = vmatprep.subr.mxu0 0.0
        %4473 = vmatpush1.msra.mxu0 0.0
        %4474 = vmatprep.subr.mxu0 0.0
        %4475 = vmatpush1.msra.mxu0 0.0
        %4476 = vmatprep.subr.mxu0 0.0
        %4477 = vmatpush1.msra.mxu0 0.0
        %4478 = vmatprep.subr.mxu0 0.0
        %4479 = vmatpush1.msra.mxu0 0.0
        %4480 = vmatprep.subr.mxu0 0.0
        %4481 = vmatpush1.msra.mxu0 0.0
        %4482 = vmatprep.subr.mxu0 0.0
        %4483 = vmatpush1.msra.mxu0 0.0
        %4484 = vmatprep.subr.mxu0 0.0
        %4485 = vmatpush1.msra.mxu0 0.0
        %4486 = vmatprep.subr.mxu0 0.0
        %4487 = vmatpush1.msra.mxu0 0.0
        %4488 = vmatprep.subr.mxu0 0.0
        %4489 = vmatpush1.msra.mxu0 0.0
        %4490 = vmatprep.subr.mxu0 0.0
        %4491 = vmatpush1.msra.mxu0 0.0
        %4492 = vmatprep.subr.mxu0 0.0
        %4493 = vmatpush1.msra.mxu0 0.0
        %4494 = vmatprep.subr.mxu0 0.0
        %4495 = vmatpush1.msra.mxu0 0.0
        %4496 = vmatprep.mubr.f32.mxu0 0.0
        %4497 = vmatmul.mubr.f32.gmra.mrb[0].mxu0 %v4119
        %v4498 = vpop.f32.mrb[0].mxu0
        %v4499 = vadd.f32 0.0, %v4498
        %v4500 = vpop.f32.mrb[0].mxu0
        %v4501 = vadd.f32 0.0, %v4500
        %4502 = vmatprep.mubr.f32.mxu0 0.0
        %4503 = vmatmul.mubr.f32.gmra.mrb[0].mxu0 %v4122
        %v4504 = vpop.f32.mrb[0].mxu0
        %v4505 = vadd.f32 0.0, %v4504
        %v4506 = vpop.f32.mrb[0].mxu0
        %v4507 = vadd.f32 0.0, %v4506
        %4508 = vdwg.mxu0
        %4509 = vmatprep.subr.mxu0 %v4065
        %4510 = vmatpush1.msra.mxu0 %v4064
        %4511 = vmatprep.subr.mxu0 %v4081
        %4512 = vmatpush1.msra.mxu0 %v4080
        %4513 = vmatprep.subr.mxu0 0.0
        %4514 = vmatpush1.msra.mxu0 0.0
        %4515 = vmatprep.subr.mxu0 0.0
        %4516 = vmatpush1.msra.mxu0 0.0
        %4517 = vmatprep.subr.mxu0 0.0
        %4518 = vmatpush1.msra.mxu0 0.0
        %4519 = vmatprep.subr.mxu0 0.0
        %4520 = vmatpush1.msra.mxu0 0.0
        %4521 = vmatprep.subr.mxu0 0.0
        %4522 = vmatpush1.msra.mxu0 0.0
        %4523 = vmatprep.subr.mxu0 0.0
        %4524 = vmatpush1.msra.mxu0 0.0
        %4525 = vmatprep.subr.mxu0 0.0
        %4526 = vmatpush1.msra.mxu0 0.0
        %4527 = vmatprep.subr.mxu0 0.0
        %4528 = vmatpush1.msra.mxu0 0.0
        %4529 = vmatprep.subr.mxu0 0.0
        %4530 = vmatpush1.msra.mxu0 0.0
        %4531 = vmatprep.subr.mxu0 0.0
        %4532 = vmatpush1.msra.mxu0 0.0
        %4533 = vmatprep.subr.mxu0 0.0
        %4534 = vmatpush1.msra.mxu0 0.0
        %4535 = vmatprep.subr.mxu0 0.0
        %4536 = vmatpush1.msra.mxu0 0.0
        %4537 = vmatprep.subr.mxu0 0.0
        %4538 = vmatpush1.msra.mxu0 0.0
        %4539 = vmatprep.subr.mxu0 0.0
        %4540 = vmatpush1.msra.mxu0 0.0
        %4541 = vmatprep.subr.mxu0 0.0
        %4542 = vmatpush1.msra.mxu0 0.0
        %4543 = vmatprep.subr.mxu0 0.0
        %4544 = vmatpush1.msra.mxu0 0.0
        %4545 = vmatprep.subr.mxu0 0.0
        %4546 = vmatpush1.msra.mxu0 0.0
        %4547 = vmatprep.subr.mxu0 0.0
        %4548 = vmatpush1.msra.mxu0 0.0
        %4549 = vmatprep.subr.mxu0 0.0
        %4550 = vmatpush1.msra.mxu0 0.0
        %4551 = vmatprep.subr.mxu0 0.0
        %4552 = vmatpush1.msra.mxu0 0.0
        %4553 = vmatprep.subr.mxu0 0.0
        %4554 = vmatpush1.msra.mxu0 0.0
        %4555 = vmatprep.subr.mxu0 0.0
        %4556 = vmatpush1.msra.mxu0 0.0
        %4557 = vmatprep.subr.mxu0 0.0
        %4558 = vmatpush1.msra.mxu0 0.0
        %4559 = vmatprep.subr.mxu0 0.0
        %4560 = vmatpush1.msra.mxu0 0.0
        %4561 = vmatprep.subr.mxu0 0.0
        %4562 = vmatpush1.msra.mxu0 0.0
        %4563 = vmatprep.subr.mxu0 0.0
        %4564 = vmatpush1.msra.mxu0 0.0
        %4565 = vmatprep.subr.mxu0 0.0
        %4566 = vmatpush1.msra.mxu0 0.0
        %4567 = vmatprep.subr.mxu0 0.0
        %4568 = vmatpush1.msra.mxu0 0.0
        %4569 = vmatprep.subr.mxu0 0.0
        %4570 = vmatpush1.msra.mxu0 0.0
        %4571 = vmatprep.subr.mxu0 0.0
        %4572 = vmatpush1.msra.mxu0 0.0
        %4573 = vmatprep.mubr.f32.mxu0 0.0
        %4574 = vmatmul.mubr.f32.gmra.mrb[0].mxu0 %v4119
        %v4575 = vpop.f32.mrb[0].mxu0
        %v4576 = vadd.f32 0.0, %v4575
        %v4577 = vpop.f32.mrb[0].mxu0
        %v4578 = vadd.f32 0.0, %v4577
        %4579 = vmatprep.mubr.f32.mxu0 0.0
        %4580 = vmatmul.mubr.f32.gmra.mrb[0].mxu0 %v4122
        %v4581 = vpop.f32.mrb[0].mxu0
        %v4582 = vadd.f32 0.0, %v4581
        %v4583 = vpop.f32.mrb[0].mxu0
        %v4584 = vadd.f32 0.0, %v4583
        %4585 = vdwg.mxu0
        %4586 = vmatprep.subr.mxu0 %v4067
        %4587 = vmatpush1.msra.mxu0 %v4066
        %4588 = vmatprep.subr.mxu0 %v4083
        %4589 = vmatpush1.msra.mxu0 %v4082
        %4590 = vmatprep.subr.mxu0 0.0
        %4591 = vmatpush1.msra.mxu0 0.0
        %4592 = vmatprep.subr.mxu0 0.0
        %4593 = vmatpush1.msra.mxu0 0.0
        %4594 = vmatprep.subr.mxu0 0.0
        %4595 = vmatpush1.msra.mxu0 0.0
        %4596 = vmatprep.subr.mxu0 0.0
        %4597 = vmatpush1.msra.mxu0 0.0
        %4598 = vmatprep.subr.mxu0 0.0
        %4599 = vmatpush1.msra.mxu0 0.0
        %4600 = vmatprep.subr.mxu0 0.0
        %4601 = vmatpush1.msra.mxu0 0.0
        %4602 = vmatprep.subr.mxu0 0.0
        %4603 = vmatpush1.msra.mxu0 0.0
        %4604 = vmatprep.subr.mxu0 0.0
        %4605 = vmatpush1.msra.mxu0 0.0
        %4606 = vmatprep.subr.mxu0 0.0
        %4607 = vmatpush1.msra.mxu0 0.0
        %4608 = vmatprep.subr.mxu0 0.0
        %4609 = vmatpush1.msra.mxu0 0.0
        %4610 = vmatprep.subr.mxu0 0.0
        %4611 = vmatpush1.msra.mxu0 0.0
        %4612 = vmatprep.subr.mxu0 0.0
        %4613 = vmatpush1.msra.mxu0 0.0
        %4614 = vmatprep.subr.mxu0 0.0
        %4615 = vmatpush1.msra.mxu0 0.0
        %4616 = vmatprep.subr.mxu0 0.0
        %4617 = vmatpush1.msra.mxu0 0.0
        %4618 = vmatprep.subr.mxu0 0.0
        %4619 = vmatpush1.msra.mxu0 0.0
        %4620 = vmatprep.subr.mxu0 0.0
        %4621 = vmatpush1.msra.mxu0 0.0
        %4622 = vmatprep.subr.mxu0 0.0
        %4623 = vmatpush1.msra.mxu0 0.0
        %4624 = vmatprep.subr.mxu0 0.0
        %4625 = vmatpush1.msra.mxu0 0.0
        %4626 = vmatprep.subr.mxu0 0.0
        %4627 = vmatpush1.msra.mxu0 0.0
        %4628 = vmatprep.subr.mxu0 0.0
        %4629 = vmatpush1.msra.mxu0 0.0
        %4630 = vmatprep.subr.mxu0 0.0
        %4631 = vmatpush1.msra.mxu0 0.0
        %4632 = vmatprep.subr.mxu0 0.0
        %4633 = vmatpush1.msra.mxu0 0.0
        %4634 = vmatprep.subr.mxu0 0.0
        %4635 = vmatpush1.msra.mxu0 0.0
        %4636 = vmatprep.subr.mxu0 0.0
        %4637 = vmatpush1.msra.mxu0 0.0
        %4638 = vmatprep.subr.mxu0 0.0
        %4639 = vmatpush1.msra.mxu0 0.0
        %4640 = vmatprep.subr.mxu0 0.0
        %4641 = vmatpush1.msra.mxu0 0.0
        %4642 = vmatprep.subr.mxu0 0.0
        %4643 = vmatpush1.msra.mxu0 0.0
        %4644 = vmatprep.subr.mxu0 0.0
        %4645 = vmatpush1.msra.mxu0 0.0
        %4646 = vmatprep.subr.mxu0 0.0
        %4647 = vmatpush1.msra.mxu0 0.0
        %4648 = vmatprep.subr.mxu0 0.0
        %4649 = vmatpush1.msra.mxu0 0.0
        %4650 = vmatprep.mubr.f32.mxu0 0.0
        %4651 = vmatmul.mubr.f32.gmra.mrb[0].mxu0 %v4119
        %v4652 = vpop.f32.mrb[0].mxu0
        %v4653 = vadd.f32 0.0, %v4652
        %v4654 = vpop.f32.mrb[0].mxu0
        %v4655 = vadd.f32 0.0, %v4654
        %4656 = vmatprep.mubr.f32.mxu0 0.0
        %4657 = vmatmul.mubr.f32.gmra.mrb[0].mxu0 %v4122
        %v4658 = vpop.f32.mrb[0].mxu0
        %v4659 = vadd.f32 0.0, %v4658
        %v4660 = vpop.f32.mrb[0].mxu0
        %v4661 = vadd.f32 0.0, %v4660
        %4662 = vdwg.mxu0
        %4663 = vmatprep.subr.mxu0 %v4069
        %4664 = vmatpush1.msra.mxu0 %v4068
        %4665 = vmatprep.subr.mxu0 %v4085
        %4666 = vmatpush1.msra.mxu0 %v4084
        %4667 = vmatprep.subr.mxu0 0.0
        %4668 = vmatpush1.msra.mxu0 0.0
        %4669 = vmatprep.subr.mxu0 0.0
        %4670 = vmatpush1.msra.mxu0 0.0
        %4671 = vmatprep.subr.mxu0 0.0
        %4672 = vmatpush1.msra.mxu0 0.0
        %4673 = vmatprep.subr.mxu0 0.0
        %4674 = vmatpush1.msra.mxu0 0.0
        %4675 = vmatprep.subr.mxu0 0.0
        %4676 = vmatpush1.msra.mxu0 0.0
        %4677 = vmatprep.subr.mxu0 0.0
        %4678 = vmatpush1.msra.mxu0 0.0
        %4679 = vmatprep.subr.mxu0 0.0
        %4680 = vmatpush1.msra.mxu0 0.0
        %4681 = vmatprep.subr.mxu0 0.0
        %4682 = vmatpush1.msra.mxu0 0.0
        %4683 = vmatprep.subr.mxu0 0.0
        %4684 = vmatpush1.msra.mxu0 0.0
        %4685 = vmatprep.subr.mxu0 0.0
        %4686 = vmatpush1.msra.mxu0 0.0
        %4687 = vmatprep.subr.mxu0 0.0
        %4688 = vmatpush1.msra.mxu0 0.0
        %4689 = vmatprep.subr.mxu0 0.0
        %4690 = vmatpush1.msra.mxu0 0.0
        %4691 = vmatprep.subr.mxu0 0.0
        %4692 = vmatpush1.msra.mxu0 0.0
        %4693 = vmatprep.subr.mxu0 0.0
        %4694 = vmatpush1.msra.mxu0 0.0
        %4695 = vmatprep.subr.mxu0 0.0
        %4696 = vmatpush1.msra.mxu0 0.0
        %4697 = vmatprep.subr.mxu0 0.0
        %4698 = vmatpush1.msra.mxu0 0.0
        %4699 = vmatprep.subr.mxu0 0.0
        %4700 = vmatpush1.msra.mxu0 0.0
        %4701 = vmatprep.subr.mxu0 0.0
        %4702 = vmatpush1.msra.mxu0 0.0
        %4703 = vmatprep.subr.mxu0 0.0
        %4704 = vmatpush1.msra.mxu0 0.0
        %4705 = vmatprep.subr.mxu0 0.0
        %4706 = vmatpush1.msra.mxu0 0.0
        %4707 = vmatprep.subr.mxu0 0.0
        %4708 = vmatpush1.msra.mxu0 0.0
        %4709 = vmatprep.subr.mxu0 0.0
        %4710 = vmatpush1.msra.mxu0 0.0
        %4711 = vmatprep.subr.mxu0 0.0
        %4712 = vmatpush1.msra.mxu0 0.0
        %4713 = vmatprep.subr.mxu0 0.0
        %4714 = vmatpush1.msra.mxu0 0.0
        %4715 = vmatprep.subr.mxu0 0.0
        %4716 = vmatpush1.msra.mxu0 0.0
        %4717 = vmatprep.subr.mxu0 0.0
        %4718 = vmatpush1.msra.mxu0 0.0
        %4719 = vmatprep.subr.mxu0 0.0
        %4720 = vmatpush1.msra.mxu0 0.0
        %4721 = vmatprep.subr.mxu0 0.0
        %4722 = vmatpush1.msra.mxu0 0.0
        %4723 = vmatprep.subr.mxu0 0.0
        %4724 = vmatpush1.msra.mxu0 0.0
        %4725 = vmatprep.subr.mxu0 0.0
        %4726 = vmatpush1.msra.mxu0 0.0
        %4727 = vmatprep.mubr.f32.mxu0 0.0
        %4728 = vmatmul.mubr.f32.gmra.mrb[0].mxu0 %v4119
        %v4729 = vpop.f32.mrb[0].mxu0
        %v4730 = vadd.f32 0.0, %v4729
        %v4731 = vpop.f32.mrb[0].mxu0
        %v4732 = vadd.f32 0.0, %v4731
        %4733 = vmatprep.mubr.f32.mxu0 0.0
        %4734 = vmatmul.mubr.f32.gmra.mrb[0].mxu0 %v4122
        %v4735 = vpop.f32.mrb[0].mxu0
        %v4736 = vadd.f32 0.0, %v4735
        %v4737 = vpop.f32.mrb[0].mxu0
        %v4738 = vadd.f32 0.0, %v4737
        %4739 = vdwg.mxu0
        %v4740 = vadd.f32 %v3951, %v4191
        %v4741 = vadd.f32 %v3952, %v4193
        %v4742 = vadd.f32 %v3953, %v4268
        %v4743 = vadd.f32 %v3954, %v4270
        %v4744 = vadd.f32 %v3955, %v4345
        %v4745 = vadd.f32 %v3956, %v4347
        %v4746 = vadd.f32 %v3957, %v4422
        %v4747 = vadd.f32 %v3958, %v4424
        %v4748 = vadd.f32 %v3959, %v4499
        %v4749 = vadd.f32 %v3960, %v4501
        %v4750 = vadd.f32 %v3961, %v4576
        %v4751 = vadd.f32 %v3962, %v4578
        %v4752 = vadd.f32 %v3963, %v4653
        %v4753 = vadd.f32 %v3964, %v4655
        %v4754 = vadd.f32 %v3965, %v4730
        %v4755 = vadd.f32 %v3966, %v4732
        %v4756 = vadd.f32 %v3967, %v4197
        %v4757 = vadd.f32 %v3968, %v4199
        %v4758 = vadd.f32 %v3969, %v4274
        %v4759 = vadd.f32 %v3970, %v4276
        %v4760 = vadd.f32 %v3971, %v4351
        %v4761 = vadd.f32 %v3972, %v4353
        %v4762 = vadd.f32 %v3973, %v4428
        %v4763 = vadd.f32 %v3974, %v4430
        %v4764 = vadd.f32 %v3975, %v4505
        %v4765 = vadd.f32 %v3976, %v4507
        %v4766 = vadd.f32 %v3977, %v4582
        %v4767 = vadd.f32 %v3978, %v4584
        %v4768 = vadd.f32 %v3979, %v4659
        %v4769 = vadd.f32 %v3980, %v4661
        %v4770 = vadd.f32 %v3981, %v4736
        %v4771 = vadd.f32 %v3982, %v4738
        %s4772 = scalar_lea.vmem [#allocation6], 96
        %v4773 = vld [vmem:[%s4772] sm:$0xff]
        %v4774 = vld [vmem:[%s4772 + $0x8] sm:$0xff]
        %v4776 = vsel %vm434, %v4773, 0
        %v4779 = vsel %vm434, %v4774, 0
        %4781 = vmatprep.subr.mxu0 %v3128
        %4782 = vmatpush1.msra.mxu0 %v3127
        %4783 = vmatprep.subr.mxu0 %v3145
        %4784 = vmatpush1.msra.mxu0 %v3144
        %4785 = vmatprep.subr.mxu0 0.0
        %4786 = vmatpush1.msra.mxu0 0.0
        %4787 = vmatprep.subr.mxu0 0.0
        %4788 = vmatpush1.msra.mxu0 0.0
        %4789 = vmatprep.subr.mxu0 0.0
        %4790 = vmatpush1.msra.mxu0 0.0
        %4791 = vmatprep.subr.mxu0 0.0
        %4792 = vmatpush1.msra.mxu0 0.0
        %4793 = vmatprep.subr.mxu0 0.0
        %4794 = vmatpush1.msra.mxu0 0.0
        %4795 = vmatprep.subr.mxu0 0.0
        %4796 = vmatpush1.msra.mxu0 0.0
        %4797 = vmatprep.subr.mxu0 0.0
        %4798 = vmatpush1.msra.mxu0 0.0
        %4799 = vmatprep.subr.mxu0 0.0
        %4800 = vmatpush1.msra.mxu0 0.0
        %4801 = vmatprep.subr.mxu0 0.0
        %4802 = vmatpush1.msra.mxu0 0.0
        %4803 = vmatprep.subr.mxu0 0.0
        %4804 = vmatpush1.msra.mxu0 0.0
        %4805 = vmatprep.subr.mxu0 0.0
        %4806 = vmatpush1.msra.mxu0 0.0
        %4807 = vmatprep.subr.mxu0 0.0
        %4808 = vmatpush1.msra.mxu0 0.0
        %4809 = vmatprep.subr.mxu0 0.0
        %4810 = vmatpush1.msra.mxu0 0.0
        %4811 = vmatprep.subr.mxu0 0.0
        %4812 = vmatpush1.msra.mxu0 0.0
        %4813 = vmatprep.subr.mxu0 0.0
        %4814 = vmatpush1.msra.mxu0 0.0
        %4815 = vmatprep.subr.mxu0 0.0
        %4816 = vmatpush1.msra.mxu0 0.0
        %4817 = vmatprep.subr.mxu0 0.0
        %4818 = vmatpush1.msra.mxu0 0.0
        %4819 = vmatprep.subr.mxu0 0.0
        %4820 = vmatpush1.msra.mxu0 0.0
        %4821 = vmatprep.subr.mxu0 0.0
        %4822 = vmatpush1.msra.mxu0 0.0
        %4823 = vmatprep.subr.mxu0 0.0
        %4824 = vmatpush1.msra.mxu0 0.0
        %4825 = vmatprep.subr.mxu0 0.0
        %4826 = vmatpush1.msra.mxu0 0.0
        %4827 = vmatprep.subr.mxu0 0.0
        %4828 = vmatpush1.msra.mxu0 0.0
        %4829 = vmatprep.subr.mxu0 0.0
        %4830 = vmatpush1.msra.mxu0 0.0
        %4831 = vmatprep.subr.mxu0 0.0
        %4832 = vmatpush1.msra.mxu0 0.0
        %4833 = vmatprep.subr.mxu0 0.0
        %4834 = vmatpush1.msra.mxu0 0.0
        %4835 = vmatprep.subr.mxu0 0.0
        %4836 = vmatpush1.msra.mxu0 0.0
        %4837 = vmatprep.subr.mxu0 0.0
        %4838 = vmatpush1.msra.mxu0 0.0
        %4839 = vmatprep.subr.mxu0 0.0
        %4840 = vmatpush1.msra.mxu0 0.0
        %4841 = vmatprep.subr.mxu0 0.0
        %4842 = vmatpush1.msra.mxu0 0.0
        %4843 = vmatprep.subr.mxu0 0.0
        %4844 = vmatpush1.msra.mxu0 0.0
        %4845 = vmatprep.mubr.f32.mxu0 0.0
        %4846 = vmatmul.mubr.f32.gmra.mrb[0].mxu0 %v4776
        %v4847 = vpop.f32.mrb[0].mxu0
        %v4848 = vadd.f32 0.0, %v4847
        %v4849 = vpop.f32.mrb[0].mxu0
        %v4850 = vadd.f32 0.0, %v4849
        %4851 = vmatprep.mubr.f32.mxu0 0.0
        %4852 = vmatmul.mubr.f32.gmra.mrb[0].mxu0 %v4779
        %v4853 = vpop.f32.mrb[0].mxu0
        %v4854 = vadd.f32 0.0, %v4853
        %v4855 = vpop.f32.mrb[0].mxu0
        %v4856 = vadd.f32 0.0, %v4855
        %4857 = vdwg.mxu0
        %4858 = vmatprep.subr.mxu0 %v3130
        %4859 = vmatpush1.msra.mxu0 %v3129
        %4860 = vmatprep.subr.mxu0 %v3147
        %4861 = vmatpush1.msra.mxu0 %v3146
        %4862 = vmatprep.subr.mxu0 0.0
        %4863 = vmatpush1.msra.mxu0 0.0
        %4864 = vmatprep.subr.mxu0 0.0
        %4865 = vmatpush1.msra.mxu0 0.0
        %4866 = vmatprep.subr.mxu0 0.0
        %4867 = vmatpush1.msra.mxu0 0.0
        %4868 = vmatprep.subr.mxu0 0.0
        %4869 = vmatpush1.msra.mxu0 0.0
        %4870 = vmatprep.subr.mxu0 0.0
        %4871 = vmatpush1.msra.mxu0 0.0
        %4872 = vmatprep.subr.mxu0 0.0
        %4873 = vmatpush1.msra.mxu0 0.0
        %4874 = vmatprep.subr.mxu0 0.0
        %4875 = vmatpush1.msra.mxu0 0.0
        %4876 = vmatprep.subr.mxu0 0.0
        %4877 = vmatpush1.msra.mxu0 0.0
        %4878 = vmatprep.subr.mxu0 0.0
        %4879 = vmatpush1.msra.mxu0 0.0
        %4880 = vmatprep.subr.mxu0 0.0
        %4881 = vmatpush1.msra.mxu0 0.0
        %4882 = vmatprep.subr.mxu0 0.0
        %4883 = vmatpush1.msra.mxu0 0.0
        %4884 = vmatprep.subr.mxu0 0.0
        %4885 = vmatpush1.msra.mxu0 0.0
        %4886 = vmatprep.subr.mxu0 0.0
        %4887 = vmatpush1.msra.mxu0 0.0
        %4888 = vmatprep.subr.mxu0 0.0
        %4889 = vmatpush1.msra.mxu0 0.0
        %4890 = vmatprep.subr.mxu0 0.0
        %4891 = vmatpush1.msra.mxu0 0.0
        %4892 = vmatprep.subr.mxu0 0.0
        %4893 = vmatpush1.msra.mxu0 0.0
        %4894 = vmatprep.subr.mxu0 0.0
        %4895 = vmatpush1.msra.mxu0 0.0
        %4896 = vmatprep.subr.mxu0 0.0
        %4897 = vmatpush1.msra.mxu0 0.0
        %4898 = vmatprep.subr.mxu0 0.0
        %4899 = vmatpush1.msra.mxu0 0.0
        %4900 = vmatprep.subr.mxu0 0.0
        %4901 = vmatpush1.msra.mxu0 0.0
        %4902 = vmatprep.subr.mxu0 0.0
        %4903 = vmatpush1.msra.mxu0 0.0
        %4904 = vmatprep.subr.mxu0 0.0
        %4905 = vmatpush1.msra.mxu0 0.0
        %4906 = vmatprep.subr.mxu0 0.0
        %4907 = vmatpush1.msra.mxu0 0.0
        %4908 = vmatprep.subr.mxu0 0.0
        %4909 = vmatpush1.msra.mxu0 0.0
        %4910 = vmatprep.subr.mxu0 0.0
        %4911 = vmatpush1.msra.mxu0 0.0
        %4912 = vmatprep.subr.mxu0 0.0
        %4913 = vmatpush1.msra.mxu0 0.0
        %4914 = vmatprep.subr.mxu0 0.0
        %4915 = vmatpush1.msra.mxu0 0.0
        %4916 = vmatprep.subr.mxu0 0.0
        %4917 = vmatpush1.msra.mxu0 0.0
        %4918 = vmatprep.subr.mxu0 0.0
        %4919 = vmatpush1.msra.mxu0 0.0
        %4920 = vmatprep.subr.mxu0 0.0
        %4921 = vmatpush1.msra.mxu0 0.0
        %4922 = vmatprep.mubr.f32.mxu0 0.0
        %4923 = vmatmul.mubr.f32.gmra.mrb[0].mxu0 %v4776
        %v4924 = vpop.f32.mrb[0].mxu0
        %v4925 = vadd.f32 0.0, %v4924
        %v4926 = vpop.f32.mrb[0].mxu0
        %v4927 = vadd.f32 0.0, %v4926
        %4928 = vmatprep.mubr.f32.mxu0 0.0
        %4929 = vmatmul.mubr.f32.gmra.mrb[0].mxu0 %v4779
        %v4930 = vpop.f32.mrb[0].mxu0
        %v4931 = vadd.f32 0.0, %v4930
        %v4932 = vpop.f32.mrb[0].mxu0
        %v4933 = vadd.f32 0.0, %v4932
        %4934 = vdwg.mxu0
        %4935 = vmatprep.subr.mxu0 %v3132
        %4936 = vmatpush1.msra.mxu0 %v3131
        %4937 = vmatprep.subr.mxu0 %v3149
        %4938 = vmatpush1.msra.mxu0 %v3148
        %4939 = vmatprep.subr.mxu0 0.0
        %4940 = vmatpush1.msra.mxu0 0.0
        %4941 = vmatprep.subr.mxu0 0.0
        %4942 = vmatpush1.msra.mxu0 0.0
        %4943 = vmatprep.subr.mxu0 0.0
        %4944 = vmatpush1.msra.mxu0 0.0
        %4945 = vmatprep.subr.mxu0 0.0
        %4946 = vmatpush1.msra.mxu0 0.0
        %4947 = vmatprep.subr.mxu0 0.0
        %4948 = vmatpush1.msra.mxu0 0.0
        %4949 = vmatprep.subr.mxu0 0.0
        %4950 = vmatpush1.msra.mxu0 0.0
        %4951 = vmatprep.subr.mxu0 0.0
        %4952 = vmatpush1.msra.mxu0 0.0
        %4953 = vmatprep.subr.mxu0 0.0
        %4954 = vmatpush1.msra.mxu0 0.0
        %4955 = vmatprep.subr.mxu0 0.0
        %4956 = vmatpush1.msra.mxu0 0.0
        %4957 = vmatprep.subr.mxu0 0.0
        %4958 = vmatpush1.msra.mxu0 0.0
        %4959 = vmatprep.subr.mxu0 0.0
        %4960 = vmatpush1.msra.mxu0 0.0
        %4961 = vmatprep.subr.mxu0 0.0
        %4962 = vmatpush1.msra.mxu0 0.0
        %4963 = vmatprep.subr.mxu0 0.0
        %4964 = vmatpush1.msra.mxu0 0.0
        %4965 = vmatprep.subr.mxu0 0.0
        %4966 = vmatpush1.msra.mxu0 0.0
        %4967 = vmatprep.subr.mxu0 0.0
        %4968 = vmatpush1.msra.mxu0 0.0
        %4969 = vmatprep.subr.mxu0 0.0
        %4970 = vmatpush1.msra.mxu0 0.0
        %4971 = vmatprep.subr.mxu0 0.0
        %4972 = vmatpush1.msra.mxu0 0.0
        %4973 = vmatprep.subr.mxu0 0.0
        %4974 = vmatpush1.msra.mxu0 0.0
        %4975 = vmatprep.subr.mxu0 0.0
        %4976 = vmatpush1.msra.mxu0 0.0
        %4977 = vmatprep.subr.mxu0 0.0
        %4978 = vmatpush1.msra.mxu0 0.0
        %4979 = vmatprep.subr.mxu0 0.0
        %4980 = vmatpush1.msra.mxu0 0.0
        %4981 = vmatprep.subr.mxu0 0.0
        %4982 = vmatpush1.msra.mxu0 0.0
        %4983 = vmatprep.subr.mxu0 0.0
        %4984 = vmatpush1.msra.mxu0 0.0
        %4985 = vmatprep.subr.mxu0 0.0
        %4986 = vmatpush1.msra.mxu0 0.0
        %4987 = vmatprep.subr.mxu0 0.0
        %4988 = vmatpush1.msra.mxu0 0.0
        %4989 = vmatprep.subr.mxu0 0.0
        %4990 = vmatpush1.msra.mxu0 0.0
        %4991 = vmatprep.subr.mxu0 0.0
        %4992 = vmatpush1.msra.mxu0 0.0
        %4993 = vmatprep.subr.mxu0 0.0
        %4994 = vmatpush1.msra.mxu0 0.0
        %4995 = vmatprep.subr.mxu0 0.0
        %4996 = vmatpush1.msra.mxu0 0.0
        %4997 = vmatprep.subr.mxu0 0.0
        %4998 = vmatpush1.msra.mxu0 0.0
        %4999 = vmatprep.mubr.f32.mxu0 0.0
        %5000 = vmatmul.mubr.f32.gmra.mrb[0].mxu0 %v4776
        %v5001 = vpop.f32.mrb[0].mxu0
        %v5002 = vadd.f32 0.0, %v5001
        %v5003 = vpop.f32.mrb[0].mxu0
        %v5004 = vadd.f32 0.0, %v5003
        %5005 = vmatprep.mubr.f32.mxu0 0.0
        %5006 = vmatmul.mubr.f32.gmra.mrb[0].mxu0 %v4779
        %v5007 = vpop.f32.mrb[0].mxu0
        %v5008 = vadd.f32 0.0, %v5007
        %v5009 = vpop.f32.mrb[0].mxu0
        %v5010 = vadd.f32 0.0, %v5009
        %5011 = vdwg.mxu0
        %5012 = vmatprep.subr.mxu0 %v3134
        %5013 = vmatpush1.msra.mxu0 %v3133
        %5014 = vmatprep.subr.mxu0 %v3151
        %5015 = vmatpush1.msra.mxu0 %v3150
        %5016 = vmatprep.subr.mxu0 0.0
        %5017 = vmatpush1.msra.mxu0 0.0
        %5018 = vmatprep.subr.mxu0 0.0
        %5019 = vmatpush1.msra.mxu0 0.0
        %5020 = vmatprep.subr.mxu0 0.0
        %5021 = vmatpush1.msra.mxu0 0.0
        %5022 = vmatprep.subr.mxu0 0.0
        %5023 = vmatpush1.msra.mxu0 0.0
        %5024 = vmatprep.subr.mxu0 0.0
        %5025 = vmatpush1.msra.mxu0 0.0
        %5026 = vmatprep.subr.mxu0 0.0
        %5027 = vmatpush1.msra.mxu0 0.0
        %5028 = vmatprep.subr.mxu0 0.0
        %5029 = vmatpush1.msra.mxu0 0.0
        %5030 = vmatprep.subr.mxu0 0.0
        %5031 = vmatpush1.msra.mxu0 0.0
        %5032 = vmatprep.subr.mxu0 0.0
        %5033 = vmatpush1.msra.mxu0 0.0
        %5034 = vmatprep.subr.mxu0 0.0
        %5035 = vmatpush1.msra.mxu0 0.0
        %5036 = vmatprep.subr.mxu0 0.0
        %5037 = vmatpush1.msra.mxu0 0.0
        %5038 = vmatprep.subr.mxu0 0.0
        %5039 = vmatpush1.msra.mxu0 0.0
        %5040 = vmatprep.subr.mxu0 0.0
        %5041 = vmatpush1.msra.mxu0 0.0
        %5042 = vmatprep.subr.mxu0 0.0
        %5043 = vmatpush1.msra.mxu0 0.0
        %5044 = vmatprep.subr.mxu0 0.0
        %5045 = vmatpush1.msra.mxu0 0.0
        %5046 = vmatprep.subr.mxu0 0.0
        %5047 = vmatpush1.msra.mxu0 0.0
        %5048 = vmatprep.subr.mxu0 0.0
        %5049 = vmatpush1.msra.mxu0 0.0
        %5050 = vmatprep.subr.mxu0 0.0
        %5051 = vmatpush1.msra.mxu0 0.0
        %5052 = vmatprep.subr.mxu0 0.0
        %5053 = vmatpush1.msra.mxu0 0.0
        %5054 = vmatprep.subr.mxu0 0.0
        %5055 = vmatpush1.msra.mxu0 0.0
        %5056 = vmatprep.subr.mxu0 0.0
        %5057 = vmatpush1.msra.mxu0 0.0
        %5058 = vmatprep.subr.mxu0 0.0
        %5059 = vmatpush1.msra.mxu0 0.0
        %5060 = vmatprep.subr.mxu0 0.0
        %5061 = vmatpush1.msra.mxu0 0.0
        %5062 = vmatprep.subr.mxu0 0.0
        %5063 = vmatpush1.msra.mxu0 0.0
        %5064 = vmatprep.subr.mxu0 0.0
        %5065 = vmatpush1.msra.mxu0 0.0
        %5066 = vmatprep.subr.mxu0 0.0
        %5067 = vmatpush1.msra.mxu0 0.0
        %5068 = vmatprep.subr.mxu0 0.0
        %5069 = vmatpush1.msra.mxu0 0.0
        %5070 = vmatprep.subr.mxu0 0.0
        %5071 = vmatpush1.msra.mxu0 0.0
        %5072 = vmatprep.subr.mxu0 0.0
        %5073 = vmatpush1.msra.mxu0 0.0
        %5074 = vmatprep.subr.mxu0 0.0
        %5075 = vmatpush1.msra.mxu0 0.0
        %5076 = vmatprep.mubr.f32.mxu0 0.0
        %5077 = vmatmul.mubr.f32.gmra.mrb[0].mxu0 %v4776
        %v5078 = vpop.f32.mrb[0].mxu0
        %v5079 = vadd.f32 0.0, %v5078
        %v5080 = vpop.f32.mrb[0].mxu0
        %v5081 = vadd.f32 0.0, %v5080
        %5082 = vmatprep.mubr.f32.mxu0 0.0
        %5083 = vmatmul.mubr.f32.gmra.mrb[0].mxu0 %v4779
        %v5084 = vpop.f32.mrb[0].mxu0
        %v5085 = vadd.f32 0.0, %v5084
        %v5086 = vpop.f32.mrb[0].mxu0
        %v5087 = vadd.f32 0.0, %v5086
        %5088 = vdwg.mxu0
        %5089 = vmatprep.subr.mxu0 %v3136
        %5090 = vmatpush1.msra.mxu0 %v3135
        %5091 = vmatprep.subr.mxu0 %v3153
        %5092 = vmatpush1.msra.mxu0 %v3152
        %5093 = vmatprep.subr.mxu0 0.0
        %5094 = vmatpush1.msra.mxu0 0.0
        %5095 = vmatprep.subr.mxu0 0.0
        %5096 = vmatpush1.msra.mxu0 0.0
        %5097 = vmatprep.subr.mxu0 0.0
        %5098 = vmatpush1.msra.mxu0 0.0
        %5099 = vmatprep.subr.mxu0 0.0
        %5100 = vmatpush1.msra.mxu0 0.0
        %5101 = vmatprep.subr.mxu0 0.0
        %5102 = vmatpush1.msra.mxu0 0.0
        %5103 = vmatprep.subr.mxu0 0.0
        %5104 = vmatpush1.msra.mxu0 0.0
        %5105 = vmatprep.subr.mxu0 0.0
        %5106 = vmatpush1.msra.mxu0 0.0
        %5107 = vmatprep.subr.mxu0 0.0
        %5108 = vmatpush1.msra.mxu0 0.0
        %5109 = vmatprep.subr.mxu0 0.0
        %5110 = vmatpush1.msra.mxu0 0.0
        %5111 = vmatprep.subr.mxu0 0.0
        %5112 = vmatpush1.msra.mxu0 0.0
        %5113 = vmatprep.subr.mxu0 0.0
        %5114 = vmatpush1.msra.mxu0 0.0
        %5115 = vmatprep.subr.mxu0 0.0
        %5116 = vmatpush1.msra.mxu0 0.0
        %5117 = vmatprep.subr.mxu0 0.0
        %5118 = vmatpush1.msra.mxu0 0.0
        %5119 = vmatprep.subr.mxu0 0.0
        %5120 = vmatpush1.msra.mxu0 0.0
        %5121 = vmatprep.subr.mxu0 0.0
        %5122 = vmatpush1.msra.mxu0 0.0
        %5123 = vmatprep.subr.mxu0 0.0
        %5124 = vmatpush1.msra.mxu0 0.0
        %5125 = vmatprep.subr.mxu0 0.0
        %5126 = vmatpush1.msra.mxu0 0.0
        %5127 = vmatprep.subr.mxu0 0.0
        %5128 = vmatpush1.msra.mxu0 0.0
        %5129 = vmatprep.subr.mxu0 0.0
        %5130 = vmatpush1.msra.mxu0 0.0
        %5131 = vmatprep.subr.mxu0 0.0
        %5132 = vmatpush1.msra.mxu0 0.0
        %5133 = vmatprep.subr.mxu0 0.0
        %5134 = vmatpush1.msra.mxu0 0.0
        %5135 = vmatprep.subr.mxu0 0.0
        %5136 = vmatpush1.msra.mxu0 0.0
        %5137 = vmatprep.subr.mxu0 0.0
        %5138 = vmatpush1.msra.mxu0 0.0
        %5139 = vmatprep.subr.mxu0 0.0
        %5140 = vmatpush1.msra.mxu0 0.0
        %5141 = vmatprep.subr.mxu0 0.0
        %5142 = vmatpush1.msra.mxu0 0.0
        %5143 = vmatprep.subr.mxu0 0.0
        %5144 = vmatpush1.msra.mxu0 0.0
        %5145 = vmatprep.subr.mxu0 0.0
        %5146 = vmatpush1.msra.mxu0 0.0
        %5147 = vmatprep.subr.mxu0 0.0
        %5148 = vmatpush1.msra.mxu0 0.0
        %5149 = vmatprep.subr.mxu0 0.0
        %5150 = vmatpush1.msra.mxu0 0.0
        %5151 = vmatprep.subr.mxu0 0.0
        %5152 = vmatpush1.msra.mxu0 0.0
        %5153 = vmatprep.mubr.f32.mxu0 0.0
        %5154 = vmatmul.mubr.f32.gmra.mrb[0].mxu0 %v4776
        %v5155 = vpop.f32.mrb[0].mxu0
        %v5156 = vadd.f32 0.0, %v5155
        %v5157 = vpop.f32.mrb[0].mxu0
        %v5158 = vadd.f32 0.0, %v5157
        %5159 = vmatprep.mubr.f32.mxu0 0.0
        %5160 = vmatmul.mubr.f32.gmra.mrb[0].mxu0 %v4779
        %v5161 = vpop.f32.mrb[0].mxu0
        %v5162 = vadd.f32 0.0, %v5161
        %v5163 = vpop.f32.mrb[0].mxu0
        %v5164 = vadd.f32 0.0, %v5163
        %5165 = vdwg.mxu0
        %5166 = vmatprep.subr.mxu0 %v3138
        %5167 = vmatpush1.msra.mxu0 %v3137
        %5168 = vmatprep.subr.mxu0 %v3155
        %5169 = vmatpush1.msra.mxu0 %v3154
        %5170 = vmatprep.subr.mxu0 0.0
        %5171 = vmatpush1.msra.mxu0 0.0
        %5172 = vmatprep.subr.mxu0 0.0
        %5173 = vmatpush1.msra.mxu0 0.0
        %5174 = vmatprep.subr.mxu0 0.0
        %5175 = vmatpush1.msra.mxu0 0.0
        %5176 = vmatprep.subr.mxu0 0.0
        %5177 = vmatpush1.msra.mxu0 0.0
        %5178 = vmatprep.subr.mxu0 0.0
        %5179 = vmatpush1.msra.mxu0 0.0
        %5180 = vmatprep.subr.mxu0 0.0
        %5181 = vmatpush1.msra.mxu0 0.0
        %5182 = vmatprep.subr.mxu0 0.0
        %5183 = vmatpush1.msra.mxu0 0.0
        %5184 = vmatprep.subr.mxu0 0.0
        %5185 = vmatpush1.msra.mxu0 0.0
        %5186 = vmatprep.subr.mxu0 0.0
        %5187 = vmatpush1.msra.mxu0 0.0
        %5188 = vmatprep.subr.mxu0 0.0
        %5189 = vmatpush1.msra.mxu0 0.0
        %5190 = vmatprep.subr.mxu0 0.0
        %5191 = vmatpush1.msra.mxu0 0.0
        %5192 = vmatprep.subr.mxu0 0.0
        %5193 = vmatpush1.msra.mxu0 0.0
        %5194 = vmatprep.subr.mxu0 0.0
        %5195 = vmatpush1.msra.mxu0 0.0
        %5196 = vmatprep.subr.mxu0 0.0
        %5197 = vmatpush1.msra.mxu0 0.0
        %5198 = vmatprep.subr.mxu0 0.0
        %5199 = vmatpush1.msra.mxu0 0.0
        %5200 = vmatprep.subr.mxu0 0.0
        %5201 = vmatpush1.msra.mxu0 0.0
        %5202 = vmatprep.subr.mxu0 0.0
        %5203 = vmatpush1.msra.mxu0 0.0
        %5204 = vmatprep.subr.mxu0 0.0
        %5205 = vmatpush1.msra.mxu0 0.0
        %5206 = vmatprep.subr.mxu0 0.0
        %5207 = vmatpush1.msra.mxu0 0.0
        %5208 = vmatprep.subr.mxu0 0.0
        %5209 = vmatpush1.msra.mxu0 0.0
        %5210 = vmatprep.subr.mxu0 0.0
        %5211 = vmatpush1.msra.mxu0 0.0
        %5212 = vmatprep.subr.mxu0 0.0
        %5213 = vmatpush1.msra.mxu0 0.0
        %5214 = vmatprep.subr.mxu0 0.0
        %5215 = vmatpush1.msra.mxu0 0.0
        %5216 = vmatprep.subr.mxu0 0.0
        %5217 = vmatpush1.msra.mxu0 0.0
        %5218 = vmatprep.subr.mxu0 0.0
        %5219 = vmatpush1.msra.mxu0 0.0
        %5220 = vmatprep.subr.mxu0 0.0
        %5221 = vmatpush1.msra.mxu0 0.0
        %5222 = vmatprep.subr.mxu0 0.0
        %5223 = vmatpush1.msra.mxu0 0.0
        %5224 = vmatprep.subr.mxu0 0.0
        %5225 = vmatpush1.msra.mxu0 0.0
        %5226 = vmatprep.subr.mxu0 0.0
        %5227 = vmatpush1.msra.mxu0 0.0
        %5228 = vmatprep.subr.mxu0 0.0
        %5229 = vmatpush1.msra.mxu0 0.0
        %5230 = vmatprep.mubr.f32.mxu0 0.0
        %5231 = vmatmul.mubr.f32.gmra.mrb[0].mxu0 %v4776
        %v5232 = vpop.f32.mrb[0].mxu0
        %v5233 = vadd.f32 0.0, %v5232
        %v5234 = vpop.f32.mrb[0].mxu0
        %v5235 = vadd.f32 0.0, %v5234
        %5236 = vmatprep.mubr.f32.mxu0 0.0
        %5237 = vmatmul.mubr.f32.gmra.mrb[0].mxu0 %v4779
        %v5238 = vpop.f32.mrb[0].mxu0
        %v5239 = vadd.f32 0.0, %v5238
        %v5240 = vpop.f32.mrb[0].mxu0
        %v5241 = vadd.f32 0.0, %v5240
        %5242 = vdwg.mxu0
        %5243 = vmatprep.subr.mxu0 %v3140
        %5244 = vmatpush1.msra.mxu0 %v3139
        %5245 = vmatprep.subr.mxu0 %v3157
        %5246 = vmatpush1.msra.mxu0 %v3156
        %5247 = vmatprep.subr.mxu0 0.0
        %5248 = vmatpush1.msra.mxu0 0.0
        %5249 = vmatprep.subr.mxu0 0.0
        %5250 = vmatpush1.msra.mxu0 0.0
        %5251 = vmatprep.subr.mxu0 0.0
        %5252 = vmatpush1.msra.mxu0 0.0
        %5253 = vmatprep.subr.mxu0 0.0
        %5254 = vmatpush1.msra.mxu0 0.0
        %5255 = vmatprep.subr.mxu0 0.0
        %5256 = vmatpush1.msra.mxu0 0.0
        %5257 = vmatprep.subr.mxu0 0.0
        %5258 = vmatpush1.msra.mxu0 0.0
        %5259 = vmatprep.subr.mxu0 0.0
        %5260 = vmatpush1.msra.mxu0 0.0
        %5261 = vmatprep.subr.mxu0 0.0
        %5262 = vmatpush1.msra.mxu0 0.0
        %5263 = vmatprep.subr.mxu0 0.0
        %5264 = vmatpush1.msra.mxu0 0.0
        %5265 = vmatprep.subr.mxu0 0.0
        %5266 = vmatpush1.msra.mxu0 0.0
        %5267 = vmatprep.subr.mxu0 0.0
        %5268 = vmatpush1.msra.mxu0 0.0
        %5269 = vmatprep.subr.mxu0 0.0
        %5270 = vmatpush1.msra.mxu0 0.0
        %5271 = vmatprep.subr.mxu0 0.0
        %5272 = vmatpush1.msra.mxu0 0.0
        %5273 = vmatprep.subr.mxu0 0.0
        %5274 = vmatpush1.msra.mxu0 0.0
        %5275 = vmatprep.subr.mxu0 0.0
        %5276 = vmatpush1.msra.mxu0 0.0
        %5277 = vmatprep.subr.mxu0 0.0
        %5278 = vmatpush1.msra.mxu0 0.0
        %5279 = vmatprep.subr.mxu0 0.0
        %5280 = vmatpush1.msra.mxu0 0.0
        %5281 = vmatprep.subr.mxu0 0.0
        %5282 = vmatpush1.msra.mxu0 0.0
        %5283 = vmatprep.subr.mxu0 0.0
        %5284 = vmatpush1.msra.mxu0 0.0
        %5285 = vmatprep.subr.mxu0 0.0
        %5286 = vmatpush1.msra.mxu0 0.0
        %5287 = vmatprep.subr.mxu0 0.0
        %5288 = vmatpush1.msra.mxu0 0.0
        %5289 = vmatprep.subr.mxu0 0.0
        %5290 = vmatpush1.msra.mxu0 0.0
        %5291 = vmatprep.subr.mxu0 0.0
        %5292 = vmatpush1.msra.mxu0 0.0
        %5293 = vmatprep.subr.mxu0 0.0
        %5294 = vmatpush1.msra.mxu0 0.0
        %5295 = vmatprep.subr.mxu0 0.0
        %5296 = vmatpush1.msra.mxu0 0.0
        %5297 = vmatprep.subr.mxu0 0.0
        %5298 = vmatpush1.msra.mxu0 0.0
        %5299 = vmatprep.subr.mxu0 0.0
        %5300 = vmatpush1.msra.mxu0 0.0
        %5301 = vmatprep.subr.mxu0 0.0
        %5302 = vmatpush1.msra.mxu0 0.0
        %5303 = vmatprep.subr.mxu0 0.0
        %5304 = vmatpush1.msra.mxu0 0.0
        %5305 = vmatprep.subr.mxu0 0.0
        %5306 = vmatpush1.msra.mxu0 0.0
        %5307 = vmatprep.mubr.f32.mxu0 0.0
        %5308 = vmatmul.mubr.f32.gmra.mrb[0].mxu0 %v4776
        %v5309 = vpop.f32.mrb[0].mxu0
        %v5310 = vadd.f32 0.0, %v5309
        %v5311 = vpop.f32.mrb[0].mxu0
        %v5312 = vadd.f32 0.0, %v5311
        %5313 = vmatprep.mubr.f32.mxu0 0.0
        %5314 = vmatmul.mubr.f32.gmra.mrb[0].mxu0 %v4779
        %v5315 = vpop.f32.mrb[0].mxu0
        %v5316 = vadd.f32 0.0, %v5315
        %v5317 = vpop.f32.mrb[0].mxu0
        %v5318 = vadd.f32 0.0, %v5317
        %5319 = vdwg.mxu0
        %5320 = vmatprep.subr.mxu0 %v3142
        %5321 = vmatpush1.msra.mxu0 %v3141
        %5322 = vmatprep.subr.mxu0 %v3159
        %5323 = vmatpush1.msra.mxu0 %v3158
        %5324 = vmatprep.subr.mxu0 0.0
        %5325 = vmatpush1.msra.mxu0 0.0
        %5326 = vmatprep.subr.mxu0 0.0
        %5327 = vmatpush1.msra.mxu0 0.0
        %5328 = vmatprep.subr.mxu0 0.0
        %5329 = vmatpush1.msra.mxu0 0.0
        %5330 = vmatprep.subr.mxu0 0.0
        %5331 = vmatpush1.msra.mxu0 0.0
        %5332 = vmatprep.subr.mxu0 0.0
        %5333 = vmatpush1.msra.mxu0 0.0
        %5334 = vmatprep.subr.mxu0 0.0
        %5335 = vmatpush1.msra.mxu0 0.0
        %5336 = vmatprep.subr.mxu0 0.0
        %5337 = vmatpush1.msra.mxu0 0.0
        %5338 = vmatprep.subr.mxu0 0.0
        %5339 = vmatpush1.msra.mxu0 0.0
        %5340 = vmatprep.subr.mxu0 0.0
        %5341 = vmatpush1.msra.mxu0 0.0
        %5342 = vmatprep.subr.mxu0 0.0
        %5343 = vmatpush1.msra.mxu0 0.0
        %5344 = vmatprep.subr.mxu0 0.0
        %5345 = vmatpush1.msra.mxu0 0.0
        %5346 = vmatprep.subr.mxu0 0.0
        %5347 = vmatpush1.msra.mxu0 0.0
        %5348 = vmatprep.subr.mxu0 0.0
        %5349 = vmatpush1.msra.mxu0 0.0
        %5350 = vmatprep.subr.mxu0 0.0
        %5351 = vmatpush1.msra.mxu0 0.0
        %5352 = vmatprep.subr.mxu0 0.0
        %5353 = vmatpush1.msra.mxu0 0.0
        %5354 = vmatprep.subr.mxu0 0.0
        %5355 = vmatpush1.msra.mxu0 0.0
        %5356 = vmatprep.subr.mxu0 0.0
        %5357 = vmatpush1.msra.mxu0 0.0
        %5358 = vmatprep.subr.mxu0 0.0
        %5359 = vmatpush1.msra.mxu0 0.0
        %5360 = vmatprep.subr.mxu0 0.0
        %5361 = vmatpush1.msra.mxu0 0.0
        %5362 = vmatprep.subr.mxu0 0.0
        %5363 = vmatpush1.msra.mxu0 0.0
        %5364 = vmatprep.subr.mxu0 0.0
        %5365 = vmatpush1.msra.mxu0 0.0
        %5366 = vmatprep.subr.mxu0 0.0
        %5367 = vmatpush1.msra.mxu0 0.0
        %5368 = vmatprep.subr.mxu0 0.0
        %5369 = vmatpush1.msra.mxu0 0.0
        %5370 = vmatprep.subr.mxu0 0.0
        %5371 = vmatpush1.msra.mxu0 0.0
        %5372 = vmatprep.subr.mxu0 0.0
        %5373 = vmatpush1.msra.mxu0 0.0
        %5374 = vmatprep.subr.mxu0 0.0
        %5375 = vmatpush1.msra.mxu0 0.0
        %5376 = vmatprep.subr.mxu0 0.0
        %5377 = vmatpush1.msra.mxu0 0.0
        %5378 = vmatprep.subr.mxu0 0.0
        %5379 = vmatpush1.msra.mxu0 0.0
        %5380 = vmatprep.subr.mxu0 0.0
        %5381 = vmatpush1.msra.mxu0 0.0
        %5382 = vmatprep.subr.mxu0 0.0
        %5383 = vmatpush1.msra.mxu0 0.0
        %5384 = vmatprep.mubr.f32.mxu0 0.0
        %5385 = vmatmul.mubr.f32.gmra.mrb[0].mxu0 %v4776
        %v5386 = vpop.f32.mrb[0].mxu0
        %v5387 = vadd.f32 0.0, %v5386
        %v5388 = vpop.f32.mrb[0].mxu0
        %v5389 = vadd.f32 0.0, %v5388
        %5390 = vmatprep.mubr.f32.mxu0 0.0
        %5391 = vmatmul.mubr.f32.gmra.mrb[0].mxu0 %v4779
        %v5392 = vpop.f32.mrb[0].mxu0
        %v5393 = vadd.f32 0.0, %v5392
        %v5394 = vpop.f32.mrb[0].mxu0
        %v5395 = vadd.f32 0.0, %v5394
        %5396 = vdwg.mxu0
        %v5397 = vadd.f32 %v4740, %v4848
        %v5398 = vadd.f32 %v4741, %v4850
        %v5399 = vadd.f32 %v4742, %v4925
        %v5400 = vadd.f32 %v4743, %v4927
        %v5401 = vadd.f32 %v4744, %v5002
        %v5402 = vadd.f32 %v4745, %v5004
        %v5403 = vadd.f32 %v4746, %v5079
        %v5404 = vadd.f32 %v4747, %v5081
        %v5405 = vadd.f32 %v4748, %v5156
        %v5406 = vadd.f32 %v4749, %v5158
        %v5407 = vadd.f32 %v4750, %v5233
        %v5408 = vadd.f32 %v4751, %v5235
        %v5409 = vadd.f32 %v4752, %v5310
        %v5410 = vadd.f32 %v4753, %v5312
        %v5411 = vadd.f32 %v4754, %v5387
        %v5412 = vadd.f32 %v4755, %v5389
        %v5413 = vadd.f32 %v4756, %v4854
        %v5414 = vadd.f32 %v4757, %v4856
        %v5415 = vadd.f32 %v4758, %v4931
        %v5416 = vadd.f32 %v4759, %v4933
        %v5417 = vadd.f32 %v4760, %v5008
        %v5418 = vadd.f32 %v4761, %v5010
        %v5419 = vadd.f32 %v4762, %v5085
        %v5420 = vadd.f32 %v4763, %v5087
        %v5421 = vadd.f32 %v4764, %v5162
        %v5422 = vadd.f32 %v4765, %v5164
        %v5423 = vadd.f32 %v4766, %v5239
        %v5424 = vadd.f32 %v4767, %v5241
        %v5425 = vadd.f32 %v4768, %v5316
        %v5426 = vadd.f32 %v4769, %v5318
        %v5427 = vadd.f32 %v4770, %v5393
        %v5428 = vadd.f32 %v4771, %v5395
        %v5429 = vld [vmem:[%s201 + $0x10] sm:$0xff]
        %v5430 = vld [vmem:[%s201 + $0x18] sm:$0xff]
        %v5431 = vld [vmem:[%s201 + $0x20] sm:$0xff]
        %v5432 = vld [vmem:[%s201 + $0x28] sm:$0xff]
        %v5433 = vld [vmem:[%s201 + $0x30] sm:$0xff]
        %v5434 = vld [vmem:[%s201 + $0x38] sm:$0xff]
        %v5435 = vld [vmem:[%s201 + $0x40] sm:$0xff]
        %v5436 = vld [vmem:[%s201 + $0x48] sm:$0xff]
        %v5437 = vld [vmem:[%s201 + $0x50] sm:$0xff]
        %v5438 = vld [vmem:[%s201 + $0x58] sm:$0xff]
        %v5439 = vld [vmem:[%s201 + $0x60] sm:$0xff]
        %v5440 = vld [vmem:[%s201 + $0x68] sm:$0xff]
        %v5441 = vld [vmem:[%s201 + $0x70] sm:$0xff]
        %v5442 = vld [vmem:[%s201 + $0x78] sm:$0xff]
        %v5443 = vld [vmem:[%s201 + $0x80] sm:$0xff]
        %v5444 = vld [vmem:[%s201 + $0x88] sm:$0xff]
        %v5445 = vld [vmem:[%s201 + $0x90] sm:$0xff]
        %v5446 = vld [vmem:[%s201 + $0xa8] sm:$0xff]
        %v5447 = vld [vmem:[%s201 + $0xb0] sm:$0xff]
        %v5448 = vld [vmem:[%s201 + $0xb8] sm:$0xff]
        %v5449 = vld [vmem:[%s201 + $0xc0] sm:$0xff]
        %v5450 = vld [vmem:[%s201 + $0xc8] sm:$0xff]
        %v5451 = vld [vmem:[%s201 + $0xd0] sm:$0xff]
        %v5452 = vld [vmem:[%s201 + $0xd8] sm:$0xff]
        %v5453 = vld [vmem:[%s201 + $0xe0] sm:$0xff]
        %v5454 = vld [vmem:[%s201 + $0xe8] sm:$0xff]
        %v5455 = vld [vmem:[%s201 + $0xf0] sm:$0xff]
        %v5456 = vld [vmem:[%s201 + $0xf8] sm:$0xff]
        %v5457 = vld [vmem:[%s201 + $0x100] sm:$0xff]
        %v5458 = vld [vmem:[%s201 + $0x108] sm:$0xff]
        %v5459 = vld [vmem:[%s201 + $0x110] sm:$0xff]
        %v5460 = vld [vmem:[%s201 + $0x118] sm:$0xff]
        %v5461 = vld [vmem:[%s201 + $0x120] sm:$0xff]
        %v5462 = vld [vmem:[%s201 + $0x128] sm:$0xff]
        %s5463 = scalar_lea.vmem [#allocation6], 112
        %v5464 = vld [vmem:[%s5463] sm:$0xff]
        %v5465 = vld [vmem:[%s5463 + $0x8] sm:$0xff]
        %5500 = vrot.lane.b32.xlu0 %v5429, 127
        %v5501 = vpop.permute.xlu0 %5500
        %5502 = vrot.lane.b32.xlu0 %v5430, 127
        %v5503 = vpop.permute.xlu0 %5502
        %5504 = vrot.lane.b32.xlu0 %v5431, 127
        %v5505 = vpop.permute.xlu0 %5504
        %5506 = vrot.lane.b32.xlu0 %v5432, 127
        %v5507 = vpop.permute.xlu0 %5506
        %5508 = vrot.lane.b32.xlu0 %v5433, 127
        %v5509 = vpop.permute.xlu0 %5508
        %5510 = vrot.lane.b32.xlu0 %v5434, 127
        %v5511 = vpop.permute.xlu0 %5510
        %5512 = vrot.lane.b32.xlu0 %v5435, 127
        %v5513 = vpop.permute.xlu0 %5512
        %5514 = vrot.lane.b32.xlu0 %v5436, 127
        %v5515 = vpop.permute.xlu0 %5514
        %5516 = vrot.lane.b32.xlu0 %v5437, 127
        %v5517 = vpop.permute.xlu0 %5516
        %5518 = vrot.lane.b32.xlu0 %v5438, 127
        %v5519 = vpop.permute.xlu0 %5518
        %5520 = vrot.lane.b32.xlu0 %v5439, 127
        %v5521 = vpop.permute.xlu0 %5520
        %5522 = vrot.lane.b32.xlu0 %v5440, 127
        %v5523 = vpop.permute.xlu0 %5522
        %5524 = vrot.lane.b32.xlu0 %v5441, 127
        %v5525 = vpop.permute.xlu0 %5524
        %5526 = vrot.lane.b32.xlu0 %v5442, 127
        %v5527 = vpop.permute.xlu0 %5526
        %5528 = vrot.lane.b32.xlu0 %v5443, 127
        %v5529 = vpop.permute.xlu0 %5528
        %5530 = vrot.lane.b32.xlu0 %v5444, 127
        %v5531 = vpop.permute.xlu0 %5530
        %5532 = vrot.lane.b32.xlu0 %v5445, 127
        %v5533 = vpop.permute.xlu0 %5532
        %5534 = vrot.lane.b32.xlu0 %v5446, 127
        %v5535 = vpop.permute.xlu0 %5534
        %5536 = vrot.lane.b32.xlu0 %v5447, 127
        %v5537 = vpop.permute.xlu0 %5536
        %5538 = vrot.lane.b32.xlu0 %v5448, 127
        %v5539 = vpop.permute.xlu0 %5538
        %5540 = vrot.lane.b32.xlu0 %v5449, 127
        %v5541 = vpop.permute.xlu0 %5540
        %5542 = vrot.lane.b32.xlu0 %v5450, 127
        %v5543 = vpop.permute.xlu0 %5542
        %5544 = vrot.lane.b32.xlu0 %v5451, 127
        %v5545 = vpop.permute.xlu0 %5544
        %5546 = vrot.lane.b32.xlu0 %v5452, 127
        %v5547 = vpop.permute.xlu0 %5546
        %5548 = vrot.lane.b32.xlu0 %v5453, 127
        %v5549 = vpop.permute.xlu0 %5548
        %5550 = vrot.lane.b32.xlu0 %v5454, 127
        %v5551 = vpop.permute.xlu0 %5550
        %5552 = vrot.lane.b32.xlu0 %v5455, 127
        %v5553 = vpop.permute.xlu0 %5552
        %5554 = vrot.lane.b32.xlu0 %v5456, 127
        %v5555 = vpop.permute.xlu0 %5554
        %5556 = vrot.lane.b32.xlu0 %v5457, 127
        %v5557 = vpop.permute.xlu0 %5556
        %5558 = vrot.lane.b32.xlu0 %v5458, 127
        %v5559 = vpop.permute.xlu0 %5558
        %5560 = vrot.lane.b32.xlu0 %v5459, 127
        %v5561 = vpop.permute.xlu0 %5560
        %5562 = vrot.lane.b32.xlu0 %v5460, 127
        %v5563 = vpop.permute.xlu0 %5562
        %5564 = vrot.lane.b32.xlu0 %v5461, 127
        %v5565 = vpop.permute.xlu0 %5564
        %5566 = vrot.lane.b32.xlu0 %v5462, 127
        %v5567 = vpop.permute.xlu0 %5566
        %v5568 = vsel %vm369, %v5501, %v5503
        %v5569 = vsel %vm369, %v5503, %v5505
        %v5570 = vsel %vm369, %v5505, %v5507
        %v5571 = vsel %vm369, %v5507, %v5509
        %v5572 = vsel %vm369, %v5509, %v5511
        %v5573 = vsel %vm369, %v5511, %v5513
        %v5574 = vsel %vm369, %v5513, %v5515
        %v5575 = vsel %vm369, %v5515, %v5517
        %v5576 = vsel %vm369, %v5517, %v5519
        %v5577 = vsel %vm369, %v5519, %v5521
        %v5578 = vsel %vm369, %v5521, %v5523
        %v5579 = vsel %vm369, %v5523, %v5525
        %v5580 = vsel %vm369, %v5525, %v5527
        %v5581 = vsel %vm369, %v5527, %v5529
        %v5582 = vsel %vm369, %v5529, %v5531
        %v5583 = vsel %vm369, %v5531, %v5533
        %v5584 = vsel %vm369, %v5535, %v5537
        %v5585 = vsel %vm369, %v5537, %v5539
        %v5586 = vsel %vm369, %v5539, %v5541
        %v5587 = vsel %vm369, %v5541, %v5543
        %v5588 = vsel %vm369, %v5543, %v5545
        %v5589 = vsel %vm369, %v5545, %v5547
        %v5590 = vsel %vm369, %v5547, %v5549
        %v5591 = vsel %vm369, %v5549, %v5551
        %v5592 = vsel %vm369, %v5551, %v5553
        %v5593 = vsel %vm369, %v5553, %v5555
        %v5594 = vsel %vm369, %v5555, %v5557
        %v5595 = vsel %vm369, %v5557, %v5559
        %v5596 = vsel %vm369, %v5559, %v5561
        %v5597 = vsel %vm369, %v5561, %v5563
        %v5598 = vsel %vm369, %v5563, %v5565
        %v5599 = vsel %vm369, %v5565, %v5567
        %v5633 = vsel %vm434, %v5464, 0
        %v5636 = vsel %vm434, %v5465, 0
        %5638 = vmatprep.subr.mxu0 %v5569
        %5639 = vmatpush1.msra.mxu0 %v5568
        %5640 = vmatprep.subr.mxu0 %v5585
        %5641 = vmatpush1.msra.mxu0 %v5584
        %5642 = vmatprep.subr.mxu0 0.0
        %5643 = vmatpush1.msra.mxu0 0.0
        %5644 = vmatprep.subr.mxu0 0.0
        %5645 = vmatpush1.msra.mxu0 0.0
        %5646 = vmatprep.subr.mxu0 0.0
        %5647 = vmatpush1.msra.mxu0 0.0
        %5648 = vmatprep.subr.mxu0 0.0
        %5649 = vmatpush1.msra.mxu0 0.0
        %5650 = vmatprep.subr.mxu0 0.0
        %5651 = vmatpush1.msra.mxu0 0.0
        %5652 = vmatprep.subr.mxu0 0.0
        %5653 = vmatpush1.msra.mxu0 0.0
        %5654 = vmatprep.subr.mxu0 0.0
        %5655 = vmatpush1.msra.mxu0 0.0
        %5656 = vmatprep.subr.mxu0 0.0
        %5657 = vmatpush1.msra.mxu0 0.0
        %5658 = vmatprep.subr.mxu0 0.0
        %5659 = vmatpush1.msra.mxu0 0.0
        %5660 = vmatprep.subr.mxu0 0.0
        %5661 = vmatpush1.msra.mxu0 0.0
        %5662 = vmatprep.subr.mxu0 0.0
        %5663 = vmatpush1.msra.mxu0 0.0
        %5664 = vmatprep.subr.mxu0 0.0
        %5665 = vmatpush1.msra.mxu0 0.0
        %5666 = vmatprep.subr.mxu0 0.0
        %5667 = vmatpush1.msra.mxu0 0.0
        %5668 = vmatprep.subr.mxu0 0.0
        %5669 = vmatpush1.msra.mxu0 0.0
        %5670 = vmatprep.subr.mxu0 0.0
        %5671 = vmatpush1.msra.mxu0 0.0
        %5672 = vmatprep.subr.mxu0 0.0
        %5673 = vmatpush1.msra.mxu0 0.0
        %5674 = vmatprep.subr.mxu0 0.0
        %5675 = vmatpush1.msra.mxu0 0.0
        %5676 = vmatprep.subr.mxu0 0.0
        %5677 = vmatpush1.msra.mxu0 0.0
        %5678 = vmatprep.subr.mxu0 0.0
        %5679 = vmatpush1.msra.mxu0 0.0
        %5680 = vmatprep.subr.mxu0 0.0
        %5681 = vmatpush1.msra.mxu0 0.0
        %5682 = vmatprep.subr.mxu0 0.0
        %5683 = vmatpush1.msra.mxu0 0.0
        %5684 = vmatprep.subr.mxu0 0.0
        %5685 = vmatpush1.msra.mxu0 0.0
        %5686 = vmatprep.subr.mxu0 0.0
        %5687 = vmatpush1.msra.mxu0 0.0
        %5688 = vmatprep.subr.mxu0 0.0
        %5689 = vmatpush1.msra.mxu0 0.0
        %5690 = vmatprep.subr.mxu0 0.0
        %5691 = vmatpush1.msra.mxu0 0.0
        %5692 = vmatprep.subr.mxu0 0.0
        %5693 = vmatpush1.msra.mxu0 0.0
        %5694 = vmatprep.subr.mxu0 0.0
        %5695 = vmatpush1.msra.mxu0 0.0
        %5696 = vmatprep.subr.mxu0 0.0
        %5697 = vmatpush1.msra.mxu0 0.0
        %5698 = vmatprep.subr.mxu0 0.0
        %5699 = vmatpush1.msra.mxu0 0.0
        %5700 = vmatprep.subr.mxu0 0.0
        %5701 = vmatpush1.msra.mxu0 0.0
        %5702 = vmatprep.mubr.f32.mxu0 0.0
        %5703 = vmatmul.mubr.f32.gmra.mrb[0].mxu0 %v5633
        %v5704 = vpop.f32.mrb[0].mxu0
        %v5705 = vadd.f32 0.0, %v5704
        %v5706 = vpop.f32.mrb[0].mxu0
        %v5707 = vadd.f32 0.0, %v5706
        %5708 = vmatprep.mubr.f32.mxu0 0.0
        %5709 = vmatmul.mubr.f32.gmra.mrb[0].mxu0 %v5636
        %v5710 = vpop.f32.mrb[0].mxu0
        %v5711 = vadd.f32 0.0, %v5710
        %v5712 = vpop.f32.mrb[0].mxu0
        %v5713 = vadd.f32 0.0, %v5712
        %5714 = vdwg.mxu0
        %5715 = vmatprep.subr.mxu0 %v5571
        %5716 = vmatpush1.msra.mxu0 %v5570
        %5717 = vmatprep.subr.mxu0 %v5587
        %5718 = vmatpush1.msra.mxu0 %v5586
        %5719 = vmatprep.subr.mxu0 0.0
        %5720 = vmatpush1.msra.mxu0 0.0
        %5721 = vmatprep.subr.mxu0 0.0
        %5722 = vmatpush1.msra.mxu0 0.0
        %5723 = vmatprep.subr.mxu0 0.0
        %5724 = vmatpush1.msra.mxu0 0.0
        %5725 = vmatprep.subr.mxu0 0.0
        %5726 = vmatpush1.msra.mxu0 0.0
        %5727 = vmatprep.subr.mxu0 0.0
        %5728 = vmatpush1.msra.mxu0 0.0
        %5729 = vmatprep.subr.mxu0 0.0
        %5730 = vmatpush1.msra.mxu0 0.0
        %5731 = vmatprep.subr.mxu0 0.0
        %5732 = vmatpush1.msra.mxu0 0.0
        %5733 = vmatprep.subr.mxu0 0.0
        %5734 = vmatpush1.msra.mxu0 0.0
        %5735 = vmatprep.subr.mxu0 0.0
        %5736 = vmatpush1.msra.mxu0 0.0
        %5737 = vmatprep.subr.mxu0 0.0
        %5738 = vmatpush1.msra.mxu0 0.0
        %5739 = vmatprep.subr.mxu0 0.0
        %5740 = vmatpush1.msra.mxu0 0.0
        %5741 = vmatprep.subr.mxu0 0.0
        %5742 = vmatpush1.msra.mxu0 0.0
        %5743 = vmatprep.subr.mxu0 0.0
        %5744 = vmatpush1.msra.mxu0 0.0
        %5745 = vmatprep.subr.mxu0 0.0
        %5746 = vmatpush1.msra.mxu0 0.0
        %5747 = vmatprep.subr.mxu0 0.0
        %5748 = vmatpush1.msra.mxu0 0.0
        %5749 = vmatprep.subr.mxu0 0.0
        %5750 = vmatpush1.msra.mxu0 0.0
        %5751 = vmatprep.subr.mxu0 0.0
        %5752 = vmatpush1.msra.mxu0 0.0
        %5753 = vmatprep.subr.mxu0 0.0
        %5754 = vmatpush1.msra.mxu0 0.0
        %5755 = vmatprep.subr.mxu0 0.0
        %5756 = vmatpush1.msra.mxu0 0.0
        %5757 = vmatprep.subr.mxu0 0.0
        %5758 = vmatpush1.msra.mxu0 0.0
        %5759 = vmatprep.subr.mxu0 0.0
        %5760 = vmatpush1.msra.mxu0 0.0
        %5761 = vmatprep.subr.mxu0 0.0
        %5762 = vmatpush1.msra.mxu0 0.0
        %5763 = vmatprep.subr.mxu0 0.0
        %5764 = vmatpush1.msra.mxu0 0.0
        %5765 = vmatprep.subr.mxu0 0.0
        %5766 = vmatpush1.msra.mxu0 0.0
        %5767 = vmatprep.subr.mxu0 0.0
        %5768 = vmatpush1.msra.mxu0 0.0
        %5769 = vmatprep.subr.mxu0 0.0
        %5770 = vmatpush1.msra.mxu0 0.0
        %5771 = vmatprep.subr.mxu0 0.0
        %5772 = vmatpush1.msra.mxu0 0.0
        %5773 = vmatprep.subr.mxu0 0.0
        %5774 = vmatpush1.msra.mxu0 0.0
        %5775 = vmatprep.subr.mxu0 0.0
        %5776 = vmatpush1.msra.mxu0 0.0
        %5777 = vmatprep.subr.mxu0 0.0
        %5778 = vmatpush1.msra.mxu0 0.0
        %5779 = vmatprep.mubr.f32.mxu0 0.0
        %5780 = vmatmul.mubr.f32.gmra.mrb[0].mxu0 %v5633
        %v5781 = vpop.f32.mrb[0].mxu0
        %v5782 = vadd.f32 0.0, %v5781
        %v5783 = vpop.f32.mrb[0].mxu0
        %v5784 = vadd.f32 0.0, %v5783
        %5785 = vmatprep.mubr.f32.mxu0 0.0
        %5786 = vmatmul.mubr.f32.gmra.mrb[0].mxu0 %v5636
        %v5787 = vpop.f32.mrb[0].mxu0
        %v5788 = vadd.f32 0.0, %v5787
        %v5789 = vpop.f32.mrb[0].mxu0
        %v5790 = vadd.f32 0.0, %v5789
        %5791 = vdwg.mxu0
        %5792 = vmatprep.subr.mxu0 %v5573
        %5793 = vmatpush1.msra.mxu0 %v5572
        %5794 = vmatprep.subr.mxu0 %v5589
        %5795 = vmatpush1.msra.mxu0 %v5588
        %5796 = vmatprep.subr.mxu0 0.0
        %5797 = vmatpush1.msra.mxu0 0.0
        %5798 = vmatprep.subr.mxu0 0.0
        %5799 = vmatpush1.msra.mxu0 0.0
        %5800 = vmatprep.subr.mxu0 0.0
        %5801 = vmatpush1.msra.mxu0 0.0
        %5802 = vmatprep.subr.mxu0 0.0
        %5803 = vmatpush1.msra.mxu0 0.0
        %5804 = vmatprep.subr.mxu0 0.0
        %5805 = vmatpush1.msra.mxu0 0.0
        %5806 = vmatprep.subr.mxu0 0.0
        %5807 = vmatpush1.msra.mxu0 0.0
        %5808 = vmatprep.subr.mxu0 0.0
        %5809 = vmatpush1.msra.mxu0 0.0
        %5810 = vmatprep.subr.mxu0 0.0
        %5811 = vmatpush1.msra.mxu0 0.0
        %5812 = vmatprep.subr.mxu0 0.0
        %5813 = vmatpush1.msra.mxu0 0.0
        %5814 = vmatprep.subr.mxu0 0.0
        %5815 = vmatpush1.msra.mxu0 0.0
        %5816 = vmatprep.subr.mxu0 0.0
        %5817 = vmatpush1.msra.mxu0 0.0
        %5818 = vmatprep.subr.mxu0 0.0
        %5819 = vmatpush1.msra.mxu0 0.0
        %5820 = vmatprep.subr.mxu0 0.0
        %5821 = vmatpush1.msra.mxu0 0.0
        %5822 = vmatprep.subr.mxu0 0.0
        %5823 = vmatpush1.msra.mxu0 0.0
        %5824 = vmatprep.subr.mxu0 0.0
        %5825 = vmatpush1.msra.mxu0 0.0
        %5826 = vmatprep.subr.mxu0 0.0
        %5827 = vmatpush1.msra.mxu0 0.0
        %5828 = vmatprep.subr.mxu0 0.0
        %5829 = vmatpush1.msra.mxu0 0.0
        %5830 = vmatprep.subr.mxu0 0.0
        %5831 = vmatpush1.msra.mxu0 0.0
        %5832 = vmatprep.subr.mxu0 0.0
        %5833 = vmatpush1.msra.mxu0 0.0
        %5834 = vmatprep.subr.mxu0 0.0
        %5835 = vmatpush1.msra.mxu0 0.0
        %5836 = vmatprep.subr.mxu0 0.0
        %5837 = vmatpush1.msra.mxu0 0.0
        %5838 = vmatprep.subr.mxu0 0.0
        %5839 = vmatpush1.msra.mxu0 0.0
        %5840 = vmatprep.subr.mxu0 0.0
        %5841 = vmatpush1.msra.mxu0 0.0
        %5842 = vmatprep.subr.mxu0 0.0
        %5843 = vmatpush1.msra.mxu0 0.0
        %5844 = vmatprep.subr.mxu0 0.0
        %5845 = vmatpush1.msra.mxu0 0.0
        %5846 = vmatprep.subr.mxu0 0.0
        %5847 = vmatpush1.msra.mxu0 0.0
        %5848 = vmatprep.subr.mxu0 0.0
        %5849 = vmatpush1.msra.mxu0 0.0
        %5850 = vmatprep.subr.mxu0 0.0
        %5851 = vmatpush1.msra.mxu0 0.0
        %5852 = vmatprep.subr.mxu0 0.0
        %5853 = vmatpush1.msra.mxu0 0.0
        %5854 = vmatprep.subr.mxu0 0.0
        %5855 = vmatpush1.msra.mxu0 0.0
        %5856 = vmatprep.mubr.f32.mxu0 0.0
        %5857 = vmatmul.mubr.f32.gmra.mrb[0].mxu0 %v5633
        %v5858 = vpop.f32.mrb[0].mxu0
        %v5859 = vadd.f32 0.0, %v5858
        %v5860 = vpop.f32.mrb[0].mxu0
        %v5861 = vadd.f32 0.0, %v5860
        %5862 = vmatprep.mubr.f32.mxu0 0.0
        %5863 = vmatmul.mubr.f32.gmra.mrb[0].mxu0 %v5636
        %v5864 = vpop.f32.mrb[0].mxu0
        %v5865 = vadd.f32 0.0, %v5864
        %v5866 = vpop.f32.mrb[0].mxu0
        %v5867 = vadd.f32 0.0, %v5866
        %5868 = vdwg.mxu0
        %5869 = vmatprep.subr.mxu0 %v5575
        %5870 = vmatpush1.msra.mxu0 %v5574
        %5871 = vmatprep.subr.mxu0 %v5591
        %5872 = vmatpush1.msra.mxu0 %v5590
        %5873 = vmatprep.subr.mxu0 0.0
        %5874 = vmatpush1.msra.mxu0 0.0
        %5875 = vmatprep.subr.mxu0 0.0
        %5876 = vmatpush1.msra.mxu0 0.0
        %5877 = vmatprep.subr.mxu0 0.0
        %5878 = vmatpush1.msra.mxu0 0.0
        %5879 = vmatprep.subr.mxu0 0.0
        %5880 = vmatpush1.msra.mxu0 0.0
        %5881 = vmatprep.subr.mxu0 0.0
        %5882 = vmatpush1.msra.mxu0 0.0
        %5883 = vmatprep.subr.mxu0 0.0
        %5884 = vmatpush1.msra.mxu0 0.0
        %5885 = vmatprep.subr.mxu0 0.0
        %5886 = vmatpush1.msra.mxu0 0.0
        %5887 = vmatprep.subr.mxu0 0.0
        %5888 = vmatpush1.msra.mxu0 0.0
        %5889 = vmatprep.subr.mxu0 0.0
        %5890 = vmatpush1.msra.mxu0 0.0
        %5891 = vmatprep.subr.mxu0 0.0
        %5892 = vmatpush1.msra.mxu0 0.0
        %5893 = vmatprep.subr.mxu0 0.0
        %5894 = vmatpush1.msra.mxu0 0.0
        %5895 = vmatprep.subr.mxu0 0.0
        %5896 = vmatpush1.msra.mxu0 0.0
        %5897 = vmatprep.subr.mxu0 0.0
        %5898 = vmatpush1.msra.mxu0 0.0
        %5899 = vmatprep.subr.mxu0 0.0
        %5900 = vmatpush1.msra.mxu0 0.0
        %5901 = vmatprep.subr.mxu0 0.0
        %5902 = vmatpush1.msra.mxu0 0.0
        %5903 = vmatprep.subr.mxu0 0.0
        %5904 = vmatpush1.msra.mxu0 0.0
        %5905 = vmatprep.subr.mxu0 0.0
        %5906 = vmatpush1.msra.mxu0 0.0
        %5907 = vmatprep.subr.mxu0 0.0
        %5908 = vmatpush1.msra.mxu0 0.0
        %5909 = vmatprep.subr.mxu0 0.0
        %5910 = vmatpush1.msra.mxu0 0.0
        %5911 = vmatprep.subr.mxu0 0.0
        %5912 = vmatpush1.msra.mxu0 0.0
        %5913 = vmatprep.subr.mxu0 0.0
        %5914 = vmatpush1.msra.mxu0 0.0
        %5915 = vmatprep.subr.mxu0 0.0
        %5916 = vmatpush1.msra.mxu0 0.0
        %5917 = vmatprep.subr.mxu0 0.0
        %5918 = vmatpush1.msra.mxu0 0.0
        %5919 = vmatprep.subr.mxu0 0.0
        %5920 = vmatpush1.msra.mxu0 0.0
        %5921 = vmatprep.subr.mxu0 0.0
        %5922 = vmatpush1.msra.mxu0 0.0
        %5923 = vmatprep.subr.mxu0 0.0
        %5924 = vmatpush1.msra.mxu0 0.0
        %5925 = vmatprep.subr.mxu0 0.0
        %5926 = vmatpush1.msra.mxu0 0.0
        %5927 = vmatprep.subr.mxu0 0.0
        %5928 = vmatpush1.msra.mxu0 0.0
        %5929 = vmatprep.subr.mxu0 0.0
        %5930 = vmatpush1.msra.mxu0 0.0
        %5931 = vmatprep.subr.mxu0 0.0
        %5932 = vmatpush1.msra.mxu0 0.0
        %5933 = vmatprep.mubr.f32.mxu0 0.0
        %5934 = vmatmul.mubr.f32.gmra.mrb[0].mxu0 %v5633
        %v5935 = vpop.f32.mrb[0].mxu0
        %v5936 = vadd.f32 0.0, %v5935
        %v5937 = vpop.f32.mrb[0].mxu0
        %v5938 = vadd.f32 0.0, %v5937
        %5939 = vmatprep.mubr.f32.mxu0 0.0
        %5940 = vmatmul.mubr.f32.gmra.mrb[0].mxu0 %v5636
        %v5941 = vpop.f32.mrb[0].mxu0
        %v5942 = vadd.f32 0.0, %v5941
        %v5943 = vpop.f32.mrb[0].mxu0
        %v5944 = vadd.f32 0.0, %v5943
        %5945 = vdwg.mxu0
        %5946 = vmatprep.subr.mxu0 %v5577
        %5947 = vmatpush1.msra.mxu0 %v5576
        %5948 = vmatprep.subr.mxu0 %v5593
        %5949 = vmatpush1.msra.mxu0 %v5592
        %5950 = vmatprep.subr.mxu0 0.0
        %5951 = vmatpush1.msra.mxu0 0.0
        %5952 = vmatprep.subr.mxu0 0.0
        %5953 = vmatpush1.msra.mxu0 0.0
        %5954 = vmatprep.subr.mxu0 0.0
        %5955 = vmatpush1.msra.mxu0 0.0
        %5956 = vmatprep.subr.mxu0 0.0
        %5957 = vmatpush1.msra.mxu0 0.0
        %5958 = vmatprep.subr.mxu0 0.0
        %5959 = vmatpush1.msra.mxu0 0.0
        %5960 = vmatprep.subr.mxu0 0.0
        %5961 = vmatpush1.msra.mxu0 0.0
        %5962 = vmatprep.subr.mxu0 0.0
        %5963 = vmatpush1.msra.mxu0 0.0
        %5964 = vmatprep.subr.mxu0 0.0
        %5965 = vmatpush1.msra.mxu0 0.0
        %5966 = vmatprep.subr.mxu0 0.0
        %5967 = vmatpush1.msra.mxu0 0.0
        %5968 = vmatprep.subr.mxu0 0.0
        %5969 = vmatpush1.msra.mxu0 0.0
        %5970 = vmatprep.subr.mxu0 0.0
        %5971 = vmatpush1.msra.mxu0 0.0
        %5972 = vmatprep.subr.mxu0 0.0
        %5973 = vmatpush1.msra.mxu0 0.0
        %5974 = vmatprep.subr.mxu0 0.0
        %5975 = vmatpush1.msra.mxu0 0.0
        %5976 = vmatprep.subr.mxu0 0.0
        %5977 = vmatpush1.msra.mxu0 0.0
        %5978 = vmatprep.subr.mxu0 0.0
        %5979 = vmatpush1.msra.mxu0 0.0
        %5980 = vmatprep.subr.mxu0 0.0
        %5981 = vmatpush1.msra.mxu0 0.0
        %5982 = vmatprep.subr.mxu0 0.0
        %5983 = vmatpush1.msra.mxu0 0.0
        %5984 = vmatprep.subr.mxu0 0.0
        %5985 = vmatpush1.msra.mxu0 0.0
        %5986 = vmatprep.subr.mxu0 0.0
        %5987 = vmatpush1.msra.mxu0 0.0
        %5988 = vmatprep.subr.mxu0 0.0
        %5989 = vmatpush1.msra.mxu0 0.0
        %5990 = vmatprep.subr.mxu0 0.0
        %5991 = vmatpush1.msra.mxu0 0.0
        %5992 = vmatprep.subr.mxu0 0.0
        %5993 = vmatpush1.msra.mxu0 0.0
        %5994 = vmatprep.subr.mxu0 0.0
        %5995 = vmatpush1.msra.mxu0 0.0
        %5996 = vmatprep.subr.mxu0 0.0
        %5997 = vmatpush1.msra.mxu0 0.0
        %5998 = vmatprep.subr.mxu0 0.0
        %5999 = vmatpush1.msra.mxu0 0.0
        %6000 = vmatprep.subr.mxu0 0.0
        %6001 = vmatpush1.msra.mxu0 0.0
        %6002 = vmatprep.subr.mxu0 0.0
        %6003 = vmatpush1.msra.mxu0 0.0
        %6004 = vmatprep.subr.mxu0 0.0
        %6005 = vmatpush1.msra.mxu0 0.0
        %6006 = vmatprep.subr.mxu0 0.0
        %6007 = vmatpush1.msra.mxu0 0.0
        %6008 = vmatprep.subr.mxu0 0.0
        %6009 = vmatpush1.msra.mxu0 0.0
        %6010 = vmatprep.mubr.f32.mxu0 0.0
        %6011 = vmatmul.mubr.f32.gmra.mrb[0].mxu0 %v5633
        %v6012 = vpop.f32.mrb[0].mxu0
        %v6013 = vadd.f32 0.0, %v6012
        %v6014 = vpop.f32.mrb[0].mxu0
        %v6015 = vadd.f32 0.0, %v6014
        %6016 = vmatprep.mubr.f32.mxu0 0.0
        %6017 = vmatmul.mubr.f32.gmra.mrb[0].mxu0 %v5636
        %v6018 = vpop.f32.mrb[0].mxu0
        %v6019 = vadd.f32 0.0, %v6018
        %v6020 = vpop.f32.mrb[0].mxu0
        %v6021 = vadd.f32 0.0, %v6020
        %6022 = vdwg.mxu0
        %6023 = vmatprep.subr.mxu0 %v5579
        %6024 = vmatpush1.msra.mxu0 %v5578
        %6025 = vmatprep.subr.mxu0 %v5595
        %6026 = vmatpush1.msra.mxu0 %v5594
        %6027 = vmatprep.subr.mxu0 0.0
        %6028 = vmatpush1.msra.mxu0 0.0
        %6029 = vmatprep.subr.mxu0 0.0
        %6030 = vmatpush1.msra.mxu0 0.0
        %6031 = vmatprep.subr.mxu0 0.0
        %6032 = vmatpush1.msra.mxu0 0.0
        %6033 = vmatprep.subr.mxu0 0.0
        %6034 = vmatpush1.msra.mxu0 0.0
        %6035 = vmatprep.subr.mxu0 0.0
        %6036 = vmatpush1.msra.mxu0 0.0
        %6037 = vmatprep.subr.mxu0 0.0
        %6038 = vmatpush1.msra.mxu0 0.0
        %6039 = vmatprep.subr.mxu0 0.0
        %6040 = vmatpush1.msra.mxu0 0.0
        %6041 = vmatprep.subr.mxu0 0.0
        %6042 = vmatpush1.msra.mxu0 0.0
        %6043 = vmatprep.subr.mxu0 0.0
        %6044 = vmatpush1.msra.mxu0 0.0
        %6045 = vmatprep.subr.mxu0 0.0
        %6046 = vmatpush1.msra.mxu0 0.0
        %6047 = vmatprep.subr.mxu0 0.0
        %6048 = vmatpush1.msra.mxu0 0.0
        %6049 = vmatprep.subr.mxu0 0.0
        %6050 = vmatpush1.msra.mxu0 0.0
        %6051 = vmatprep.subr.mxu0 0.0
        %6052 = vmatpush1.msra.mxu0 0.0
        %6053 = vmatprep.subr.mxu0 0.0
        %6054 = vmatpush1.msra.mxu0 0.0
        %6055 = vmatprep.subr.mxu0 0.0
        %6056 = vmatpush1.msra.mxu0 0.0
        %6057 = vmatprep.subr.mxu0 0.0
        %6058 = vmatpush1.msra.mxu0 0.0
        %6059 = vmatprep.subr.mxu0 0.0
        %6060 = vmatpush1.msra.mxu0 0.0
        %6061 = vmatprep.subr.mxu0 0.0
        %6062 = vmatpush1.msra.mxu0 0.0
        %6063 = vmatprep.subr.mxu0 0.0
        %6064 = vmatpush1.msra.mxu0 0.0
        %6065 = vmatprep.subr.mxu0 0.0
        %6066 = vmatpush1.msra.mxu0 0.0
        %6067 = vmatprep.subr.mxu0 0.0
        %6068 = vmatpush1.msra.mxu0 0.0
        %6069 = vmatprep.subr.mxu0 0.0
        %6070 = vmatpush1.msra.mxu0 0.0
        %6071 = vmatprep.subr.mxu0 0.0
        %6072 = vmatpush1.msra.mxu0 0.0
        %6073 = vmatprep.subr.mxu0 0.0
        %6074 = vmatpush1.msra.mxu0 0.0
        %6075 = vmatprep.subr.mxu0 0.0
        %6076 = vmatpush1.msra.mxu0 0.0
        %6077 = vmatprep.subr.mxu0 0.0
        %6078 = vmatpush1.msra.mxu0 0.0
        %6079 = vmatprep.subr.mxu0 0.0
        %6080 = vmatpush1.msra.mxu0 0.0
        %6081 = vmatprep.subr.mxu0 0.0
        %6082 = vmatpush1.msra.mxu0 0.0
        %6083 = vmatprep.subr.mxu0 0.0
        %6084 = vmatpush1.msra.mxu0 0.0
        %6085 = vmatprep.subr.mxu0 0.0
        %6086 = vmatpush1.msra.mxu0 0.0
        %6087 = vmatprep.mubr.f32.mxu0 0.0
        %6088 = vmatmul.mubr.f32.gmra.mrb[0].mxu0 %v5633
        %v6089 = vpop.f32.mrb[0].mxu0
        %v6090 = vadd.f32 0.0, %v6089
        %v6091 = vpop.f32.mrb[0].mxu0
        %v6092 = vadd.f32 0.0, %v6091
        %6093 = vmatprep.mubr.f32.mxu0 0.0
        %6094 = vmatmul.mubr.f32.gmra.mrb[0].mxu0 %v5636
        %v6095 = vpop.f32.mrb[0].mxu0
        %v6096 = vadd.f32 0.0, %v6095
        %v6097 = vpop.f32.mrb[0].mxu0
        %v6098 = vadd.f32 0.0, %v6097
        %6099 = vdwg.mxu0
        %6100 = vmatprep.subr.mxu0 %v5581
        %6101 = vmatpush1.msra.mxu0 %v5580
        %6102 = vmatprep.subr.mxu0 %v5597
        %6103 = vmatpush1.msra.mxu0 %v5596
        %6104 = vmatprep.subr.mxu0 0.0
        %6105 = vmatpush1.msra.mxu0 0.0
        %6106 = vmatprep.subr.mxu0 0.0
        %6107 = vmatpush1.msra.mxu0 0.0
        %6108 = vmatprep.subr.mxu0 0.0
        %6109 = vmatpush1.msra.mxu0 0.0
        %6110 = vmatprep.subr.mxu0 0.0
        %6111 = vmatpush1.msra.mxu0 0.0
        %6112 = vmatprep.subr.mxu0 0.0
        %6113 = vmatpush1.msra.mxu0 0.0
        %6114 = vmatprep.subr.mxu0 0.0
        %6115 = vmatpush1.msra.mxu0 0.0
        %6116 = vmatprep.subr.mxu0 0.0
        %6117 = vmatpush1.msra.mxu0 0.0
        %6118 = vmatprep.subr.mxu0 0.0
        %6119 = vmatpush1.msra.mxu0 0.0
        %6120 = vmatprep.subr.mxu0 0.0
        %6121 = vmatpush1.msra.mxu0 0.0
        %6122 = vmatprep.subr.mxu0 0.0
        %6123 = vmatpush1.msra.mxu0 0.0
        %6124 = vmatprep.subr.mxu0 0.0
        %6125 = vmatpush1.msra.mxu0 0.0
        %6126 = vmatprep.subr.mxu0 0.0
        %6127 = vmatpush1.msra.mxu0 0.0
        %6128 = vmatprep.subr.mxu0 0.0
        %6129 = vmatpush1.msra.mxu0 0.0
        %6130 = vmatprep.subr.mxu0 0.0
        %6131 = vmatpush1.msra.mxu0 0.0
        %6132 = vmatprep.subr.mxu0 0.0
        %6133 = vmatpush1.msra.mxu0 0.0
        %6134 = vmatprep.subr.mxu0 0.0
        %6135 = vmatpush1.msra.mxu0 0.0
        %6136 = vmatprep.subr.mxu0 0.0
        %6137 = vmatpush1.msra.mxu0 0.0
        %6138 = vmatprep.subr.mxu0 0.0
        %6139 = vmatpush1.msra.mxu0 0.0
        %6140 = vmatprep.subr.mxu0 0.0
        %6141 = vmatpush1.msra.mxu0 0.0
        %6142 = vmatprep.subr.mxu0 0.0
        %6143 = vmatpush1.msra.mxu0 0.0
        %6144 = vmatprep.subr.mxu0 0.0
        %6145 = vmatpush1.msra.mxu0 0.0
        %6146 = vmatprep.subr.mxu0 0.0
        %6147 = vmatpush1.msra.mxu0 0.0
        %6148 = vmatprep.subr.mxu0 0.0
        %6149 = vmatpush1.msra.mxu0 0.0
        %6150 = vmatprep.subr.mxu0 0.0
        %6151 = vmatpush1.msra.mxu0 0.0
        %6152 = vmatprep.subr.mxu0 0.0
        %6153 = vmatpush1.msra.mxu0 0.0
        %6154 = vmatprep.subr.mxu0 0.0
        %6155 = vmatpush1.msra.mxu0 0.0
        %6156 = vmatprep.subr.mxu0 0.0
        %6157 = vmatpush1.msra.mxu0 0.0
        %6158 = vmatprep.subr.mxu0 0.0
        %6159 = vmatpush1.msra.mxu0 0.0
        %6160 = vmatprep.subr.mxu0 0.0
        %6161 = vmatpush1.msra.mxu0 0.0
        %6162 = vmatprep.subr.mxu0 0.0
        %6163 = vmatpush1.msra.mxu0 0.0
        %6164 = vmatprep.mubr.f32.mxu0 0.0
        %6165 = vmatmul.mubr.f32.gmra.mrb[0].mxu0 %v5633
        %v6166 = vpop.f32.mrb[0].mxu0
        %v6167 = vadd.f32 0.0, %v6166
        %v6168 = vpop.f32.mrb[0].mxu0
        %v6169 = vadd.f32 0.0, %v6168
        %6170 = vmatprep.mubr.f32.mxu0 0.0
        %6171 = vmatmul.mubr.f32.gmra.mrb[0].mxu0 %v5636
        %v6172 = vpop.f32.mrb[0].mxu0
        %v6173 = vadd.f32 0.0, %v6172
        %v6174 = vpop.f32.mrb[0].mxu0
        %v6175 = vadd.f32 0.0, %v6174
        %6176 = vdwg.mxu0
        %6177 = vmatprep.subr.mxu0 %v5583
        %6178 = vmatpush1.msra.mxu0 %v5582
        %6179 = vmatprep.subr.mxu0 %v5599
        %6180 = vmatpush1.msra.mxu0 %v5598
        %6181 = vmatprep.subr.mxu0 0.0
        %6182 = vmatpush1.msra.mxu0 0.0
        %6183 = vmatprep.subr.mxu0 0.0
        %6184 = vmatpush1.msra.mxu0 0.0
        %6185 = vmatprep.subr.mxu0 0.0
        %6186 = vmatpush1.msra.mxu0 0.0
        %6187 = vmatprep.subr.mxu0 0.0
        %6188 = vmatpush1.msra.mxu0 0.0
        %6189 = vmatprep.subr.mxu0 0.0
        %6190 = vmatpush1.msra.mxu0 0.0
        %6191 = vmatprep.subr.mxu0 0.0
        %6192 = vmatpush1.msra.mxu0 0.0
        %6193 = vmatprep.subr.mxu0 0.0
        %6194 = vmatpush1.msra.mxu0 0.0
        %6195 = vmatprep.subr.mxu0 0.0
        %6196 = vmatpush1.msra.mxu0 0.0
        %6197 = vmatprep.subr.mxu0 0.0
        %6198 = vmatpush1.msra.mxu0 0.0
        %6199 = vmatprep.subr.mxu0 0.0
        %6200 = vmatpush1.msra.mxu0 0.0
        %6201 = vmatprep.subr.mxu0 0.0
        %6202 = vmatpush1.msra.mxu0 0.0
        %6203 = vmatprep.subr.mxu0 0.0
        %6204 = vmatpush1.msra.mxu0 0.0
        %6205 = vmatprep.subr.mxu0 0.0
        %6206 = vmatpush1.msra.mxu0 0.0
        %6207 = vmatprep.subr.mxu0 0.0
        %6208 = vmatpush1.msra.mxu0 0.0
        %6209 = vmatprep.subr.mxu0 0.0
        %6210 = vmatpush1.msra.mxu0 0.0
        %6211 = vmatprep.subr.mxu0 0.0
        %6212 = vmatpush1.msra.mxu0 0.0
        %6213 = vmatprep.subr.mxu0 0.0
        %6214 = vmatpush1.msra.mxu0 0.0
        %6215 = vmatprep.subr.mxu0 0.0
        %6216 = vmatpush1.msra.mxu0 0.0
        %6217 = vmatprep.subr.mxu0 0.0
        %6218 = vmatpush1.msra.mxu0 0.0
        %6219 = vmatprep.subr.mxu0 0.0
        %6220 = vmatpush1.msra.mxu0 0.0
        %6221 = vmatprep.subr.mxu0 0.0
        %6222 = vmatpush1.msra.mxu0 0.0
        %6223 = vmatprep.subr.mxu0 0.0
        %6224 = vmatpush1.msra.mxu0 0.0
        %6225 = vmatprep.subr.mxu0 0.0
        %6226 = vmatpush1.msra.mxu0 0.0
        %6227 = vmatprep.subr.mxu0 0.0
        %6228 = vmatpush1.msra.mxu0 0.0
        %6229 = vmatprep.subr.mxu0 0.0
        %6230 = vmatpush1.msra.mxu0 0.0
        %6231 = vmatprep.subr.mxu0 0.0
        %6232 = vmatpush1.msra.mxu0 0.0
        %6233 = vmatprep.subr.mxu0 0.0
        %6234 = vmatpush1.msra.mxu0 0.0
        %6235 = vmatprep.subr.mxu0 0.0
        %6236 = vmatpush1.msra.mxu0 0.0
        %6237 = vmatprep.subr.mxu0 0.0
        %6238 = vmatpush1.msra.mxu0 0.0
        %6239 = vmatprep.subr.mxu0 0.0
        %6240 = vmatpush1.msra.mxu0 0.0
        %6241 = vmatprep.mubr.f32.mxu0 0.0
        %6242 = vmatmul.mubr.f32.gmra.mrb[0].mxu0 %v5633
        %v6243 = vpop.f32.mrb[0].mxu0
        %v6244 = vadd.f32 0.0, %v6243
        %v6245 = vpop.f32.mrb[0].mxu0
        %v6246 = vadd.f32 0.0, %v6245
        %6247 = vmatprep.mubr.f32.mxu0 0.0
        %6248 = vmatmul.mubr.f32.gmra.mrb[0].mxu0 %v5636
        %v6249 = vpop.f32.mrb[0].mxu0
        %v6250 = vadd.f32 0.0, %v6249
        %v6251 = vpop.f32.mrb[0].mxu0
        %v6252 = vadd.f32 0.0, %v6251
        %6253 = vdwg.mxu0
        %v6254 = vadd.f32 %v5397, %v5705
        %v6255 = vadd.f32 %v5398, %v5707
        %v6256 = vadd.f32 %v5399, %v5782
        %v6257 = vadd.f32 %v5400, %v5784
        %v6258 = vadd.f32 %v5401, %v5859
        %v6259 = vadd.f32 %v5402, %v5861
        %v6260 = vadd.f32 %v5403, %v5936
        %v6261 = vadd.f32 %v5404, %v5938
        %v6262 = vadd.f32 %v5405, %v6013
        %v6263 = vadd.f32 %v5406, %v6015
        %v6264 = vadd.f32 %v5407, %v6090
        %v6265 = vadd.f32 %v5408, %v6092
        %v6266 = vadd.f32 %v5409, %v6167
        %v6267 = vadd.f32 %v5410, %v6169
        %v6268 = vadd.f32 %v5411, %v6244
        %v6269 = vadd.f32 %v5412, %v6246
        %v6270 = vadd.f32 %v5413, %v5711
        %v6271 = vadd.f32 %v5414, %v5713
        %v6272 = vadd.f32 %v5415, %v5788
        %v6273 = vadd.f32 %v5416, %v5790
        %v6274 = vadd.f32 %v5417, %v5865
        %v6275 = vadd.f32 %v5418, %v5867
        %v6276 = vadd.f32 %v5419, %v5942
        %v6277 = vadd.f32 %v5420, %v5944
        %v6278 = vadd.f32 %v5421, %v6019
        %v6279 = vadd.f32 %v5422, %v6021
        %v6280 = vadd.f32 %v5423, %v6096
        %v6281 = vadd.f32 %v5424, %v6098
        %v6282 = vadd.f32 %v5425, %v6173
        %v6283 = vadd.f32 %v5426, %v6175
        %v6284 = vadd.f32 %v5427, %v6250
        %v6285 = vadd.f32 %v5428, %v6252
        %s6286 = scalar_lea.vmem [#allocation6], 128
        %v6287 = vld [vmem:[%s6286] sm:$0xff]
        %v6288 = vld [vmem:[%s6286 + $0x8] sm:$0xff]
        %6289 = vrot.lane.b32.xlu0 %v5429, 126
        %v6290 = vpop.permute.xlu0 %6289
        %6291 = vrot.lane.b32.xlu0 %v5430, 126
        %v6292 = vpop.permute.xlu0 %6291
        %6293 = vrot.lane.b32.xlu0 %v5431, 126
        %v6294 = vpop.permute.xlu0 %6293
        %6295 = vrot.lane.b32.xlu0 %v5432, 126
        %v6296 = vpop.permute.xlu0 %6295
        %6297 = vrot.lane.b32.xlu0 %v5433, 126
        %v6298 = vpop.permute.xlu0 %6297
        %6299 = vrot.lane.b32.xlu0 %v5434, 126
        %v6300 = vpop.permute.xlu0 %6299
        %6301 = vrot.lane.b32.xlu0 %v5435, 126
        %v6302 = vpop.permute.xlu0 %6301
        %6303 = vrot.lane.b32.xlu0 %v5436, 126
        %v6304 = vpop.permute.xlu0 %6303
        %6305 = vrot.lane.b32.xlu0 %v5437, 126
        %v6306 = vpop.permute.xlu0 %6305
        %6307 = vrot.lane.b32.xlu0 %v5438, 126
        %v6308 = vpop.permute.xlu0 %6307
        %6309 = vrot.lane.b32.xlu0 %v5439, 126
        %v6310 = vpop.permute.xlu0 %6309
        %6311 = vrot.lane.b32.xlu0 %v5440, 126
        %v6312 = vpop.permute.xlu0 %6311
        %6313 = vrot.lane.b32.xlu0 %v5441, 126
        %v6314 = vpop.permute.xlu0 %6313
        %6315 = vrot.lane.b32.xlu0 %v5442, 126
        %v6316 = vpop.permute.xlu0 %6315
        %6317 = vrot.lane.b32.xlu0 %v5443, 126
        %v6318 = vpop.permute.xlu0 %6317
        %6319 = vrot.lane.b32.xlu0 %v5444, 126
        %v6320 = vpop.permute.xlu0 %6319
        %6321 = vrot.lane.b32.xlu0 %v5445, 126
        %v6322 = vpop.permute.xlu0 %6321
        %6323 = vrot.lane.b32.xlu0 %v5446, 126
        %v6324 = vpop.permute.xlu0 %6323
        %6325 = vrot.lane.b32.xlu0 %v5447, 126
        %v6326 = vpop.permute.xlu0 %6325
        %6327 = vrot.lane.b32.xlu0 %v5448, 126
        %v6328 = vpop.permute.xlu0 %6327
        %6329 = vrot.lane.b32.xlu0 %v5449, 126
        %v6330 = vpop.permute.xlu0 %6329
        %6331 = vrot.lane.b32.xlu0 %v5450, 126
        %v6332 = vpop.permute.xlu0 %6331
        %6333 = vrot.lane.b32.xlu0 %v5451, 126
        %v6334 = vpop.permute.xlu0 %6333
        %6335 = vrot.lane.b32.xlu0 %v5452, 126
        %v6336 = vpop.permute.xlu0 %6335
        %6337 = vrot.lane.b32.xlu0 %v5453, 126
        %v6338 = vpop.permute.xlu0 %6337
        %6339 = vrot.lane.b32.xlu0 %v5454, 126
        %v6340 = vpop.permute.xlu0 %6339
        %6341 = vrot.lane.b32.xlu0 %v5455, 126
        %v6342 = vpop.permute.xlu0 %6341
        %6343 = vrot.lane.b32.xlu0 %v5456, 126
        %v6344 = vpop.permute.xlu0 %6343
        %6345 = vrot.lane.b32.xlu0 %v5457, 126
        %v6346 = vpop.permute.xlu0 %6345
        %6347 = vrot.lane.b32.xlu0 %v5458, 126
        %v6348 = vpop.permute.xlu0 %6347
        %6349 = vrot.lane.b32.xlu0 %v5459, 126
        %v6350 = vpop.permute.xlu0 %6349
        %6351 = vrot.lane.b32.xlu0 %v5460, 126
        %v6352 = vpop.permute.xlu0 %6351
        %6353 = vrot.lane.b32.xlu0 %v5461, 126
        %v6354 = vpop.permute.xlu0 %6353
        %6355 = vrot.lane.b32.xlu0 %v5462, 126
        %v6356 = vpop.permute.xlu0 %6355
        %v6357 = vsel %vm1750, %v6290, %v6292
        %v6358 = vsel %vm1750, %v6292, %v6294
        %v6359 = vsel %vm1750, %v6294, %v6296
        %v6360 = vsel %vm1750, %v6296, %v6298
        %v6361 = vsel %vm1750, %v6298, %v6300
        %v6362 = vsel %vm1750, %v6300, %v6302
        %v6363 = vsel %vm1750, %v6302, %v6304
        %v6364 = vsel %vm1750, %v6304, %v6306
        %v6365 = vsel %vm1750, %v6306, %v6308
        %v6366 = vsel %vm1750, %v6308, %v6310
        %v6367 = vsel %vm1750, %v6310, %v6312
        %v6368 = vsel %vm1750, %v6312, %v6314
        %v6369 = vsel %vm1750, %v6314, %v6316
        %v6370 = vsel %vm1750, %v6316, %v6318
        %v6371 = vsel %vm1750, %v6318, %v6320
        %v6372 = vsel %vm1750, %v6320, %v6322
        %v6373 = vsel %vm1750, %v6324, %v6326
        %v6374 = vsel %vm1750, %v6326, %v6328
        %v6375 = vsel %vm1750, %v6328, %v6330
        %v6376 = vsel %vm1750, %v6330, %v6332
        %v6377 = vsel %vm1750, %v6332, %v6334
        %v6378 = vsel %vm1750, %v6334, %v6336
        %v6379 = vsel %vm1750, %v6336, %v6338
        %v6380 = vsel %vm1750, %v6338, %v6340
        %v6381 = vsel %vm1750, %v6340, %v6342
        %v6382 = vsel %vm1750, %v6342, %v6344
        %v6383 = vsel %vm1750, %v6344, %v6346
        %v6384 = vsel %vm1750, %v6346, %v6348
        %v6385 = vsel %vm1750, %v6348, %v6350
        %v6386 = vsel %vm1750, %v6350, %v6352
        %v6387 = vsel %vm1750, %v6352, %v6354
        %v6388 = vsel %vm1750, %v6354, %v6356
        %v6422 = vsel %vm434, %v6287, 0
        %v6425 = vsel %vm434, %v6288, 0
        %6427 = vmatprep.subr.mxu0 %v6358
        %6428 = vmatpush1.msra.mxu0 %v6357
        %6429 = vmatprep.subr.mxu0 %v6374
        %6430 = vmatpush1.msra.mxu0 %v6373
        %6431 = vmatprep.subr.mxu0 0.0
        %6432 = vmatpush1.msra.mxu0 0.0
        %6433 = vmatprep.subr.mxu0 0.0
        %6434 = vmatpush1.msra.mxu0 0.0
        %6435 = vmatprep.subr.mxu0 0.0
        %6436 = vmatpush1.msra.mxu0 0.0
        %6437 = vmatprep.subr.mxu0 0.0
        %6438 = vmatpush1.msra.mxu0 0.0
        %6439 = vmatprep.subr.mxu0 0.0
        %6440 = vmatpush1.msra.mxu0 0.0
        %6441 = vmatprep.subr.mxu0 0.0
        %6442 = vmatpush1.msra.mxu0 0.0
        %6443 = vmatprep.subr.mxu0 0.0
        %6444 = vmatpush1.msra.mxu0 0.0
        %6445 = vmatprep.subr.mxu0 0.0
        %6446 = vmatpush1.msra.mxu0 0.0
        %6447 = vmatprep.subr.mxu0 0.0
        %6448 = vmatpush1.msra.mxu0 0.0
        %6449 = vmatprep.subr.mxu0 0.0
        %6450 = vmatpush1.msra.mxu0 0.0
        %6451 = vmatprep.subr.mxu0 0.0
        %6452 = vmatpush1.msra.mxu0 0.0
        %6453 = vmatprep.subr.mxu0 0.0
        %6454 = vmatpush1.msra.mxu0 0.0
        %6455 = vmatprep.subr.mxu0 0.0
        %6456 = vmatpush1.msra.mxu0 0.0
        %6457 = vmatprep.subr.mxu0 0.0
        %6458 = vmatpush1.msra.mxu0 0.0
        %6459 = vmatprep.subr.mxu0 0.0
        %6460 = vmatpush1.msra.mxu0 0.0
        %6461 = vmatprep.subr.mxu0 0.0
        %6462 = vmatpush1.msra.mxu0 0.0
        %6463 = vmatprep.subr.mxu0 0.0
        %6464 = vmatpush1.msra.mxu0 0.0
        %6465 = vmatprep.subr.mxu0 0.0
        %6466 = vmatpush1.msra.mxu0 0.0
        %6467 = vmatprep.subr.mxu0 0.0
        %6468 = vmatpush1.msra.mxu0 0.0
        %6469 = vmatprep.subr.mxu0 0.0
        %6470 = vmatpush1.msra.mxu0 0.0
        %6471 = vmatprep.subr.mxu0 0.0
        %6472 = vmatpush1.msra.mxu0 0.0
        %6473 = vmatprep.subr.mxu0 0.0
        %6474 = vmatpush1.msra.mxu0 0.0
        %6475 = vmatprep.subr.mxu0 0.0
        %6476 = vmatpush1.msra.mxu0 0.0
        %6477 = vmatprep.subr.mxu0 0.0
        %6478 = vmatpush1.msra.mxu0 0.0
        %6479 = vmatprep.subr.mxu0 0.0
        %6480 = vmatpush1.msra.mxu0 0.0
        %6481 = vmatprep.subr.mxu0 0.0
        %6482 = vmatpush1.msra.mxu0 0.0
        %6483 = vmatprep.subr.mxu0 0.0
        %6484 = vmatpush1.msra.mxu0 0.0
        %6485 = vmatprep.subr.mxu0 0.0
        %6486 = vmatpush1.msra.mxu0 0.0
        %6487 = vmatprep.subr.mxu0 0.0
        %6488 = vmatpush1.msra.mxu0 0.0
        %6489 = vmatprep.subr.mxu0 0.0
        %6490 = vmatpush1.msra.mxu0 0.0
        %6491 = vmatprep.mubr.f32.mxu0 0.0
        %6492 = vmatmul.mubr.f32.gmra.mrb[0].mxu0 %v6422
        %v6493 = vpop.f32.mrb[0].mxu0
        %v6494 = vadd.f32 0.0, %v6493
        %v6495 = vpop.f32.mrb[0].mxu0
        %v6496 = vadd.f32 0.0, %v6495
        %6497 = vmatprep.mubr.f32.mxu0 0.0
        %6498 = vmatmul.mubr.f32.gmra.mrb[0].mxu0 %v6425
        %v6499 = vpop.f32.mrb[0].mxu0
        %v6500 = vadd.f32 0.0, %v6499
        %v6501 = vpop.f32.mrb[0].mxu0
        %v6502 = vadd.f32 0.0, %v6501
        %6503 = vdwg.mxu0
        %6504 = vmatprep.subr.mxu0 %v6360
        %6505 = vmatpush1.msra.mxu0 %v6359
        %6506 = vmatprep.subr.mxu0 %v6376
        %6507 = vmatpush1.msra.mxu0 %v6375
        %6508 = vmatprep.subr.mxu0 0.0
        %6509 = vmatpush1.msra.mxu0 0.0
        %6510 = vmatprep.subr.mxu0 0.0
        %6511 = vmatpush1.msra.mxu0 0.0
        %6512 = vmatprep.subr.mxu0 0.0
        %6513 = vmatpush1.msra.mxu0 0.0
        %6514 = vmatprep.subr.mxu0 0.0
        %6515 = vmatpush1.msra.mxu0 0.0
        %6516 = vmatprep.subr.mxu0 0.0
        %6517 = vmatpush1.msra.mxu0 0.0
        %6518 = vmatprep.subr.mxu0 0.0
        %6519 = vmatpush1.msra.mxu0 0.0
        %6520 = vmatprep.subr.mxu0 0.0
        %6521 = vmatpush1.msra.mxu0 0.0
        %6522 = vmatprep.subr.mxu0 0.0
        %6523 = vmatpush1.msra.mxu0 0.0
        %6524 = vmatprep.subr.mxu0 0.0
        %6525 = vmatpush1.msra.mxu0 0.0
        %6526 = vmatprep.subr.mxu0 0.0
        %6527 = vmatpush1.msra.mxu0 0.0
        %6528 = vmatprep.subr.mxu0 0.0
        %6529 = vmatpush1.msra.mxu0 0.0
        %6530 = vmatprep.subr.mxu0 0.0
        %6531 = vmatpush1.msra.mxu0 0.0
        %6532 = vmatprep.subr.mxu0 0.0
        %6533 = vmatpush1.msra.mxu0 0.0
        %6534 = vmatprep.subr.mxu0 0.0
        %6535 = vmatpush1.msra.mxu0 0.0
        %6536 = vmatprep.subr.mxu0 0.0
        %6537 = vmatpush1.msra.mxu0 0.0
        %6538 = vmatprep.subr.mxu0 0.0
        %6539 = vmatpush1.msra.mxu0 0.0
        %6540 = vmatprep.subr.mxu0 0.0
        %6541 = vmatpush1.msra.mxu0 0.0
        %6542 = vmatprep.subr.mxu0 0.0
        %6543 = vmatpush1.msra.mxu0 0.0
        %6544 = vmatprep.subr.mxu0 0.0
        %6545 = vmatpush1.msra.mxu0 0.0
        %6546 = vmatprep.subr.mxu0 0.0
        %6547 = vmatpush1.msra.mxu0 0.0
        %6548 = vmatprep.subr.mxu0 0.0
        %6549 = vmatpush1.msra.mxu0 0.0
        %6550 = vmatprep.subr.mxu0 0.0
        %6551 = vmatpush1.msra.mxu0 0.0
        %6552 = vmatprep.subr.mxu0 0.0
        %6553 = vmatpush1.msra.mxu0 0.0
        %6554 = vmatprep.subr.mxu0 0.0
        %6555 = vmatpush1.msra.mxu0 0.0
        %6556 = vmatprep.subr.mxu0 0.0
        %6557 = vmatpush1.msra.mxu0 0.0
        %6558 = vmatprep.subr.mxu0 0.0
        %6559 = vmatpush1.msra.mxu0 0.0
        %6560 = vmatprep.subr.mxu0 0.0
        %6561 = vmatpush1.msra.mxu0 0.0
        %6562 = vmatprep.subr.mxu0 0.0
        %6563 = vmatpush1.msra.mxu0 0.0
        %6564 = vmatprep.subr.mxu0 0.0
        %6565 = vmatpush1.msra.mxu0 0.0
        %6566 = vmatprep.subr.mxu0 0.0
        %6567 = vmatpush1.msra.mxu0 0.0
        %6568 = vmatprep.mubr.f32.mxu0 0.0
        %6569 = vmatmul.mubr.f32.gmra.mrb[0].mxu0 %v6422
        %v6570 = vpop.f32.mrb[0].mxu0
        %v6571 = vadd.f32 0.0, %v6570
        %v6572 = vpop.f32.mrb[0].mxu0
        %v6573 = vadd.f32 0.0, %v6572
        %6574 = vmatprep.mubr.f32.mxu0 0.0
        %6575 = vmatmul.mubr.f32.gmra.mrb[0].mxu0 %v6425
        %v6576 = vpop.f32.mrb[0].mxu0
        %v6577 = vadd.f32 0.0, %v6576
        %v6578 = vpop.f32.mrb[0].mxu0
        %v6579 = vadd.f32 0.0, %v6578
        %6580 = vdwg.mxu0
        %6581 = vmatprep.subr.mxu0 %v6362
        %6582 = vmatpush1.msra.mxu0 %v6361
        %6583 = vmatprep.subr.mxu0 %v6378
        %6584 = vmatpush1.msra.mxu0 %v6377
        %6585 = vmatprep.subr.mxu0 0.0
        %6586 = vmatpush1.msra.mxu0 0.0
        %6587 = vmatprep.subr.mxu0 0.0
        %6588 = vmatpush1.msra.mxu0 0.0
        %6589 = vmatprep.subr.mxu0 0.0
        %6590 = vmatpush1.msra.mxu0 0.0
        %6591 = vmatprep.subr.mxu0 0.0
        %6592 = vmatpush1.msra.mxu0 0.0
        %6593 = vmatprep.subr.mxu0 0.0
        %6594 = vmatpush1.msra.mxu0 0.0
        %6595 = vmatprep.subr.mxu0 0.0
        %6596 = vmatpush1.msra.mxu0 0.0
        %6597 = vmatprep.subr.mxu0 0.0
        %6598 = vmatpush1.msra.mxu0 0.0
        %6599 = vmatprep.subr.mxu0 0.0
        %6600 = vmatpush1.msra.mxu0 0.0
        %6601 = vmatprep.subr.mxu0 0.0
        %6602 = vmatpush1.msra.mxu0 0.0
        %6603 = vmatprep.subr.mxu0 0.0
        %6604 = vmatpush1.msra.mxu0 0.0
        %6605 = vmatprep.subr.mxu0 0.0
        %6606 = vmatpush1.msra.mxu0 0.0
        %6607 = vmatprep.subr.mxu0 0.0
        %6608 = vmatpush1.msra.mxu0 0.0
        %6609 = vmatprep.subr.mxu0 0.0
        %6610 = vmatpush1.msra.mxu0 0.0
        %6611 = vmatprep.subr.mxu0 0.0
        %6612 = vmatpush1.msra.mxu0 0.0
        %6613 = vmatprep.subr.mxu0 0.0
        %6614 = vmatpush1.msra.mxu0 0.0
        %6615 = vmatprep.subr.mxu0 0.0
        %6616 = vmatpush1.msra.mxu0 0.0
        %6617 = vmatprep.subr.mxu0 0.0
        %6618 = vmatpush1.msra.mxu0 0.0
        %6619 = vmatprep.subr.mxu0 0.0
        %6620 = vmatpush1.msra.mxu0 0.0
        %6621 = vmatprep.subr.mxu0 0.0
        %6622 = vmatpush1.msra.mxu0 0.0
        %6623 = vmatprep.subr.mxu0 0.0
        %6624 = vmatpush1.msra.mxu0 0.0
        %6625 = vmatprep.subr.mxu0 0.0
        %6626 = vmatpush1.msra.mxu0 0.0
        %6627 = vmatprep.subr.mxu0 0.0
        %6628 = vmatpush1.msra.mxu0 0.0
        %6629 = vmatprep.subr.mxu0 0.0
        %6630 = vmatpush1.msra.mxu0 0.0
        %6631 = vmatprep.subr.mxu0 0.0
        %6632 = vmatpush1.msra.mxu0 0.0
        %6633 = vmatprep.subr.mxu0 0.0
        %6634 = vmatpush1.msra.mxu0 0.0
        %6635 = vmatprep.subr.mxu0 0.0
        %6636 = vmatpush1.msra.mxu0 0.0
        %6637 = vmatprep.subr.mxu0 0.0
        %6638 = vmatpush1.msra.mxu0 0.0
        %6639 = vmatprep.subr.mxu0 0.0
        %6640 = vmatpush1.msra.mxu0 0.0
        %6641 = vmatprep.subr.mxu0 0.0
        %6642 = vmatpush1.msra.mxu0 0.0
        %6643 = vmatprep.subr.mxu0 0.0
        %6644 = vmatpush1.msra.mxu0 0.0
        %6645 = vmatprep.mubr.f32.mxu0 0.0
        %6646 = vmatmul.mubr.f32.gmra.mrb[0].mxu0 %v6422
        %v6647 = vpop.f32.mrb[0].mxu0
        %v6648 = vadd.f32 0.0, %v6647
        %v6649 = vpop.f32.mrb[0].mxu0
        %v6650 = vadd.f32 0.0, %v6649
        %6651 = vmatprep.mubr.f32.mxu0 0.0
        %6652 = vmatmul.mubr.f32.gmra.mrb[0].mxu0 %v6425
        %v6653 = vpop.f32.mrb[0].mxu0
        %v6654 = vadd.f32 0.0, %v6653
        %v6655 = vpop.f32.mrb[0].mxu0
        %v6656 = vadd.f32 0.0, %v6655
        %6657 = vdwg.mxu0
        %6658 = vmatprep.subr.mxu0 %v6364
        %6659 = vmatpush1.msra.mxu0 %v6363
        %6660 = vmatprep.subr.mxu0 %v6380
        %6661 = vmatpush1.msra.mxu0 %v6379
        %6662 = vmatprep.subr.mxu0 0.0
        %6663 = vmatpush1.msra.mxu0 0.0
        %6664 = vmatprep.subr.mxu0 0.0
        %6665 = vmatpush1.msra.mxu0 0.0
        %6666 = vmatprep.subr.mxu0 0.0
        %6667 = vmatpush1.msra.mxu0 0.0
        %6668 = vmatprep.subr.mxu0 0.0
        %6669 = vmatpush1.msra.mxu0 0.0
        %6670 = vmatprep.subr.mxu0 0.0
        %6671 = vmatpush1.msra.mxu0 0.0
        %6672 = vmatprep.subr.mxu0 0.0
        %6673 = vmatpush1.msra.mxu0 0.0
        %6674 = vmatprep.subr.mxu0 0.0
        %6675 = vmatpush1.msra.mxu0 0.0
        %6676 = vmatprep.subr.mxu0 0.0
        %6677 = vmatpush1.msra.mxu0 0.0
        %6678 = vmatprep.subr.mxu0 0.0
        %6679 = vmatpush1.msra.mxu0 0.0
        %6680 = vmatprep.subr.mxu0 0.0
        %6681 = vmatpush1.msra.mxu0 0.0
        %6682 = vmatprep.subr.mxu0 0.0
        %6683 = vmatpush1.msra.mxu0 0.0
        %6684 = vmatprep.subr.mxu0 0.0
        %6685 = vmatpush1.msra.mxu0 0.0
        %6686 = vmatprep.subr.mxu0 0.0
        %6687 = vmatpush1.msra.mxu0 0.0
        %6688 = vmatprep.subr.mxu0 0.0
        %6689 = vmatpush1.msra.mxu0 0.0
        %6690 = vmatprep.subr.mxu0 0.0
        %6691 = vmatpush1.msra.mxu0 0.0
        %6692 = vmatprep.subr.mxu0 0.0
        %6693 = vmatpush1.msra.mxu0 0.0
        %6694 = vmatprep.subr.mxu0 0.0
        %6695 = vmatpush1.msra.mxu0 0.0
        %6696 = vmatprep.subr.mxu0 0.0
        %6697 = vmatpush1.msra.mxu0 0.0
        %6698 = vmatprep.subr.mxu0 0.0
        %6699 = vmatpush1.msra.mxu0 0.0
        %6700 = vmatprep.subr.mxu0 0.0
        %6701 = vmatpush1.msra.mxu0 0.0
        %6702 = vmatprep.subr.mxu0 0.0
        %6703 = vmatpush1.msra.mxu0 0.0
        %6704 = vmatprep.subr.mxu0 0.0
        %6705 = vmatpush1.msra.mxu0 0.0
        %6706 = vmatprep.subr.mxu0 0.0
        %6707 = vmatpush1.msra.mxu0 0.0
        %6708 = vmatprep.subr.mxu0 0.0
        %6709 = vmatpush1.msra.mxu0 0.0
        %6710 = vmatprep.subr.mxu0 0.0
        %6711 = vmatpush1.msra.mxu0 0.0
        %6712 = vmatprep.subr.mxu0 0.0
        %6713 = vmatpush1.msra.mxu0 0.0
        %6714 = vmatprep.subr.mxu0 0.0
        %6715 = vmatpush1.msra.mxu0 0.0
        %6716 = vmatprep.subr.mxu0 0.0
        %6717 = vmatpush1.msra.mxu0 0.0
        %6718 = vmatprep.subr.mxu0 0.0
        %6719 = vmatpush1.msra.mxu0 0.0
        %6720 = vmatprep.subr.mxu0 0.0
        %6721 = vmatpush1.msra.mxu0 0.0
        %6722 = vmatprep.mubr.f32.mxu0 0.0
        %6723 = vmatmul.mubr.f32.gmra.mrb[0].mxu0 %v6422
        %v6724 = vpop.f32.mrb[0].mxu0
        %v6725 = vadd.f32 0.0, %v6724
        %v6726 = vpop.f32.mrb[0].mxu0
        %v6727 = vadd.f32 0.0, %v6726
        %6728 = vmatprep.mubr.f32.mxu0 0.0
        %6729 = vmatmul.mubr.f32.gmra.mrb[0].mxu0 %v6425
        %v6730 = vpop.f32.mrb[0].mxu0
        %v6731 = vadd.f32 0.0, %v6730
        %v6732 = vpop.f32.mrb[0].mxu0
        %v6733 = vadd.f32 0.0, %v6732
        %6734 = vdwg.mxu0
        %6735 = vmatprep.subr.mxu0 %v6366
        %6736 = vmatpush1.msra.mxu0 %v6365
        %6737 = vmatprep.subr.mxu0 %v6382
        %6738 = vmatpush1.msra.mxu0 %v6381
        %6739 = vmatprep.subr.mxu0 0.0
        %6740 = vmatpush1.msra.mxu0 0.0
        %6741 = vmatprep.subr.mxu0 0.0
        %6742 = vmatpush1.msra.mxu0 0.0
        %6743 = vmatprep.subr.mxu0 0.0
        %6744 = vmatpush1.msra.mxu0 0.0
        %6745 = vmatprep.subr.mxu0 0.0
        %6746 = vmatpush1.msra.mxu0 0.0
        %6747 = vmatprep.subr.mxu0 0.0
        %6748 = vmatpush1.msra.mxu0 0.0
        %6749 = vmatprep.subr.mxu0 0.0
        %6750 = vmatpush1.msra.mxu0 0.0
        %6751 = vmatprep.subr.mxu0 0.0
        %6752 = vmatpush1.msra.mxu0 0.0
        %6753 = vmatprep.subr.mxu0 0.0
        %6754 = vmatpush1.msra.mxu0 0.0
        %6755 = vmatprep.subr.mxu0 0.0
        %6756 = vmatpush1.msra.mxu0 0.0
        %6757 = vmatprep.subr.mxu0 0.0
        %6758 = vmatpush1.msra.mxu0 0.0
        %6759 = vmatprep.subr.mxu0 0.0
        %6760 = vmatpush1.msra.mxu0 0.0
        %6761 = vmatprep.subr.mxu0 0.0
        %6762 = vmatpush1.msra.mxu0 0.0
        %6763 = vmatprep.subr.mxu0 0.0
        %6764 = vmatpush1.msra.mxu0 0.0
        %6765 = vmatprep.subr.mxu0 0.0
        %6766 = vmatpush1.msra.mxu0 0.0
        %6767 = vmatprep.subr.mxu0 0.0
        %6768 = vmatpush1.msra.mxu0 0.0
        %6769 = vmatprep.subr.mxu0 0.0
        %6770 = vmatpush1.msra.mxu0 0.0
        %6771 = vmatprep.subr.mxu0 0.0
        %6772 = vmatpush1.msra.mxu0 0.0
        %6773 = vmatprep.subr.mxu0 0.0
        %6774 = vmatpush1.msra.mxu0 0.0
        %6775 = vmatprep.subr.mxu0 0.0
        %6776 = vmatpush1.msra.mxu0 0.0
        %6777 = vmatprep.subr.mxu0 0.0
        %6778 = vmatpush1.msra.mxu0 0.0
        %6779 = vmatprep.subr.mxu0 0.0
        %6780 = vmatpush1.msra.mxu0 0.0
        %6781 = vmatprep.subr.mxu0 0.0
        %6782 = vmatpush1.msra.mxu0 0.0
        %6783 = vmatprep.subr.mxu0 0.0
        %6784 = vmatpush1.msra.mxu0 0.0
        %6785 = vmatprep.subr.mxu0 0.0
        %6786 = vmatpush1.msra.mxu0 0.0
        %6787 = vmatprep.subr.mxu0 0.0
        %6788 = vmatpush1.msra.mxu0 0.0
        %6789 = vmatprep.subr.mxu0 0.0
        %6790 = vmatpush1.msra.mxu0 0.0
        %6791 = vmatprep.subr.mxu0 0.0
        %6792 = vmatpush1.msra.mxu0 0.0
        %6793 = vmatprep.subr.mxu0 0.0
        %6794 = vmatpush1.msra.mxu0 0.0
        %6795 = vmatprep.subr.mxu0 0.0
        %6796 = vmatpush1.msra.mxu0 0.0
        %6797 = vmatprep.subr.mxu0 0.0
        %6798 = vmatpush1.msra.mxu0 0.0
        %6799 = vmatprep.mubr.f32.mxu0 0.0
        %6800 = vmatmul.mubr.f32.gmra.mrb[0].mxu0 %v6422
        %v6801 = vpop.f32.mrb[0].mxu0
        %v6802 = vadd.f32 0.0, %v6801
        %v6803 = vpop.f32.mrb[0].mxu0
        %v6804 = vadd.f32 0.0, %v6803
        %6805 = vmatprep.mubr.f32.mxu0 0.0
        %6806 = vmatmul.mubr.f32.gmra.mrb[0].mxu0 %v6425
        %v6807 = vpop.f32.mrb[0].mxu0
        %v6808 = vadd.f32 0.0, %v6807
        %v6809 = vpop.f32.mrb[0].mxu0
        %v6810 = vadd.f32 0.0, %v6809
        %6811 = vdwg.mxu0
        %6812 = vmatprep.subr.mxu0 %v6368
        %6813 = vmatpush1.msra.mxu0 %v6367
        %6814 = vmatprep.subr.mxu0 %v6384
        %6815 = vmatpush1.msra.mxu0 %v6383
        %6816 = vmatprep.subr.mxu0 0.0
        %6817 = vmatpush1.msra.mxu0 0.0
        %6818 = vmatprep.subr.mxu0 0.0
        %6819 = vmatpush1.msra.mxu0 0.0
        %6820 = vmatprep.subr.mxu0 0.0
        %6821 = vmatpush1.msra.mxu0 0.0
        %6822 = vmatprep.subr.mxu0 0.0
        %6823 = vmatpush1.msra.mxu0 0.0
        %6824 = vmatprep.subr.mxu0 0.0
        %6825 = vmatpush1.msra.mxu0 0.0
        %6826 = vmatprep.subr.mxu0 0.0
        %6827 = vmatpush1.msra.mxu0 0.0
        %6828 = vmatprep.subr.mxu0 0.0
        %6829 = vmatpush1.msra.mxu0 0.0
        %6830 = vmatprep.subr.mxu0 0.0
        %6831 = vmatpush1.msra.mxu0 0.0
        %6832 = vmatprep.subr.mxu0 0.0
        %6833 = vmatpush1.msra.mxu0 0.0
        %6834 = vmatprep.subr.mxu0 0.0
        %6835 = vmatpush1.msra.mxu0 0.0
        %6836 = vmatprep.subr.mxu0 0.0
        %6837 = vmatpush1.msra.mxu0 0.0
        %6838 = vmatprep.subr.mxu0 0.0
        %6839 = vmatpush1.msra.mxu0 0.0
        %6840 = vmatprep.subr.mxu0 0.0
        %6841 = vmatpush1.msra.mxu0 0.0
        %6842 = vmatprep.subr.mxu0 0.0
        %6843 = vmatpush1.msra.mxu0 0.0
        %6844 = vmatprep.subr.mxu0 0.0
        %6845 = vmatpush1.msra.mxu0 0.0
        %6846 = vmatprep.subr.mxu0 0.0
        %6847 = vmatpush1.msra.mxu0 0.0
        %6848 = vmatprep.subr.mxu0 0.0
        %6849 = vmatpush1.msra.mxu0 0.0
        %6850 = vmatprep.subr.mxu0 0.0
        %6851 = vmatpush1.msra.mxu0 0.0
        %6852 = vmatprep.subr.mxu0 0.0
        %6853 = vmatpush1.msra.mxu0 0.0
        %6854 = vmatprep.subr.mxu0 0.0
        %6855 = vmatpush1.msra.mxu0 0.0
        %6856 = vmatprep.subr.mxu0 0.0
        %6857 = vmatpush1.msra.mxu0 0.0
        %6858 = vmatprep.subr.mxu0 0.0
        %6859 = vmatpush1.msra.mxu0 0.0
        %6860 = vmatprep.subr.mxu0 0.0
        %6861 = vmatpush1.msra.mxu0 0.0
        %6862 = vmatprep.subr.mxu0 0.0
        %6863 = vmatpush1.msra.mxu0 0.0
        %6864 = vmatprep.subr.mxu0 0.0
        %6865 = vmatpush1.msra.mxu0 0.0
        %6866 = vmatprep.subr.mxu0 0.0
        %6867 = vmatpush1.msra.mxu0 0.0
        %6868 = vmatprep.subr.mxu0 0.0
        %6869 = vmatpush1.msra.mxu0 0.0
        %6870 = vmatprep.subr.mxu0 0.0
        %6871 = vmatpush1.msra.mxu0 0.0
        %6872 = vmatprep.subr.mxu0 0.0
        %6873 = vmatpush1.msra.mxu0 0.0
        %6874 = vmatprep.subr.mxu0 0.0
        %6875 = vmatpush1.msra.mxu0 0.0
        %6876 = vmatprep.mubr.f32.mxu0 0.0
        %6877 = vmatmul.mubr.f32.gmra.mrb[0].mxu0 %v6422
        %v6878 = vpop.f32.mrb[0].mxu0
        %v6879 = vadd.f32 0.0, %v6878
        %v6880 = vpop.f32.mrb[0].mxu0
        %v6881 = vadd.f32 0.0, %v6880
        %6882 = vmatprep.mubr.f32.mxu0 0.0
        %6883 = vmatmul.mubr.f32.gmra.mrb[0].mxu0 %v6425
        %v6884 = vpop.f32.mrb[0].mxu0
        %v6885 = vadd.f32 0.0, %v6884
        %v6886 = vpop.f32.mrb[0].mxu0
        %v6887 = vadd.f32 0.0, %v6886
        %6888 = vdwg.mxu0
        %6889 = vmatprep.subr.mxu0 %v6370
        %6890 = vmatpush1.msra.mxu0 %v6369
        %6891 = vmatprep.subr.mxu0 %v6386
        %6892 = vmatpush1.msra.mxu0 %v6385
        %6893 = vmatprep.subr.mxu0 0.0
        %6894 = vmatpush1.msra.mxu0 0.0
        %6895 = vmatprep.subr.mxu0 0.0
        %6896 = vmatpush1.msra.mxu0 0.0
        %6897 = vmatprep.subr.mxu0 0.0
        %6898 = vmatpush1.msra.mxu0 0.0
        %6899 = vmatprep.subr.mxu0 0.0
        %6900 = vmatpush1.msra.mxu0 0.0
        %6901 = vmatprep.subr.mxu0 0.0
        %6902 = vmatpush1.msra.mxu0 0.0
        %6903 = vmatprep.subr.mxu0 0.0
        %6904 = vmatpush1.msra.mxu0 0.0
        %6905 = vmatprep.subr.mxu0 0.0
        %6906 = vmatpush1.msra.mxu0 0.0
        %6907 = vmatprep.subr.mxu0 0.0
        %6908 = vmatpush1.msra.mxu0 0.0
        %6909 = vmatprep.subr.mxu0 0.0
        %6910 = vmatpush1.msra.mxu0 0.0
        %6911 = vmatprep.subr.mxu0 0.0
        %6912 = vmatpush1.msra.mxu0 0.0
        %6913 = vmatprep.subr.mxu0 0.0
        %6914 = vmatpush1.msra.mxu0 0.0
        %6915 = vmatprep.subr.mxu0 0.0
        %6916 = vmatpush1.msra.mxu0 0.0
        %6917 = vmatprep.subr.mxu0 0.0
        %6918 = vmatpush1.msra.mxu0 0.0
        %6919 = vmatprep.subr.mxu0 0.0
        %6920 = vmatpush1.msra.mxu0 0.0
        %6921 = vmatprep.subr.mxu0 0.0
        %6922 = vmatpush1.msra.mxu0 0.0
        %6923 = vmatprep.subr.mxu0 0.0
        %6924 = vmatpush1.msra.mxu0 0.0
        %6925 = vmatprep.subr.mxu0 0.0
        %6926 = vmatpush1.msra.mxu0 0.0
        %6927 = vmatprep.subr.mxu0 0.0
        %6928 = vmatpush1.msra.mxu0 0.0
        %6929 = vmatprep.subr.mxu0 0.0
        %6930 = vmatpush1.msra.mxu0 0.0
        %6931 = vmatprep.subr.mxu0 0.0
        %6932 = vmatpush1.msra.mxu0 0.0
        %6933 = vmatprep.subr.mxu0 0.0
        %6934 = vmatpush1.msra.mxu0 0.0
        %6935 = vmatprep.subr.mxu0 0.0
        %6936 = vmatpush1.msra.mxu0 0.0
        %6937 = vmatprep.subr.mxu0 0.0
        %6938 = vmatpush1.msra.mxu0 0.0
        %6939 = vmatprep.subr.mxu0 0.0
        %6940 = vmatpush1.msra.mxu0 0.0
        %6941 = vmatprep.subr.mxu0 0.0
        %6942 = vmatpush1.msra.mxu0 0.0
        %6943 = vmatprep.subr.mxu0 0.0
        %6944 = vmatpush1.msra.mxu0 0.0
        %6945 = vmatprep.subr.mxu0 0.0
        %6946 = vmatpush1.msra.mxu0 0.0
        %6947 = vmatprep.subr.mxu0 0.0
        %6948 = vmatpush1.msra.mxu0 0.0
        %6949 = vmatprep.subr.mxu0 0.0
        %6950 = vmatpush1.msra.mxu0 0.0
        %6951 = vmatprep.subr.mxu0 0.0
        %6952 = vmatpush1.msra.mxu0 0.0
        %6953 = vmatprep.mubr.f32.mxu0 0.0
        %6954 = vmatmul.mubr.f32.gmra.mrb[0].mxu0 %v6422
        %v6955 = vpop.f32.mrb[0].mxu0
        %v6956 = vadd.f32 0.0, %v6955
        %v6957 = vpop.f32.mrb[0].mxu0
        %v6958 = vadd.f32 0.0, %v6957
        %6959 = vmatprep.mubr.f32.mxu0 0.0
        %6960 = vmatmul.mubr.f32.gmra.mrb[0].mxu0 %v6425
        %v6961 = vpop.f32.mrb[0].mxu0
        %v6962 = vadd.f32 0.0, %v6961
        %v6963 = vpop.f32.mrb[0].mxu0
        %v6964 = vadd.f32 0.0, %v6963
        %6965 = vdwg.mxu0
        %6966 = vmatprep.subr.mxu0 %v6372
        %6967 = vmatpush1.msra.mxu0 %v6371
        %6968 = vmatprep.subr.mxu0 %v6388
        %6969 = vmatpush1.msra.mxu0 %v6387
        %6970 = vmatprep.subr.mxu0 0.0
        %6971 = vmatpush1.msra.mxu0 0.0
        %6972 = vmatprep.subr.mxu0 0.0
        %6973 = vmatpush1.msra.mxu0 0.0
        %6974 = vmatprep.subr.mxu0 0.0
        %6975 = vmatpush1.msra.mxu0 0.0
        %6976 = vmatprep.subr.mxu0 0.0
        %6977 = vmatpush1.msra.mxu0 0.0
        %6978 = vmatprep.subr.mxu0 0.0
        %6979 = vmatpush1.msra.mxu0 0.0
        %6980 = vmatprep.subr.mxu0 0.0
        %6981 = vmatpush1.msra.mxu0 0.0
        %6982 = vmatprep.subr.mxu0 0.0
        %6983 = vmatpush1.msra.mxu0 0.0
        %6984 = vmatprep.subr.mxu0 0.0
        %6985 = vmatpush1.msra.mxu0 0.0
        %6986 = vmatprep.subr.mxu0 0.0
        %6987 = vmatpush1.msra.mxu0 0.0
        %6988 = vmatprep.subr.mxu0 0.0
        %6989 = vmatpush1.msra.mxu0 0.0
        %6990 = vmatprep.subr.mxu0 0.0
        %6991 = vmatpush1.msra.mxu0 0.0
        %6992 = vmatprep.subr.mxu0 0.0
        %6993 = vmatpush1.msra.mxu0 0.0
        %6994 = vmatprep.subr.mxu0 0.0
        %6995 = vmatpush1.msra.mxu0 0.0
        %6996 = vmatprep.subr.mxu0 0.0
        %6997 = vmatpush1.msra.mxu0 0.0
        %6998 = vmatprep.subr.mxu0 0.0
        %6999 = vmatpush1.msra.mxu0 0.0
        %7000 = vmatprep.subr.mxu0 0.0
        %7001 = vmatpush1.msra.mxu0 0.0
        %7002 = vmatprep.subr.mxu0 0.0
        %7003 = vmatpush1.msra.mxu0 0.0
        %7004 = vmatprep.subr.mxu0 0.0
        %7005 = vmatpush1.msra.mxu0 0.0
        %7006 = vmatprep.subr.mxu0 0.0
        %7007 = vmatpush1.msra.mxu0 0.0
        %7008 = vmatprep.subr.mxu0 0.0
        %7009 = vmatpush1.msra.mxu0 0.0
        %7010 = vmatprep.subr.mxu0 0.0
        %7011 = vmatpush1.msra.mxu0 0.0
        %7012 = vmatprep.subr.mxu0 0.0
        %7013 = vmatpush1.msra.mxu0 0.0
        %7014 = vmatprep.subr.mxu0 0.0
        %7015 = vmatpush1.msra.mxu0 0.0
        %7016 = vmatprep.subr.mxu0 0.0
        %7017 = vmatpush1.msra.mxu0 0.0
        %7018 = vmatprep.subr.mxu0 0.0
        %7019 = vmatpush1.msra.mxu0 0.0
        %7020 = vmatprep.subr.mxu0 0.0
        %7021 = vmatpush1.msra.mxu0 0.0
        %7022 = vmatprep.subr.mxu0 0.0
        %7023 = vmatpush1.msra.mxu0 0.0
        %7024 = vmatprep.subr.mxu0 0.0
        %7025 = vmatpush1.msra.mxu0 0.0
        %7026 = vmatprep.subr.mxu0 0.0
        %7027 = vmatpush1.msra.mxu0 0.0
        %7028 = vmatprep.subr.mxu0 0.0
        %7029 = vmatpush1.msra.mxu0 0.0
        %7030 = vmatprep.mubr.f32.mxu0 0.0
        %7031 = vmatmul.mubr.f32.gmra.mrb[0].mxu0 %v6422
        %v7032 = vpop.f32.mrb[0].mxu0
        %v7033 = vadd.f32 0.0, %v7032
        %v7034 = vpop.f32.mrb[0].mxu0
        %v7035 = vadd.f32 0.0, %v7034
        %7036 = vmatprep.mubr.f32.mxu0 0.0
        %7037 = vmatmul.mubr.f32.gmra.mrb[0].mxu0 %v6425
        %v7038 = vpop.f32.mrb[0].mxu0
        %v7039 = vadd.f32 0.0, %v7038
        %v7040 = vpop.f32.mrb[0].mxu0
        %v7041 = vadd.f32 0.0, %v7040
        %7042 = vdwg.mxu0
        %v7043 = vadd.f32 %v6254, %v6494
        %v7044 = vadd.f32 %v6255, %v6496
        %v7045 = vadd.f32 %v6256, %v6571
        %v7046 = vadd.f32 %v6257, %v6573
        %v7047 = vadd.f32 %v6258, %v6648
        %v7048 = vadd.f32 %v6259, %v6650
        %v7049 = vadd.f32 %v6260, %v6725
        %v7050 = vadd.f32 %v6261, %v6727
        %v7051 = vadd.f32 %v6262, %v6802
        %v7052 = vadd.f32 %v6263, %v6804
        %v7053 = vadd.f32 %v6264, %v6879
        %v7054 = vadd.f32 %v6265, %v6881
        %v7055 = vadd.f32 %v6266, %v6956
        %v7056 = vadd.f32 %v6267, %v6958
        %v7057 = vadd.f32 %v6268, %v7033
        %v7058 = vadd.f32 %v6269, %v7035
        %v7059 = vadd.f32 %v6270, %v6500
        %v7060 = vadd.f32 %v6271, %v6502
        %v7061 = vadd.f32 %v6272, %v6577
        %v7062 = vadd.f32 %v6273, %v6579
        %v7063 = vadd.f32 %v6274, %v6654
        %v7064 = vadd.f32 %v6275, %v6656
        %v7065 = vadd.f32 %v6276, %v6731
        %v7066 = vadd.f32 %v6277, %v6733
        %v7067 = vadd.f32 %v6278, %v6808
        %v7068 = vadd.f32 %v6279, %v6810
        %v7069 = vadd.f32 %v6280, %v6885
        %v7070 = vadd.f32 %v6281, %v6887
        %v7071 = vadd.f32 %v6282, %v6962
        %v7072 = vadd.f32 %v6283, %v6964
        %v7073 = vadd.f32 %v6284, %v7039
        %v7074 = vadd.f32 %v6285, %v7041
        %p7075 = scmp.eq.s32.totalorder %s26, 0
        // Predicated region
        $region41: #{tpu_custom_call.1} parent=31 // pred_check
          %p7076 = pneg %p7075
        $region42: #{tpu_custom_call.1} parent=31 // pred_check_branch
          %7078 = sbr.rel (%p7076) target = $region44
        $region43: #{tpu_custom_call.1} parent=31 // pred_region
          %7079 = vst [vmem:[#allocation2] sm:$0xff] %v7043
          %7080 = vst [vmem:[#allocation2 + $0x8] sm:$0xff] %v7044
          %7081 = vst [vmem:[#allocation2 + $0x10] sm:$0xff] %v7045
          %7082 = vst [vmem:[#allocation2 + $0x18] sm:$0xff] %v7046
          %7083 = vst [vmem:[#allocation2 + $0x20] sm:$0xff] %v7047
          %7084 = vst [vmem:[#allocation2 + $0x28] sm:$0xff] %v7048
          %7085 = vst [vmem:[#allocation2 + $0x30] sm:$0xff] %v7049
          %7086 = vst [vmem:[#allocation2 + $0x38] sm:$0xff] %v7050
          %7087 = vst [vmem:[#allocation2 + $0x40] sm:$0xff] %v7051
          %7088 = vst [vmem:[#allocation2 + $0x48] sm:$0xff] %v7052
          %7089 = vst [vmem:[#allocation2 + $0x50] sm:$0xff] %v7053
          %7090 = vst [vmem:[#allocation2 + $0x58] sm:$0xff] %v7054
          %7091 = vst [vmem:[#allocation2 + $0x60] sm:$0xff] %v7055
          %7092 = vst [vmem:[#allocation2 + $0x68] sm:$0xff] %v7056
          %7093 = vst [vmem:[#allocation2 + $0x70] sm:$0xff] %v7057
          %7094 = vst [vmem:[#allocation2 + $0x78] sm:$0xff] %v7058
          %7095 = vst [vmem:[#allocation2 + $0x80] sm:$0xff] %v7059
          %7096 = vst [vmem:[#allocation2 + $0x88] sm:$0xff] %v7060
          %7097 = vst [vmem:[#allocation2 + $0x90] sm:$0xff] %v7061
          %7098 = vst [vmem:[#allocation2 + $0x98] sm:$0xff] %v7062
          %7099 = vst [vmem:[#allocation2 + $0xa0] sm:$0xff] %v7063
          %7100 = vst [vmem:[#allocation2 + $0xa8] sm:$0xff] %v7064
          %7101 = vst [vmem:[#allocation2 + $0xb0] sm:$0xff] %v7065
          %7102 = vst [vmem:[#allocation2 + $0xb8] sm:$0xff] %v7066
          %7103 = vst [vmem:[#allocation2 + $0xc0] sm:$0xff] %v7067
          %7104 = vst [vmem:[#allocation2 + $0xc8] sm:$0xff] %v7068
          %7105 = vst [vmem:[#allocation2 + $0xd0] sm:$0xff] %v7069
          %7106 = vst [vmem:[#allocation2 + $0xd8] sm:$0xff] %v7070
          %7107 = vst [vmem:[#allocation2 + $0xe0] sm:$0xff] %v7071
          %7108 = vst [vmem:[#allocation2 + $0xe8] sm:$0xff] %v7072
          %7109 = vst [vmem:[#allocation2 + $0xf0] sm:$0xff] %v7073
          %7110 = vst [vmem:[#allocation2 + $0xf8] sm:$0xff] %v7074
        $region44: #{tpu_custom_call.1} parent=31 // pred_fallthru
          _
        %p7111 = scmp.gt.s32.totalorder %s26, 0
        // Predicated region
        $region45: #{tpu_custom_call.1} parent=31 // pred_check
          %p7112 = pneg %p7111
        $region46: #{tpu_custom_call.1} parent=31 // pred_check_branch
          %7114 = sbr.rel (%p7112) target = $region48
        $region47: #{tpu_custom_call.1} parent=31 // pred_region
          %v7115 = vld [vmem:[#allocation2] sm:$0xff]
          %v7116 = vld [vmem:[#allocation2 + $0x8] sm:$0xff]
          %v7117 = vld [vmem:[#allocation2 + $0x10] sm:$0xff]
          %v7118 = vld [vmem:[#allocation2 + $0x18] sm:$0xff]
          %v7119 = vld [vmem:[#allocation2 + $0x20] sm:$0xff]
          %v7120 = vld [vmem:[#allocation2 + $0x28] sm:$0xff]
          %v7121 = vld [vmem:[#allocation2 + $0x30] sm:$0xff]
          %v7122 = vld [vmem:[#allocation2 + $0x38] sm:$0xff]
          %v7123 = vld [vmem:[#allocation2 + $0x40] sm:$0xff]
          %v7124 = vld [vmem:[#allocation2 + $0x48] sm:$0xff]
          %v7125 = vld [vmem:[#allocation2 + $0x50] sm:$0xff]
          %v7126 = vld [vmem:[#allocation2 + $0x58] sm:$0xff]
          %v7127 = vld [vmem:[#allocation2 + $0x60] sm:$0xff]
          %v7128 = vld [vmem:[#allocation2 + $0x68] sm:$0xff]
          %v7129 = vld [vmem:[#allocation2 + $0x70] sm:$0xff]
          %v7130 = vld [vmem:[#allocation2 + $0x78] sm:$0xff]
          %v7131 = vld [vmem:[#allocation2 + $0x80] sm:$0xff]
          %v7132 = vld [vmem:[#allocation2 + $0x88] sm:$0xff]
          %v7133 = vld [vmem:[#allocation2 + $0x90] sm:$0xff]
          %v7134 = vld [vmem:[#allocation2 + $0x98] sm:$0xff]
          %v7135 = vld [vmem:[#allocation2 + $0xa0] sm:$0xff]
          %v7136 = vld [vmem:[#allocation2 + $0xa8] sm:$0xff]
          %v7137 = vld [vmem:[#allocation2 + $0xb0] sm:$0xff]
          %v7138 = vld [vmem:[#allocation2 + $0xb8] sm:$0xff]
          %v7139 = vld [vmem:[#allocation2 + $0xc0] sm:$0xff]
          %v7140 = vld [vmem:[#allocation2 + $0xc8] sm:$0xff]
          %v7141 = vld [vmem:[#allocation2 + $0xd0] sm:$0xff]
          %v7142 = vld [vmem:[#allocation2 + $0xd8] sm:$0xff]
          %v7143 = vld [vmem:[#allocation2 + $0xe0] sm:$0xff]
          %v7144 = vld [vmem:[#allocation2 + $0xe8] sm:$0xff]
          %v7145 = vld [vmem:[#allocation2 + $0xf0] sm:$0xff]
          %v7146 = vld [vmem:[#allocation2 + $0xf8] sm:$0xff]
          %v7147 = vadd.f32 %v7115, %v7043
          %v7148 = vadd.f32 %v7116, %v7044
          %v7149 = vadd.f32 %v7117, %v7045
          %v7150 = vadd.f32 %v7118, %v7046
          %v7151 = vadd.f32 %v7119, %v7047
          %v7152 = vadd.f32 %v7120, %v7048
          %v7153 = vadd.f32 %v7121, %v7049
          %v7154 = vadd.f32 %v7122, %v7050
          %v7155 = vadd.f32 %v7123, %v7051
          %v7156 = vadd.f32 %v7124, %v7052
          %v7157 = vadd.f32 %v7125, %v7053
          %v7158 = vadd.f32 %v7126, %v7054
          %v7159 = vadd.f32 %v7127, %v7055
          %v7160 = vadd.f32 %v7128, %v7056
          %v7161 = vadd.f32 %v7129, %v7057
          %v7162 = vadd.f32 %v7130, %v7058
          %v7163 = vadd.f32 %v7131, %v7059
          %v7164 = vadd.f32 %v7132, %v7060
          %v7165 = vadd.f32 %v7133, %v7061
          %v7166 = vadd.f32 %v7134, %v7062
          %v7167 = vadd.f32 %v7135, %v7063
          %v7168 = vadd.f32 %v7136, %v7064
          %v7169 = vadd.f32 %v7137, %v7065
          %v7170 = vadd.f32 %v7138, %v7066
          %v7171 = vadd.f32 %v7139, %v7067
          %v7172 = vadd.f32 %v7140, %v7068
          %v7173 = vadd.f32 %v7141, %v7069
          %v7174 = vadd.f32 %v7142, %v7070
          %v7175 = vadd.f32 %v7143, %v7071
          %v7176 = vadd.f32 %v7144, %v7072
          %v7177 = vadd.f32 %v7145, %v7073
          %v7178 = vadd.f32 %v7146, %v7074
          %7179 = vst [vmem:[#allocation2] sm:$0xff] %v7147
          %7180 = vst [vmem:[#allocation2 + $0x8] sm:$0xff] %v7148
          %7181 = vst [vmem:[#allocation2 + $0x10] sm:$0xff] %v7149
          %7182 = vst [vmem:[#allocation2 + $0x18] sm:$0xff] %v7150
          %7183 = vst [vmem:[#allocation2 + $0x20] sm:$0xff] %v7151
          %7184 = vst [vmem:[#allocation2 + $0x28] sm:$0xff] %v7152
          %7185 = vst [vmem:[#allocation2 + $0x30] sm:$0xff] %v7153
          %7186 = vst [vmem:[#allocation2 + $0x38] sm:$0xff] %v7154
          %7187 = vst [vmem:[#allocation2 + $0x40] sm:$0xff] %v7155
          %7188 = vst [vmem:[#allocation2 + $0x48] sm:$0xff] %v7156
          %7189 = vst [vmem:[#allocation2 + $0x50] sm:$0xff] %v7157
          %7190 = vst [vmem:[#allocation2 + $0x58] sm:$0xff] %v7158
          %7191 = vst [vmem:[#allocation2 + $0x60] sm:$0xff] %v7159
          %7192 = vst [vmem:[#allocation2 + $0x68] sm:$0xff] %v7160
          %7193 = vst [vmem:[#allocation2 + $0x70] sm:$0xff] %v7161
          %7194 = vst [vmem:[#allocation2 + $0x78] sm:$0xff] %v7162
          %7195 = vst [vmem:[#allocation2 + $0x80] sm:$0xff] %v7163
          %7196 = vst [vmem:[#allocation2 + $0x88] sm:$0xff] %v7164
          %7197 = vst [vmem:[#allocation2 + $0x90] sm:$0xff] %v7165
          %7198 = vst [vmem:[#allocation2 + $0x98] sm:$0xff] %v7166
          %7199 = vst [vmem:[#allocation2 + $0xa0] sm:$0xff] %v7167
          %7200 = vst [vmem:[#allocation2 + $0xa8] sm:$0xff] %v7168
          %7201 = vst [vmem:[#allocation2 + $0xb0] sm:$0xff] %v7169
          %7202 = vst [vmem:[#allocation2 + $0xb8] sm:$0xff] %v7170
          %7203 = vst [vmem:[#allocation2 + $0xc0] sm:$0xff] %v7171
          %7204 = vst [vmem:[#allocation2 + $0xc8] sm:$0xff] %v7172
          %7205 = vst [vmem:[#allocation2 + $0xd0] sm:$0xff] %v7173
          %7206 = vst [vmem:[#allocation2 + $0xd8] sm:$0xff] %v7174
          %7207 = vst [vmem:[#allocation2 + $0xe0] sm:$0xff] %v7175
          %7208 = vst [vmem:[#allocation2 + $0xe8] sm:$0xff] %v7176
          %7209 = vst [vmem:[#allocation2 + $0xf0] sm:$0xff] %v7177
          %7210 = vst [vmem:[#allocation2 + $0xf8] sm:$0xff] %v7178
        $region48: #{tpu_custom_call.1} parent=31 // pred_fallthru
          _
        // Predicated region
        $region49: #{tpu_custom_call.1} parent=31 // pred_check
          %p7211 = pneg %p7075
        $region50: #{tpu_custom_call.1} parent=31 // pred_check_branch
          %7213 = sbr.rel (%p7211) target = $region52
        $region51: #{tpu_custom_call.1} parent=31 // pred_region
          %v7214 = vld [vmem:[#allocation2] sm:$0xff]
          %v7215 = vld [vmem:[#allocation2 + $0x8] sm:$0xff]
          %v7216 = vld [vmem:[#allocation2 + $0x10] sm:$0xff]
          %v7217 = vld [vmem:[#allocation2 + $0x18] sm:$0xff]
          %v7218 = vld [vmem:[#allocation2 + $0x20] sm:$0xff]
          %v7219 = vld [vmem:[#allocation2 + $0x28] sm:$0xff]
          %v7220 = vld [vmem:[#allocation2 + $0x30] sm:$0xff]
          %v7221 = vld [vmem:[#allocation2 + $0x38] sm:$0xff]
          %v7222 = vld [vmem:[#allocation2 + $0x40] sm:$0xff]
          %v7223 = vld [vmem:[#allocation2 + $0x48] sm:$0xff]
          %v7224 = vld [vmem:[#allocation2 + $0x50] sm:$0xff]
          %v7225 = vld [vmem:[#allocation2 + $0x58] sm:$0xff]
          %v7226 = vld [vmem:[#allocation2 + $0x60] sm:$0xff]
          %v7227 = vld [vmem:[#allocation2 + $0x68] sm:$0xff]
          %v7228 = vld [vmem:[#allocation2 + $0x70] sm:$0xff]
          %v7229 = vld [vmem:[#allocation2 + $0x78] sm:$0xff]
          %v7230 = vld [vmem:[#allocation2 + $0x80] sm:$0xff]
          %v7231 = vld [vmem:[#allocation2 + $0x88] sm:$0xff]
          %v7232 = vld [vmem:[#allocation2 + $0x90] sm:$0xff]
          %v7233 = vld [vmem:[#allocation2 + $0x98] sm:$0xff]
          %v7234 = vld [vmem:[#allocation2 + $0xa0] sm:$0xff]
          %v7235 = vld [vmem:[#allocation2 + $0xa8] sm:$0xff]
          %v7236 = vld [vmem:[#allocation2 + $0xb0] sm:$0xff]
          %v7237 = vld [vmem:[#allocation2 + $0xb8] sm:$0xff]
          %v7238 = vld [vmem:[#allocation2 + $0xc0] sm:$0xff]
          %v7239 = vld [vmem:[#allocation2 + $0xc8] sm:$0xff]
          %v7240 = vld [vmem:[#allocation2 + $0xd0] sm:$0xff]
          %v7241 = vld [vmem:[#allocation2 + $0xd8] sm:$0xff]
          %v7242 = vld [vmem:[#allocation2 + $0xe0] sm:$0xff]
          %v7243 = vld [vmem:[#allocation2 + $0xe8] sm:$0xff]
          %v7244 = vld [vmem:[#allocation2 + $0xf0] sm:$0xff]
          %v7245 = vld [vmem:[#allocation2 + $0xf8] sm:$0xff]
          %v7246 = vld [vmem:[%s2] sm:$0xff]
          %v7247 = vld [vmem:[%s2 + $0x8] sm:$0xff]
          %7249 = vset.pattern.permute.xlu0 0
          %7250 = vperm.xlu0 %7249, %v7246
          %v7251 = vpop.permute.xlu0 %7250
          %7254 = vset.pattern.permute.xlu0 0
          %7255 = vperm.xlu0 %7254, %v7247
          %v7256 = vpop.permute.xlu0 %7255
          %v7258 = vadd.f32 %v7214, %v7251
          %v7259 = vadd.f32 %v7215, %v7251
          %v7260 = vadd.f32 %v7216, %v7251
          %v7261 = vadd.f32 %v7217, %v7251
          %v7262 = vadd.f32 %v7218, %v7251
          %v7263 = vadd.f32 %v7219, %v7251
          %v7264 = vadd.f32 %v7220, %v7251
          %v7265 = vadd.f32 %v7221, %v7251
          %v7266 = vadd.f32 %v7222, %v7251
          %v7267 = vadd.f32 %v7223, %v7251
          %v7268 = vadd.f32 %v7224, %v7251
          %v7269 = vadd.f32 %v7225, %v7251
          %v7270 = vadd.f32 %v7226, %v7251
          %v7271 = vadd.f32 %v7227, %v7251
          %v7272 = vadd.f32 %v7228, %v7251
          %v7273 = vadd.f32 %v7229, %v7251
          %v7274 = vadd.f32 %v7230, %v7256
          %v7275 = vadd.f32 %v7231, %v7256
          %v7276 = vadd.f32 %v7232, %v7256
          %v7277 = vadd.f32 %v7233, %v7256
          %v7278 = vadd.f32 %v7234, %v7256
          %v7279 = vadd.f32 %v7235, %v7256
          %v7280 = vadd.f32 %v7236, %v7256
          %v7281 = vadd.f32 %v7237, %v7256
          %v7282 = vadd.f32 %v7238, %v7256
          %v7283 = vadd.f32 %v7239, %v7256
          %v7284 = vadd.f32 %v7240, %v7256
          %v7285 = vadd.f32 %v7241, %v7256
          %v7286 = vadd.f32 %v7242, %v7256
          %v7287 = vadd.f32 %v7243, %v7256
          %v7288 = vadd.f32 %v7244, %v7256
          %v7289 = vadd.f32 %v7245, %v7256
          %7290 = vst [vmem:[%s227] sm:$0xff] %v7258
          %7291 = vst [vmem:[%s227 + $0x8] sm:$0xff] %v7259
          %7292 = vst [vmem:[%s227 + $0x10] sm:$0xff] %v7260
          %7293 = vst [vmem:[%s227 + $0x18] sm:$0xff] %v7261
          %7294 = vst [vmem:[%s227 + $0x20] sm:$0xff] %v7262
          %7295 = vst [vmem:[%s227 + $0x28] sm:$0xff] %v7263
          %7296 = vst [vmem:[%s227 + $0x30] sm:$0xff] %v7264
          %7297 = vst [vmem:[%s227 + $0x38] sm:$0xff] %v7265
          %7298 = vst [vmem:[%s227 + $0x40] sm:$0xff] %v7266
          %7299 = vst [vmem:[%s227 + $0x48] sm:$0xff] %v7267
          %7300 = vst [vmem:[%s227 + $0x50] sm:$0xff] %v7268
          %7301 = vst [vmem:[%s227 + $0x58] sm:$0xff] %v7269
          %7302 = vst [vmem:[%s227 + $0x60] sm:$0xff] %v7270
          %7303 = vst [vmem:[%s227 + $0x68] sm:$0xff] %v7271
          %7304 = vst [vmem:[%s227 + $0x70] sm:$0xff] %v7272
          %7305 = vst [vmem:[%s227 + $0x78] sm:$0xff] %v7273
          %7306 = vst [vmem:[%s227 + $0x80] sm:$0xff] %v7274
          %7307 = vst [vmem:[%s227 + $0x88] sm:$0xff] %v7275
          %7308 = vst [vmem:[%s227 + $0x90] sm:$0xff] %v7276
          %7309 = vst [vmem:[%s227 + $0x98] sm:$0xff] %v7277
          %7310 = vst [vmem:[%s227 + $0xa0] sm:$0xff] %v7278
          %7311 = vst [vmem:[%s227 + $0xa8] sm:$0xff] %v7279
          %7312 = vst [vmem:[%s227 + $0xb0] sm:$0xff] %v7280
          %7313 = vst [vmem:[%s227 + $0xb8] sm:$0xff] %v7281
          %7314 = vst [vmem:[%s227 + $0xc0] sm:$0xff] %v7282
          %7315 = vst [vmem:[%s227 + $0xc8] sm:$0xff] %v7283
          %7316 = vst [vmem:[%s227 + $0xd0] sm:$0xff] %v7284
          %7317 = vst [vmem:[%s227 + $0xd8] sm:$0xff] %v7285
          %7318 = vst [vmem:[%s227 + $0xe0] sm:$0xff] %v7286
          %7319 = vst [vmem:[%s227 + $0xe8] sm:$0xff] %v7287
          %7320 = vst [vmem:[%s227 + $0xf0] sm:$0xff] %v7288
          %7321 = vst [vmem:[%s227 + $0xf8] sm:$0xff] %v7289
        $region52: #{tpu_custom_call.1} parent=31 // pred_fallthru
          _
        %s7322 = sand.u32 %s116, 1
        %s7323 = scalar_lea.sflag [#allocation5], %s7322
        %s7324 = sand.u32 %s116, 1
        %s7325 = smul.addr %s7324, 256
        %s7326 = scalar_lea.vmem [#allocation8], %s7325
        // Predicated region
        $region53: #{tpu_custom_call.1} parent=31 // pred_check
          %p7327 = pneg %p126
        $region54: #{tpu_custom_call.1} parent=31 // pred_check_branch
          %7329 = sbr.rel (%p7327) target = $region56
        $region55: #{tpu_custom_call.1} parent=31 // pred_region
          %s7331 = ssub.s32 4096, 4096
          %7332 = vsyncadd %s7323, %s7331
          %s7333 = smul.addr %s25, 32
          %s7334 = smul.addr %s7333, 128
          %s7335 = scalar_lea.hbm %s3, %s7334
          %s7336 = sshll.u32 %s7326, 4
          %s7337 = int_to_ptr.vmem [resolvable:$true] %s7336
          %7342 = dma.vmem_to_hbm [thread:$0]  %s7337, 4096, %s7335, %s7323, 2048, 2048, 128
        $region56: #{tpu_custom_call.1} parent=31 // pred_fallthru
          _
      $region32: #{tpu_custom_call.1} parent=5 // pred_fallthru
        _
      %p7343 = scmp.le.s32.totalorder 2, %s16
      // Predicated region
      $region57: #{tpu_custom_call.1} parent=5 // pred_check
        %p7344 = pneg %p7343
      $region58: #{tpu_custom_call.1} parent=5 // pred_check_branch
        %7346 = sbr.rel (%p7344) target = $region60
      $region59: #{tpu_custom_call.1} parent=5 // pred_region
        %s7347 = ssub.s32 %s16, 2
        // Predicated region
        $region61: #{tpu_custom_call.1} parent=59 // pred_check
          %p7348 = pneg %p132
        $region62: #{tpu_custom_call.1} parent=59 // pred_check_branch
          %7350 = sbr.rel (%p7348) target = $region64
        $region63: #{tpu_custom_call.1} parent=59 // pred_region
          %s7351 = sand.u32 %s117, 1
          %s7352 = scalar_lea.sflag [#allocation5], %s7351
          %s7353 = sand.u32 %s117, 1
          %s7354 = smul.addr %s7353, 256
          %s7355 = scalar_lea.vmem [#allocation8], %s7354
          %7356 = dma.done %s7352, 4096
        $region64: #{tpu_custom_call.1} parent=59 // pred_fallthru
          _
      $region60: #{tpu_custom_call.1} parent=5 // pred_fallthru
        _
    $region6: #{tpu_custom_call.1} parent=1 // loop_footer
      %s20 = sadd.s32 1, %s16
    $region7: #{tpu_custom_call.1} parent=1 // loop_footer_branch
      %15 = sbr.rel target = $region3
    $region8: #{tpu_custom_call.1} parent=1 // loop_exit
      _
    %7357 = vsyncpa [#allocation4], 1
    %s7358 = scalar_lea.sflag [#allocation4], 1
    %7359 = vsyncpa %s7358, 1
    %7360 = vsyncpa [#allocation7], 1
    %7361 = vsyncpa [#allocation5], 1
    %s7362 = scalar_lea.sflag [#allocation5], 1
    %7363 = vsyncpa %s7362, 1

</llo_original>
